<compile_context>
chip_gen: v7x
topology: tpu7x:2x2x1
jax: 0.10.0
libtpu: 0.0.40
codegen_flags: <defaults>
</compile_context>

<pallas_src>
import jax
import jax.numpy as jnp
import numpy as np
from jax.experimental import pallas as pl
from jax.experimental.pallas import tpu as pltpu


HIDDEN = 64
CONV_OUT = 12 * 12 * 64   # 9216
FC1 = 1024
FC2 = 1024
HEADS_N = 128             # 1 (value) + 64 (hidden_out) padded to a full lane group


def _fc1_blocks():
    """Generation-aware fc1 tiling: split N across v7x's 2 TCs, lane-dense on 1-TC chips."""
    try:
        kind = jax.devices()[0].device_kind.lower()
    except Exception:
        kind = ""
    if "7" in kind:              # v7x: 2 TensorCores per chip
        return 512, 4608         # (block_n, block_k) -> grid (2, 2)
    return 1024, 2304            # v5e / v6e: single TC -> grid (1, 4)


_FC1_BLOCK_N, _FC1_BLOCK_K = _fc1_blocks()


# ----------------------------------------------------------------------------
# Pallas kernel bodies
# ----------------------------------------------------------------------------
def _conv_stack_kernel(x_ref, w1_ref, b1_ref, w2_ref, b2_ref, w3_ref, b3_ref, o_ref):
    """All three 2x2/s2 convs as chained matmuls (block-diagonal weights, z-order cols)."""
    y = jnp.dot(x_ref[...], w1_ref[...], preferred_element_type=jnp.float32) + b1_ref[...]
    y = jnp.maximum(y, 0.0)
    y = jnp.dot(y, w2_ref[...], preferred_element_type=jnp.float32) + b2_ref[...]
    y = jnp.maximum(y, 0.0)
    y = jnp.dot(y, w3_ref[...], preferred_element_type=jnp.float32) + b3_ref[...]
    o_ref[...] = jnp.maximum(y, 0.0)


def _fc1_fused_kernel(hid_ref, whi_ref, bhi_ref, w1h_ref, b1_ref,
                      xc_ref, w1c_ref, s1c_ref, o_ref, acc_ref):
    """Fused hidden_in + fc1 with int8 conv-part weights:
         out = relu( sum_k (conv_k @ dequant(W1c_k)) + relu(hid @ Whi + bhi) @ W1h + b1 )

    grid = (N tiles, K tiles of the conv part).  int8 weights are cast to bf16
    in-kernel; accumulation / scale / bias / ReLU stay f32.
    """
    k = pl.program_id(1)

    @pl.when(k == 0)
    def _():
        h = jnp.dot(hid_ref[...].astype(jnp.bfloat16), whi_ref[...],
                    preferred_element_type=jnp.float32) + bhi_ref[...]
        h = jnp.maximum(h, 0.0).astype(jnp.bfloat16)
        acc_ref[...] = jnp.dot(h, w1h_ref[...],
                               preferred_element_type=jnp.float32) + b1_ref[...]

    wq = w1c_ref[...].astype(jnp.bfloat16)        # int8 -> bf16 (exact)
    part = jnp.dot(xc_ref[...].astype(jnp.bfloat16), wq,
                   preferred_element_type=jnp.float32)
    acc_ref[...] += part * s1c_ref[...]           # per-output-column dequant scale

    @pl.when(k == pl.num_programs(1) - 1)
    def _():
        o_ref[...] = jnp.maximum(acc_ref[...], 0.0).astype(o_ref.dtype)


def _fc2_heads_kernel(x1_ref, w2_ref, b2_ref, wh_ref, bh_ref, o_ref):
    """Fused fc2 (+ReLU) and the value/hidden_out heads (single grid step)."""
    x2 = jnp.dot(x1_ref[...].astype(jnp.bfloat16), w2_ref[...],
                 preferred_element_type=jnp.float32) + b2_ref[...]
    x2 = jnp.maximum(x2, 0.0).astype(jnp.bfloat16)
    o_ref[...] = (jnp.dot(x2, wh_ref[...], preferred_element_type=jnp.float32)
                  + bh_ref[...]).astype(o_ref.dtype)


# ----------------------------------------------------------------------------
# pallas_call wrappers
# ----------------------------------------------------------------------------
def conv_stack(x0, q, *, block_m=144):
    """x0: (B*144, 192) z-order patches -> (B*144, 64) conv3 output (NHWC col order)."""
    M = x0.shape[0]
    assert M % block_m == 0
    return pl.pallas_call(
        _conv_stack_kernel,
        out_shape=jax.ShapeDtypeStruct((M, 64), jnp.float32),
        grid_spec=pltpu.PrefetchScalarGridSpec(
            num_scalar_prefetch=0,
            grid=(M // block_m,),
            in_specs=[
                pl.BlockSpec((block_m, 192), lambda m: (m, 0)),
                pl.BlockSpec((192, 256), lambda m: (0, 0)),
                pl.BlockSpec((1, 256), lambda m: (0, 0)),
                pl.BlockSpec((256, 128), lambda m: (0, 0)),
                pl.BlockSpec((1, 128), lambda m: (0, 0)),
                pl.BlockSpec((128, 64), lambda m: (0, 0)),
                pl.BlockSpec((1, 64), lambda m: (0, 0)),
            ],
            out_specs=pl.BlockSpec((block_m, 64), lambda m: (m, 0)),
        ),
        compiler_params=pltpu.CompilerParams(
            dimension_semantics=("parallel",)),
    )(x0, q["conv_w1"], q["conv_b1"], q["conv_w2"], q["conv_b2"],
      q["conv_w3"], q["conv_b3"])


def fc1_fused(conv_flat, hidden, q, *, block_n=None, block_k=None):
    """relu(concat([conv_flat, relu(hidden @ Whi + bhi)]) @ W1 + b1), fully fused."""
    if block_n is None:
        block_n = _FC1_BLOCK_N
    if block_k is None:
        block_k = _FC1_BLOCK_K
    M, K = conv_flat.shape
    H = hidden.shape[1]
    N = FC1
    assert K % block_k == 0 and N % block_n == 0
    nt, kt = N // block_n, K // block_k

    return pl.pallas_call(
        _fc1_fused_kernel,
        out_shape=jax.ShapeDtypeStruct((M, N), jnp.float32),
        grid_spec=pltpu.PrefetchScalarGridSpec(
            num_scalar_prefetch=0,
            grid=(nt, kt),
            in_specs=[
                pl.BlockSpec((M, H), lambda n, k: (0, 0)),              # hidden (f32)
                pl.BlockSpec((H, H), lambda n, k: (0, 0)),              # hid_in_w (bf16)
                pl.BlockSpec((1, H), lambda n, k: (0, 0)),              # hid_in_b (f32)
                pl.BlockSpec((H, block_n), lambda n, k: (0, n)),        # fc1_w_hid (bf16)
                pl.BlockSpec((1, block_n), lambda n, k: (0, n)),        # fc1_b (f32)
                pl.BlockSpec((M, block_k), lambda n, k: (0, k)),        # conv_flat (f32)
                pl.BlockSpec((block_k, block_n), lambda n, k: (k, n)),  # fc1_w_conv (int8)
                pl.BlockSpec((1, block_n), lambda n, k: (0, n)),        # per-col scale (f32)
            ],
            out_specs=pl.BlockSpec((M, block_n), lambda n, k: (0, n)),
            scratch_shapes=[pltpu.VMEM((M, block_n), jnp.float32)],
        ),
        compiler_params=pltpu.CompilerParams(
            dimension_semantics=("parallel", "arbitrary"),
            vmem_limit_bytes=24 << 20),
    )(hidden, q["hid_in_w"], q["hid_in_b2"], q["fc1_w_hid"], q["fc1_b2"],
      conv_flat, q["fc1_w_conv_q"], q["fc1_w_conv_s"])


def fc2_heads(x1, q):
    """Fused fc2(+ReLU) and both heads; output cols: [value, hidden_out, zero pad]."""
    M = x1.shape[0]
    return pl.pallas_call(
        _fc2_heads_kernel,
        out_shape=jax.ShapeDtypeStruct((M, HEADS_N), jnp.float32),
        grid_spec=pltpu.PrefetchScalarGridSpec(
            num_scalar_prefetch=0,
            grid=(1,),
            in_specs=[
                pl.BlockSpec((M, FC1), lambda i: (0, 0)),
                pl.BlockSpec((FC1, FC2), lambda i: (0, 0)),
                pl.BlockSpec((1, FC2), lambda i: (0, 0)),
                pl.BlockSpec((FC2, HEADS_N), lambda i: (0, 0)),
                pl.BlockSpec((1, HEADS_N), lambda i: (0, 0)),
            ],
            out_specs=pl.BlockSpec((M, HEADS_N), lambda i: (0, 0)),
        ),
        compiler_params=pltpu.CompilerParams(
            dimension_semantics=("arbitrary",)),
    )(x1, q["fc2_w"], q["fc2_b2"], q["heads_w"], q["heads_b2"])


# ----------------------------------------------------------------------------
# One-time offline weight preparation (layout, bf16/int8 storage, fusions).
# ----------------------------------------------------------------------------
def prepare_params(p):
    bf = jnp.bfloat16
    q = {}

    # Conv stack: 2x2/s2 conv -> matmul with block-diagonal weight over z-order cols.
    # Column order of the z-order patch: (h2, w2, h1, w1, h0, w0, c) where h0/w0 are
    # conv1 kernel offsets, h1/w1 conv2's, h2/w2 conv3's.
    w1m = p["conv1_w"].transpose(2, 3, 1, 0).reshape(12, 16)     # (kh,kw,cin) -> cout
    q["conv_w1"] = jnp.kron(jnp.eye(16, dtype=jnp.float32), w1m)  # (192, 256)
    q["conv_b1"] = jnp.tile(p["conv1_b"], 16).reshape(1, 256)
    w2m = p["conv2_w"].transpose(2, 3, 1, 0).reshape(64, 32)
    q["conv_w2"] = jnp.kron(jnp.eye(4, dtype=jnp.float32), w2m)   # (256, 128)
    q["conv_b2"] = jnp.tile(p["conv2_b"], 4).reshape(1, 128)
    q["conv_w3"] = p["conv3_w"].transpose(2, 3, 1, 0).reshape(128, 64)
    q["conv_b3"] = p["conv3_b"].reshape(1, 64)

    q["hid_in_w"] = p["hid_in_w"].astype(bf)
    q["hid_in_b2"] = p["hid_in_b"].reshape(1, HIDDEN)

    # fc1 conv-part: permute rows from torch NCHW-flatten (c,h,w) to the NHWC-flatten
    # (h,w,c) order produced by the conv stack, then symmetric int8 per-output-column.
    wc = p["fc1_w_conv"].reshape(64, 12, 12, FC1).transpose(1, 2, 0, 3).reshape(CONV_OUT, FC1)
    scale = jnp.maximum(jnp.max(jnp.abs(wc), axis=0) / 127.0, 1e-12)
    q["fc1_w_conv_q"] = jnp.clip(jnp.round(wc / scale), -127, 127).astype(jnp.int8)
    q["fc1_w_conv_s"] = scale.reshape(1, FC1).astype(jnp.float32)

    q["fc1_w_hid"] = p["fc1_w_hid"].astype(bf)
    q["fc1_b2"] = p["fc1_b"].reshape(1, FC1)
    q["fc2_w"] = p["fc2_w"].astype(bf)
    q["fc2_b2"] = p["fc2_b"].reshape(1, FC2)

    # fuse the two heads into one lane-dense (FC2, 128) matmul:
    # col 0 = value, cols 1..64 = hidden_out, rest zero padding.
    wh = jnp.concatenate([p["val_w"], p["hid_out_w"]], axis=1)        # (1024, 65)
    q["heads_w"] = jnp.pad(wh, ((0, 0), (0, HEADS_N - wh.shape[1]))).astype(bf)
    bh = jnp.concatenate([p["val_b"], p["hid_out_b"]])
    q["heads_b2"] = jnp.pad(bh, (0, HEADS_N - bh.shape[0])).reshape(1, HEADS_N)
    return q


# ----------------------------------------------------------------------------
# Full CriticNetwork forward.
# ----------------------------------------------------------------------------
def critic_forward(q, state_nchw, hidden_state):
    B = state_nchw.shape[0]

    # Single ~110 KB XLA transpose: NCHW -> z-order 8x8 patches (B*144, 192).
    # h = 8*P_h + 4*h2 + 2*h1 + h0 (same for w); cols ordered (h2,w2,h1,w1,h0,w0,c).
    x0 = state_nchw.reshape(B, 3, 12, 2, 2, 2, 12, 2, 2, 2)
    x0 = x0.transpose(0, 2, 6, 3, 7, 4, 8, 5, 9, 1).reshape(B * 144, 192)

    y3 = conv_stack(x0, q)                                       # (B*144, 64)
    conv_flat = y3.reshape(B, CONV_OUT)                          # contiguous: NHWC flatten

    # pad batch rows to a full sublane group (8) for the FC path
    Mp = max(8, -(-B // 8) * 8)
    hidden = hidden_state
    if Mp != B:
        conv_flat = jnp.pad(conv_flat, ((0, Mp - B), (0, 0)))
        hidden = jnp.pad(hidden, ((0, Mp - B), (0, 0)))

    x1 = fc1_fused(conv_flat, hidden, q)                         # (Mp, 1024)
    heads = fc2_heads(x1, q)                                     # (Mp, 128)
    value = heads[:B, 0:1]
    hidden_out = heads[:B, 1:1 + HIDDEN]
    return value, hidden_out


# ----------------------------------------------------------------------------
# References for correctness checks.
# ----------------------------------------------------------------------------
def _ref_conv_stack(p, state):
    def conv(x, w, b):
        y = jax.lax.conv_general_dilated(
            x, w, (2, 2), "VALID", dimension_numbers=("NCHW", "OIHW", "NCHW"))
        return jax.nn.relu(y + b.reshape(1, -1, 1, 1))
    x = conv(state, p["conv1_w"], p["conv1_b"])
    x = conv(x, p["conv2_w"], p["conv2_b"])
    x = conv(x, p["conv3_w"], p["conv3_b"])
    return x                                                      # (B, 64, 12, 12)


def ref_forward_f32(p, state, hidden):
    """Exact f32 semantics of the PyTorch module."""
    flat = _ref_conv_stack(p, state).reshape(state.shape[0], -1)  # torch .view order (c,h,w)
    h = jax.nn.relu(hidden @ p["hid_in_w"] + p["hid_in_b"])
    cat = jnp.concatenate([flat, h], axis=1)
    W1 = jnp.concatenate([p["fc1_w_conv"], p["fc1_w_hid"]], axis=0)
    x1 = jax.nn.relu(cat @ W1 + p["fc1_b"])
    x2 = jax.nn.relu(x1 @ p["fc2_w"] + p["fc2_b"])
    return x2 @ p["val_w"] + p["val_b"], x2 @ p["hid_out_w"] + p["hid_out_b"]


def _bdot(x, w):
    return jnp.dot(x.astype(jnp.bfloat16), w.astype(jnp.bfloat16),
                   preferred_element_type=jnp.float32)


def ref_forward_quant(p, q, state, hidden):
    """Mirrors the kernels' int8/bf16-weight, f32-accumulate math (tight check)."""
    B = state.shape[0]
    flat_nhwc = _ref_conv_stack(p, state).transpose(0, 2, 3, 1).reshape(B, -1)
    h = jax.nn.relu(_bdot(hidden, p["hid_in_w"]) + p["hid_in_b"])
    conv_part = _bdot(flat_nhwc, q["fc1_w_conv_q"]) * q["fc1_w_conv_s"]
    x1 = jax.nn.relu(conv_part + _bdot(h, p["fc1_w_hid"]) + p["fc1_b"])
    x2 = jax.nn.relu(_bdot(x1, p["fc2_w"]) + p["fc2_b"])
    return _bdot(x2, p["val_w"]) + p["val_b"], _bdot(x2, p["hid_out_w"]) + p["hid_out_b"]


# ----------------------------------------------------------------------------
# Deterministic parameter init (synthetic; Linear weights stored as (in, out)).
# ----------------------------------------------------------------------------
def init_params(key):
    ks = jax.random.split(key, 16)
    s = 0.02
    return {
        "conv1_w": jax.random.normal(ks[0], (16, 3, 2, 2), jnp.float32) * 0.1,
        "conv1_b": jax.random.normal(ks[1], (16,), jnp.float32) * s,
        "conv2_w": jax.random.normal(ks[2], (32, 16, 2, 2), jnp.float32) * 0.1,
        "conv2_b": jax.random.normal(ks[3], (32,), jnp.float32) * s,
        "conv3_w": jax.random.normal(ks[4], (64, 32, 2, 2), jnp.float32) * 0.1,
        "conv3_b": jax.random.normal(ks[5], (64,), jnp.float32) * s,
        "hid_in_w": jax.random.normal(ks[6], (HIDDEN, HIDDEN), jnp.float32) * s,
        "hid_in_b": jax.random.normal(ks[7], (HIDDEN,), jnp.float32) * s,
        "fc1_w_conv": jax.random.normal(ks[8], (CONV_OUT, FC1), jnp.float32) * s,
        "fc1_w_hid": jax.random.normal(ks[9], (HIDDEN, FC1), jnp.float32) * s,
        "fc1_b": jax.random.normal(ks[10], (FC1,), jnp.float32) * s,
        "fc2_w": jax.random.normal(ks[11], (FC1, FC2), jnp.float32) * s,
        "fc2_b": jax.random.normal(ks[12], (FC2,), jnp.float32) * s,
        "val_w": jax.random.normal(ks[13], (FC2, 1), jnp.float32) * s,
        "val_b": jnp.zeros((1,), jnp.float32),
        "hid_out_w": jax.random.normal(ks[14], (FC2, HIDDEN), jnp.float32) * s,
        "hid_out_b": jax.random.normal(ks[15], (HIDDEN,), jnp.float32) * s,
    }


if __name__ == "__main__":
    key = jax.random.PRNGKey(0)
    kp, kx, kh = jax.random.split(key, 3)
    params = init_params(kp)
    prepared = prepare_params(params)

    B = 2
    # input shape implied by conv_out_dims = 12*12*64 with three stride-2 convs -> 96x96x3
    state = jax.random.normal(kx, (B, 3, 96, 96), jnp.float32)
    hidden_state = jax.random.normal(kh, (B, HIDDEN), jnp.float32)

    fwd = jax.jit(critic_forward)
    value, hidden_out = jax.block_until_ready(fwd(prepared, state, hidden_state))
    assert value.shape == (B, 1) and hidden_out.shape == (B, HIDDEN)

    # tight check vs a reference that mirrors the kernels' int8/bf16 math
    rv_q, rh_q = jax.block_until_ready(ref_forward_quant(params, prepared, state, hidden_state))
    np.testing.assert_allclose(np.asarray(value), np.asarray(rv_q), rtol=2e-3, atol=2e-3)
    np.testing.assert_allclose(np.asarray(hidden_out), np.asarray(rh_q), rtol=2e-3, atol=2e-3)

    # loose check vs exact f32 module semantics (int8 fc1-conv weights + bf16 weight
    # storage are the only approximations; accumulation / bias / ReLU are f32)
    rv_f, rh_f = jax.block_until_ready(ref_forward_f32(params, state, hidden_state))
    np.testing.assert_allclose(np.asarray(value), np.asarray(rv_f), rtol=3e-2, atol=3e-2)
    np.testing.assert_allclose(np.asarray(hidden_out), np.asarray(rh_f), rtol=3e-2, atol=3e-2)

    print("KERNEL_OK")
</pallas_src>

<mosaic_0001>
module attributes {stable_mosaic.version = 11 : i64} {
  func.func @_conv_stack_kernel(%arg0: i32, %arg1: memref<144x192xf32, #tpu.memory_space<vmem>>, %arg2: memref<192x256xf32, #tpu.memory_space<vmem>>, %arg3: memref<1x256xf32, #tpu.memory_space<vmem>>, %arg4: memref<256x128xf32, #tpu.memory_space<vmem>>, %arg5: memref<1x128xf32, #tpu.memory_space<vmem>>, %arg6: memref<128x64xf32, #tpu.memory_space<vmem>>, %arg7: memref<1x64xf32, #tpu.memory_space<vmem>>, %arg8: memref<144x64xf32, #tpu.memory_space<vmem>>) attributes {dimension_semantics = [#tpu.dimension_semantics<parallel>], iteration_bounds = array<i64: 2>, scalar_prefetch = 0 : i64, scratch_operands = 0 : i64, tpu.core_type = #tpu.core_type<tc>, window_params = [{transform_indices = @transform_0, window_bounds = array<i64: 144, 192>}, {pipeline_mode = #tpu.pipeline_mode<synchronous>, transform_indices = @transform_1, window_bounds = array<i64: 192, 256>}, {pipeline_mode = #tpu.pipeline_mode<synchronous>, transform_indices = @transform_2, window_bounds = array<i64: 1, 256>}, {pipeline_mode = #tpu.pipeline_mode<synchronous>, transform_indices = @transform_3, window_bounds = array<i64: 256, 128>}, {pipeline_mode = #tpu.pipeline_mode<synchronous>, transform_indices = @transform_4, window_bounds = array<i64: 1, 128>}, {pipeline_mode = #tpu.pipeline_mode<synchronous>, transform_indices = @transform_5, window_bounds = array<i64: 128, 64>}, {pipeline_mode = #tpu.pipeline_mode<synchronous>, transform_indices = @transform_6, window_bounds = array<i64: 1, 64>}, {transform_indices = @transform_7, window_bounds = array<i64: 144, 64>}]} {
    %c0 = arith.constant 0 : index
    %c0_0 = arith.constant 0 : index
    %0 = vector.load %arg1[%c0, %c0_0] : memref<144x192xf32, #tpu.memory_space<vmem>>, vector<144x192xf32>
    %c0_1 = arith.constant 0 : index
    %c0_2 = arith.constant 0 : index
    %1 = vector.load %arg2[%c0_1, %c0_2] : memref<192x256xf32, #tpu.memory_space<vmem>>, vector<192x256xf32>
    %cst = arith.constant dense<0.000000e+00> : vector<144x256xf32>
    %2 = tpu.matmul %0, %1, %cst {dimension_numbers = #tpu.dot_dimension_numbers<[1], [0], [0], [1], [0, 0, 1, 1], [], []>} : vector<144x192xf32>, vector<192x256xf32>, vector<144x256xf32> -> vector<144x256xf32>
    %c0_3 = arith.constant 0 : index
    %c0_4 = arith.constant 0 : index
    %3 = vector.load %arg3[%c0_3, %c0_4] : memref<1x256xf32, #tpu.memory_space<vmem>>, vector<1x256xf32>
    %4 = vector.broadcast %3 : vector<1x256xf32> to vector<144x256xf32>
    %5 = arith.addf %2, %4 : vector<144x256xf32>
    %cst_5 = arith.constant 0.000000e+00 : f32
    %6 = vector.broadcast %cst_5 : f32 to vector<144x256xf32>
    %7 = arith.maximumf %5, %6 : vector<144x256xf32>
    %c0_6 = arith.constant 0 : index
    %c0_7 = arith.constant 0 : index
    %8 = vector.load %arg4[%c0_6, %c0_7] : memref<256x128xf32, #tpu.memory_space<vmem>>, vector<256x128xf32>
    %cst_8 = arith.constant dense<0.000000e+00> : vector<144x128xf32>
    %9 = tpu.matmul %7, %8, %cst_8 {dimension_numbers = #tpu.dot_dimension_numbers<[1], [0], [0], [1], [0, 0, 1, 1], [], []>} : vector<144x256xf32>, vector<256x128xf32>, vector<144x128xf32> -> vector<144x128xf32>
    %c0_9 = arith.constant 0 : index
    %c0_10 = arith.constant 0 : index
    %10 = vector.load %arg5[%c0_9, %c0_10] : memref<1x128xf32, #tpu.memory_space<vmem>>, vector<1x128xf32>
    %11 = vector.broadcast %10 : vector<1x128xf32> to vector<144x128xf32>
    %12 = arith.addf %9, %11 : vector<144x128xf32>
    %cst_11 = arith.constant 0.000000e+00 : f32
    %13 = vector.broadcast %cst_11 : f32 to vector<144x128xf32>
    %14 = arith.maximumf %12, %13 : vector<144x128xf32>
    %c0_12 = arith.constant 0 : index
    %c0_13 = arith.constant 0 : index
    %15 = vector.load %arg6[%c0_12, %c0_13] : memref<128x64xf32, #tpu.memory_space<vmem>>, vector<128x64xf32>
    %cst_14 = arith.constant dense<0.000000e+00> : vector<144x64xf32>
    %16 = tpu.matmul %14, %15, %cst_14 {dimension_numbers = #tpu.dot_dimension_numbers<[1], [0], [0], [1], [0, 0, 1, 1], [], []>} : vector<144x128xf32>, vector<128x64xf32>, vector<144x64xf32> -> vector<144x64xf32>
    %c0_15 = arith.constant 0 : index
    %c0_16 = arith.constant 0 : index
    %17 = vector.load %arg7[%c0_15, %c0_16] : memref<1x64xf32, #tpu.memory_space<vmem>>, vector<1x64xf32>
    %18 = vector.broadcast %17 : vector<1x64xf32> to vector<144x64xf32>
    %19 = arith.addf %16, %18 : vector<144x64xf32>
    %cst_17 = arith.constant 0.000000e+00 : f32
    %20 = vector.broadcast %cst_17 : f32 to vector<144x64xf32>
    %21 = arith.maximumf %19, %20 : vector<144x64xf32>
    %c0_18 = arith.constant 0 : index
    %c0_19 = arith.constant 0 : index
    %22 = vector.load %arg8[%c0_18, %c0_19] : memref<144x64xf32, #tpu.memory_space<vmem>>, vector<144x64xf32>
    tpu.vector_store %arg8[%c0_18, %c0_19], %21 {strides = array<i32>} : memref<144x64xf32, #tpu.memory_space<vmem>>, vector<144x64xf32>,
    return
  }
  func.func @transform_0(%arg0: i32) -> (i32, i32) {
    %c0_i32 = arith.constant 0 : i32
    %c0_i32_0 = arith.constant 0 : i32
    return %arg0, %c0_i32 : i32, i32
  }
  func.func @transform_1(%arg0: i32) -> (i32, i32) {
    %c0_i32 = arith.constant 0 : i32
    %c0_i32_0 = arith.constant 0 : i32
    %c0_i32_1 = arith.constant 0 : i32
    return %c0_i32, %c0_i32_0 : i32, i32
  }
  func.func @transform_2(%arg0: i32) -> (i32, i32) {
    %c0_i32 = arith.constant 0 : i32
    %c0_i32_0 = arith.constant 0 : i32
    %c0_i32_1 = arith.constant 0 : i32
    return %c0_i32, %c0_i32_0 : i32, i32
  }
  func.func @transform_3(%arg0: i32) -> (i32, i32) {
    %c0_i32 = arith.constant 0 : i32
    %c0_i32_0 = arith.constant 0 : i32
    %c0_i32_1 = arith.constant 0 : i32
    return %c0_i32, %c0_i32_0 : i32, i32
  }
  func.func @transform_4(%arg0: i32) -> (i32, i32) {
    %c0_i32 = arith.constant 0 : i32
    %c0_i32_0 = arith.constant 0 : i32
    %c0_i32_1 = arith.constant 0 : i32
    return %c0_i32, %c0_i32_0 : i32, i32
  }
  func.func @transform_5(%arg0: i32) -> (i32, i32) {
    %c0_i32 = arith.constant 0 : i32
    %c0_i32_0 = arith.constant 0 : i32
    %c0_i32_1 = arith.constant 0 : i32
    return %c0_i32, %c0_i32_0 : i32, i32
  }
  func.func @transform_6(%arg0: i32) -> (i32, i32) {
    %c0_i32 = arith.constant 0 : i32
    %c0_i32_0 = arith.constant 0 : i32
    %c0_i32_1 = arith.constant 0 : i32
    return %c0_i32, %c0_i32_0 : i32, i32
  }
  func.func @transform_7(%arg0: i32) -> (i32, i32) {
    %c0_i32 = arith.constant 0 : i32
    %c0_i32_0 = arith.constant 0 : i32
    return %arg0, %c0_i32 : i32, i32
  }
}

module attributes {stable_mosaic.version = 11 : i64} {
  func.func @_fc1_fused_kernel(%arg0: i32, %arg1: i32, %arg2: memref<8x64xf32, #tpu.memory_space<vmem>>, %arg3: memref<64x64xbf16, #tpu.memory_space<vmem>>, %arg4: memref<1x64xf32, #tpu.memory_space<vmem>>, %arg5: memref<64x1024xbf16, #tpu.memory_space<vmem>>, %arg6: memref<1x1024xf32, #tpu.memory_space<vmem>>, %arg7: memref<8x2304xf32, #tpu.memory_space<vmem>>, %arg8: memref<2304x1024xi8, #tpu.memory_space<vmem>>, %arg9: memref<1x1024xf32, #tpu.memory_space<vmem>>, %arg10: memref<8x1024xf32, #tpu.memory_space<vmem>>, %arg11: memref<8x1024xf32, #tpu.memory_space<vmem>>) attributes {dimension_semantics = [#tpu.dimension_semantics<parallel>, #tpu.dimension_semantics<arbitrary>], iteration_bounds = array<i64: 1, 4>, scalar_prefetch = 0 : i64, scratch_operands = 1 : i64, tpu.core_type = #tpu.core_type<tc>, window_params = [{pipeline_mode = #tpu.pipeline_mode<synchronous>, transform_indices = @transform_0, window_bounds = array<i64: 8, 64>}, {pipeline_mode = #tpu.pipeline_mode<synchronous>, transform_indices = @transform_1, window_bounds = array<i64: 64, 64>}, {pipeline_mode = #tpu.pipeline_mode<synchronous>, transform_indices = @transform_2, window_bounds = array<i64: 1, 64>}, {transform_indices = @transform_3, window_bounds = array<i64: 64, 1024>}, {transform_indices = @transform_4, window_bounds = array<i64: 1, 1024>}, {transform_indices = @transform_5, window_bounds = array<i64: 8, 2304>}, {transform_indices = @transform_6, window_bounds = array<i64: 2304, 1024>}, {transform_indices = @transform_7, window_bounds = array<i64: 1, 1024>}, {transform_indices = @transform_8, window_bounds = array<i64: 8, 1024>}]} {
    %c0_i32 = arith.constant 0 : i32
    %0 = arith.cmpi eq, %arg1, %c0_i32 : i32
    %1 = arith.extui %0 : i1 to i32
    %c0_i32_0 = arith.constant 0 : i32
    %2 = arith.cmpi ne, %1, %c0_i32_0 : i32
    scf.if %2 {
      %c0_11 = arith.constant 0 : index
      %c0_12 = arith.constant 0 : index
      %17 = vector.load %arg2[%c0_11, %c0_12] : memref<8x64xf32, #tpu.memory_space<vmem>>, vector<8x64xf32>
      %18 = arith.truncf %17 : vector<8x64xf32> to vector<8x64xbf16>
      %c0_13 = arith.constant 0 : index
      %c0_14 = arith.constant 0 : index
      %19 = vector.load %arg3[%c0_13, %c0_14] : memref<64x64xbf16, #tpu.memory_space<vmem>>, vector<64x64xbf16>
      %cst_15 = arith.constant dense<0.000000e+00> : vector<8x64xf32>
      %20 = tpu.matmul %18, %19, %cst_15 {dimension_numbers = #tpu.dot_dimension_numbers<[1], [0], [0], [1], [0, 0, 1, 1], [], []>} : vector<8x64xbf16>, vector<64x64xbf16>, vector<8x64xf32> -> vector<8x64xf32>
      %c0_16 = arith.constant 0 : index
      %c0_17 = arith.constant 0 : index
      %21 = vector.load %arg4[%c0_16, %c0_17] : memref<1x64xf32, #tpu.memory_space<vmem>>, vector<1x64xf32>
      %22 = vector.broadcast %21 : vector<1x64xf32> to vector<8x64xf32>
      %23 = arith.addf %20, %22 : vector<8x64xf32>
      %cst_18 = arith.constant 0.000000e+00 : f32
      %24 = vector.broadcast %cst_18 : f32 to vector<8x64xf32>
      %25 = arith.maximumf %23, %24 : vector<8x64xf32>
      %26 = arith.truncf %25 : vector<8x64xf32> to vector<8x64xbf16>
      %c0_19 = arith.constant 0 : index
      %c0_20 = arith.constant 0 : index
      %27 = vector.load %arg5[%c0_19, %c0_20] : memref<64x1024xbf16, #tpu.memory_space<vmem>>, vector<64x1024xbf16>
      %cst_21 = arith.constant dense<0.000000e+00> : vector<8x1024xf32>
      %28 = tpu.matmul %26, %27, %cst_21 {dimension_numbers = #tpu.dot_dimension_numbers<[1], [0], [0], [1], [0, 0, 1, 1], [], []>} : vector<8x64xbf16>, vector<64x1024xbf16>, vector<8x1024xf32> -> vector<8x1024xf32>
      %c0_22 = arith.constant 0 : index
      %c0_23 = arith.constant 0 : index
      %29 = vector.load %arg6[%c0_22, %c0_23] : memref<1x1024xf32, #tpu.memory_space<vmem>>, vector<1x1024xf32>
      %30 = vector.broadcast %29 : vector<1x1024xf32> to vector<8x1024xf32>
      %31 = arith.addf %28, %30 : vector<8x1024xf32>
      %c0_24 = arith.constant 0 : index
      %c0_25 = arith.constant 0 : index
      %32 = vector.load %arg11[%c0_24, %c0_25] : memref<8x1024xf32, #tpu.memory_space<vmem>>, vector<8x1024xf32>
      tpu.vector_store %arg11[%c0_24, %c0_25], %31 {strides = array<i32>} : memref<8x1024xf32, #tpu.memory_space<vmem>>, vector<8x1024xf32>,
    } else {
    }
    %c0 = arith.constant 0 : index
    %c0_1 = arith.constant 0 : index
    %3 = vector.load %arg8[%c0, %c0_1] : memref<2304x1024xi8, #tpu.memory_space<vmem>>, vector<2304x1024xi8>
    %4 = arith.sitofp %3 : vector<2304x1024xi8> to vector<2304x1024xbf16>
    %c0_2 = arith.constant 0 : index
    %c0_3 = arith.constant 0 : index
    %5 = vector.load %arg7[%c0_2, %c0_3] : memref<8x2304xf32, #tpu.memory_space<vmem>>, vector<8x2304xf32>
    %6 = arith.truncf %5 : vector<8x2304xf32> to vector<8x2304xbf16>
    %cst = arith.constant dense<0.000000e+00> : vector<8x1024xf32>
    %7 = tpu.matmul %6, %4, %cst {dimension_numbers = #tpu.dot_dimension_numbers<[1], [0], [0], [1], [0, 0, 1, 1], [], []>} : vector<8x2304xbf16>, vector<2304x1024xbf16>, vector<8x1024xf32> -> vector<8x1024xf32>
    %c0_4 = arith.constant 0 : index
    %c0_5 = arith.constant 0 : index
    %8 = vector.load %arg11[%c0_4, %c0_5] : memref<8x1024xf32, #tpu.memory_space<vmem>>, vector<8x1024xf32>
    %c0_6 = arith.constant 0 : index
    %c0_7 = arith.constant 0 : index
    %9 = vector.load %arg9[%c0_6, %c0_7] : memref<1x1024xf32, #tpu.memory_space<vmem>>, vector<1x1024xf32>
    %10 = vector.broadcast %9 : vector<1x1024xf32> to vector<8x1024xf32>
    %11 = arith.mulf %7, %10 : vector<8x1024xf32>
    %12 = arith.addf %8, %11 : vector<8x1024xf32>
    %c0_8 = arith.constant 0 : index
    %c0_9 = arith.constant 0 : index
    %13 = vector.load %arg11[%c0_8, %c0_9] : memref<8x1024xf32, #tpu.memory_space<vmem>>, vector<8x1024xf32>
    tpu.vector_store %arg11[%c0_8, %c0_9], %12 {strides = array<i32>} : memref<8x1024xf32, #tpu.memory_space<vmem>>, vector<8x1024xf32>,
    %c3_i32 = arith.constant 3 : i32
    %14 = arith.cmpi eq, %arg1, %c3_i32 : i32
    %15 = arith.extui %14 : i1 to i32
    %c0_i32_10 = arith.constant 0 : i32
    %16 = arith.cmpi ne, %15, %c0_i32_10 : i32
    scf.if %16 {
      %c0_11 = arith.constant 0 : index
      %c0_12 = arith.constant 0 : index
      %17 = vector.load %arg11[%c0_11, %c0_12] : memref<8x1024xf32, #tpu.memory_space<vmem>>, vector<8x1024xf32>
      %cst_13 = arith.constant 0.000000e+00 : f32
      %18 = vector.broadcast %cst_13 : f32 to vector<8x1024xf32>
      %19 = arith.maximumf %17, %18 : vector<8x1024xf32>
      %c0_14 = arith.constant 0 : index
      %c0_15 = arith.constant 0 : index
      %20 = vector.load %arg10[%c0_14, %c0_15] : memref<8x1024xf32, #tpu.memory_space<vmem>>, vector<8x1024xf32>
      tpu.vector_store %arg10[%c0_14, %c0_15], %19 {strides = array<i32>} : memref<8x1024xf32, #tpu.memory_space<vmem>>, vector<8x1024xf32>,
    } else {
    }
    return
  }
  func.func @transform_0(%arg0: i32, %arg1: i32) -> (i32, i32) {
    %c0_i32 = arith.constant 0 : i32
    %c0_i32_0 = arith.constant 0 : i32
    %c0_i32_1 = arith.constant 0 : i32
    return %c0_i32, %c0_i32_0 : i32, i32
  }
  func.func @transform_1(%arg0: i32, %arg1: i32) -> (i32, i32) {
    %c0_i32 = arith.constant 0 : i32
    %c0_i32_0 = arith.constant 0 : i32
    %c0_i32_1 = arith.constant 0 : i32
    return %c0_i32, %c0_i32_0 : i32, i32
  }
  func.func @transform_2(%arg0: i32, %arg1: i32) -> (i32, i32) {
    %c0_i32 = arith.constant 0 : i32
    %c0_i32_0 = arith.constant 0 : i32
    %c0_i32_1 = arith.constant 0 : i32
    return %c0_i32, %c0_i32_0 : i32, i32
  }
  func.func @transform_3(%arg0: i32, %arg1: i32) -> (i32, i32) {
    %c0_i32 = arith.constant 0 : i32
    %c0_i32_0 = arith.constant 0 : i32
    return %c0_i32, %arg0 : i32, i32
  }
  func.func @transform_4(%arg0: i32, %arg1: i32) -> (i32, i32) {
    %c0_i32 = arith.constant 0 : i32
    %c0_i32_0 = arith.constant 0 : i32
    return %c0_i32, %arg0 : i32, i32
  }
  func.func @transform_5(%arg0: i32, %arg1: i32) -> (i32, i32) {
    %c0_i32 = arith.constant 0 : i32
    %c0_i32_0 = arith.constant 0 : i32
    return %c0_i32, %arg1 : i32, i32
  }
  func.func @transform_6(%arg0: i32, %arg1: i32) -> (i32, i32) {
    %c0_i32 = arith.constant 0 : i32
    return %arg1, %arg0 : i32, i32
  }
  func.func @transform_7(%arg0: i32, %arg1: i32) -> (i32, i32) {
    %c0_i32 = arith.constant 0 : i32
    %c0_i32_0 = arith.constant 0 : i32
    return %c0_i32, %arg0 : i32, i32
  }
  func.func @transform_8(%arg0: i32, %arg1: i32) -> (i32, i32) {
    %c0_i32 = arith.constant 0 : i32
    %c0_i32_0 = arith.constant 0 : i32
    return %c0_i32, %arg0 : i32, i32
  }
}

module attributes {stable_mosaic.version = 11 : i64} {
  func.func @_fc2_heads_kernel(%arg0: i32, %arg1: memref<8x1024xf32, #tpu.memory_space<vmem>>, %arg2: memref<1024x1024xbf16, #tpu.memory_space<vmem>>, %arg3: memref<1x1024xf32, #tpu.memory_space<vmem>>, %arg4: memref<1024x128xbf16, #tpu.memory_space<vmem>>, %arg5: memref<1x128xf32, #tpu.memory_space<vmem>>, %arg6: memref<8x128xf32, #tpu.memory_space<vmem>>) attributes {dimension_semantics = [#tpu.dimension_semantics<arbitrary>], iteration_bounds = array<i64: 1>, scalar_prefetch = 0 : i64, scratch_operands = 0 : i64, tpu.core_type = #tpu.core_type<tc>, window_params = [{pipeline_mode = #tpu.pipeline_mode<synchronous>, transform_indices = @transform_0, window_bounds = array<i64: 8, 1024>}, {pipeline_mode = #tpu.pipeline_mode<synchronous>, transform_indices = @transform_1, window_bounds = array<i64: 1024, 1024>}, {pipeline_mode = #tpu.pipeline_mode<synchronous>, transform_indices = @transform_2, window_bounds = array<i64: 1, 1024>}, {pipeline_mode = #tpu.pipeline_mode<synchronous>, transform_indices = @transform_3, window_bounds = array<i64: 1024, 128>}, {pipeline_mode = #tpu.pipeline_mode<synchronous>, transform_indices = @transform_4, window_bounds = array<i64: 1, 128>}, {pipeline_mode = #tpu.pipeline_mode<synchronous>, transform_indices = @transform_5, window_bounds = array<i64: 8, 128>}]} {
    %c0 = arith.constant 0 : index
    %c0_0 = arith.constant 0 : index
    %0 = vector.load %arg1[%c0, %c0_0] : memref<8x1024xf32, #tpu.memory_space<vmem>>, vector<8x1024xf32>
    %1 = arith.truncf %0 : vector<8x1024xf32> to vector<8x1024xbf16>
    %c0_1 = arith.constant 0 : index
    %c0_2 = arith.constant 0 : index
    %2 = vector.load %arg2[%c0_1, %c0_2] : memref<1024x1024xbf16, #tpu.memory_space<vmem>>, vector<1024x1024xbf16>
    %cst = arith.constant dense<0.000000e+00> : vector<8x1024xf32>
    %3 = tpu.matmul %1, %2, %cst {dimension_numbers = #tpu.dot_dimension_numbers<[1], [0], [0], [1], [0, 0, 1, 1], [], []>} : vector<8x1024xbf16>, vector<1024x1024xbf16>, vector<8x1024xf32> -> vector<8x1024xf32>
    %c0_3 = arith.constant 0 : index
    %c0_4 = arith.constant 0 : index
    %4 = vector.load %arg3[%c0_3, %c0_4] : memref<1x1024xf32, #tpu.memory_space<vmem>>, vector<1x1024xf32>
    %5 = vector.broadcast %4 : vector<1x1024xf32> to vector<8x1024xf32>
    %6 = arith.addf %3, %5 : vector<8x1024xf32>
    %cst_5 = arith.constant 0.000000e+00 : f32
    %7 = vector.broadcast %cst_5 : f32 to vector<8x1024xf32>
    %8 = arith.maximumf %6, %7 : vector<8x1024xf32>
    %9 = arith.truncf %8 : vector<8x1024xf32> to vector<8x1024xbf16>
    %c0_6 = arith.constant 0 : index
    %c0_7 = arith.constant 0 : index
    %10 = vector.load %arg4[%c0_6, %c0_7] : memref<1024x128xbf16, #tpu.memory_space<vmem>>, vector<1024x128xbf16>
    %cst_8 = arith.constant dense<0.000000e+00> : vector<8x128xf32>
    %11 = tpu.matmul %9, %10, %cst_8 {dimension_numbers = #tpu.dot_dimension_numbers<[1], [0], [0], [1], [0, 0, 1, 1], [], []>} : vector<8x1024xbf16>, vector<1024x128xbf16>, vector<8x128xf32> -> vector<8x128xf32>
    %c0_9 = arith.constant 0 : index
    %c0_10 = arith.constant 0 : index
    %12 = vector.load %arg5[%c0_9, %c0_10] : memref<1x128xf32, #tpu.memory_space<vmem>>, vector<1x128xf32>
    %13 = vector.broadcast %12 : vector<1x128xf32> to vector<8x128xf32>
    %14 = arith.addf %11, %13 : vector<8x128xf32>
    %c0_11 = arith.constant 0 : index
    %c0_12 = arith.constant 0 : index
    %15 = vector.load %arg6[%c0_11, %c0_12] : memref<8x128xf32, #tpu.memory_space<vmem>>, vector<8x128xf32>
    tpu.vector_store %arg6[%c0_11, %c0_12], %14 {strides = array<i32>} : memref<8x128xf32, #tpu.memory_space<vmem>>, vector<8x128xf32>,
    return
  }
  func.func @transform_0(%arg0: i32) -> (i32, i32) {
    %c0_i32 = arith.constant 0 : i32
    %c0_i32_0 = arith.constant 0 : i32
    %c0_i32_1 = arith.constant 0 : i32
    return %c0_i32, %c0_i32_0 : i32, i32
  }
  func.func @transform_1(%arg0: i32) -> (i32, i32) {
    %c0_i32 = arith.constant 0 : i32
    %c0_i32_0 = arith.constant 0 : i32
    %c0_i32_1 = arith.constant 0 : i32
    return %c0_i32, %c0_i32_0 : i32, i32
  }
  func.func @transform_2(%arg0: i32) -> (i32, i32) {
    %c0_i32 = arith.constant 0 : i32
    %c0_i32_0 = arith.constant 0 : i32
    %c0_i32_1 = arith.constant 0 : i32
    return %c0_i32, %c0_i32_0 : i32, i32
  }
  func.func @transform_3(%arg0: i32) -> (i32, i32) {
    %c0_i32 = arith.constant 0 : i32
    %c0_i32_0 = arith.constant 0 : i32
    %c0_i32_1 = arith.constant 0 : i32
    return %c0_i32, %c0_i32_0 : i32, i32
  }
  func.func @transform_4(%arg0: i32) -> (i32, i32) {
    %c0_i32 = arith.constant 0 : i32
    %c0_i32_0 = arith.constant 0 : i32
    %c0_i32_1 = arith.constant 0 : i32
    return %c0_i32, %c0_i32_0 : i32, i32
  }
  func.func @transform_5(%arg0: i32) -> (i32, i32) {
    %c0_i32 = arith.constant 0 : i32
    %c0_i32_0 = arith.constant 0 : i32
    %c0_i32_1 = arith.constant 0 : i32
    return %c0_i32, %c0_i32_0 : i32, i32
  }
}

</mosaic_0001>

<llo_original>
// kernel: critic_forward.3
$region0: #{critic_forward.3}
  #allocation0 [shape = 'u32[]', space=smem, size = 0x4, offset = 0x4, fixed_abs, tag = 'smem constant byte address 0x4 - core index']
  #allocation1 [shape = 'u32[144,128]{1,0:T(1,128)}', space=vmem, size = 0x12000, scoped, tag = 'internal scratch']
  %s0 = inlined_call_operand.vmem [shape: f32[288,192], index: 0, kind: input, shape index: {}]
  %s1 = inlined_call_operand.vmem [shape: f32[192,256], index: 1, kind: input, shape index: {}]
  %s2 = inlined_call_operand.vmem [shape: f32[1,256], index: 2, kind: input, shape index: {}]
  %s3 = inlined_call_operand.vmem [shape: f32[256,128], index: 3, kind: input, shape index: {}]
  %s4 = inlined_call_operand.vmem [shape: f32[1,128], index: 4, kind: input, shape index: {}]
  %s5 = inlined_call_operand.vmem [shape: f32[128,64], index: 5, kind: input, shape index: {}]
  %s6 = inlined_call_operand.vmem [shape: f32[1,64], index: 6, kind: input, shape index: {}]
  %s7 = inlined_call_operand.vmem [shape: f32[288,64], index: 7, kind: output, shape index: {}]
  %s8 = sld [smem:[#allocation0]]
  $region61: #{critic_forward.3} parent=0
    _
  %s10 = ssub.s32 1, %s8
  %s11 = scalar_select 0, %s10, %s8
  loop: start=0, step=1, limit=4
  $region2: #{critic_forward.3} parent=0 // loop_pre_header
    _
  $region3: #{critic_forward.3} parent=0 // loop_header
    %s13 = sphi 0, %s17
    %p14 = scmp.ge.s32.totalorder %s13, 4
    %s23 = sphi 0, %s25
    %s26 = sphi 0, %s23
    %s27 = sphi 0, %s26
    %s43 = sphi 0, %s27
    %s47 = sphi 0, %s47
    %s49 = sphi 0, %s47
    %s50 = sphi 0, %s49
    %s64 = sphi 0, %s50
    %s68 = sphi 0, %s68
    %s70 = sphi 0, %s68
    %s71 = sphi 0, %s70
    %s85 = sphi 0, %s71
    %s89 = sphi 0, %s89
    %s91 = sphi 0, %s89
    %s92 = sphi 0, %s91
    %s106 = sphi 0, %s92
    %s110 = sphi 0, %s110
    %s112 = sphi 0, %s110
    %s113 = sphi 0, %s112
    %s127 = sphi 0, %s113
    %s131 = sphi 0, %s131
    %s133 = sphi 0, %s131
    %s134 = sphi 0, %s133
    %s148 = sphi 0, %s134
    %s152 = sphi 0, %s152
    %s154 = sphi 0, %s152
    %s155 = sphi 0, %s154
    %s169 = sphi 0, %s155
    %s175 = sphi 0, %s177
    %s178 = sphi 0, %s175
    %s179 = sphi 0, %s178
    %s195 = sphi 0, %s179
  $region4: #{critic_forward.3} parent=0 // loop_header_branch
    %16 = sbr.rel (%p14) target = $region8
  $region5: #{critic_forward.3} parent=0 // loop_body
    %s18 = ssub.s32 %s13, 1
    %s19 = ssub.s32 %s13, 2
    %s20 = sadd.s32 %s13, 1
    %s21 = ssub.s32 %s13, %s20
    %p22 = scmp.eq.s32.totalorder %s21, 0
    %s24 = sadd.s32 %s23, 1
    %s25 = scalar_select %p22, %s23, %s24
    %p28 = pneg %p22
    %p29 = scmp.eq.s32.totalorder %s13, 1
    %p30 = por %p28, %p29
    %p31 = scmp.ne.s32.totalorder %s23, %s26
    %p32 = scmp.eq.s32.totalorder %s13, 0
    %p33 = por %p31, %p32
    %p34 = scmp.ne.s32.totalorder %s23, %s26
    %p35 = scmp.eq.s32.totalorder %s18, 1
    %p36 = por %p34, %p35
    %p37 = scmp.ne.s32.totalorder %s26, %s27
    %p38 = scmp.eq.s32.totalorder %s18, 0
    %p39 = por %p37, %p38
    %p40 = scmp.ne.s32.totalorder %s26, %s27
    %p41 = scmp.eq.s32.totalorder %s19, 1
    %p42 = por %p40, %p41
    %p44 = scmp.ne.s32.totalorder %s27, %s43
    %p45 = scmp.eq.s32.totalorder %s19, 0
    %p46 = por %p44, %p45
    %s48 = sadd.s32 %s47, 1
    %p51 = scmp.eq.s32.totalorder %s13, 1
    %p52 = scmp.ne.s32.totalorder %s47, %s49
    %p53 = scmp.eq.s32.totalorder %s13, 0
    %p54 = por %p52, %p53
    %p55 = scmp.ne.s32.totalorder %s47, %s49
    %p56 = scmp.eq.s32.totalorder %s18, 1
    %p57 = por %p55, %p56
    %p58 = scmp.ne.s32.totalorder %s49, %s50
    %p59 = scmp.eq.s32.totalorder %s18, 0
    %p60 = por %p58, %p59
    %p61 = scmp.ne.s32.totalorder %s49, %s50
    %p62 = scmp.eq.s32.totalorder %s19, 1
    %p63 = por %p61, %p62
    %p65 = scmp.ne.s32.totalorder %s50, %s64
    %p66 = scmp.eq.s32.totalorder %s19, 0
    %p67 = por %p65, %p66
    %s69 = sadd.s32 %s68, 1
    %p72 = scmp.eq.s32.totalorder %s13, 1
    %p73 = scmp.ne.s32.totalorder %s68, %s70
    %p74 = scmp.eq.s32.totalorder %s13, 0
    %p75 = por %p73, %p74
    %p76 = scmp.ne.s32.totalorder %s68, %s70
    %p77 = scmp.eq.s32.totalorder %s18, 1
    %p78 = por %p76, %p77
    %p79 = scmp.ne.s32.totalorder %s70, %s71
    %p80 = scmp.eq.s32.totalorder %s18, 0
    %p81 = por %p79, %p80
    %p82 = scmp.ne.s32.totalorder %s70, %s71
    %p83 = scmp.eq.s32.totalorder %s19, 1
    %p84 = por %p82, %p83
    %p86 = scmp.ne.s32.totalorder %s71, %s85
    %p87 = scmp.eq.s32.totalorder %s19, 0
    %p88 = por %p86, %p87
    %s90 = sadd.s32 %s89, 1
    %p93 = scmp.eq.s32.totalorder %s13, 1
    %p94 = scmp.ne.s32.totalorder %s89, %s91
    %p95 = scmp.eq.s32.totalorder %s13, 0
    %p96 = por %p94, %p95
    %p97 = scmp.ne.s32.totalorder %s89, %s91
    %p98 = scmp.eq.s32.totalorder %s18, 1
    %p99 = por %p97, %p98
    %p100 = scmp.ne.s32.totalorder %s91, %s92
    %p101 = scmp.eq.s32.totalorder %s18, 0
    %p102 = por %p100, %p101
    %p103 = scmp.ne.s32.totalorder %s91, %s92
    %p104 = scmp.eq.s32.totalorder %s19, 1
    %p105 = por %p103, %p104
    %p107 = scmp.ne.s32.totalorder %s92, %s106
    %p108 = scmp.eq.s32.totalorder %s19, 0
    %p109 = por %p107, %p108
    %s111 = sadd.s32 %s110, 1
    %p114 = scmp.eq.s32.totalorder %s13, 1
    %p115 = scmp.ne.s32.totalorder %s110, %s112
    %p116 = scmp.eq.s32.totalorder %s13, 0
    %p117 = por %p115, %p116
    %p118 = scmp.ne.s32.totalorder %s110, %s112
    %p119 = scmp.eq.s32.totalorder %s18, 1
    %p120 = por %p118, %p119
    %p121 = scmp.ne.s32.totalorder %s112, %s113
    %p122 = scmp.eq.s32.totalorder %s18, 0
    %p123 = por %p121, %p122
    %p124 = scmp.ne.s32.totalorder %s112, %s113
    %p125 = scmp.eq.s32.totalorder %s19, 1
    %p126 = por %p124, %p125
    %p128 = scmp.ne.s32.totalorder %s113, %s127
    %p129 = scmp.eq.s32.totalorder %s19, 0
    %p130 = por %p128, %p129
    %s132 = sadd.s32 %s131, 1
    %p135 = scmp.eq.s32.totalorder %s13, 1
    %p136 = scmp.ne.s32.totalorder %s131, %s133
    %p137 = scmp.eq.s32.totalorder %s13, 0
    %p138 = por %p136, %p137
    %p139 = scmp.ne.s32.totalorder %s131, %s133
    %p140 = scmp.eq.s32.totalorder %s18, 1
    %p141 = por %p139, %p140
    %p142 = scmp.ne.s32.totalorder %s133, %s134
    %p143 = scmp.eq.s32.totalorder %s18, 0
    %p144 = por %p142, %p143
    %p145 = scmp.ne.s32.totalorder %s133, %s134
    %p146 = scmp.eq.s32.totalorder %s19, 1
    %p147 = por %p145, %p146
    %p149 = scmp.ne.s32.totalorder %s134, %s148
    %p150 = scmp.eq.s32.totalorder %s19, 0
    %p151 = por %p149, %p150
    %s153 = sadd.s32 %s152, 1
    %p156 = scmp.eq.s32.totalorder %s13, 1
    %p157 = scmp.ne.s32.totalorder %s152, %s154
    %p158 = scmp.eq.s32.totalorder %s13, 0
    %p159 = por %p157, %p158
    %p160 = scmp.ne.s32.totalorder %s152, %s154
    %p161 = scmp.eq.s32.totalorder %s18, 1
    %p162 = por %p160, %p161
    %p163 = scmp.ne.s32.totalorder %s154, %s155
    %p164 = scmp.eq.s32.totalorder %s18, 0
    %p165 = por %p163, %p164
    %p166 = scmp.ne.s32.totalorder %s154, %s155
    %p167 = scmp.eq.s32.totalorder %s19, 1
    %p168 = por %p166, %p167
    %p170 = scmp.ne.s32.totalorder %s155, %s169
    %p171 = scmp.eq.s32.totalorder %s19, 0
    %p172 = por %p170, %p171
    %s173 = ssub.s32 %s13, %s20
    %p174 = scmp.eq.s32.totalorder %s173, 0
    %s176 = sadd.s32 %s175, 1
    %s177 = scalar_select %p174, %s175, %s176
    %p180 = pneg %p174
    %p181 = scmp.eq.s32.totalorder %s13, 1
    %p182 = por %p180, %p181
    %p183 = scmp.ne.s32.totalorder %s175, %s178
    %p184 = scmp.eq.s32.totalorder %s13, 0
    %p185 = por %p183, %p184
    %p186 = scmp.ne.s32.totalorder %s175, %s178
    %p187 = scmp.eq.s32.totalorder %s18, 1
    %p188 = por %p186, %p187
    %p189 = scmp.ne.s32.totalorder %s178, %s179
    %p190 = scmp.eq.s32.totalorder %s18, 0
    %p191 = por %p189, %p190
    %p192 = scmp.ne.s32.totalorder %s178, %s179
    %p193 = scmp.eq.s32.totalorder %s19, 1
    %p194 = por %p192, %p193
    %p196 = scmp.ne.s32.totalorder %s179, %s195
    %p197 = scmp.eq.s32.totalorder %s19, 0
    %p198 = por %p196, %p197
    %p199 = scmp.le.s32.totalorder 1, %s13
    %p200 = scmp.lt.s32.totalorder %s13, 3
    %p201 = pnand %p199, %p200
    %p202 = pneg %p201
    // Predicated region
    $region9: #{critic_forward.3} parent=5 // pred_check
      _
    $region10: #{critic_forward.3} parent=5 // pred_check_branch
      %204 = sbr.rel (%p201) target = $region12
    $region11: #{critic_forward.3} parent=5 // pred_region
      %s205 = ssub.s32 %s13, 1
      // Predicated region
      $region13: #{critic_forward.3} parent=11 // pred_check
        %p206 = pneg %p60
      $region14: #{critic_forward.3} parent=11 // pred_check_branch
        %208 = sbr.rel (%p206) target = $region16
      $region15: #{critic_forward.3} parent=11 // pred_region
        _
      $region16: #{critic_forward.3} parent=11 // pred_fallthru
        _
      // Predicated region
      $region17: #{critic_forward.3} parent=11 // pred_check
        %p209 = pneg %p81
      $region18: #{critic_forward.3} parent=11 // pred_check_branch
        %211 = sbr.rel (%p209) target = $region20
      $region19: #{critic_forward.3} parent=11 // pred_region
        _
      $region20: #{critic_forward.3} parent=11 // pred_fallthru
        _
      // Predicated region
      $region21: #{critic_forward.3} parent=11 // pred_check
        %p212 = pneg %p102
      $region22: #{critic_forward.3} parent=11 // pred_check_branch
        %214 = sbr.rel (%p212) target = $region24
      $region23: #{critic_forward.3} parent=11 // pred_region
        _
      $region24: #{critic_forward.3} parent=11 // pred_fallthru
        _
      // Predicated region
      $region25: #{critic_forward.3} parent=11 // pred_check
        %p215 = pneg %p123
      $region26: #{critic_forward.3} parent=11 // pred_check_branch
        %217 = sbr.rel (%p215) target = $region28
      $region27: #{critic_forward.3} parent=11 // pred_region
        _
      $region28: #{critic_forward.3} parent=11 // pred_fallthru
        _
      // Predicated region
      $region29: #{critic_forward.3} parent=11 // pred_check
        %p218 = pneg %p144
      $region30: #{critic_forward.3} parent=11 // pred_check_branch
        %220 = sbr.rel (%p218) target = $region32
      $region31: #{critic_forward.3} parent=11 // pred_region
        _
      $region32: #{critic_forward.3} parent=11 // pred_fallthru
        _
      // Predicated region
      $region33: #{critic_forward.3} parent=11 // pred_check
        %p221 = pneg %p165
      $region34: #{critic_forward.3} parent=11 // pred_check_branch
        %223 = sbr.rel (%p221) target = $region36
      $region35: #{critic_forward.3} parent=11 // pred_region
        _
      $region36: #{critic_forward.3} parent=11 // pred_fallthru
        _
    $region12: #{critic_forward.3} parent=5 // pred_fallthru
      _
    %p224 = scmp.lt.s32.totalorder %s13, 2
    // Predicated region
    $region37: #{critic_forward.3} parent=5 // pred_check
      %p225 = pneg %p224
    $region38: #{critic_forward.3} parent=5 // pred_check_branch
      %227 = sbr.rel (%p225) target = $region40
    $region39: #{critic_forward.3} parent=5 // pred_region
      // Predicated region
      $region41: #{critic_forward.3} parent=39 // pred_check
        %p228 = pneg %p33
      $region42: #{critic_forward.3} parent=39 // pred_check_branch
        %230 = sbr.rel (%p228) target = $region44
      $region43: #{critic_forward.3} parent=39 // pred_region
        %s231 = smul.u32 18, %s13
        %p232 = scmp.lt.s32.totalorder %s231, 35
        %s233 = scalar_select %p232, %s231, 35
        %s234 = smul.addr %s233, 2
        %s235 = smul.addr %s234, 8
        %s236 = scalar_lea.vmem %s0, %s235
        %s237 = smul.u32 18, %s13
      $region44: #{critic_forward.3} parent=39 // pred_fallthru
        _
    $region40: #{critic_forward.3} parent=5 // pred_fallthru
      _
    %p238 = scmp.le.s32.totalorder 1, %s13
    %p239 = scmp.lt.s32.totalorder %s13, 3
    %p240 = pnand %p238, %p239
    %p241 = pneg %p240
    // Predicated region
    $region45: #{critic_forward.3} parent=5 // pred_check
      _
    $region46: #{critic_forward.3} parent=5 // pred_check_branch
      %243 = sbr.rel (%p240) target = $region48
    $region47: #{critic_forward.3} parent=5 // pred_region
      %s244 = ssub.s32 %s13, 1
      %s245 = smul.u32 18, %s18
      %p246 = scmp.lt.s32.totalorder %s245, 35
      %s247 = scalar_select %p246, %s245, 35
      %s248 = smul.addr %s247, 2
      %s249 = smul.addr %s248, 8
      %s250 = scalar_lea.vmem %s0, %s249
      %p251 = pneg %p39
      %p252 = pneg %p36
      %p253 = pneg %p60
      %p254 = pneg %p57
      %p255 = pneg %p81
      %p256 = pneg %p78
      %p257 = pneg %p102
      %p258 = pneg %p99
      %p259 = pneg %p123
      %p260 = pneg %p120
      %p261 = pneg %p144
      %p262 = pneg %p141
      %p263 = pneg %p165
      %p264 = pneg %p162
      %p265 = pneg %p191
      %p266 = pneg %p188
      %s267 = smul.u32 18, %s18
      %p268 = scmp.lt.s32.totalorder %s267, 35
      %s269 = scalar_select %p268, %s267, 35
      %s270 = smul.addr %s269, 8
      %s271 = scalar_lea.vmem %s7, %s270
      %s272 = smul.u32 18, %s18
      %p273 = scmp.lt.s32.totalorder %s272, 35
      %s274 = scalar_select %p273, %s272, 35
      %s275 = smul.addr %s274, 2
      %s276 = smul.addr %s275, 8
      %s277 = scalar_lea.vmem %s0, %s276
      %s278 = smul.u32 18, %s18
      %s279 = smul.u32 18, %s18
      %p280 = scmp.lt.s32.totalorder %s279, 35
      %s281 = scalar_select %p280, %s279, 35
      %s282 = smul.addr %s281, 8
      %s283 = scalar_lea.vmem %s7, %s282
      %s284 = smul.u32 18, %s18
      %v285 = vld [vmem:[%s277] sm:$0xff]
      %v286 = vld [vmem:[%s277 + $0x8] sm:$0xff]
      %v287 = vld [vmem:[%s277 + $0x10] sm:$0xff]
      %v288 = vld [vmem:[%s277 + $0x18] sm:$0xff]
      %v289 = vld [vmem:[%s277 + $0x20] sm:$0xff]
      %v290 = vld [vmem:[%s277 + $0x28] sm:$0xff]
      %v291 = vld [vmem:[%s277 + $0x30] sm:$0xff]
      %v292 = vld [vmem:[%s277 + $0x38] sm:$0xff]
      %v293 = vld [vmem:[%s277 + $0x40] sm:$0xff]
      %v294 = vld [vmem:[%s277 + $0x48] sm:$0xff]
      %v295 = vld [vmem:[%s277 + $0x50] sm:$0xff]
      %v296 = vld [vmem:[%s277 + $0x58] sm:$0xff]
      %v297 = vld [vmem:[%s277 + $0x60] sm:$0xff]
      %v298 = vld [vmem:[%s277 + $0x68] sm:$0xff]
      %v299 = vld [vmem:[%s277 + $0x70] sm:$0xff]
      %v300 = vld [vmem:[%s277 + $0x78] sm:$0xff]
      %v301 = vld [vmem:[%s277 + $0x80] sm:$0xff]
      %v302 = vld [vmem:[%s277 + $0x88] sm:$0xff]
      %v303 = vld [vmem:[%s277 + $0x90] sm:$0xff]
      %v304 = vld [vmem:[%s277 + $0x98] sm:$0xff]
      %v305 = vld [vmem:[%s277 + $0xa0] sm:$0xff]
      %v306 = vld [vmem:[%s277 + $0xa8] sm:$0xff]
      %v307 = vld [vmem:[%s277 + $0xb0] sm:$0xff]
      %v308 = vld [vmem:[%s277 + $0xb8] sm:$0xff]
      %v309 = vld [vmem:[%s277 + $0xc0] sm:$0xff]
      %v310 = vld [vmem:[%s277 + $0xc8] sm:$0xff]
      %v311 = vld [vmem:[%s277 + $0xd0] sm:$0xff]
      %v312 = vld [vmem:[%s277 + $0xd8] sm:$0xff]
      %v313 = vld [vmem:[%s277 + $0xe0] sm:$0xff]
      %v314 = vld [vmem:[%s277 + $0xe8] sm:$0xff]
      %v315 = vld [vmem:[%s277 + $0xf0] sm:$0xff]
      %v316 = vld [vmem:[%s277 + $0xf8] sm:$0xff]
      %v317 = vld [vmem:[%s277 + $0x100] sm:$0xff]
      %v318 = vld [vmem:[%s277 + $0x108] sm:$0xff]
      %v319 = vld [vmem:[%s277 + $0x110] sm:$0xff]
      %v320 = vld [vmem:[%s277 + $0x118] sm:$0xff]
      %v321 = vld [vmem:[%s1] sm:$0xff]
      %v322 = vld [vmem:[%s1 + $0x8] sm:$0xff]
      %v323 = vld [vmem:[%s1 + $0x10] sm:$0xff]
      %v324 = vld [vmem:[%s1 + $0x18] sm:$0xff]
      %v325 = vld [vmem:[%s1 + $0x20] sm:$0xff]
      %v326 = vld [vmem:[%s1 + $0x28] sm:$0xff]
      %v327 = vld [vmem:[%s1 + $0x30] sm:$0xff]
      %v328 = vld [vmem:[%s1 + $0x38] sm:$0xff]
      %v329 = vld [vmem:[%s1 + $0x40] sm:$0xff]
      %v330 = vld [vmem:[%s1 + $0x48] sm:$0xff]
      %v331 = vld [vmem:[%s1 + $0x50] sm:$0xff]
      %v332 = vld [vmem:[%s1 + $0x58] sm:$0xff]
      %v333 = vld [vmem:[%s1 + $0x60] sm:$0xff]
      %v334 = vld [vmem:[%s1 + $0x68] sm:$0xff]
      %v335 = vld [vmem:[%s1 + $0x70] sm:$0xff]
      %v336 = vld [vmem:[%s1 + $0x78] sm:$0xff]
      %v337 = vld [vmem:[%s1 + $0x80] sm:$0xff]
      %v338 = vld [vmem:[%s1 + $0x88] sm:$0xff]
      %v339 = vld [vmem:[%s1 + $0x90] sm:$0xff]
      %v340 = vld [vmem:[%s1 + $0x98] sm:$0xff]
      %v341 = vld [vmem:[%s1 + $0xa0] sm:$0xff]
      %v342 = vld [vmem:[%s1 + $0xa8] sm:$0xff]
      %v343 = vld [vmem:[%s1 + $0xb0] sm:$0xff]
      %v344 = vld [vmem:[%s1 + $0xb8] sm:$0xff]
      %v345 = vld [vmem:[%s1 + $0xc0] sm:$0xff]
      %v346 = vld [vmem:[%s1 + $0xc8] sm:$0xff]
      %v347 = vld [vmem:[%s1 + $0xd0] sm:$0xff]
      %v348 = vld [vmem:[%s1 + $0xd8] sm:$0xff]
      %v349 = vld [vmem:[%s1 + $0xe0] sm:$0xff]
      %v350 = vld [vmem:[%s1 + $0xe8] sm:$0xff]
      %v351 = vld [vmem:[%s1 + $0xf0] sm:$0xff]
      %v352 = vld [vmem:[%s1 + $0xf8] sm:$0xff]
      %v353 = vld [vmem:[%s1 + $0x100] sm:$0xff]
      %v354 = vld [vmem:[%s1 + $0x108] sm:$0xff]
      %v355 = vld [vmem:[%s1 + $0x110] sm:$0xff]
      %v356 = vld [vmem:[%s1 + $0x118] sm:$0xff]
      %v357 = vld [vmem:[%s1 + $0x120] sm:$0xff]
      %v358 = vld [vmem:[%s1 + $0x128] sm:$0xff]
      %v359 = vld [vmem:[%s1 + $0x130] sm:$0xff]
      %v360 = vld [vmem:[%s1 + $0x138] sm:$0xff]
      %v361 = vld [vmem:[%s1 + $0x140] sm:$0xff]
      %v362 = vld [vmem:[%s1 + $0x148] sm:$0xff]
      %v363 = vld [vmem:[%s1 + $0x150] sm:$0xff]
      %v364 = vld [vmem:[%s1 + $0x158] sm:$0xff]
      %v365 = vld [vmem:[%s1 + $0x160] sm:$0xff]
      %v366 = vld [vmem:[%s1 + $0x168] sm:$0xff]
      %v367 = vld [vmem:[%s1 + $0x170] sm:$0xff]
      %v368 = vld [vmem:[%s1 + $0x178] sm:$0xff]
      %v369 = vld [vmem:[%s2] sm:$0x3]
      %v371 = vlaneseq
      %v372 = vshrl.u32 %v371, 7
      %v373 = vsub.s32 0, %v372
      %v374 = vrot.slane %v369, %v373
      %v375 = vlaneseq
      %v376 = vshrl.u32 %v375, 7
      %v377 = vsub.s32 1, %v376
      %v378 = vrot.slane %v369, %v377
      %vm381 = vcmask 523264
      %v383 = vsel %vm381, %v286, 0
      %v386 = vsel %vm381, %v288, 0
      %v389 = vsel %vm381, %v290, 0
      %v392 = vsel %vm381, %v292, 0
      %v395 = vsel %vm381, %v294, 0
      %v398 = vsel %vm381, %v296, 0
      %v401 = vsel %vm381, %v298, 0
      %v404 = vsel %vm381, %v300, 0
      %v407 = vsel %vm381, %v302, 0
      %v410 = vsel %vm381, %v304, 0
      %v413 = vsel %vm381, %v306, 0
      %v416 = vsel %vm381, %v308, 0
      %v419 = vsel %vm381, %v310, 0
      %v422 = vsel %vm381, %v312, 0
      %v425 = vsel %vm381, %v314, 0
      %v428 = vsel %vm381, %v316, 0
      %v431 = vsel %vm381, %v318, 0
      %v434 = vsel %vm381, %v320, 0
      %436 = vmatprep.subr.mxu0 %v322
      %437 = vmatpush1.msra.mxu0 %v321
      %438 = vmatprep.subr.mxu0 %v324
      %439 = vmatpush1.msra.mxu0 %v323
      %440 = vmatprep.subr.mxu0 %v326
      %441 = vmatpush1.msra.mxu0 %v325
      %442 = vmatprep.subr.mxu0 %v328
      %443 = vmatpush1.msra.mxu0 %v327
      %444 = vmatprep.subr.mxu0 %v330
      %445 = vmatpush1.msra.mxu0 %v329
      %446 = vmatprep.subr.mxu0 %v332
      %447 = vmatpush1.msra.mxu0 %v331
      %448 = vmatprep.subr.mxu0 %v334
      %449 = vmatpush1.msra.mxu0 %v333
      %450 = vmatprep.subr.mxu0 %v336
      %451 = vmatpush1.msra.mxu0 %v335
      %452 = vmatprep.subr.mxu0 %v338
      %453 = vmatpush1.msra.mxu0 %v337
      %454 = vmatprep.subr.mxu0 %v340
      %455 = vmatpush1.msra.mxu0 %v339
      %456 = vmatprep.subr.mxu0 %v342
      %457 = vmatpush1.msra.mxu0 %v341
      %458 = vmatprep.subr.mxu0 %v344
      %459 = vmatpush1.msra.mxu0 %v343
      %460 = vmatprep.subr.mxu0 %v346
      %461 = vmatpush1.msra.mxu0 %v345
      %462 = vmatprep.subr.mxu0 %v348
      %463 = vmatpush1.msra.mxu0 %v347
      %464 = vmatprep.subr.mxu0 %v350
      %465 = vmatpush1.msra.mxu0 %v349
      %466 = vmatprep.subr.mxu0 %v352
      %467 = vmatpush1.msra.mxu0 %v351
      %468 = vmatprep.subr.mxu0 %v354
      %469 = vmatpush1.msra.mxu0 %v353
      %470 = vmatprep.subr.mxu0 %v356
      %471 = vmatpush1.msra.mxu0 %v355
      %472 = vmatprep.subr.mxu0 %v358
      %473 = vmatpush1.msra.mxu0 %v357
      %474 = vmatprep.subr.mxu0 %v360
      %475 = vmatpush1.msra.mxu0 %v359
      %476 = vmatprep.subr.mxu0 %v362
      %477 = vmatpush1.msra.mxu0 %v361
      %478 = vmatprep.subr.mxu0 %v364
      %479 = vmatpush1.msra.mxu0 %v363
      %480 = vmatprep.subr.mxu0 %v366
      %481 = vmatpush1.msra.mxu0 %v365
      %482 = vmatprep.subr.mxu0 %v368
      %483 = vmatpush1.msra.mxu0 %v367
      %484 = vmatprep.subr.mxu0 0.0
      %485 = vmatpush1.msra.mxu0 0.0
      %486 = vmatprep.subr.mxu0 0.0
      %487 = vmatpush1.msra.mxu0 0.0
      %488 = vmatprep.subr.mxu0 0.0
      %489 = vmatpush1.msra.mxu0 0.0
      %490 = vmatprep.subr.mxu0 0.0
      %491 = vmatpush1.msra.mxu0 0.0
      %492 = vmatprep.subr.mxu0 0.0
      %493 = vmatpush1.msra.mxu0 0.0
      %494 = vmatprep.subr.mxu0 0.0
      %495 = vmatpush1.msra.mxu0 0.0
      %496 = vmatprep.subr.mxu0 0.0
      %497 = vmatpush1.msra.mxu0 0.0
      %498 = vmatprep.subr.mxu0 0.0
      %499 = vmatpush1.msra.mxu0 0.0
      %500 = vmatprep.mubr.f32.mxu0 %v383
      %501 = vmatmul.mubr.f32.gmra.mrb[0].mxu0 %v285
      %v502 = vpop.f32.mrb[0].mxu0
      %v503 = vadd.f32 %v374, %v502
      %v504 = vpop.f32.mrb[0].mxu0
      %v505 = vadd.f32 %v378, %v504
      %506 = vmatprep.mubr.f32.mxu0 %v386
      %507 = vmatmul.mubr.f32.gmra.mrb[0].mxu0 %v287
      %v508 = vpop.f32.mrb[0].mxu0
      %v509 = vadd.f32 %v374, %v508
      %v510 = vpop.f32.mrb[0].mxu0
      %v511 = vadd.f32 %v378, %v510
      %512 = vmatprep.mubr.f32.mxu0 %v389
      %513 = vmatmul.mubr.f32.gmra.mrb[0].mxu0 %v289
      %v514 = vpop.f32.mrb[0].mxu0
      %v515 = vadd.f32 %v374, %v514
      %v516 = vpop.f32.mrb[0].mxu0
      %v517 = vadd.f32 %v378, %v516
      %518 = vmatprep.mubr.f32.mxu0 %v392
      %519 = vmatmul.mubr.f32.gmra.mrb[0].mxu0 %v291
      %v520 = vpop.f32.mrb[0].mxu0
      %v521 = vadd.f32 %v374, %v520
      %v522 = vpop.f32.mrb[0].mxu0
      %v523 = vadd.f32 %v378, %v522
      %524 = vmatprep.mubr.f32.mxu0 %v395
      %525 = vmatmul.mubr.f32.gmra.mrb[0].mxu0 %v293
      %v526 = vpop.f32.mrb[0].mxu0
      %v527 = vadd.f32 %v374, %v526
      %v528 = vpop.f32.mrb[0].mxu0
      %v529 = vadd.f32 %v378, %v528
      %530 = vmatprep.mubr.f32.mxu0 %v398
      %531 = vmatmul.mubr.f32.gmra.mrb[0].mxu0 %v295
      %v532 = vpop.f32.mrb[0].mxu0
      %v533 = vadd.f32 %v374, %v532
      %v534 = vpop.f32.mrb[0].mxu0
      %v535 = vadd.f32 %v378, %v534
      %536 = vmatprep.mubr.f32.mxu0 %v401
      %537 = vmatmul.mubr.f32.gmra.mrb[0].mxu0 %v297
      %v538 = vpop.f32.mrb[0].mxu0
      %v539 = vadd.f32 %v374, %v538
      %v540 = vpop.f32.mrb[0].mxu0
      %v541 = vadd.f32 %v378, %v540
      %542 = vmatprep.mubr.f32.mxu0 %v404
      %543 = vmatmul.mubr.f32.gmra.mrb[0].mxu0 %v299
      %v544 = vpop.f32.mrb[0].mxu0
      %v545 = vadd.f32 %v374, %v544
      %v546 = vpop.f32.mrb[0].mxu0
      %v547 = vadd.f32 %v378, %v546
      %548 = vmatprep.mubr.f32.mxu0 %v407
      %549 = vmatmul.mubr.f32.gmra.mrb[0].mxu0 %v301
      %v550 = vpop.f32.mrb[0].mxu0
      %v551 = vadd.f32 %v374, %v550
      %v552 = vpop.f32.mrb[0].mxu0
      %v553 = vadd.f32 %v378, %v552
      %554 = vmatprep.mubr.f32.mxu0 %v410
      %555 = vmatmul.mubr.f32.gmra.mrb[0].mxu0 %v303
      %v556 = vpop.f32.mrb[0].mxu0
      %v557 = vadd.f32 %v374, %v556
      %v558 = vpop.f32.mrb[0].mxu0
      %v559 = vadd.f32 %v378, %v558
      %560 = vmatprep.mubr.f32.mxu0 %v413
      %561 = vmatmul.mubr.f32.gmra.mrb[0].mxu0 %v305
      %v562 = vpop.f32.mrb[0].mxu0
      %v563 = vadd.f32 %v374, %v562
      %v564 = vpop.f32.mrb[0].mxu0
      %v565 = vadd.f32 %v378, %v564
      %566 = vmatprep.mubr.f32.mxu0 %v416
      %567 = vmatmul.mubr.f32.gmra.mrb[0].mxu0 %v307
      %v568 = vpop.f32.mrb[0].mxu0
      %v569 = vadd.f32 %v374, %v568
      %v570 = vpop.f32.mrb[0].mxu0
      %v571 = vadd.f32 %v378, %v570
      %572 = vmatprep.mubr.f32.mxu0 %v419
      %573 = vmatmul.mubr.f32.gmra.mrb[0].mxu0 %v309
      %v574 = vpop.f32.mrb[0].mxu0
      %v575 = vadd.f32 %v374, %v574
      %v576 = vpop.f32.mrb[0].mxu0
      %v577 = vadd.f32 %v378, %v576
      %578 = vmatprep.mubr.f32.mxu0 %v422
      %579 = vmatmul.mubr.f32.gmra.mrb[0].mxu0 %v311
      %v580 = vpop.f32.mrb[0].mxu0
      %v581 = vadd.f32 %v374, %v580
      %v582 = vpop.f32.mrb[0].mxu0
      %v583 = vadd.f32 %v378, %v582
      %584 = vmatprep.mubr.f32.mxu0 %v425
      %585 = vmatmul.mubr.f32.gmra.mrb[0].mxu0 %v313
      %v586 = vpop.f32.mrb[0].mxu0
      %v587 = vadd.f32 %v374, %v586
      %v588 = vpop.f32.mrb[0].mxu0
      %v589 = vadd.f32 %v378, %v588
      %590 = vmatprep.mubr.f32.mxu0 %v428
      %591 = vmatmul.mubr.f32.gmra.mrb[0].mxu0 %v315
      %v592 = vpop.f32.mrb[0].mxu0
      %v593 = vadd.f32 %v374, %v592
      %v594 = vpop.f32.mrb[0].mxu0
      %v595 = vadd.f32 %v378, %v594
      %596 = vmatprep.mubr.f32.mxu0 %v431
      %597 = vmatmul.mubr.f32.gmra.mrb[0].mxu0 %v317
      %v598 = vpop.f32.mrb[0].mxu0
      %v599 = vadd.f32 %v374, %v598
      %v600 = vpop.f32.mrb[0].mxu0
      %v601 = vadd.f32 %v378, %v600
      %602 = vmatprep.mubr.f32.mxu0 %v434
      %603 = vmatmul.mubr.f32.gmra.mrb[0].mxu0 %v319
      %v604 = vpop.f32.mrb[0].mxu0
      %v605 = vadd.f32 %v374, %v604
      %v606 = vpop.f32.mrb[0].mxu0
      %v607 = vadd.f32 %v378, %v606
      %608 = vdwg.mxu0
      %v609 = vmax.f32 %v503, 0.0
      %v610 = vmax.f32 %v505, 0.0
      %v611 = vmax.f32 %v509, 0.0
      %v612 = vmax.f32 %v511, 0.0
      %v613 = vmax.f32 %v515, 0.0
      %v614 = vmax.f32 %v517, 0.0
      %v615 = vmax.f32 %v521, 0.0
      %v616 = vmax.f32 %v523, 0.0
      %v617 = vmax.f32 %v527, 0.0
      %v618 = vmax.f32 %v529, 0.0
      %v619 = vmax.f32 %v533, 0.0
      %v620 = vmax.f32 %v535, 0.0
      %v621 = vmax.f32 %v539, 0.0
      %v622 = vmax.f32 %v541, 0.0
      %v623 = vmax.f32 %v545, 0.0
      %v624 = vmax.f32 %v547, 0.0
      %v625 = vmax.f32 %v551, 0.0
      %v626 = vmax.f32 %v553, 0.0
      %v627 = vmax.f32 %v557, 0.0
      %v628 = vmax.f32 %v559, 0.0
      %v629 = vmax.f32 %v563, 0.0
      %v630 = vmax.f32 %v565, 0.0
      %v631 = vmax.f32 %v569, 0.0
      %v632 = vmax.f32 %v571, 0.0
      %v633 = vmax.f32 %v575, 0.0
      %v634 = vmax.f32 %v577, 0.0
      %v635 = vmax.f32 %v581, 0.0
      %v636 = vmax.f32 %v583, 0.0
      %v637 = vmax.f32 %v587, 0.0
      %v638 = vmax.f32 %v589, 0.0
      %v639 = vmax.f32 %v593, 0.0
      %v640 = vmax.f32 %v595, 0.0
      %v641 = vmax.f32 %v599, 0.0
      %v642 = vmax.f32 %v601, 0.0
      %v643 = vmax.f32 %v605, 0.0
      %v644 = vmax.f32 %v607, 0.0
      %v645 = vld [vmem:[%s3] sm:$0xff]
      %v646 = vld [vmem:[%s3 + $0x8] sm:$0xff]
      %v647 = vld [vmem:[%s3 + $0x10] sm:$0xff]
      %v648 = vld [vmem:[%s3 + $0x18] sm:$0xff]
      %v649 = vld [vmem:[%s3 + $0x20] sm:$0xff]
      %v650 = vld [vmem:[%s3 + $0x28] sm:$0xff]
      %v651 = vld [vmem:[%s3 + $0x30] sm:$0xff]
      %v652 = vld [vmem:[%s3 + $0x38] sm:$0xff]
      %v653 = vld [vmem:[%s3 + $0x40] sm:$0xff]
      %v654 = vld [vmem:[%s3 + $0x48] sm:$0xff]
      %v655 = vld [vmem:[%s3 + $0x50] sm:$0xff]
      %v656 = vld [vmem:[%s3 + $0x58] sm:$0xff]
      %v657 = vld [vmem:[%s3 + $0x60] sm:$0xff]
      %v658 = vld [vmem:[%s3 + $0x68] sm:$0xff]
      %v659 = vld [vmem:[%s3 + $0x70] sm:$0xff]
      %v660 = vld [vmem:[%s3 + $0x78] sm:$0xff]
      %v661 = vld [vmem:[%s3 + $0x80] sm:$0xff]
      %v662 = vld [vmem:[%s3 + $0x88] sm:$0xff]
      %v663 = vld [vmem:[%s3 + $0x90] sm:$0xff]
      %v664 = vld [vmem:[%s3 + $0x98] sm:$0xff]
      %v665 = vld [vmem:[%s3 + $0xa0] sm:$0xff]
      %v666 = vld [vmem:[%s3 + $0xa8] sm:$0xff]
      %v667 = vld [vmem:[%s3 + $0xb0] sm:$0xff]
      %v668 = vld [vmem:[%s3 + $0xb8] sm:$0xff]
      %v669 = vld [vmem:[%s3 + $0xc0] sm:$0xff]
      %v670 = vld [vmem:[%s3 + $0xc8] sm:$0xff]
      %v671 = vld [vmem:[%s3 + $0xd0] sm:$0xff]
      %v672 = vld [vmem:[%s3 + $0xd8] sm:$0xff]
      %v673 = vld [vmem:[%s3 + $0xe0] sm:$0xff]
      %v674 = vld [vmem:[%s3 + $0xe8] sm:$0xff]
      %v675 = vld [vmem:[%s3 + $0xf0] sm:$0xff]
      %v676 = vld [vmem:[%s3 + $0xf8] sm:$0xff]
      %v677 = vld [vmem:[%s4] sm:$0x1]
      %v679 = vlaneseq
      %v680 = vshrl.u32 %v679, 7
      %v681 = vsub.s32 0, %v680
      %v682 = vrot.slane %v677, %v681
      %684 = vmatprep.subr.mxu0 0.0
      %685 = vmatpush1.msra.mxu0 %v645
      %686 = vmatprep.subr.mxu0 0.0
      %687 = vmatpush1.msra.mxu0 %v646
      %688 = vmatprep.subr.mxu0 0.0
      %689 = vmatpush1.msra.mxu0 %v647
      %690 = vmatprep.subr.mxu0 0.0
      %691 = vmatpush1.msra.mxu0 %v648
      %692 = vmatprep.subr.mxu0 0.0
      %693 = vmatpush1.msra.mxu0 %v649
      %694 = vmatprep.subr.mxu0 0.0
      %695 = vmatpush1.msra.mxu0 %v650
      %696 = vmatprep.subr.mxu0 0.0
      %697 = vmatpush1.msra.mxu0 %v651
      %698 = vmatprep.subr.mxu0 0.0
      %699 = vmatpush1.msra.mxu0 %v652
      %700 = vmatprep.subr.mxu0 0.0
      %701 = vmatpush1.msra.mxu0 %v653
      %702 = vmatprep.subr.mxu0 0.0
      %703 = vmatpush1.msra.mxu0 %v654
      %704 = vmatprep.subr.mxu0 0.0
      %705 = vmatpush1.msra.mxu0 %v655
      %706 = vmatprep.subr.mxu0 0.0
      %707 = vmatpush1.msra.mxu0 %v656
      %708 = vmatprep.subr.mxu0 0.0
      %709 = vmatpush1.msra.mxu0 %v657
      %710 = vmatprep.subr.mxu0 0.0
      %711 = vmatpush1.msra.mxu0 %v658
      %712 = vmatprep.subr.mxu0 0.0
      %713 = vmatpush1.msra.mxu0 %v659
      %714 = vmatprep.subr.mxu0 0.0
      %715 = vmatpush1.msra.mxu0 %v660
      %716 = vmatprep.subr.mxu0 0.0
      %717 = vmatpush1.msra.mxu0 %v661
      %718 = vmatprep.subr.mxu0 0.0
      %719 = vmatpush1.msra.mxu0 %v662
      %720 = vmatprep.subr.mxu0 0.0
      %721 = vmatpush1.msra.mxu0 %v663
      %722 = vmatprep.subr.mxu0 0.0
      %723 = vmatpush1.msra.mxu0 %v664
      %724 = vmatprep.subr.mxu0 0.0
      %725 = vmatpush1.msra.mxu0 %v665
      %726 = vmatprep.subr.mxu0 0.0
      %727 = vmatpush1.msra.mxu0 %v666
      %728 = vmatprep.subr.mxu0 0.0
      %729 = vmatpush1.msra.mxu0 %v667
      %730 = vmatprep.subr.mxu0 0.0
      %731 = vmatpush1.msra.mxu0 %v668
      %732 = vmatprep.subr.mxu0 0.0
      %733 = vmatpush1.msra.mxu0 %v669
      %734 = vmatprep.subr.mxu0 0.0
      %735 = vmatpush1.msra.mxu0 %v670
      %736 = vmatprep.subr.mxu0 0.0
      %737 = vmatpush1.msra.mxu0 %v671
      %738 = vmatprep.subr.mxu0 0.0
      %739 = vmatpush1.msra.mxu0 %v672
      %740 = vmatprep.subr.mxu0 0.0
      %741 = vmatpush1.msra.mxu0 %v673
      %742 = vmatprep.subr.mxu0 0.0
      %743 = vmatpush1.msra.mxu0 %v674
      %744 = vmatprep.subr.mxu0 0.0
      %745 = vmatpush1.msra.mxu0 %v675
      %746 = vmatprep.subr.mxu0 0.0
      %747 = vmatpush1.msra.mxu0 %v676
      %748 = vmatprep.mubr.f32.mxu0 %v610
      %749 = vmatmul.mubr.f32.gmra.mrb[0].mxu0 %v609
      %v750 = vpop.f32.mrb[0].mxu0
      %v751 = vadd.f32 %v682, %v750
      %v752 = vpop.f32.mrb[0].mxu0
      %753 = vmatprep.mubr.f32.mxu0 %v612
      %754 = vmatmul.mubr.f32.gmra.mrb[0].mxu0 %v611
      %v755 = vpop.f32.mrb[0].mxu0
      %v756 = vadd.f32 %v682, %v755
      %v757 = vpop.f32.mrb[0].mxu0
      %758 = vmatprep.mubr.f32.mxu0 %v614
      %759 = vmatmul.mubr.f32.gmra.mrb[0].mxu0 %v613
      %v760 = vpop.f32.mrb[0].mxu0
      %v761 = vadd.f32 %v682, %v760
      %v762 = vpop.f32.mrb[0].mxu0
      %763 = vmatprep.mubr.f32.mxu0 %v616
      %764 = vmatmul.mubr.f32.gmra.mrb[0].mxu0 %v615
      %v765 = vpop.f32.mrb[0].mxu0
      %v766 = vadd.f32 %v682, %v765
      %v767 = vpop.f32.mrb[0].mxu0
      %768 = vmatprep.mubr.f32.mxu0 %v618
      %769 = vmatmul.mubr.f32.gmra.mrb[0].mxu0 %v617
      %v770 = vpop.f32.mrb[0].mxu0
      %v771 = vadd.f32 %v682, %v770
      %v772 = vpop.f32.mrb[0].mxu0
      %773 = vmatprep.mubr.f32.mxu0 %v620
      %774 = vmatmul.mubr.f32.gmra.mrb[0].mxu0 %v619
      %v775 = vpop.f32.mrb[0].mxu0
      %v776 = vadd.f32 %v682, %v775
      %v777 = vpop.f32.mrb[0].mxu0
      %778 = vmatprep.mubr.f32.mxu0 %v622
      %779 = vmatmul.mubr.f32.gmra.mrb[0].mxu0 %v621
      %v780 = vpop.f32.mrb[0].mxu0
      %v781 = vadd.f32 %v682, %v780
      %v782 = vpop.f32.mrb[0].mxu0
      %783 = vmatprep.mubr.f32.mxu0 %v624
      %784 = vmatmul.mubr.f32.gmra.mrb[0].mxu0 %v623
      %v785 = vpop.f32.mrb[0].mxu0
      %v786 = vadd.f32 %v682, %v785
      %v787 = vpop.f32.mrb[0].mxu0
      %788 = vmatprep.mubr.f32.mxu0 %v626
      %789 = vmatmul.mubr.f32.gmra.mrb[0].mxu0 %v625
      %v790 = vpop.f32.mrb[0].mxu0
      %v791 = vadd.f32 %v682, %v790
      %v792 = vpop.f32.mrb[0].mxu0
      %793 = vmatprep.mubr.f32.mxu0 %v628
      %794 = vmatmul.mubr.f32.gmra.mrb[0].mxu0 %v627
      %v795 = vpop.f32.mrb[0].mxu0
      %v796 = vadd.f32 %v682, %v795
      %v797 = vpop.f32.mrb[0].mxu0
      %798 = vmatprep.mubr.f32.mxu0 %v630
      %799 = vmatmul.mubr.f32.gmra.mrb[0].mxu0 %v629
      %v800 = vpop.f32.mrb[0].mxu0
      %v801 = vadd.f32 %v682, %v800
      %v802 = vpop.f32.mrb[0].mxu0
      %803 = vmatprep.mubr.f32.mxu0 %v632
      %804 = vmatmul.mubr.f32.gmra.mrb[0].mxu0 %v631
      %v805 = vpop.f32.mrb[0].mxu0
      %v806 = vadd.f32 %v682, %v805
      %v807 = vpop.f32.mrb[0].mxu0
      %808 = vmatprep.mubr.f32.mxu0 %v634
      %809 = vmatmul.mubr.f32.gmra.mrb[0].mxu0 %v633
      %v810 = vpop.f32.mrb[0].mxu0
      %v811 = vadd.f32 %v682, %v810
      %v812 = vpop.f32.mrb[0].mxu0
      %813 = vmatprep.mubr.f32.mxu0 %v636
      %814 = vmatmul.mubr.f32.gmra.mrb[0].mxu0 %v635
      %v815 = vpop.f32.mrb[0].mxu0
      %v816 = vadd.f32 %v682, %v815
      %v817 = vpop.f32.mrb[0].mxu0
      %818 = vmatprep.mubr.f32.mxu0 %v638
      %819 = vmatmul.mubr.f32.gmra.mrb[0].mxu0 %v637
      %v820 = vpop.f32.mrb[0].mxu0
      %v821 = vadd.f32 %v682, %v820
      %v822 = vpop.f32.mrb[0].mxu0
      %823 = vmatprep.mubr.f32.mxu0 %v640
      %824 = vmatmul.mubr.f32.gmra.mrb[0].mxu0 %v639
      %v825 = vpop.f32.mrb[0].mxu0
      %v826 = vadd.f32 %v682, %v825
      %v827 = vpop.f32.mrb[0].mxu0
      %828 = vmatprep.mubr.f32.mxu0 %v642
      %829 = vmatmul.mubr.f32.gmra.mrb[0].mxu0 %v641
      %v830 = vpop.f32.mrb[0].mxu0
      %v831 = vadd.f32 %v682, %v830
      %v832 = vpop.f32.mrb[0].mxu0
      %833 = vmatprep.mubr.f32.mxu0 %v644
      %834 = vmatmul.mubr.f32.gmra.mrb[0].mxu0 %v643
      %v835 = vpop.f32.mrb[0].mxu0
      %v836 = vadd.f32 %v682, %v835
      %v837 = vpop.f32.mrb[0].mxu0
      %838 = vdwg.mxu0
      %v839 = vmax.f32 %v751, 0.0
      %v840 = vmax.f32 %v756, 0.0
      %v841 = vmax.f32 %v761, 0.0
      %v842 = vmax.f32 %v766, 0.0
      %v843 = vmax.f32 %v771, 0.0
      %v844 = vmax.f32 %v776, 0.0
      %v845 = vmax.f32 %v781, 0.0
      %v846 = vmax.f32 %v786, 0.0
      %v847 = vmax.f32 %v791, 0.0
      %v848 = vmax.f32 %v796, 0.0
      %v849 = vmax.f32 %v801, 0.0
      %v850 = vmax.f32 %v806, 0.0
      %v851 = vmax.f32 %v811, 0.0
      %v852 = vmax.f32 %v816, 0.0
      %v853 = vmax.f32 %v821, 0.0
      %v854 = vmax.f32 %v826, 0.0
      %v855 = vmax.f32 %v831, 0.0
      %v856 = vmax.f32 %v836, 0.0
      %v857 = vld [vmem:[%s5] sm:$0xff]
      %v858 = vld [vmem:[%s5 + $0x8] sm:$0xff]
      %v859 = vld [vmem:[%s5 + $0x10] sm:$0xff]
      %v860 = vld [vmem:[%s5 + $0x18] sm:$0xff]
      %v861 = vld [vmem:[%s5 + $0x20] sm:$0xff]
      %v862 = vld [vmem:[%s5 + $0x28] sm:$0xff]
      %v863 = vld [vmem:[%s5 + $0x30] sm:$0xff]
      %v864 = vld [vmem:[%s5 + $0x38] sm:$0xff]
      %v865 = vld [vmem:[%s5 + $0x40] sm:$0xff]
      %v866 = vld [vmem:[%s5 + $0x48] sm:$0xff]
      %v867 = vld [vmem:[%s5 + $0x50] sm:$0xff]
      %v868 = vld [vmem:[%s5 + $0x58] sm:$0xff]
      %v869 = vld [vmem:[%s5 + $0x60] sm:$0xff]
      %v870 = vld [vmem:[%s5 + $0x68] sm:$0xff]
      %v871 = vld [vmem:[%s5 + $0x70] sm:$0xff]
      %v872 = vld [vmem:[%s5 + $0x78] sm:$0xff]
      %v873 = vld [vmem:[%s6] sm:$0x1]
      %v875 = vlaneseq
      %v876 = vshrl.u32 %v875, 7
      %v877 = vsub.s32 0, %v876
      %v878 = vrot.slane %v873, %v877
      %880 = vmatprep.subr.mxu0 0.0
      %881 = vmatpush1.msra.mxu0 %v857
      %882 = vmatprep.subr.mxu0 0.0
      %883 = vmatpush1.msra.mxu0 %v858
      %884 = vmatprep.subr.mxu0 0.0
      %885 = vmatpush1.msra.mxu0 %v859
      %886 = vmatprep.subr.mxu0 0.0
      %887 = vmatpush1.msra.mxu0 %v860
      %888 = vmatprep.subr.mxu0 0.0
      %889 = vmatpush1.msra.mxu0 %v861
      %890 = vmatprep.subr.mxu0 0.0
      %891 = vmatpush1.msra.mxu0 %v862
      %892 = vmatprep.subr.mxu0 0.0
      %893 = vmatpush1.msra.mxu0 %v863
      %894 = vmatprep.subr.mxu0 0.0
      %895 = vmatpush1.msra.mxu0 %v864
      %896 = vmatprep.subr.mxu0 0.0
      %897 = vmatpush1.msra.mxu0 %v865
      %898 = vmatprep.subr.mxu0 0.0
      %899 = vmatpush1.msra.mxu0 %v866
      %900 = vmatprep.subr.mxu0 0.0
      %901 = vmatpush1.msra.mxu0 %v867
      %902 = vmatprep.subr.mxu0 0.0
      %903 = vmatpush1.msra.mxu0 %v868
      %904 = vmatprep.subr.mxu0 0.0
      %905 = vmatpush1.msra.mxu0 %v869
      %906 = vmatprep.subr.mxu0 0.0
      %907 = vmatpush1.msra.mxu0 %v870
      %908 = vmatprep.subr.mxu0 0.0
      %909 = vmatpush1.msra.mxu0 %v871
      %910 = vmatprep.subr.mxu0 0.0
      %911 = vmatpush1.msra.mxu0 %v872
      %912 = vmatprep.subr.mxu0 0.0
      %913 = vmatpush1.msra.mxu0 0.0
      %914 = vmatprep.subr.mxu0 0.0
      %915 = vmatpush1.msra.mxu0 0.0
      %916 = vmatprep.subr.mxu0 0.0
      %917 = vmatpush1.msra.mxu0 0.0
      %918 = vmatprep.subr.mxu0 0.0
      %919 = vmatpush1.msra.mxu0 0.0
      %920 = vmatprep.subr.mxu0 0.0
      %921 = vmatpush1.msra.mxu0 0.0
      %922 = vmatprep.subr.mxu0 0.0
      %923 = vmatpush1.msra.mxu0 0.0
      %924 = vmatprep.subr.mxu0 0.0
      %925 = vmatpush1.msra.mxu0 0.0
      %926 = vmatprep.subr.mxu0 0.0
      %927 = vmatpush1.msra.mxu0 0.0
      %928 = vmatprep.subr.mxu0 0.0
      %929 = vmatpush1.msra.mxu0 0.0
      %930 = vmatprep.subr.mxu0 0.0
      %931 = vmatpush1.msra.mxu0 0.0
      %932 = vmatprep.subr.mxu0 0.0
      %933 = vmatpush1.msra.mxu0 0.0
      %934 = vmatprep.subr.mxu0 0.0
      %935 = vmatpush1.msra.mxu0 0.0
      %936 = vmatprep.subr.mxu0 0.0
      %937 = vmatpush1.msra.mxu0 0.0
      %938 = vmatprep.subr.mxu0 0.0
      %939 = vmatpush1.msra.mxu0 0.0
      %940 = vmatprep.subr.mxu0 0.0
      %941 = vmatpush1.msra.mxu0 0.0
      %942 = vmatprep.subr.mxu0 0.0
      %943 = vmatpush1.msra.mxu0 0.0
      %944 = vmatprep.mubr.f32.mxu0 0.0
      %945 = vmatmul.mubr.f32.gmra.mrb[0].mxu0 %v839
      %v946 = vpop.f32.mrb[0].mxu0
      %v947 = vadd.f32 %v878, %v946
      %v948 = vpop.f32.mrb[0].mxu0
      %949 = vmatprep.mubr.f32.mxu0 0.0
      %950 = vmatmul.mubr.f32.gmra.mrb[0].mxu0 %v840
      %v951 = vpop.f32.mrb[0].mxu0
      %v952 = vadd.f32 %v878, %v951
      %v953 = vpop.f32.mrb[0].mxu0
      %954 = vmatprep.mubr.f32.mxu0 0.0
      %955 = vmatmul.mubr.f32.gmra.mrb[0].mxu0 %v841
      %v956 = vpop.f32.mrb[0].mxu0
      %v957 = vadd.f32 %v878, %v956
      %v958 = vpop.f32.mrb[0].mxu0
      %959 = vmatprep.mubr.f32.mxu0 0.0
      %960 = vmatmul.mubr.f32.gmra.mrb[0].mxu0 %v842
      %v961 = vpop.f32.mrb[0].mxu0
      %v962 = vadd.f32 %v878, %v961
      %v963 = vpop.f32.mrb[0].mxu0
      %964 = vmatprep.mubr.f32.mxu0 0.0
      %965 = vmatmul.mubr.f32.gmra.mrb[0].mxu0 %v843
      %v966 = vpop.f32.mrb[0].mxu0
      %v967 = vadd.f32 %v878, %v966
      %v968 = vpop.f32.mrb[0].mxu0
      %969 = vmatprep.mubr.f32.mxu0 0.0
      %970 = vmatmul.mubr.f32.gmra.mrb[0].mxu0 %v844
      %v971 = vpop.f32.mrb[0].mxu0
      %v972 = vadd.f32 %v878, %v971
      %v973 = vpop.f32.mrb[0].mxu0
      %974 = vmatprep.mubr.f32.mxu0 0.0
      %975 = vmatmul.mubr.f32.gmra.mrb[0].mxu0 %v845
      %v976 = vpop.f32.mrb[0].mxu0
      %v977 = vadd.f32 %v878, %v976
      %v978 = vpop.f32.mrb[0].mxu0
      %979 = vmatprep.mubr.f32.mxu0 0.0
      %980 = vmatmul.mubr.f32.gmra.mrb[0].mxu0 %v846
      %v981 = vpop.f32.mrb[0].mxu0
      %v982 = vadd.f32 %v878, %v981
      %v983 = vpop.f32.mrb[0].mxu0
      %984 = vmatprep.mubr.f32.mxu0 0.0
      %985 = vmatmul.mubr.f32.gmra.mrb[0].mxu0 %v847
      %v986 = vpop.f32.mrb[0].mxu0
      %v987 = vadd.f32 %v878, %v986
      %v988 = vpop.f32.mrb[0].mxu0
      %989 = vmatprep.mubr.f32.mxu0 0.0
      %990 = vmatmul.mubr.f32.gmra.mrb[0].mxu0 %v848
      %v991 = vpop.f32.mrb[0].mxu0
      %v992 = vadd.f32 %v878, %v991
      %v993 = vpop.f32.mrb[0].mxu0
      %994 = vmatprep.mubr.f32.mxu0 0.0
      %995 = vmatmul.mubr.f32.gmra.mrb[0].mxu0 %v849
      %v996 = vpop.f32.mrb[0].mxu0
      %v997 = vadd.f32 %v878, %v996
      %v998 = vpop.f32.mrb[0].mxu0
      %999 = vmatprep.mubr.f32.mxu0 0.0
      %1000 = vmatmul.mubr.f32.gmra.mrb[0].mxu0 %v850
      %v1001 = vpop.f32.mrb[0].mxu0
      %v1002 = vadd.f32 %v878, %v1001
      %v1003 = vpop.f32.mrb[0].mxu0
      %1004 = vmatprep.mubr.f32.mxu0 0.0
      %1005 = vmatmul.mubr.f32.gmra.mrb[0].mxu0 %v851
      %v1006 = vpop.f32.mrb[0].mxu0
      %v1007 = vadd.f32 %v878, %v1006
      %v1008 = vpop.f32.mrb[0].mxu0
      %1009 = vmatprep.mubr.f32.mxu0 0.0
      %1010 = vmatmul.mubr.f32.gmra.mrb[0].mxu0 %v852
      %v1011 = vpop.f32.mrb[0].mxu0
      %v1012 = vadd.f32 %v878, %v1011
      %v1013 = vpop.f32.mrb[0].mxu0
      %1014 = vmatprep.mubr.f32.mxu0 0.0
      %1015 = vmatmul.mubr.f32.gmra.mrb[0].mxu0 %v853
      %v1016 = vpop.f32.mrb[0].mxu0
      %v1017 = vadd.f32 %v878, %v1016
      %v1018 = vpop.f32.mrb[0].mxu0
      %1019 = vmatprep.mubr.f32.mxu0 0.0
      %1020 = vmatmul.mubr.f32.gmra.mrb[0].mxu0 %v854
      %v1021 = vpop.f32.mrb[0].mxu0
      %v1022 = vadd.f32 %v878, %v1021
      %v1023 = vpop.f32.mrb[0].mxu0
      %1024 = vmatprep.mubr.f32.mxu0 0.0
      %1025 = vmatmul.mubr.f32.gmra.mrb[0].mxu0 %v855
      %v1026 = vpop.f32.mrb[0].mxu0
      %v1027 = vadd.f32 %v878, %v1026
      %v1028 = vpop.f32.mrb[0].mxu0
      %1029 = vmatprep.mubr.f32.mxu0 0.0
      %1030 = vmatmul.mubr.f32.gmra.mrb[0].mxu0 %v856
      %v1031 = vpop.f32.mrb[0].mxu0
      %v1032 = vadd.f32 %v878, %v1031
      %v1033 = vpop.f32.mrb[0].mxu0
      %1034 = vdwg.mxu0
      %v1035 = vmax.f32 %v947, 0.0
      %v1036 = vmax.f32 %v952, 0.0
      %v1037 = vmax.f32 %v957, 0.0
      %v1038 = vmax.f32 %v962, 0.0
      %v1039 = vmax.f32 %v967, 0.0
      %v1040 = vmax.f32 %v972, 0.0
      %v1041 = vmax.f32 %v977, 0.0
      %v1042 = vmax.f32 %v982, 0.0
      %v1043 = vmax.f32 %v987, 0.0
      %v1044 = vmax.f32 %v992, 0.0
      %v1045 = vmax.f32 %v997, 0.0
      %v1046 = vmax.f32 %v1002, 0.0
      %v1047 = vmax.f32 %v1007, 0.0
      %v1048 = vmax.f32 %v1012, 0.0
      %v1049 = vmax.f32 %v1017, 0.0
      %v1050 = vmax.f32 %v1022, 0.0
      %v1051 = vmax.f32 %v1027, 0.0
      %v1052 = vmax.f32 %v1032, 0.0
      %1053 = vst.msk [vmem:[%s283] sm:$0xff] %vm381, %v1035
      %1054 = vst.msk [vmem:[%s283 + $0x8] sm:$0xff] %vm381, %v1036
      %1055 = vst.msk [vmem:[%s283 + $0x10] sm:$0xff] %vm381, %v1037
      %1056 = vst.msk [vmem:[%s283 + $0x18] sm:$0xff] %vm381, %v1038
      %1057 = vst.msk [vmem:[%s283 + $0x20] sm:$0xff] %vm381, %v1039
      %1058 = vst.msk [vmem:[%s283 + $0x28] sm:$0xff] %vm381, %v1040
      %1059 = vst.msk [vmem:[%s283 + $0x30] sm:$0xff] %vm381, %v1041
      %1060 = vst.msk [vmem:[%s283 + $0x38] sm:$0xff] %vm381, %v1042
      %1061 = vst.msk [vmem:[%s283 + $0x40] sm:$0xff] %vm381, %v1043
      %1062 = vst.msk [vmem:[%s283 + $0x48] sm:$0xff] %vm381, %v1044
      %1063 = vst.msk [vmem:[%s283 + $0x50] sm:$0xff] %vm381, %v1045
      %1064 = vst.msk [vmem:[%s283 + $0x58] sm:$0xff] %vm381, %v1046
      %1065 = vst.msk [vmem:[%s283 + $0x60] sm:$0xff] %vm381, %v1047
      %1066 = vst.msk [vmem:[%s283 + $0x68] sm:$0xff] %vm381, %v1048
      %1067 = vst.msk [vmem:[%s283 + $0x70] sm:$0xff] %vm381, %v1049
      %1068 = vst.msk [vmem:[%s283 + $0x78] sm:$0xff] %vm381, %v1050
      %1069 = vst.msk [vmem:[%s283 + $0x80] sm:$0xff] %vm381, %v1051
      %1070 = vst.msk [vmem:[%s283 + $0x88] sm:$0xff] %vm381, %v1052
      %s1071 = smul.u32 18, %s18
      %p1072 = scmp.lt.s32.totalorder %s1071, 35
      %s1073 = scalar_select %p1072, %s1071, 35
      %s1074 = smul.addr %s1073, 8
      %s1075 = scalar_lea.vmem %s7, %s1074
      // Predicated region
      $region49: #{critic_forward.3} parent=47 // pred_check
        %p1076 = pneg %p188
      $region50: #{critic_forward.3} parent=47 // pred_check_branch
        %1078 = sbr.rel (%p1076) target = $region52
      $region51: #{critic_forward.3} parent=47 // pred_region
        %s1079 = smul.u32 18, %s18
      $region52: #{critic_forward.3} parent=47 // pred_fallthru
        _
    $region48: #{critic_forward.3} parent=5 // pred_fallthru
      _
    %p1080 = scmp.le.s32.totalorder 2, %s13
    // Predicated region
    $region53: #{critic_forward.3} parent=5 // pred_check
      %p1081 = pneg %p1080
    $region54: #{critic_forward.3} parent=5 // pred_check_branch
      %1083 = sbr.rel (%p1081) target = $region56
    $region55: #{critic_forward.3} parent=5 // pred_region
      %s1084 = ssub.s32 %s13, 2
      // Predicated region
      $region57: #{critic_forward.3} parent=55 // pred_check
        %p1085 = pneg %p194
      $region58: #{critic_forward.3} parent=55 // pred_check_branch
        %1087 = sbr.rel (%p1085) target = $region60
      $region59: #{critic_forward.3} parent=55 // pred_region
        %s1088 = smul.u32 18, %s19
        %p1089 = scmp.lt.s32.totalorder %s1088, 35
        %s1090 = scalar_select %p1089, %s1088, 35
        %s1091 = smul.addr %s1090, 8
        %s1092 = scalar_lea.vmem %s7, %s1091
      $region60: #{critic_forward.3} parent=55 // pred_fallthru
        _
    $region56: #{critic_forward.3} parent=5 // pred_fallthru
      _
  $region6: #{critic_forward.3} parent=0 // loop_footer
    %s17 = sadd.s32 1, %s13
  $region7: #{critic_forward.3} parent=0 // loop_footer_branch
    %12 = sbr.rel target = $region3
  $region8: #{critic_forward.3} parent=0 // loop_exit
    _

// kernel: critic_forward.5
$region0: #{critic_forward.5}
  #allocation0 [shape = 'u32[]', space=smem, size = 0x4, offset = 0x4, fixed_abs, tag = 'smem constant byte address 0x4 - core index']
  #allocation1 [shape = 'u32[144,128]{1,0:T(1,128)}', space=vmem, size = 0x12000, scoped, tag = 'internal scratch']
  %s0 = inlined_call_operand.vmem [shape: f32[8,1024], index: 0, kind: input, shape index: {}]
  %s1 = inlined_call_operand.vmem [shape: bf16[1024,1024], index: 1, kind: input, shape index: {}]
  %s2 = inlined_call_operand.vmem [shape: f32[1,1024], index: 2, kind: input, shape index: {}]
  %s3 = inlined_call_operand.vmem [shape: bf16[1024,128], index: 3, kind: input, shape index: {}]
  %s4 = inlined_call_operand.vmem [shape: f32[1,128], index: 4, kind: input, shape index: {}]
  %s5 = inlined_call_operand.vmem [shape: f32[8,128], index: 5, kind: output, shape index: {}]
  %s6 = sld [smem:[#allocation0]]
  $region30: #{critic_forward.5} parent=0
    _
  %s8 = ssub.s32 1, %s6
  %s9 = scalar_select 0, %s8, %s6
  // Predicated region
  $region2: #{critic_forward.5} parent=0 // pred_check
    _
  $region3: #{critic_forward.5} parent=0 // pred_check_branch
    %11 = sbr.rel (0) target = $region5
  $region4: #{critic_forward.5} parent=0 // pred_region
    _
  $region5: #{critic_forward.5} parent=0 // pred_fallthru
    _
  // Predicated region
  $region6: #{critic_forward.5} parent=0 // pred_check
    _
  $region7: #{critic_forward.5} parent=0 // pred_check_branch
    %13 = sbr.rel (0) target = $region9
  $region8: #{critic_forward.5} parent=0 // pred_region
    _
  $region9: #{critic_forward.5} parent=0 // pred_fallthru
    _
  // Predicated region
  $region10: #{critic_forward.5} parent=0 // pred_check
    _
  $region11: #{critic_forward.5} parent=0 // pred_check_branch
    %15 = sbr.rel (0) target = $region13
  $region12: #{critic_forward.5} parent=0 // pred_region
    _
  $region13: #{critic_forward.5} parent=0 // pred_fallthru
    _
  // Predicated region
  $region14: #{critic_forward.5} parent=0 // pred_check
    _
  $region15: #{critic_forward.5} parent=0 // pred_check_branch
    %17 = sbr.rel (0) target = $region17
  $region16: #{critic_forward.5} parent=0 // pred_region
    _
  $region17: #{critic_forward.5} parent=0 // pred_fallthru
    _
  // Predicated region
  $region18: #{critic_forward.5} parent=0 // pred_check
    _
  $region19: #{critic_forward.5} parent=0 // pred_check_branch
    %19 = sbr.rel (0) target = $region21
  $region20: #{critic_forward.5} parent=0 // pred_region
    _
  $region21: #{critic_forward.5} parent=0 // pred_fallthru
    _
  %v21 = vld [vmem:[%s0] sm:$0xff]
  %v22 = vld [vmem:[%s0 + $0x8] sm:$0xff]
  %v23 = vld [vmem:[%s0 + $0x10] sm:$0xff]
  %v24 = vld [vmem:[%s0 + $0x18] sm:$0xff]
  %v25 = vld [vmem:[%s0 + $0x20] sm:$0xff]
  %v26 = vld [vmem:[%s0 + $0x28] sm:$0xff]
  %v27 = vld [vmem:[%s0 + $0x30] sm:$0xff]
  %v28 = vld [vmem:[%s0 + $0x38] sm:$0xff]
  %v29 = vpack.c.bf16 %v21, %v21
  %v30 = vpack.c.bf16 %v22, %v22
  %v31 = vpack.c.bf16 %v23, %v23
  %v32 = vpack.c.bf16 %v24, %v24
  %v33 = vpack.c.bf16 %v25, %v25
  %v34 = vpack.c.bf16 %v26, %v26
  %v35 = vpack.c.bf16 %v27, %v27
  %v36 = vpack.c.bf16 %v28, %v28
  %v37 = vld [vmem:[%s1] sm:$0xff]
  %v38 = vld [vmem:[%s1 + $0x8] sm:$0xff]
  %v39 = vld [vmem:[%s1 + $0x10] sm:$0xff]
  %v40 = vld [vmem:[%s1 + $0x18] sm:$0xff]
  %v41 = vld [vmem:[%s1 + $0x20] sm:$0xff]
  %v42 = vld [vmem:[%s1 + $0x28] sm:$0xff]
  %v43 = vld [vmem:[%s1 + $0x30] sm:$0xff]
  %v44 = vld [vmem:[%s1 + $0x38] sm:$0xff]
  %v45 = vld [vmem:[%s1 + $0x40] sm:$0xff]
  %v46 = vld [vmem:[%s1 + $0x48] sm:$0xff]
  %v47 = vld [vmem:[%s1 + $0x50] sm:$0xff]
  %v48 = vld [vmem:[%s1 + $0x58] sm:$0xff]
  %v49 = vld [vmem:[%s1 + $0x60] sm:$0xff]
  %v50 = vld [vmem:[%s1 + $0x68] sm:$0xff]
  %v51 = vld [vmem:[%s1 + $0x70] sm:$0xff]
  %v52 = vld [vmem:[%s1 + $0x78] sm:$0xff]
  %v53 = vld [vmem:[%s1 + $0x80] sm:$0xff]
  %v54 = vld [vmem:[%s1 + $0x88] sm:$0xff]
  %v55 = vld [vmem:[%s1 + $0x90] sm:$0xff]
  %v56 = vld [vmem:[%s1 + $0x98] sm:$0xff]
  %v57 = vld [vmem:[%s1 + $0xa0] sm:$0xff]
  %v58 = vld [vmem:[%s1 + $0xa8] sm:$0xff]
  %v59 = vld [vmem:[%s1 + $0xb0] sm:$0xff]
  %v60 = vld [vmem:[%s1 + $0xb8] sm:$0xff]
  %v61 = vld [vmem:[%s1 + $0xc0] sm:$0xff]
  %v62 = vld [vmem:[%s1 + $0xc8] sm:$0xff]
  %v63 = vld [vmem:[%s1 + $0xd0] sm:$0xff]
  %v64 = vld [vmem:[%s1 + $0xd8] sm:$0xff]
  %v65 = vld [vmem:[%s1 + $0xe0] sm:$0xff]
  %v66 = vld [vmem:[%s1 + $0xe8] sm:$0xff]
  %v67 = vld [vmem:[%s1 + $0xf0] sm:$0xff]
  %v68 = vld [vmem:[%s1 + $0xf8] sm:$0xff]
  %v69 = vld [vmem:[%s1 + $0x100] sm:$0xff]
  %v70 = vld [vmem:[%s1 + $0x108] sm:$0xff]
  %v71 = vld [vmem:[%s1 + $0x110] sm:$0xff]
  %v72 = vld [vmem:[%s1 + $0x118] sm:$0xff]
  %v73 = vld [vmem:[%s1 + $0x120] sm:$0xff]
  %v74 = vld [vmem:[%s1 + $0x128] sm:$0xff]
  %v75 = vld [vmem:[%s1 + $0x130] sm:$0xff]
  %v76 = vld [vmem:[%s1 + $0x138] sm:$0xff]
  %v77 = vld [vmem:[%s1 + $0x140] sm:$0xff]
  %v78 = vld [vmem:[%s1 + $0x148] sm:$0xff]
  %v79 = vld [vmem:[%s1 + $0x150] sm:$0xff]
  %v80 = vld [vmem:[%s1 + $0x158] sm:$0xff]
  %v81 = vld [vmem:[%s1 + $0x160] sm:$0xff]
  %v82 = vld [vmem:[%s1 + $0x168] sm:$0xff]
  %v83 = vld [vmem:[%s1 + $0x170] sm:$0xff]
  %v84 = vld [vmem:[%s1 + $0x178] sm:$0xff]
  %v85 = vld [vmem:[%s1 + $0x180] sm:$0xff]
  %v86 = vld [vmem:[%s1 + $0x188] sm:$0xff]
  %v87 = vld [vmem:[%s1 + $0x190] sm:$0xff]
  %v88 = vld [vmem:[%s1 + $0x198] sm:$0xff]
  %v89 = vld [vmem:[%s1 + $0x1a0] sm:$0xff]
  %v90 = vld [vmem:[%s1 + $0x1a8] sm:$0xff]
  %v91 = vld [vmem:[%s1 + $0x1b0] sm:$0xff]
  %v92 = vld [vmem:[%s1 + $0x1b8] sm:$0xff]
  %v93 = vld [vmem:[%s1 + $0x1c0] sm:$0xff]
  %v94 = vld [vmem:[%s1 + $0x1c8] sm:$0xff]
  %v95 = vld [vmem:[%s1 + $0x1d0] sm:$0xff]
  %v96 = vld [vmem:[%s1 + $0x1d8] sm:$0xff]
  %v97 = vld [vmem:[%s1 + $0x1e0] sm:$0xff]
  %v98 = vld [vmem:[%s1 + $0x1e8] sm:$0xff]
  %v99 = vld [vmem:[%s1 + $0x1f0] sm:$0xff]
  %v100 = vld [vmem:[%s1 + $0x1f8] sm:$0xff]
  %v101 = vld [vmem:[%s1 + $0x200] sm:$0xff]
  %v102 = vld [vmem:[%s1 + $0x208] sm:$0xff]
  %v103 = vld [vmem:[%s1 + $0x210] sm:$0xff]
  %v104 = vld [vmem:[%s1 + $0x218] sm:$0xff]
  %v105 = vld [vmem:[%s1 + $0x220] sm:$0xff]
  %v106 = vld [vmem:[%s1 + $0x228] sm:$0xff]
  %v107 = vld [vmem:[%s1 + $0x230] sm:$0xff]
  %v108 = vld [vmem:[%s1 + $0x238] sm:$0xff]
  %v109 = vld [vmem:[%s1 + $0x240] sm:$0xff]
  %v110 = vld [vmem:[%s1 + $0x248] sm:$0xff]
  %v111 = vld [vmem:[%s1 + $0x250] sm:$0xff]
  %v112 = vld [vmem:[%s1 + $0x258] sm:$0xff]
  %v113 = vld [vmem:[%s1 + $0x260] sm:$0xff]
  %v114 = vld [vmem:[%s1 + $0x268] sm:$0xff]
  %v115 = vld [vmem:[%s1 + $0x270] sm:$0xff]
  %v116 = vld [vmem:[%s1 + $0x278] sm:$0xff]
  %v117 = vld [vmem:[%s1 + $0x280] sm:$0xff]
  %v118 = vld [vmem:[%s1 + $0x288] sm:$0xff]
  %v119 = vld [vmem:[%s1 + $0x290] sm:$0xff]
  %v120 = vld [vmem:[%s1 + $0x298] sm:$0xff]
  %v121 = vld [vmem:[%s1 + $0x2a0] sm:$0xff]
  %v122 = vld [vmem:[%s1 + $0x2a8] sm:$0xff]
  %v123 = vld [vmem:[%s1 + $0x2b0] sm:$0xff]
  %v124 = vld [vmem:[%s1 + $0x2b8] sm:$0xff]
  %v125 = vld [vmem:[%s1 + $0x2c0] sm:$0xff]
  %v126 = vld [vmem:[%s1 + $0x2c8] sm:$0xff]
  %v127 = vld [vmem:[%s1 + $0x2d0] sm:$0xff]
  %v128 = vld [vmem:[%s1 + $0x2d8] sm:$0xff]
  %v129 = vld [vmem:[%s1 + $0x2e0] sm:$0xff]
  %v130 = vld [vmem:[%s1 + $0x2e8] sm:$0xff]
  %v131 = vld [vmem:[%s1 + $0x2f0] sm:$0xff]
  %v132 = vld [vmem:[%s1 + $0x2f8] sm:$0xff]
  %v133 = vld [vmem:[%s1 + $0x300] sm:$0xff]
  %v134 = vld [vmem:[%s1 + $0x308] sm:$0xff]
  %v135 = vld [vmem:[%s1 + $0x310] sm:$0xff]
  %v136 = vld [vmem:[%s1 + $0x318] sm:$0xff]
  %v137 = vld [vmem:[%s1 + $0x320] sm:$0xff]
  %v138 = vld [vmem:[%s1 + $0x328] sm:$0xff]
  %v139 = vld [vmem:[%s1 + $0x330] sm:$0xff]
  %v140 = vld [vmem:[%s1 + $0x338] sm:$0xff]
  %v141 = vld [vmem:[%s1 + $0x340] sm:$0xff]
  %v142 = vld [vmem:[%s1 + $0x348] sm:$0xff]
  %v143 = vld [vmem:[%s1 + $0x350] sm:$0xff]
  %v144 = vld [vmem:[%s1 + $0x358] sm:$0xff]
  %v145 = vld [vmem:[%s1 + $0x360] sm:$0xff]
  %v146 = vld [vmem:[%s1 + $0x368] sm:$0xff]
  %v147 = vld [vmem:[%s1 + $0x370] sm:$0xff]
  %v148 = vld [vmem:[%s1 + $0x378] sm:$0xff]
  %v149 = vld [vmem:[%s1 + $0x380] sm:$0xff]
  %v150 = vld [vmem:[%s1 + $0x388] sm:$0xff]
  %v151 = vld [vmem:[%s1 + $0x390] sm:$0xff]
  %v152 = vld [vmem:[%s1 + $0x398] sm:$0xff]
  %v153 = vld [vmem:[%s1 + $0x3a0] sm:$0xff]
  %v154 = vld [vmem:[%s1 + $0x3a8] sm:$0xff]
  %v155 = vld [vmem:[%s1 + $0x3b0] sm:$0xff]
  %v156 = vld [vmem:[%s1 + $0x3b8] sm:$0xff]
  %v157 = vld [vmem:[%s1 + $0x3c0] sm:$0xff]
  %v158 = vld [vmem:[%s1 + $0x3c8] sm:$0xff]
  %v159 = vld [vmem:[%s1 + $0x3d0] sm:$0xff]
  %v160 = vld [vmem:[%s1 + $0x3d8] sm:$0xff]
  %v161 = vld [vmem:[%s1 + $0x3e0] sm:$0xff]
  %v162 = vld [vmem:[%s1 + $0x3e8] sm:$0xff]
  %v163 = vld [vmem:[%s1 + $0x3f0] sm:$0xff]
  %v164 = vld [vmem:[%s1 + $0x3f8] sm:$0xff]
  %v165 = vld [vmem:[%s1 + $0x400] sm:$0xff]
  %v166 = vld [vmem:[%s1 + $0x408] sm:$0xff]
  %v167 = vld [vmem:[%s1 + $0x410] sm:$0xff]
  %v168 = vld [vmem:[%s1 + $0x418] sm:$0xff]
  %v169 = vld [vmem:[%s1 + $0x420] sm:$0xff]
  %v170 = vld [vmem:[%s1 + $0x428] sm:$0xff]
  %v171 = vld [vmem:[%s1 + $0x430] sm:$0xff]
  %v172 = vld [vmem:[%s1 + $0x438] sm:$0xff]
  %v173 = vld [vmem:[%s1 + $0x440] sm:$0xff]
  %v174 = vld [vmem:[%s1 + $0x448] sm:$0xff]
  %v175 = vld [vmem:[%s1 + $0x450] sm:$0xff]
  %v176 = vld [vmem:[%s1 + $0x458] sm:$0xff]
  %v177 = vld [vmem:[%s1 + $0x460] sm:$0xff]
  %v178 = vld [vmem:[%s1 + $0x468] sm:$0xff]
  %v179 = vld [vmem:[%s1 + $0x470] sm:$0xff]
  %v180 = vld [vmem:[%s1 + $0x478] sm:$0xff]
  %v181 = vld [vmem:[%s1 + $0x480] sm:$0xff]
  %v182 = vld [vmem:[%s1 + $0x488] sm:$0xff]
  %v183 = vld [vmem:[%s1 + $0x490] sm:$0xff]
  %v184 = vld [vmem:[%s1 + $0x498] sm:$0xff]
  %v185 = vld [vmem:[%s1 + $0x4a0] sm:$0xff]
  %v186 = vld [vmem:[%s1 + $0x4a8] sm:$0xff]
  %v187 = vld [vmem:[%s1 + $0x4b0] sm:$0xff]
  %v188 = vld [vmem:[%s1 + $0x4b8] sm:$0xff]
  %v189 = vld [vmem:[%s1 + $0x4c0] sm:$0xff]
  %v190 = vld [vmem:[%s1 + $0x4c8] sm:$0xff]
  %v191 = vld [vmem:[%s1 + $0x4d0] sm:$0xff]
  %v192 = vld [vmem:[%s1 + $0x4d8] sm:$0xff]
  %v193 = vld [vmem:[%s1 + $0x4e0] sm:$0xff]
  %v194 = vld [vmem:[%s1 + $0x4e8] sm:$0xff]
  %v195 = vld [vmem:[%s1 + $0x4f0] sm:$0xff]
  %v196 = vld [vmem:[%s1 + $0x4f8] sm:$0xff]
  %v197 = vld [vmem:[%s1 + $0x500] sm:$0xff]
  %v198 = vld [vmem:[%s1 + $0x508] sm:$0xff]
  %v199 = vld [vmem:[%s1 + $0x510] sm:$0xff]
  %v200 = vld [vmem:[%s1 + $0x518] sm:$0xff]
  %v201 = vld [vmem:[%s1 + $0x520] sm:$0xff]
  %v202 = vld [vmem:[%s1 + $0x528] sm:$0xff]
  %v203 = vld [vmem:[%s1 + $0x530] sm:$0xff]
  %v204 = vld [vmem:[%s1 + $0x538] sm:$0xff]
  %v205 = vld [vmem:[%s1 + $0x540] sm:$0xff]
  %v206 = vld [vmem:[%s1 + $0x548] sm:$0xff]
  %v207 = vld [vmem:[%s1 + $0x550] sm:$0xff]
  %v208 = vld [vmem:[%s1 + $0x558] sm:$0xff]
  %v209 = vld [vmem:[%s1 + $0x560] sm:$0xff]
  %v210 = vld [vmem:[%s1 + $0x568] sm:$0xff]
  %v211 = vld [vmem:[%s1 + $0x570] sm:$0xff]
  %v212 = vld [vmem:[%s1 + $0x578] sm:$0xff]
  %v213 = vld [vmem:[%s1 + $0x580] sm:$0xff]
  %v214 = vld [vmem:[%s1 + $0x588] sm:$0xff]
  %v215 = vld [vmem:[%s1 + $0x590] sm:$0xff]
  %v216 = vld [vmem:[%s1 + $0x598] sm:$0xff]
  %v217 = vld [vmem:[%s1 + $0x5a0] sm:$0xff]
  %v218 = vld [vmem:[%s1 + $0x5a8] sm:$0xff]
  %v219 = vld [vmem:[%s1 + $0x5b0] sm:$0xff]
  %v220 = vld [vmem:[%s1 + $0x5b8] sm:$0xff]
  %v221 = vld [vmem:[%s1 + $0x5c0] sm:$0xff]
  %v222 = vld [vmem:[%s1 + $0x5c8] sm:$0xff]
  %v223 = vld [vmem:[%s1 + $0x5d0] sm:$0xff]
  %v224 = vld [vmem:[%s1 + $0x5d8] sm:$0xff]
  %v225 = vld [vmem:[%s1 + $0x5e0] sm:$0xff]
  %v226 = vld [vmem:[%s1 + $0x5e8] sm:$0xff]
  %v227 = vld [vmem:[%s1 + $0x5f0] sm:$0xff]
  %v228 = vld [vmem:[%s1 + $0x5f8] sm:$0xff]
  %v229 = vld [vmem:[%s1 + $0x600] sm:$0xff]
  %v230 = vld [vmem:[%s1 + $0x608] sm:$0xff]
  %v231 = vld [vmem:[%s1 + $0x610] sm:$0xff]
  %v232 = vld [vmem:[%s1 + $0x618] sm:$0xff]
  %v233 = vld [vmem:[%s1 + $0x620] sm:$0xff]
  %v234 = vld [vmem:[%s1 + $0x628] sm:$0xff]
  %v235 = vld [vmem:[%s1 + $0x630] sm:$0xff]
  %v236 = vld [vmem:[%s1 + $0x638] sm:$0xff]
  %v237 = vld [vmem:[%s1 + $0x640] sm:$0xff]
  %v238 = vld [vmem:[%s1 + $0x648] sm:$0xff]
  %v239 = vld [vmem:[%s1 + $0x650] sm:$0xff]
  %v240 = vld [vmem:[%s1 + $0x658] sm:$0xff]
  %v241 = vld [vmem:[%s1 + $0x660] sm:$0xff]
  %v242 = vld [vmem:[%s1 + $0x668] sm:$0xff]
  %v243 = vld [vmem:[%s1 + $0x670] sm:$0xff]
  %v244 = vld [vmem:[%s1 + $0x678] sm:$0xff]
  %v245 = vld [vmem:[%s1 + $0x680] sm:$0xff]
  %v246 = vld [vmem:[%s1 + $0x688] sm:$0xff]
  %v247 = vld [vmem:[%s1 + $0x690] sm:$0xff]
  %v248 = vld [vmem:[%s1 + $0x698] sm:$0xff]
  %v249 = vld [vmem:[%s1 + $0x6a0] sm:$0xff]
  %v250 = vld [vmem:[%s1 + $0x6a8] sm:$0xff]
  %v251 = vld [vmem:[%s1 + $0x6b0] sm:$0xff]
  %v252 = vld [vmem:[%s1 + $0x6b8] sm:$0xff]
  %v253 = vld [vmem:[%s1 + $0x6c0] sm:$0xff]
  %v254 = vld [vmem:[%s1 + $0x6c8] sm:$0xff]
  %v255 = vld [vmem:[%s1 + $0x6d0] sm:$0xff]
  %v256 = vld [vmem:[%s1 + $0x6d8] sm:$0xff]
  %v257 = vld [vmem:[%s1 + $0x6e0] sm:$0xff]
  %v258 = vld [vmem:[%s1 + $0x6e8] sm:$0xff]
  %v259 = vld [vmem:[%s1 + $0x6f0] sm:$0xff]
  %v260 = vld [vmem:[%s1 + $0x6f8] sm:$0xff]
  %v261 = vld [vmem:[%s1 + $0x700] sm:$0xff]
  %v262 = vld [vmem:[%s1 + $0x708] sm:$0xff]
  %v263 = vld [vmem:[%s1 + $0x710] sm:$0xff]
  %v264 = vld [vmem:[%s1 + $0x718] sm:$0xff]
  %v265 = vld [vmem:[%s1 + $0x720] sm:$0xff]
  %v266 = vld [vmem:[%s1 + $0x728] sm:$0xff]
  %v267 = vld [vmem:[%s1 + $0x730] sm:$0xff]
  %v268 = vld [vmem:[%s1 + $0x738] sm:$0xff]
  %v269 = vld [vmem:[%s1 + $0x740] sm:$0xff]
  %v270 = vld [vmem:[%s1 + $0x748] sm:$0xff]
  %v271 = vld [vmem:[%s1 + $0x750] sm:$0xff]
  %v272 = vld [vmem:[%s1 + $0x758] sm:$0xff]
  %v273 = vld [vmem:[%s1 + $0x760] sm:$0xff]
  %v274 = vld [vmem:[%s1 + $0x768] sm:$0xff]
  %v275 = vld [vmem:[%s1 + $0x770] sm:$0xff]
  %v276 = vld [vmem:[%s1 + $0x778] sm:$0xff]
  %v277 = vld [vmem:[%s1 + $0x780] sm:$0xff]
  %v278 = vld [vmem:[%s1 + $0x788] sm:$0xff]
  %v279 = vld [vmem:[%s1 + $0x790] sm:$0xff]
  %v280 = vld [vmem:[%s1 + $0x798] sm:$0xff]
  %v281 = vld [vmem:[%s1 + $0x7a0] sm:$0xff]
  %v282 = vld [vmem:[%s1 + $0x7a8] sm:$0xff]
  %v283 = vld [vmem:[%s1 + $0x7b0] sm:$0xff]
  %v284 = vld [vmem:[%s1 + $0x7b8] sm:$0xff]
  %v285 = vld [vmem:[%s1 + $0x7c0] sm:$0xff]
  %v286 = vld [vmem:[%s1 + $0x7c8] sm:$0xff]
  %v287 = vld [vmem:[%s1 + $0x7d0] sm:$0xff]
  %v288 = vld [vmem:[%s1 + $0x7d8] sm:$0xff]
  %v289 = vld [vmem:[%s1 + $0x7e0] sm:$0xff]
  %v290 = vld [vmem:[%s1 + $0x7e8] sm:$0xff]
  %v291 = vld [vmem:[%s1 + $0x7f0] sm:$0xff]
  %v292 = vld [vmem:[%s1 + $0x7f8] sm:$0xff]
  %v293 = vld [vmem:[%s1 + $0x800] sm:$0xff]
  %v294 = vld [vmem:[%s1 + $0x808] sm:$0xff]
  %v295 = vld [vmem:[%s1 + $0x810] sm:$0xff]
  %v296 = vld [vmem:[%s1 + $0x818] sm:$0xff]
  %v297 = vld [vmem:[%s1 + $0x820] sm:$0xff]
  %v298 = vld [vmem:[%s1 + $0x828] sm:$0xff]
  %v299 = vld [vmem:[%s1 + $0x830] sm:$0xff]
  %v300 = vld [vmem:[%s1 + $0x838] sm:$0xff]
  %v301 = vld [vmem:[%s1 + $0x840] sm:$0xff]
  %v302 = vld [vmem:[%s1 + $0x848] sm:$0xff]
  %v303 = vld [vmem:[%s1 + $0x850] sm:$0xff]
  %v304 = vld [vmem:[%s1 + $0x858] sm:$0xff]
  %v305 = vld [vmem:[%s1 + $0x860] sm:$0xff]
  %v306 = vld [vmem:[%s1 + $0x868] sm:$0xff]
  %v307 = vld [vmem:[%s1 + $0x870] sm:$0xff]
  %v308 = vld [vmem:[%s1 + $0x878] sm:$0xff]
  %v309 = vld [vmem:[%s1 + $0x880] sm:$0xff]
  %v310 = vld [vmem:[%s1 + $0x888] sm:$0xff]
  %v311 = vld [vmem:[%s1 + $0x890] sm:$0xff]
  %v312 = vld [vmem:[%s1 + $0x898] sm:$0xff]
  %v313 = vld [vmem:[%s1 + $0x8a0] sm:$0xff]
  %v314 = vld [vmem:[%s1 + $0x8a8] sm:$0xff]
  %v315 = vld [vmem:[%s1 + $0x8b0] sm:$0xff]
  %v316 = vld [vmem:[%s1 + $0x8b8] sm:$0xff]
  %v317 = vld [vmem:[%s1 + $0x8c0] sm:$0xff]
  %v318 = vld [vmem:[%s1 + $0x8c8] sm:$0xff]
  %v319 = vld [vmem:[%s1 + $0x8d0] sm:$0xff]
  %v320 = vld [vmem:[%s1 + $0x8d8] sm:$0xff]
  %v321 = vld [vmem:[%s1 + $0x8e0] sm:$0xff]
  %v322 = vld [vmem:[%s1 + $0x8e8] sm:$0xff]
  %v323 = vld [vmem:[%s1 + $0x8f0] sm:$0xff]
  %v324 = vld [vmem:[%s1 + $0x8f8] sm:$0xff]
  %v325 = vld [vmem:[%s1 + $0x900] sm:$0xff]
  %v326 = vld [vmem:[%s1 + $0x908] sm:$0xff]
  %v327 = vld [vmem:[%s1 + $0x910] sm:$0xff]
  %v328 = vld [vmem:[%s1 + $0x918] sm:$0xff]
  %v329 = vld [vmem:[%s1 + $0x920] sm:$0xff]
  %v330 = vld [vmem:[%s1 + $0x928] sm:$0xff]
  %v331 = vld [vmem:[%s1 + $0x930] sm:$0xff]
  %v332 = vld [vmem:[%s1 + $0x938] sm:$0xff]
  %v333 = vld [vmem:[%s1 + $0x940] sm:$0xff]
  %v334 = vld [vmem:[%s1 + $0x948] sm:$0xff]
  %v335 = vld [vmem:[%s1 + $0x950] sm:$0xff]
  %v336 = vld [vmem:[%s1 + $0x958] sm:$0xff]
  %v337 = vld [vmem:[%s1 + $0x960] sm:$0xff]
  %v338 = vld [vmem:[%s1 + $0x968] sm:$0xff]
  %v339 = vld [vmem:[%s1 + $0x970] sm:$0xff]
  %v340 = vld [vmem:[%s1 + $0x978] sm:$0xff]
  %v341 = vld [vmem:[%s1 + $0x980] sm:$0xff]
  %v342 = vld [vmem:[%s1 + $0x988] sm:$0xff]
  %v343 = vld [vmem:[%s1 + $0x990] sm:$0xff]
  %v344 = vld [vmem:[%s1 + $0x998] sm:$0xff]
  %v345 = vld [vmem:[%s1 + $0x9a0] sm:$0xff]
  %v346 = vld [vmem:[%s1 + $0x9a8] sm:$0xff]
  %v347 = vld [vmem:[%s1 + $0x9b0] sm:$0xff]
  %v348 = vld [vmem:[%s1 + $0x9b8] sm:$0xff]
  %v349 = vld [vmem:[%s1 + $0x9c0] sm:$0xff]
  %v350 = vld [vmem:[%s1 + $0x9c8] sm:$0xff]
  %v351 = vld [vmem:[%s1 + $0x9d0] sm:$0xff]
  %v352 = vld [vmem:[%s1 + $0x9d8] sm:$0xff]
  %v353 = vld [vmem:[%s1 + $0x9e0] sm:$0xff]
  %v354 = vld [vmem:[%s1 + $0x9e8] sm:$0xff]
  %v355 = vld [vmem:[%s1 + $0x9f0] sm:$0xff]
  %v356 = vld [vmem:[%s1 + $0x9f8] sm:$0xff]
  %v357 = vld [vmem:[%s1 + $0xa00] sm:$0xff]
  %v358 = vld [vmem:[%s1 + $0xa08] sm:$0xff]
  %v359 = vld [vmem:[%s1 + $0xa10] sm:$0xff]
  %v360 = vld [vmem:[%s1 + $0xa18] sm:$0xff]
  %v361 = vld [vmem:[%s1 + $0xa20] sm:$0xff]
  %v362 = vld [vmem:[%s1 + $0xa28] sm:$0xff]
  %v363 = vld [vmem:[%s1 + $0xa30] sm:$0xff]
  %v364 = vld [vmem:[%s1 + $0xa38] sm:$0xff]
  %v365 = vld [vmem:[%s1 + $0xa40] sm:$0xff]
  %v366 = vld [vmem:[%s1 + $0xa48] sm:$0xff]
  %v367 = vld [vmem:[%s1 + $0xa50] sm:$0xff]
  %v368 = vld [vmem:[%s1 + $0xa58] sm:$0xff]
  %v369 = vld [vmem:[%s1 + $0xa60] sm:$0xff]
  %v370 = vld [vmem:[%s1 + $0xa68] sm:$0xff]
  %v371 = vld [vmem:[%s1 + $0xa70] sm:$0xff]
  %v372 = vld [vmem:[%s1 + $0xa78] sm:$0xff]
  %v373 = vld [vmem:[%s1 + $0xa80] sm:$0xff]
  %v374 = vld [vmem:[%s1 + $0xa88] sm:$0xff]
  %v375 = vld [vmem:[%s1 + $0xa90] sm:$0xff]
  %v376 = vld [vmem:[%s1 + $0xa98] sm:$0xff]
  %v377 = vld [vmem:[%s1 + $0xaa0] sm:$0xff]
  %v378 = vld [vmem:[%s1 + $0xaa8] sm:$0xff]
  %v379 = vld [vmem:[%s1 + $0xab0] sm:$0xff]
  %v380 = vld [vmem:[%s1 + $0xab8] sm:$0xff]
  %v381 = vld [vmem:[%s1 + $0xac0] sm:$0xff]
  %v382 = vld [vmem:[%s1 + $0xac8] sm:$0xff]
  %v383 = vld [vmem:[%s1 + $0xad0] sm:$0xff]
  %v384 = vld [vmem:[%s1 + $0xad8] sm:$0xff]
  %v385 = vld [vmem:[%s1 + $0xae0] sm:$0xff]
  %v386 = vld [vmem:[%s1 + $0xae8] sm:$0xff]
  %v387 = vld [vmem:[%s1 + $0xaf0] sm:$0xff]
  %v388 = vld [vmem:[%s1 + $0xaf8] sm:$0xff]
  %v389 = vld [vmem:[%s1 + $0xb00] sm:$0xff]
  %v390 = vld [vmem:[%s1 + $0xb08] sm:$0xff]
  %v391 = vld [vmem:[%s1 + $0xb10] sm:$0xff]
  %v392 = vld [vmem:[%s1 + $0xb18] sm:$0xff]
  %v393 = vld [vmem:[%s1 + $0xb20] sm:$0xff]
  %v394 = vld [vmem:[%s1 + $0xb28] sm:$0xff]
  %v395 = vld [vmem:[%s1 + $0xb30] sm:$0xff]
  %v396 = vld [vmem:[%s1 + $0xb38] sm:$0xff]
  %v397 = vld [vmem:[%s1 + $0xb40] sm:$0xff]
  %v398 = vld [vmem:[%s1 + $0xb48] sm:$0xff]
  %v399 = vld [vmem:[%s1 + $0xb50] sm:$0xff]
  %v400 = vld [vmem:[%s1 + $0xb58] sm:$0xff]
  %v401 = vld [vmem:[%s1 + $0xb60] sm:$0xff]
  %v402 = vld [vmem:[%s1 + $0xb68] sm:$0xff]
  %v403 = vld [vmem:[%s1 + $0xb70] sm:$0xff]
  %v404 = vld [vmem:[%s1 + $0xb78] sm:$0xff]
  %v405 = vld [vmem:[%s1 + $0xb80] sm:$0xff]
  %v406 = vld [vmem:[%s1 + $0xb88] sm:$0xff]
  %v407 = vld [vmem:[%s1 + $0xb90] sm:$0xff]
  %v408 = vld [vmem:[%s1 + $0xb98] sm:$0xff]
  %v409 = vld [vmem:[%s1 + $0xba0] sm:$0xff]
  %v410 = vld [vmem:[%s1 + $0xba8] sm:$0xff]
  %v411 = vld [vmem:[%s1 + $0xbb0] sm:$0xff]
  %v412 = vld [vmem:[%s1 + $0xbb8] sm:$0xff]
  %v413 = vld [vmem:[%s1 + $0xbc0] sm:$0xff]
  %v414 = vld [vmem:[%s1 + $0xbc8] sm:$0xff]
  %v415 = vld [vmem:[%s1 + $0xbd0] sm:$0xff]
  %v416 = vld [vmem:[%s1 + $0xbd8] sm:$0xff]
  %v417 = vld [vmem:[%s1 + $0xbe0] sm:$0xff]
  %v418 = vld [vmem:[%s1 + $0xbe8] sm:$0xff]
  %v419 = vld [vmem:[%s1 + $0xbf0] sm:$0xff]
  %v420 = vld [vmem:[%s1 + $0xbf8] sm:$0xff]
  %v421 = vld [vmem:[%s1 + $0xc00] sm:$0xff]
  %v422 = vld [vmem:[%s1 + $0xc08] sm:$0xff]
  %v423 = vld [vmem:[%s1 + $0xc10] sm:$0xff]
  %v424 = vld [vmem:[%s1 + $0xc18] sm:$0xff]
  %v425 = vld [vmem:[%s1 + $0xc20] sm:$0xff]
  %v426 = vld [vmem:[%s1 + $0xc28] sm:$0xff]
  %v427 = vld [vmem:[%s1 + $0xc30] sm:$0xff]
  %v428 = vld [vmem:[%s1 + $0xc38] sm:$0xff]
  %v429 = vld [vmem:[%s1 + $0xc40] sm:$0xff]
  %v430 = vld [vmem:[%s1 + $0xc48] sm:$0xff]
  %v431 = vld [vmem:[%s1 + $0xc50] sm:$0xff]
  %v432 = vld [vmem:[%s1 + $0xc58] sm:$0xff]
  %v433 = vld [vmem:[%s1 + $0xc60] sm:$0xff]
  %v434 = vld [vmem:[%s1 + $0xc68] sm:$0xff]
  %v435 = vld [vmem:[%s1 + $0xc70] sm:$0xff]
  %v436 = vld [vmem:[%s1 + $0xc78] sm:$0xff]
  %v437 = vld [vmem:[%s1 + $0xc80] sm:$0xff]
  %v438 = vld [vmem:[%s1 + $0xc88] sm:$0xff]
  %v439 = vld [vmem:[%s1 + $0xc90] sm:$0xff]
  %v440 = vld [vmem:[%s1 + $0xc98] sm:$0xff]
  %v441 = vld [vmem:[%s1 + $0xca0] sm:$0xff]
  %v442 = vld [vmem:[%s1 + $0xca8] sm:$0xff]
  %v443 = vld [vmem:[%s1 + $0xcb0] sm:$0xff]
  %v444 = vld [vmem:[%s1 + $0xcb8] sm:$0xff]
  %v445 = vld [vmem:[%s1 + $0xcc0] sm:$0xff]
  %v446 = vld [vmem:[%s1 + $0xcc8] sm:$0xff]
  %v447 = vld [vmem:[%s1 + $0xcd0] sm:$0xff]
  %v448 = vld [vmem:[%s1 + $0xcd8] sm:$0xff]
  %v449 = vld [vmem:[%s1 + $0xce0] sm:$0xff]
  %v450 = vld [vmem:[%s1 + $0xce8] sm:$0xff]
  %v451 = vld [vmem:[%s1 + $0xcf0] sm:$0xff]
  %v452 = vld [vmem:[%s1 + $0xcf8] sm:$0xff]
  %v453 = vld [vmem:[%s1 + $0xd00] sm:$0xff]
  %v454 = vld [vmem:[%s1 + $0xd08] sm:$0xff]
  %v455 = vld [vmem:[%s1 + $0xd10] sm:$0xff]
  %v456 = vld [vmem:[%s1 + $0xd18] sm:$0xff]
  %v457 = vld [vmem:[%s1 + $0xd20] sm:$0xff]
  %v458 = vld [vmem:[%s1 + $0xd28] sm:$0xff]
  %v459 = vld [vmem:[%s1 + $0xd30] sm:$0xff]
  %v460 = vld [vmem:[%s1 + $0xd38] sm:$0xff]
  %v461 = vld [vmem:[%s1 + $0xd40] sm:$0xff]
  %v462 = vld [vmem:[%s1 + $0xd48] sm:$0xff]
  %v463 = vld [vmem:[%s1 + $0xd50] sm:$0xff]
  %v464 = vld [vmem:[%s1 + $0xd58] sm:$0xff]
  %v465 = vld [vmem:[%s1 + $0xd60] sm:$0xff]
  %v466 = vld [vmem:[%s1 + $0xd68] sm:$0xff]
  %v467 = vld [vmem:[%s1 + $0xd70] sm:$0xff]
  %v468 = vld [vmem:[%s1 + $0xd78] sm:$0xff]
  %v469 = vld [vmem:[%s1 + $0xd80] sm:$0xff]
  %v470 = vld [vmem:[%s1 + $0xd88] sm:$0xff]
  %v471 = vld [vmem:[%s1 + $0xd90] sm:$0xff]
  %v472 = vld [vmem:[%s1 + $0xd98] sm:$0xff]
  %v473 = vld [vmem:[%s1 + $0xda0] sm:$0xff]
  %v474 = vld [vmem:[%s1 + $0xda8] sm:$0xff]
  %v475 = vld [vmem:[%s1 + $0xdb0] sm:$0xff]
  %v476 = vld [vmem:[%s1 + $0xdb8] sm:$0xff]
  %v477 = vld [vmem:[%s1 + $0xdc0] sm:$0xff]
  %v478 = vld [vmem:[%s1 + $0xdc8] sm:$0xff]
  %v479 = vld [vmem:[%s1 + $0xdd0] sm:$0xff]
  %v480 = vld [vmem:[%s1 + $0xdd8] sm:$0xff]
  %v481 = vld [vmem:[%s1 + $0xde0] sm:$0xff]
  %v482 = vld [vmem:[%s1 + $0xde8] sm:$0xff]
  %v483 = vld [vmem:[%s1 + $0xdf0] sm:$0xff]
  %v484 = vld [vmem:[%s1 + $0xdf8] sm:$0xff]
  %v485 = vld [vmem:[%s1 + $0xe00] sm:$0xff]
  %v486 = vld [vmem:[%s1 + $0xe08] sm:$0xff]
  %v487 = vld [vmem:[%s1 + $0xe10] sm:$0xff]
  %v488 = vld [vmem:[%s1 + $0xe18] sm:$0xff]
  %v489 = vld [vmem:[%s1 + $0xe20] sm:$0xff]
  %v490 = vld [vmem:[%s1 + $0xe28] sm:$0xff]
  %v491 = vld [vmem:[%s1 + $0xe30] sm:$0xff]
  %v492 = vld [vmem:[%s1 + $0xe38] sm:$0xff]
  %v493 = vld [vmem:[%s1 + $0xe40] sm:$0xff]
  %v494 = vld [vmem:[%s1 + $0xe48] sm:$0xff]
  %v495 = vld [vmem:[%s1 + $0xe50] sm:$0xff]
  %v496 = vld [vmem:[%s1 + $0xe58] sm:$0xff]
  %v497 = vld [vmem:[%s1 + $0xe60] sm:$0xff]
  %v498 = vld [vmem:[%s1 + $0xe68] sm:$0xff]
  %v499 = vld [vmem:[%s1 + $0xe70] sm:$0xff]
  %v500 = vld [vmem:[%s1 + $0xe78] sm:$0xff]
  %v501 = vld [vmem:[%s1 + $0xe80] sm:$0xff]
  %v502 = vld [vmem:[%s1 + $0xe88] sm:$0xff]
  %v503 = vld [vmem:[%s1 + $0xe90] sm:$0xff]
  %v504 = vld [vmem:[%s1 + $0xe98] sm:$0xff]
  %v505 = vld [vmem:[%s1 + $0xea0] sm:$0xff]
  %v506 = vld [vmem:[%s1 + $0xea8] sm:$0xff]
  %v507 = vld [vmem:[%s1 + $0xeb0] sm:$0xff]
  %v508 = vld [vmem:[%s1 + $0xeb8] sm:$0xff]
  %v509 = vld [vmem:[%s1 + $0xec0] sm:$0xff]
  %v510 = vld [vmem:[%s1 + $0xec8] sm:$0xff]
  %v511 = vld [vmem:[%s1 + $0xed0] sm:$0xff]
  %v512 = vld [vmem:[%s1 + $0xed8] sm:$0xff]
  %v513 = vld [vmem:[%s1 + $0xee0] sm:$0xff]
  %v514 = vld [vmem:[%s1 + $0xee8] sm:$0xff]
  %v515 = vld [vmem:[%s1 + $0xef0] sm:$0xff]
  %v516 = vld [vmem:[%s1 + $0xef8] sm:$0xff]
  %v517 = vld [vmem:[%s1 + $0xf00] sm:$0xff]
  %v518 = vld [vmem:[%s1 + $0xf08] sm:$0xff]
  %v519 = vld [vmem:[%s1 + $0xf10] sm:$0xff]
  %v520 = vld [vmem:[%s1 + $0xf18] sm:$0xff]
  %v521 = vld [vmem:[%s1 + $0xf20] sm:$0xff]
  %v522 = vld [vmem:[%s1 + $0xf28] sm:$0xff]
  %v523 = vld [vmem:[%s1 + $0xf30] sm:$0xff]
  %v524 = vld [vmem:[%s1 + $0xf38] sm:$0xff]
  %v525 = vld [vmem:[%s1 + $0xf40] sm:$0xff]
  %v526 = vld [vmem:[%s1 + $0xf48] sm:$0xff]
  %v527 = vld [vmem:[%s1 + $0xf50] sm:$0xff]
  %v528 = vld [vmem:[%s1 + $0xf58] sm:$0xff]
  %v529 = vld [vmem:[%s1 + $0xf60] sm:$0xff]
  %v530 = vld [vmem:[%s1 + $0xf68] sm:$0xff]
  %v531 = vld [vmem:[%s1 + $0xf70] sm:$0xff]
  %v532 = vld [vmem:[%s1 + $0xf78] sm:$0xff]
  %v533 = vld [vmem:[%s1 + $0xf80] sm:$0xff]
  %v534 = vld [vmem:[%s1 + $0xf88] sm:$0xff]
  %v535 = vld [vmem:[%s1 + $0xf90] sm:$0xff]
  %v536 = vld [vmem:[%s1 + $0xf98] sm:$0xff]
  %v537 = vld [vmem:[%s1 + $0xfa0] sm:$0xff]
  %v538 = vld [vmem:[%s1 + $0xfa8] sm:$0xff]
  %v539 = vld [vmem:[%s1 + $0xfb0] sm:$0xff]
  %v540 = vld [vmem:[%s1 + $0xfb8] sm:$0xff]
  %v541 = vld [vmem:[%s1 + $0xfc0] sm:$0xff]
  %v542 = vld [vmem:[%s1 + $0xfc8] sm:$0xff]
  %v543 = vld [vmem:[%s1 + $0xfd0] sm:$0xff]
  %v544 = vld [vmem:[%s1 + $0xfd8] sm:$0xff]
  %v545 = vld [vmem:[%s1 + $0xfe0] sm:$0xff]
  %v546 = vld [vmem:[%s1 + $0xfe8] sm:$0xff]
  %v547 = vld [vmem:[%s1 + $0xff0] sm:$0xff]
  %v548 = vld [vmem:[%s1 + $0xff8] sm:$0xff]
  %v549 = vld [vmem:[%s2] sm:$0xff]
  %v551 = vlaneseq
  %v552 = vshrl.u32 %v551, 7
  %v553 = vsub.s32 0, %v552
  %v554 = vrot.slane %v549, %v553
  %v555 = vlaneseq
  %v556 = vshrl.u32 %v555, 7
  %v557 = vsub.s32 1, %v556
  %v558 = vrot.slane %v549, %v557
  %v559 = vlaneseq
  %v560 = vshrl.u32 %v559, 7
  %v561 = vsub.s32 2, %v560
  %v562 = vrot.slane %v549, %v561
  %v563 = vlaneseq
  %v564 = vshrl.u32 %v563, 7
  %v565 = vsub.s32 3, %v564
  %v566 = vrot.slane %v549, %v565
  %v567 = vlaneseq
  %v568 = vshrl.u32 %v567, 7
  %v569 = vsub.s32 4, %v568
  %v570 = vrot.slane %v549, %v569
  %v571 = vlaneseq
  %v572 = vshrl.u32 %v571, 7
  %v573 = vsub.s32 5, %v572
  %v574 = vrot.slane %v549, %v573
  %v575 = vlaneseq
  %v576 = vshrl.u32 %v575, 7
  %v577 = vsub.s32 6, %v576
  %v578 = vrot.slane %v549, %v577
  %v579 = vlaneseq
  %v580 = vshrl.u32 %v579, 7
  %v581 = vsub.s32 7, %v580
  %v582 = vrot.slane %v549, %v581
  %v1103 = vunpack.c.l.b16 %v37
  %v1104 = vunpack.c.h.b16 %v37
  %v1105 = vunpack.c.l.b16 %v38
  %v1106 = vunpack.c.h.b16 %v38
  %v1107 = vunpack.c.l.b16 %v39
  %v1108 = vunpack.c.h.b16 %v39
  %v1109 = vunpack.c.l.b16 %v40
  %v1110 = vunpack.c.h.b16 %v40
  %v1111 = vunpack.c.l.b16 %v41
  %v1112 = vunpack.c.h.b16 %v41
  %v1113 = vunpack.c.l.b16 %v42
  %v1114 = vunpack.c.h.b16 %v42
  %v1115 = vunpack.c.l.b16 %v43
  %v1116 = vunpack.c.h.b16 %v43
  %v1117 = vunpack.c.l.b16 %v44
  %v1118 = vunpack.c.h.b16 %v44
  %v1119 = vunpack.c.l.b16 %v45
  %v1120 = vunpack.c.h.b16 %v45
  %v1121 = vunpack.c.l.b16 %v46
  %v1122 = vunpack.c.h.b16 %v46
  %v1123 = vunpack.c.l.b16 %v47
  %v1124 = vunpack.c.h.b16 %v47
  %v1125 = vunpack.c.l.b16 %v48
  %v1126 = vunpack.c.h.b16 %v48
  %v1127 = vunpack.c.l.b16 %v49
  %v1128 = vunpack.c.h.b16 %v49
  %v1129 = vunpack.c.l.b16 %v50
  %v1130 = vunpack.c.h.b16 %v50
  %v1131 = vunpack.c.l.b16 %v51
  %v1132 = vunpack.c.h.b16 %v51
  %v1133 = vunpack.c.l.b16 %v52
  %v1134 = vunpack.c.h.b16 %v52
  %v1135 = vunpack.c.l.b16 %v53
  %v1136 = vunpack.c.h.b16 %v53
  %v1137 = vunpack.c.l.b16 %v54
  %v1138 = vunpack.c.h.b16 %v54
  %v1139 = vunpack.c.l.b16 %v55
  %v1140 = vunpack.c.h.b16 %v55
  %v1141 = vunpack.c.l.b16 %v56
  %v1142 = vunpack.c.h.b16 %v56
  %v1143 = vunpack.c.l.b16 %v57
  %v1144 = vunpack.c.h.b16 %v57
  %v1145 = vunpack.c.l.b16 %v58
  %v1146 = vunpack.c.h.b16 %v58
  %v1147 = vunpack.c.l.b16 %v59
  %v1148 = vunpack.c.h.b16 %v59
  %v1149 = vunpack.c.l.b16 %v60
  %v1150 = vunpack.c.h.b16 %v60
  %v1151 = vunpack.c.l.b16 %v61
  %v1152 = vunpack.c.h.b16 %v61
  %v1153 = vunpack.c.l.b16 %v62
  %v1154 = vunpack.c.h.b16 %v62
  %v1155 = vunpack.c.l.b16 %v63
  %v1156 = vunpack.c.h.b16 %v63
  %v1157 = vunpack.c.l.b16 %v64
  %v1158 = vunpack.c.h.b16 %v64
  %v1159 = vunpack.c.l.b16 %v65
  %v1160 = vunpack.c.h.b16 %v65
  %v1161 = vunpack.c.l.b16 %v66
  %v1162 = vunpack.c.h.b16 %v66
  %v1163 = vunpack.c.l.b16 %v67
  %v1164 = vunpack.c.h.b16 %v67
  %v1165 = vunpack.c.l.b16 %v68
  %v1166 = vunpack.c.h.b16 %v68
  %v1167 = vunpack.c.l.b16 %v69
  %v1168 = vunpack.c.h.b16 %v69
  %v1169 = vunpack.c.l.b16 %v70
  %v1170 = vunpack.c.h.b16 %v70
  %v1171 = vunpack.c.l.b16 %v71
  %v1172 = vunpack.c.h.b16 %v71
  %v1173 = vunpack.c.l.b16 %v72
  %v1174 = vunpack.c.h.b16 %v72
  %v1175 = vunpack.c.l.b16 %v73
  %v1176 = vunpack.c.h.b16 %v73
  %v1177 = vunpack.c.l.b16 %v74
  %v1178 = vunpack.c.h.b16 %v74
  %v1179 = vunpack.c.l.b16 %v75
  %v1180 = vunpack.c.h.b16 %v75
  %v1181 = vunpack.c.l.b16 %v76
  %v1182 = vunpack.c.h.b16 %v76
  %v1183 = vunpack.c.l.b16 %v77
  %v1184 = vunpack.c.h.b16 %v77
  %v1185 = vunpack.c.l.b16 %v78
  %v1186 = vunpack.c.h.b16 %v78
  %v1187 = vunpack.c.l.b16 %v79
  %v1188 = vunpack.c.h.b16 %v79
  %v1189 = vunpack.c.l.b16 %v80
  %v1190 = vunpack.c.h.b16 %v80
  %v1191 = vunpack.c.l.b16 %v81
  %v1192 = vunpack.c.h.b16 %v81
  %v1193 = vunpack.c.l.b16 %v82
  %v1194 = vunpack.c.h.b16 %v82
  %v1195 = vunpack.c.l.b16 %v83
  %v1196 = vunpack.c.h.b16 %v83
  %v1197 = vunpack.c.l.b16 %v84
  %v1198 = vunpack.c.h.b16 %v84
  %v1199 = vunpack.c.l.b16 %v85
  %v1200 = vunpack.c.h.b16 %v85
  %v1201 = vunpack.c.l.b16 %v86
  %v1202 = vunpack.c.h.b16 %v86
  %v1203 = vunpack.c.l.b16 %v87
  %v1204 = vunpack.c.h.b16 %v87
  %v1205 = vunpack.c.l.b16 %v88
  %v1206 = vunpack.c.h.b16 %v88
  %v1207 = vunpack.c.l.b16 %v89
  %v1208 = vunpack.c.h.b16 %v89
  %v1209 = vunpack.c.l.b16 %v90
  %v1210 = vunpack.c.h.b16 %v90
  %v1211 = vunpack.c.l.b16 %v91
  %v1212 = vunpack.c.h.b16 %v91
  %v1213 = vunpack.c.l.b16 %v92
  %v1214 = vunpack.c.h.b16 %v92
  %v1215 = vunpack.c.l.b16 %v93
  %v1216 = vunpack.c.h.b16 %v93
  %v1217 = vunpack.c.l.b16 %v94
  %v1218 = vunpack.c.h.b16 %v94
  %v1219 = vunpack.c.l.b16 %v95
  %v1220 = vunpack.c.h.b16 %v95
  %v1221 = vunpack.c.l.b16 %v96
  %v1222 = vunpack.c.h.b16 %v96
  %v1223 = vunpack.c.l.b16 %v97
  %v1224 = vunpack.c.h.b16 %v97
  %v1225 = vunpack.c.l.b16 %v98
  %v1226 = vunpack.c.h.b16 %v98
  %v1227 = vunpack.c.l.b16 %v99
  %v1228 = vunpack.c.h.b16 %v99
  %v1229 = vunpack.c.l.b16 %v100
  %v1230 = vunpack.c.h.b16 %v100
  %v1231 = vunpack.c.l.b16 %v101
  %v1232 = vunpack.c.h.b16 %v101
  %v1233 = vunpack.c.l.b16 %v102
  %v1234 = vunpack.c.h.b16 %v102
  %v1235 = vunpack.c.l.b16 %v103
  %v1236 = vunpack.c.h.b16 %v103
  %v1237 = vunpack.c.l.b16 %v104
  %v1238 = vunpack.c.h.b16 %v104
  %v1239 = vunpack.c.l.b16 %v105
  %v1240 = vunpack.c.h.b16 %v105
  %v1241 = vunpack.c.l.b16 %v106
  %v1242 = vunpack.c.h.b16 %v106
  %v1243 = vunpack.c.l.b16 %v107
  %v1244 = vunpack.c.h.b16 %v107
  %v1245 = vunpack.c.l.b16 %v108
  %v1246 = vunpack.c.h.b16 %v108
  %v1247 = vunpack.c.l.b16 %v109
  %v1248 = vunpack.c.h.b16 %v109
  %v1249 = vunpack.c.l.b16 %v110
  %v1250 = vunpack.c.h.b16 %v110
  %v1251 = vunpack.c.l.b16 %v111
  %v1252 = vunpack.c.h.b16 %v111
  %v1253 = vunpack.c.l.b16 %v112
  %v1254 = vunpack.c.h.b16 %v112
  %v1255 = vunpack.c.l.b16 %v113
  %v1256 = vunpack.c.h.b16 %v113
  %v1257 = vunpack.c.l.b16 %v114
  %v1258 = vunpack.c.h.b16 %v114
  %v1259 = vunpack.c.l.b16 %v115
  %v1260 = vunpack.c.h.b16 %v115
  %v1261 = vunpack.c.l.b16 %v116
  %v1262 = vunpack.c.h.b16 %v116
  %v1263 = vunpack.c.l.b16 %v117
  %v1264 = vunpack.c.h.b16 %v117
  %v1265 = vunpack.c.l.b16 %v118
  %v1266 = vunpack.c.h.b16 %v118
  %v1267 = vunpack.c.l.b16 %v119
  %v1268 = vunpack.c.h.b16 %v119
  %v1269 = vunpack.c.l.b16 %v120
  %v1270 = vunpack.c.h.b16 %v120
  %v1271 = vunpack.c.l.b16 %v121
  %v1272 = vunpack.c.h.b16 %v121
  %v1273 = vunpack.c.l.b16 %v122
  %v1274 = vunpack.c.h.b16 %v122
  %v1275 = vunpack.c.l.b16 %v123
  %v1276 = vunpack.c.h.b16 %v123
  %v1277 = vunpack.c.l.b16 %v124
  %v1278 = vunpack.c.h.b16 %v124
  %v1279 = vunpack.c.l.b16 %v125
  %v1280 = vunpack.c.h.b16 %v125
  %v1281 = vunpack.c.l.b16 %v126
  %v1282 = vunpack.c.h.b16 %v126
  %v1283 = vunpack.c.l.b16 %v127
  %v1284 = vunpack.c.h.b16 %v127
  %v1285 = vunpack.c.l.b16 %v128
  %v1286 = vunpack.c.h.b16 %v128
  %v1287 = vunpack.c.l.b16 %v129
  %v1288 = vunpack.c.h.b16 %v129
  %v1289 = vunpack.c.l.b16 %v130
  %v1290 = vunpack.c.h.b16 %v130
  %v1291 = vunpack.c.l.b16 %v131
  %v1292 = vunpack.c.h.b16 %v131
  %v1293 = vunpack.c.l.b16 %v132
  %v1294 = vunpack.c.h.b16 %v132
  %v1295 = vunpack.c.l.b16 %v133
  %v1296 = vunpack.c.h.b16 %v133
  %v1297 = vunpack.c.l.b16 %v134
  %v1298 = vunpack.c.h.b16 %v134
  %v1299 = vunpack.c.l.b16 %v135
  %v1300 = vunpack.c.h.b16 %v135
  %v1301 = vunpack.c.l.b16 %v136
  %v1302 = vunpack.c.h.b16 %v136
  %v1303 = vunpack.c.l.b16 %v137
  %v1304 = vunpack.c.h.b16 %v137
  %v1305 = vunpack.c.l.b16 %v138
  %v1306 = vunpack.c.h.b16 %v138
  %v1307 = vunpack.c.l.b16 %v139
  %v1308 = vunpack.c.h.b16 %v139
  %v1309 = vunpack.c.l.b16 %v140
  %v1310 = vunpack.c.h.b16 %v140
  %v1311 = vunpack.c.l.b16 %v141
  %v1312 = vunpack.c.h.b16 %v141
  %v1313 = vunpack.c.l.b16 %v142
  %v1314 = vunpack.c.h.b16 %v142
  %v1315 = vunpack.c.l.b16 %v143
  %v1316 = vunpack.c.h.b16 %v143
  %v1317 = vunpack.c.l.b16 %v144
  %v1318 = vunpack.c.h.b16 %v144
  %v1319 = vunpack.c.l.b16 %v145
  %v1320 = vunpack.c.h.b16 %v145
  %v1321 = vunpack.c.l.b16 %v146
  %v1322 = vunpack.c.h.b16 %v146
  %v1323 = vunpack.c.l.b16 %v147
  %v1324 = vunpack.c.h.b16 %v147
  %v1325 = vunpack.c.l.b16 %v148
  %v1326 = vunpack.c.h.b16 %v148
  %v1327 = vunpack.c.l.b16 %v149
  %v1328 = vunpack.c.h.b16 %v149
  %v1329 = vunpack.c.l.b16 %v150
  %v1330 = vunpack.c.h.b16 %v150
  %v1331 = vunpack.c.l.b16 %v151
  %v1332 = vunpack.c.h.b16 %v151
  %v1333 = vunpack.c.l.b16 %v152
  %v1334 = vunpack.c.h.b16 %v152
  %v1335 = vunpack.c.l.b16 %v153
  %v1336 = vunpack.c.h.b16 %v153
  %v1337 = vunpack.c.l.b16 %v154
  %v1338 = vunpack.c.h.b16 %v154
  %v1339 = vunpack.c.l.b16 %v155
  %v1340 = vunpack.c.h.b16 %v155
  %v1341 = vunpack.c.l.b16 %v156
  %v1342 = vunpack.c.h.b16 %v156
  %v1343 = vunpack.c.l.b16 %v157
  %v1344 = vunpack.c.h.b16 %v157
  %v1345 = vunpack.c.l.b16 %v158
  %v1346 = vunpack.c.h.b16 %v158
  %v1347 = vunpack.c.l.b16 %v159
  %v1348 = vunpack.c.h.b16 %v159
  %v1349 = vunpack.c.l.b16 %v160
  %v1350 = vunpack.c.h.b16 %v160
  %v1351 = vunpack.c.l.b16 %v161
  %v1352 = vunpack.c.h.b16 %v161
  %v1353 = vunpack.c.l.b16 %v162
  %v1354 = vunpack.c.h.b16 %v162
  %v1355 = vunpack.c.l.b16 %v163
  %v1356 = vunpack.c.h.b16 %v163
  %v1357 = vunpack.c.l.b16 %v164
  %v1358 = vunpack.c.h.b16 %v164
  %v1359 = vunpack.c.l.b16 %v165
  %v1360 = vunpack.c.h.b16 %v165
  %v1361 = vunpack.c.l.b16 %v166
  %v1362 = vunpack.c.h.b16 %v166
  %v1363 = vunpack.c.l.b16 %v167
  %v1364 = vunpack.c.h.b16 %v167
  %v1365 = vunpack.c.l.b16 %v168
  %v1366 = vunpack.c.h.b16 %v168
  %v1367 = vunpack.c.l.b16 %v169
  %v1368 = vunpack.c.h.b16 %v169
  %v1369 = vunpack.c.l.b16 %v170
  %v1370 = vunpack.c.h.b16 %v170
  %v1371 = vunpack.c.l.b16 %v171
  %v1372 = vunpack.c.h.b16 %v171
  %v1373 = vunpack.c.l.b16 %v172
  %v1374 = vunpack.c.h.b16 %v172
  %v1375 = vunpack.c.l.b16 %v173
  %v1376 = vunpack.c.h.b16 %v173
  %v1377 = vunpack.c.l.b16 %v174
  %v1378 = vunpack.c.h.b16 %v174
  %v1379 = vunpack.c.l.b16 %v175
  %v1380 = vunpack.c.h.b16 %v175
  %v1381 = vunpack.c.l.b16 %v176
  %v1382 = vunpack.c.h.b16 %v176
  %v1383 = vunpack.c.l.b16 %v177
  %v1384 = vunpack.c.h.b16 %v177
  %v1385 = vunpack.c.l.b16 %v178
  %v1386 = vunpack.c.h.b16 %v178
  %v1387 = vunpack.c.l.b16 %v179
  %v1388 = vunpack.c.h.b16 %v179
  %v1389 = vunpack.c.l.b16 %v180
  %v1390 = vunpack.c.h.b16 %v180
  %v1391 = vunpack.c.l.b16 %v181
  %v1392 = vunpack.c.h.b16 %v181
  %v1393 = vunpack.c.l.b16 %v182
  %v1394 = vunpack.c.h.b16 %v182
  %v1395 = vunpack.c.l.b16 %v183
  %v1396 = vunpack.c.h.b16 %v183
  %v1397 = vunpack.c.l.b16 %v184
  %v1398 = vunpack.c.h.b16 %v184
  %v1399 = vunpack.c.l.b16 %v185
  %v1400 = vunpack.c.h.b16 %v185
  %v1401 = vunpack.c.l.b16 %v186
  %v1402 = vunpack.c.h.b16 %v186
  %v1403 = vunpack.c.l.b16 %v187
  %v1404 = vunpack.c.h.b16 %v187
  %v1405 = vunpack.c.l.b16 %v188
  %v1406 = vunpack.c.h.b16 %v188
  %v1407 = vunpack.c.l.b16 %v189
  %v1408 = vunpack.c.h.b16 %v189
  %v1409 = vunpack.c.l.b16 %v190
  %v1410 = vunpack.c.h.b16 %v190
  %v1411 = vunpack.c.l.b16 %v191
  %v1412 = vunpack.c.h.b16 %v191
  %v1413 = vunpack.c.l.b16 %v192
  %v1414 = vunpack.c.h.b16 %v192
  %v1415 = vunpack.c.l.b16 %v193
  %v1416 = vunpack.c.h.b16 %v193
  %v1417 = vunpack.c.l.b16 %v194
  %v1418 = vunpack.c.h.b16 %v194
  %v1419 = vunpack.c.l.b16 %v195
  %v1420 = vunpack.c.h.b16 %v195
  %v1421 = vunpack.c.l.b16 %v196
  %v1422 = vunpack.c.h.b16 %v196
  %v1423 = vunpack.c.l.b16 %v197
  %v1424 = vunpack.c.h.b16 %v197
  %v1425 = vunpack.c.l.b16 %v198
  %v1426 = vunpack.c.h.b16 %v198
  %v1427 = vunpack.c.l.b16 %v199
  %v1428 = vunpack.c.h.b16 %v199
  %v1429 = vunpack.c.l.b16 %v200
  %v1430 = vunpack.c.h.b16 %v200
  %v1431 = vunpack.c.l.b16 %v201
  %v1432 = vunpack.c.h.b16 %v201
  %v1433 = vunpack.c.l.b16 %v202
  %v1434 = vunpack.c.h.b16 %v202
  %v1435 = vunpack.c.l.b16 %v203
  %v1436 = vunpack.c.h.b16 %v203
  %v1437 = vunpack.c.l.b16 %v204
  %v1438 = vunpack.c.h.b16 %v204
  %v1439 = vunpack.c.l.b16 %v205
  %v1440 = vunpack.c.h.b16 %v205
  %v1441 = vunpack.c.l.b16 %v206
  %v1442 = vunpack.c.h.b16 %v206
  %v1443 = vunpack.c.l.b16 %v207
  %v1444 = vunpack.c.h.b16 %v207
  %v1445 = vunpack.c.l.b16 %v208
  %v1446 = vunpack.c.h.b16 %v208
  %v1447 = vunpack.c.l.b16 %v209
  %v1448 = vunpack.c.h.b16 %v209
  %v1449 = vunpack.c.l.b16 %v210
  %v1450 = vunpack.c.h.b16 %v210
  %v1451 = vunpack.c.l.b16 %v211
  %v1452 = vunpack.c.h.b16 %v211
  %v1453 = vunpack.c.l.b16 %v212
  %v1454 = vunpack.c.h.b16 %v212
  %v1455 = vunpack.c.l.b16 %v213
  %v1456 = vunpack.c.h.b16 %v213
  %v1457 = vunpack.c.l.b16 %v214
  %v1458 = vunpack.c.h.b16 %v214
  %v1459 = vunpack.c.l.b16 %v215
  %v1460 = vunpack.c.h.b16 %v215
  %v1461 = vunpack.c.l.b16 %v216
  %v1462 = vunpack.c.h.b16 %v216
  %v1463 = vunpack.c.l.b16 %v217
  %v1464 = vunpack.c.h.b16 %v217
  %v1465 = vunpack.c.l.b16 %v218
  %v1466 = vunpack.c.h.b16 %v218
  %v1467 = vunpack.c.l.b16 %v219
  %v1468 = vunpack.c.h.b16 %v219
  %v1469 = vunpack.c.l.b16 %v220
  %v1470 = vunpack.c.h.b16 %v220
  %v1471 = vunpack.c.l.b16 %v221
  %v1472 = vunpack.c.h.b16 %v221
  %v1473 = vunpack.c.l.b16 %v222
  %v1474 = vunpack.c.h.b16 %v222
  %v1475 = vunpack.c.l.b16 %v223
  %v1476 = vunpack.c.h.b16 %v223
  %v1477 = vunpack.c.l.b16 %v224
  %v1478 = vunpack.c.h.b16 %v224
  %v1479 = vunpack.c.l.b16 %v225
  %v1480 = vunpack.c.h.b16 %v225
  %v1481 = vunpack.c.l.b16 %v226
  %v1482 = vunpack.c.h.b16 %v226
  %v1483 = vunpack.c.l.b16 %v227
  %v1484 = vunpack.c.h.b16 %v227
  %v1485 = vunpack.c.l.b16 %v228
  %v1486 = vunpack.c.h.b16 %v228
  %v1487 = vunpack.c.l.b16 %v229
  %v1488 = vunpack.c.h.b16 %v229
  %v1489 = vunpack.c.l.b16 %v230
  %v1490 = vunpack.c.h.b16 %v230
  %v1491 = vunpack.c.l.b16 %v231
  %v1492 = vunpack.c.h.b16 %v231
  %v1493 = vunpack.c.l.b16 %v232
  %v1494 = vunpack.c.h.b16 %v232
  %v1495 = vunpack.c.l.b16 %v233
  %v1496 = vunpack.c.h.b16 %v233
  %v1497 = vunpack.c.l.b16 %v234
  %v1498 = vunpack.c.h.b16 %v234
  %v1499 = vunpack.c.l.b16 %v235
  %v1500 = vunpack.c.h.b16 %v235
  %v1501 = vunpack.c.l.b16 %v236
  %v1502 = vunpack.c.h.b16 %v236
  %v1503 = vunpack.c.l.b16 %v237
  %v1504 = vunpack.c.h.b16 %v237
  %v1505 = vunpack.c.l.b16 %v238
  %v1506 = vunpack.c.h.b16 %v238
  %v1507 = vunpack.c.l.b16 %v239
  %v1508 = vunpack.c.h.b16 %v239
  %v1509 = vunpack.c.l.b16 %v240
  %v1510 = vunpack.c.h.b16 %v240
  %v1511 = vunpack.c.l.b16 %v241
  %v1512 = vunpack.c.h.b16 %v241
  %v1513 = vunpack.c.l.b16 %v242
  %v1514 = vunpack.c.h.b16 %v242
  %v1515 = vunpack.c.l.b16 %v243
  %v1516 = vunpack.c.h.b16 %v243
  %v1517 = vunpack.c.l.b16 %v244
  %v1518 = vunpack.c.h.b16 %v244
  %v1519 = vunpack.c.l.b16 %v245
  %v1520 = vunpack.c.h.b16 %v245
  %v1521 = vunpack.c.l.b16 %v246
  %v1522 = vunpack.c.h.b16 %v246
  %v1523 = vunpack.c.l.b16 %v247
  %v1524 = vunpack.c.h.b16 %v247
  %v1525 = vunpack.c.l.b16 %v248
  %v1526 = vunpack.c.h.b16 %v248
  %v1527 = vunpack.c.l.b16 %v249
  %v1528 = vunpack.c.h.b16 %v249
  %v1529 = vunpack.c.l.b16 %v250
  %v1530 = vunpack.c.h.b16 %v250
  %v1531 = vunpack.c.l.b16 %v251
  %v1532 = vunpack.c.h.b16 %v251
  %v1533 = vunpack.c.l.b16 %v252
  %v1534 = vunpack.c.h.b16 %v252
  %v1535 = vunpack.c.l.b16 %v253
  %v1536 = vunpack.c.h.b16 %v253
  %v1537 = vunpack.c.l.b16 %v254
  %v1538 = vunpack.c.h.b16 %v254
  %v1539 = vunpack.c.l.b16 %v255
  %v1540 = vunpack.c.h.b16 %v255
  %v1541 = vunpack.c.l.b16 %v256
  %v1542 = vunpack.c.h.b16 %v256
  %v1543 = vunpack.c.l.b16 %v257
  %v1544 = vunpack.c.h.b16 %v257
  %v1545 = vunpack.c.l.b16 %v258
  %v1546 = vunpack.c.h.b16 %v258
  %v1547 = vunpack.c.l.b16 %v259
  %v1548 = vunpack.c.h.b16 %v259
  %v1549 = vunpack.c.l.b16 %v260
  %v1550 = vunpack.c.h.b16 %v260
  %v1551 = vunpack.c.l.b16 %v261
  %v1552 = vunpack.c.h.b16 %v261
  %v1553 = vunpack.c.l.b16 %v262
  %v1554 = vunpack.c.h.b16 %v262
  %v1555 = vunpack.c.l.b16 %v263
  %v1556 = vunpack.c.h.b16 %v263
  %v1557 = vunpack.c.l.b16 %v264
  %v1558 = vunpack.c.h.b16 %v264
  %v1559 = vunpack.c.l.b16 %v265
  %v1560 = vunpack.c.h.b16 %v265
  %v1561 = vunpack.c.l.b16 %v266
  %v1562 = vunpack.c.h.b16 %v266
  %v1563 = vunpack.c.l.b16 %v267
  %v1564 = vunpack.c.h.b16 %v267
  %v1565 = vunpack.c.l.b16 %v268
  %v1566 = vunpack.c.h.b16 %v268
  %v1567 = vunpack.c.l.b16 %v269
  %v1568 = vunpack.c.h.b16 %v269
  %v1569 = vunpack.c.l.b16 %v270
  %v1570 = vunpack.c.h.b16 %v270
  %v1571 = vunpack.c.l.b16 %v271
  %v1572 = vunpack.c.h.b16 %v271
  %v1573 = vunpack.c.l.b16 %v272
  %v1574 = vunpack.c.h.b16 %v272
  %v1575 = vunpack.c.l.b16 %v273
  %v1576 = vunpack.c.h.b16 %v273
  %v1577 = vunpack.c.l.b16 %v274
  %v1578 = vunpack.c.h.b16 %v274
  %v1579 = vunpack.c.l.b16 %v275
  %v1580 = vunpack.c.h.b16 %v275
  %v1581 = vunpack.c.l.b16 %v276
  %v1582 = vunpack.c.h.b16 %v276
  %v1583 = vunpack.c.l.b16 %v277
  %v1584 = vunpack.c.h.b16 %v277
  %v1585 = vunpack.c.l.b16 %v278
  %v1586 = vunpack.c.h.b16 %v278
  %v1587 = vunpack.c.l.b16 %v279
  %v1588 = vunpack.c.h.b16 %v279
  %v1589 = vunpack.c.l.b16 %v280
  %v1590 = vunpack.c.h.b16 %v280
  %v1591 = vunpack.c.l.b16 %v281
  %v1592 = vunpack.c.h.b16 %v281
  %v1593 = vunpack.c.l.b16 %v282
  %v1594 = vunpack.c.h.b16 %v282
  %v1595 = vunpack.c.l.b16 %v283
  %v1596 = vunpack.c.h.b16 %v283
  %v1597 = vunpack.c.l.b16 %v284
  %v1598 = vunpack.c.h.b16 %v284
  %v1599 = vunpack.c.l.b16 %v285
  %v1600 = vunpack.c.h.b16 %v285
  %v1601 = vunpack.c.l.b16 %v286
  %v1602 = vunpack.c.h.b16 %v286
  %v1603 = vunpack.c.l.b16 %v287
  %v1604 = vunpack.c.h.b16 %v287
  %v1605 = vunpack.c.l.b16 %v288
  %v1606 = vunpack.c.h.b16 %v288
  %v1607 = vunpack.c.l.b16 %v289
  %v1608 = vunpack.c.h.b16 %v289
  %v1609 = vunpack.c.l.b16 %v290
  %v1610 = vunpack.c.h.b16 %v290
  %v1611 = vunpack.c.l.b16 %v291
  %v1612 = vunpack.c.h.b16 %v291
  %v1613 = vunpack.c.l.b16 %v292
  %v1614 = vunpack.c.h.b16 %v292
  %v1615 = vunpack.c.l.b16 %v293
  %v1616 = vunpack.c.h.b16 %v293
  %v1617 = vunpack.c.l.b16 %v294
  %v1618 = vunpack.c.h.b16 %v294
  %v1619 = vunpack.c.l.b16 %v295
  %v1620 = vunpack.c.h.b16 %v295
  %v1621 = vunpack.c.l.b16 %v296
  %v1622 = vunpack.c.h.b16 %v296
  %v1623 = vunpack.c.l.b16 %v297
  %v1624 = vunpack.c.h.b16 %v297
  %v1625 = vunpack.c.l.b16 %v298
  %v1626 = vunpack.c.h.b16 %v298
  %v1627 = vunpack.c.l.b16 %v299
  %v1628 = vunpack.c.h.b16 %v299
  %v1629 = vunpack.c.l.b16 %v300
  %v1630 = vunpack.c.h.b16 %v300
  %v1631 = vunpack.c.l.b16 %v301
  %v1632 = vunpack.c.h.b16 %v301
  %v1633 = vunpack.c.l.b16 %v302
  %v1634 = vunpack.c.h.b16 %v302
  %v1635 = vunpack.c.l.b16 %v303
  %v1636 = vunpack.c.h.b16 %v303
  %v1637 = vunpack.c.l.b16 %v304
  %v1638 = vunpack.c.h.b16 %v304
  %v1639 = vunpack.c.l.b16 %v305
  %v1640 = vunpack.c.h.b16 %v305
  %v1641 = vunpack.c.l.b16 %v306
  %v1642 = vunpack.c.h.b16 %v306
  %v1643 = vunpack.c.l.b16 %v307
  %v1644 = vunpack.c.h.b16 %v307
  %v1645 = vunpack.c.l.b16 %v308
  %v1646 = vunpack.c.h.b16 %v308
  %v1647 = vunpack.c.l.b16 %v309
  %v1648 = vunpack.c.h.b16 %v309
  %v1649 = vunpack.c.l.b16 %v310
  %v1650 = vunpack.c.h.b16 %v310
  %v1651 = vunpack.c.l.b16 %v311
  %v1652 = vunpack.c.h.b16 %v311
  %v1653 = vunpack.c.l.b16 %v312
  %v1654 = vunpack.c.h.b16 %v312
  %v1655 = vunpack.c.l.b16 %v313
  %v1656 = vunpack.c.h.b16 %v313
  %v1657 = vunpack.c.l.b16 %v314
  %v1658 = vunpack.c.h.b16 %v314
  %v1659 = vunpack.c.l.b16 %v315
  %v1660 = vunpack.c.h.b16 %v315
  %v1661 = vunpack.c.l.b16 %v316
  %v1662 = vunpack.c.h.b16 %v316
  %v1663 = vunpack.c.l.b16 %v317
  %v1664 = vunpack.c.h.b16 %v317
  %v1665 = vunpack.c.l.b16 %v318
  %v1666 = vunpack.c.h.b16 %v318
  %v1667 = vunpack.c.l.b16 %v319
  %v1668 = vunpack.c.h.b16 %v319
  %v1669 = vunpack.c.l.b16 %v320
  %v1670 = vunpack.c.h.b16 %v320
  %v1671 = vunpack.c.l.b16 %v321
  %v1672 = vunpack.c.h.b16 %v321
  %v1673 = vunpack.c.l.b16 %v322
  %v1674 = vunpack.c.h.b16 %v322
  %v1675 = vunpack.c.l.b16 %v323
  %v1676 = vunpack.c.h.b16 %v323
  %v1677 = vunpack.c.l.b16 %v324
  %v1678 = vunpack.c.h.b16 %v324
  %v1679 = vunpack.c.l.b16 %v325
  %v1680 = vunpack.c.h.b16 %v325
  %v1681 = vunpack.c.l.b16 %v326
  %v1682 = vunpack.c.h.b16 %v326
  %v1683 = vunpack.c.l.b16 %v327
  %v1684 = vunpack.c.h.b16 %v327
  %v1685 = vunpack.c.l.b16 %v328
  %v1686 = vunpack.c.h.b16 %v328
  %v1687 = vunpack.c.l.b16 %v329
  %v1688 = vunpack.c.h.b16 %v329
  %v1689 = vunpack.c.l.b16 %v330
  %v1690 = vunpack.c.h.b16 %v330
  %v1691 = vunpack.c.l.b16 %v331
  %v1692 = vunpack.c.h.b16 %v331
  %v1693 = vunpack.c.l.b16 %v332
  %v1694 = vunpack.c.h.b16 %v332
  %v1695 = vunpack.c.l.b16 %v333
  %v1696 = vunpack.c.h.b16 %v333
  %v1697 = vunpack.c.l.b16 %v334
  %v1698 = vunpack.c.h.b16 %v334
  %v1699 = vunpack.c.l.b16 %v335
  %v1700 = vunpack.c.h.b16 %v335
  %v1701 = vunpack.c.l.b16 %v336
  %v1702 = vunpack.c.h.b16 %v336
  %v1703 = vunpack.c.l.b16 %v337
  %v1704 = vunpack.c.h.b16 %v337
  %v1705 = vunpack.c.l.b16 %v338
  %v1706 = vunpack.c.h.b16 %v338
  %v1707 = vunpack.c.l.b16 %v339
  %v1708 = vunpack.c.h.b16 %v339
  %v1709 = vunpack.c.l.b16 %v340
  %v1710 = vunpack.c.h.b16 %v340
  %v1711 = vunpack.c.l.b16 %v341
  %v1712 = vunpack.c.h.b16 %v341
  %v1713 = vunpack.c.l.b16 %v342
  %v1714 = vunpack.c.h.b16 %v342
  %v1715 = vunpack.c.l.b16 %v343
  %v1716 = vunpack.c.h.b16 %v343
  %v1717 = vunpack.c.l.b16 %v344
  %v1718 = vunpack.c.h.b16 %v344
  %v1719 = vunpack.c.l.b16 %v345
  %v1720 = vunpack.c.h.b16 %v345
  %v1721 = vunpack.c.l.b16 %v346
  %v1722 = vunpack.c.h.b16 %v346
  %v1723 = vunpack.c.l.b16 %v347
  %v1724 = vunpack.c.h.b16 %v347
  %v1725 = vunpack.c.l.b16 %v348
  %v1726 = vunpack.c.h.b16 %v348
  %v1727 = vunpack.c.l.b16 %v349
  %v1728 = vunpack.c.h.b16 %v349
  %v1729 = vunpack.c.l.b16 %v350
  %v1730 = vunpack.c.h.b16 %v350
  %v1731 = vunpack.c.l.b16 %v351
  %v1732 = vunpack.c.h.b16 %v351
  %v1733 = vunpack.c.l.b16 %v352
  %v1734 = vunpack.c.h.b16 %v352
  %v1735 = vunpack.c.l.b16 %v353
  %v1736 = vunpack.c.h.b16 %v353
  %v1737 = vunpack.c.l.b16 %v354
  %v1738 = vunpack.c.h.b16 %v354
  %v1739 = vunpack.c.l.b16 %v355
  %v1740 = vunpack.c.h.b16 %v355
  %v1741 = vunpack.c.l.b16 %v356
  %v1742 = vunpack.c.h.b16 %v356
  %v1743 = vunpack.c.l.b16 %v357
  %v1744 = vunpack.c.h.b16 %v357
  %v1745 = vunpack.c.l.b16 %v358
  %v1746 = vunpack.c.h.b16 %v358
  %v1747 = vunpack.c.l.b16 %v359
  %v1748 = vunpack.c.h.b16 %v359
  %v1749 = vunpack.c.l.b16 %v360
  %v1750 = vunpack.c.h.b16 %v360
  %v1751 = vunpack.c.l.b16 %v361
  %v1752 = vunpack.c.h.b16 %v361
  %v1753 = vunpack.c.l.b16 %v362
  %v1754 = vunpack.c.h.b16 %v362
  %v1755 = vunpack.c.l.b16 %v363
  %v1756 = vunpack.c.h.b16 %v363
  %v1757 = vunpack.c.l.b16 %v364
  %v1758 = vunpack.c.h.b16 %v364
  %v1759 = vunpack.c.l.b16 %v365
  %v1760 = vunpack.c.h.b16 %v365
  %v1761 = vunpack.c.l.b16 %v366
  %v1762 = vunpack.c.h.b16 %v366
  %v1763 = vunpack.c.l.b16 %v367
  %v1764 = vunpack.c.h.b16 %v367
  %v1765 = vunpack.c.l.b16 %v368
  %v1766 = vunpack.c.h.b16 %v368
  %v1767 = vunpack.c.l.b16 %v369
  %v1768 = vunpack.c.h.b16 %v369
  %v1769 = vunpack.c.l.b16 %v370
  %v1770 = vunpack.c.h.b16 %v370
  %v1771 = vunpack.c.l.b16 %v371
  %v1772 = vunpack.c.h.b16 %v371
  %v1773 = vunpack.c.l.b16 %v372
  %v1774 = vunpack.c.h.b16 %v372
  %v1775 = vunpack.c.l.b16 %v373
  %v1776 = vunpack.c.h.b16 %v373
  %v1777 = vunpack.c.l.b16 %v374
  %v1778 = vunpack.c.h.b16 %v374
  %v1779 = vunpack.c.l.b16 %v375
  %v1780 = vunpack.c.h.b16 %v375
  %v1781 = vunpack.c.l.b16 %v376
  %v1782 = vunpack.c.h.b16 %v376
  %v1783 = vunpack.c.l.b16 %v377
  %v1784 = vunpack.c.h.b16 %v377
  %v1785 = vunpack.c.l.b16 %v378
  %v1786 = vunpack.c.h.b16 %v378
  %v1787 = vunpack.c.l.b16 %v379
  %v1788 = vunpack.c.h.b16 %v379
  %v1789 = vunpack.c.l.b16 %v380
  %v1790 = vunpack.c.h.b16 %v380
  %v1791 = vunpack.c.l.b16 %v381
  %v1792 = vunpack.c.h.b16 %v381
  %v1793 = vunpack.c.l.b16 %v382
  %v1794 = vunpack.c.h.b16 %v382
  %v1795 = vunpack.c.l.b16 %v383
  %v1796 = vunpack.c.h.b16 %v383
  %v1797 = vunpack.c.l.b16 %v384
  %v1798 = vunpack.c.h.b16 %v384
  %v1799 = vunpack.c.l.b16 %v385
  %v1800 = vunpack.c.h.b16 %v385
  %v1801 = vunpack.c.l.b16 %v386
  %v1802 = vunpack.c.h.b16 %v386
  %v1803 = vunpack.c.l.b16 %v387
  %v1804 = vunpack.c.h.b16 %v387
  %v1805 = vunpack.c.l.b16 %v388
  %v1806 = vunpack.c.h.b16 %v388
  %v1807 = vunpack.c.l.b16 %v389
  %v1808 = vunpack.c.h.b16 %v389
  %v1809 = vunpack.c.l.b16 %v390
  %v1810 = vunpack.c.h.b16 %v390
  %v1811 = vunpack.c.l.b16 %v391
  %v1812 = vunpack.c.h.b16 %v391
  %v1813 = vunpack.c.l.b16 %v392
  %v1814 = vunpack.c.h.b16 %v392
  %v1815 = vunpack.c.l.b16 %v393
  %v1816 = vunpack.c.h.b16 %v393
  %v1817 = vunpack.c.l.b16 %v394
  %v1818 = vunpack.c.h.b16 %v394
  %v1819 = vunpack.c.l.b16 %v395
  %v1820 = vunpack.c.h.b16 %v395
  %v1821 = vunpack.c.l.b16 %v396
  %v1822 = vunpack.c.h.b16 %v396
  %v1823 = vunpack.c.l.b16 %v397
  %v1824 = vunpack.c.h.b16 %v397
  %v1825 = vunpack.c.l.b16 %v398
  %v1826 = vunpack.c.h.b16 %v398
  %v1827 = vunpack.c.l.b16 %v399
  %v1828 = vunpack.c.h.b16 %v399
  %v1829 = vunpack.c.l.b16 %v400
  %v1830 = vunpack.c.h.b16 %v400
  %v1831 = vunpack.c.l.b16 %v401
  %v1832 = vunpack.c.h.b16 %v401
  %v1833 = vunpack.c.l.b16 %v402
  %v1834 = vunpack.c.h.b16 %v402
  %v1835 = vunpack.c.l.b16 %v403
  %v1836 = vunpack.c.h.b16 %v403
  %v1837 = vunpack.c.l.b16 %v404
  %v1838 = vunpack.c.h.b16 %v404
  %v1839 = vunpack.c.l.b16 %v405
  %v1840 = vunpack.c.h.b16 %v405
  %v1841 = vunpack.c.l.b16 %v406
  %v1842 = vunpack.c.h.b16 %v406
  %v1843 = vunpack.c.l.b16 %v407
  %v1844 = vunpack.c.h.b16 %v407
  %v1845 = vunpack.c.l.b16 %v408
  %v1846 = vunpack.c.h.b16 %v408
  %v1847 = vunpack.c.l.b16 %v409
  %v1848 = vunpack.c.h.b16 %v409
  %v1849 = vunpack.c.l.b16 %v410
  %v1850 = vunpack.c.h.b16 %v410
  %v1851 = vunpack.c.l.b16 %v411
  %v1852 = vunpack.c.h.b16 %v411
  %v1853 = vunpack.c.l.b16 %v412
  %v1854 = vunpack.c.h.b16 %v412
  %v1855 = vunpack.c.l.b16 %v413
  %v1856 = vunpack.c.h.b16 %v413
  %v1857 = vunpack.c.l.b16 %v414
  %v1858 = vunpack.c.h.b16 %v414
  %v1859 = vunpack.c.l.b16 %v415
  %v1860 = vunpack.c.h.b16 %v415
  %v1861 = vunpack.c.l.b16 %v416
  %v1862 = vunpack.c.h.b16 %v416
  %v1863 = vunpack.c.l.b16 %v417
  %v1864 = vunpack.c.h.b16 %v417
  %v1865 = vunpack.c.l.b16 %v418
  %v1866 = vunpack.c.h.b16 %v418
  %v1867 = vunpack.c.l.b16 %v419
  %v1868 = vunpack.c.h.b16 %v419
  %v1869 = vunpack.c.l.b16 %v420
  %v1870 = vunpack.c.h.b16 %v420
  %v1871 = vunpack.c.l.b16 %v421
  %v1872 = vunpack.c.h.b16 %v421
  %v1873 = vunpack.c.l.b16 %v422
  %v1874 = vunpack.c.h.b16 %v422
  %v1875 = vunpack.c.l.b16 %v423
  %v1876 = vunpack.c.h.b16 %v423
  %v1877 = vunpack.c.l.b16 %v424
  %v1878 = vunpack.c.h.b16 %v424
  %v1879 = vunpack.c.l.b16 %v425
  %v1880 = vunpack.c.h.b16 %v425
  %v1881 = vunpack.c.l.b16 %v426
  %v1882 = vunpack.c.h.b16 %v426
  %v1883 = vunpack.c.l.b16 %v427
  %v1884 = vunpack.c.h.b16 %v427
  %v1885 = vunpack.c.l.b16 %v428
  %v1886 = vunpack.c.h.b16 %v428
  %v1887 = vunpack.c.l.b16 %v429
  %v1888 = vunpack.c.h.b16 %v429
  %v1889 = vunpack.c.l.b16 %v430
  %v1890 = vunpack.c.h.b16 %v430
  %v1891 = vunpack.c.l.b16 %v431
  %v1892 = vunpack.c.h.b16 %v431
  %v1893 = vunpack.c.l.b16 %v432
  %v1894 = vunpack.c.h.b16 %v432
  %v1895 = vunpack.c.l.b16 %v433
  %v1896 = vunpack.c.h.b16 %v433
  %v1897 = vunpack.c.l.b16 %v434
  %v1898 = vunpack.c.h.b16 %v434
  %v1899 = vunpack.c.l.b16 %v435
  %v1900 = vunpack.c.h.b16 %v435
  %v1901 = vunpack.c.l.b16 %v436
  %v1902 = vunpack.c.h.b16 %v436
  %v1903 = vunpack.c.l.b16 %v437
  %v1904 = vunpack.c.h.b16 %v437
  %v1905 = vunpack.c.l.b16 %v438
  %v1906 = vunpack.c.h.b16 %v438
  %v1907 = vunpack.c.l.b16 %v439
  %v1908 = vunpack.c.h.b16 %v439
  %v1909 = vunpack.c.l.b16 %v440
  %v1910 = vunpack.c.h.b16 %v440
  %v1911 = vunpack.c.l.b16 %v441
  %v1912 = vunpack.c.h.b16 %v441
  %v1913 = vunpack.c.l.b16 %v442
  %v1914 = vunpack.c.h.b16 %v442
  %v1915 = vunpack.c.l.b16 %v443
  %v1916 = vunpack.c.h.b16 %v443
  %v1917 = vunpack.c.l.b16 %v444
  %v1918 = vunpack.c.h.b16 %v444
  %v1919 = vunpack.c.l.b16 %v445
  %v1920 = vunpack.c.h.b16 %v445
  %v1921 = vunpack.c.l.b16 %v446
  %v1922 = vunpack.c.h.b16 %v446
  %v1923 = vunpack.c.l.b16 %v447
  %v1924 = vunpack.c.h.b16 %v447
  %v1925 = vunpack.c.l.b16 %v448
  %v1926 = vunpack.c.h.b16 %v448
  %v1927 = vunpack.c.l.b16 %v449
  %v1928 = vunpack.c.h.b16 %v449
  %v1929 = vunpack.c.l.b16 %v450
  %v1930 = vunpack.c.h.b16 %v450
  %v1931 = vunpack.c.l.b16 %v451
  %v1932 = vunpack.c.h.b16 %v451
  %v1933 = vunpack.c.l.b16 %v452
  %v1934 = vunpack.c.h.b16 %v452
  %v1935 = vunpack.c.l.b16 %v453
  %v1936 = vunpack.c.h.b16 %v453
  %v1937 = vunpack.c.l.b16 %v454
  %v1938 = vunpack.c.h.b16 %v454
  %v1939 = vunpack.c.l.b16 %v455
  %v1940 = vunpack.c.h.b16 %v455
  %v1941 = vunpack.c.l.b16 %v456
  %v1942 = vunpack.c.h.b16 %v456
  %v1943 = vunpack.c.l.b16 %v457
  %v1944 = vunpack.c.h.b16 %v457
  %v1945 = vunpack.c.l.b16 %v458
  %v1946 = vunpack.c.h.b16 %v458
  %v1947 = vunpack.c.l.b16 %v459
  %v1948 = vunpack.c.h.b16 %v459
  %v1949 = vunpack.c.l.b16 %v460
  %v1950 = vunpack.c.h.b16 %v460
  %v1951 = vunpack.c.l.b16 %v461
  %v1952 = vunpack.c.h.b16 %v461
  %v1953 = vunpack.c.l.b16 %v462
  %v1954 = vunpack.c.h.b16 %v462
  %v1955 = vunpack.c.l.b16 %v463
  %v1956 = vunpack.c.h.b16 %v463
  %v1957 = vunpack.c.l.b16 %v464
  %v1958 = vunpack.c.h.b16 %v464
  %v1959 = vunpack.c.l.b16 %v465
  %v1960 = vunpack.c.h.b16 %v465
  %v1961 = vunpack.c.l.b16 %v466
  %v1962 = vunpack.c.h.b16 %v466
  %v1963 = vunpack.c.l.b16 %v467
  %v1964 = vunpack.c.h.b16 %v467
  %v1965 = vunpack.c.l.b16 %v468
  %v1966 = vunpack.c.h.b16 %v468
  %v1967 = vunpack.c.l.b16 %v469
  %v1968 = vunpack.c.h.b16 %v469
  %v1969 = vunpack.c.l.b16 %v470
  %v1970 = vunpack.c.h.b16 %v470
  %v1971 = vunpack.c.l.b16 %v471
  %v1972 = vunpack.c.h.b16 %v471
  %v1973 = vunpack.c.l.b16 %v472
  %v1974 = vunpack.c.h.b16 %v472
  %v1975 = vunpack.c.l.b16 %v473
  %v1976 = vunpack.c.h.b16 %v473
  %v1977 = vunpack.c.l.b16 %v474
  %v1978 = vunpack.c.h.b16 %v474
  %v1979 = vunpack.c.l.b16 %v475
  %v1980 = vunpack.c.h.b16 %v475
  %v1981 = vunpack.c.l.b16 %v476
  %v1982 = vunpack.c.h.b16 %v476
  %v1983 = vunpack.c.l.b16 %v477
  %v1984 = vunpack.c.h.b16 %v477
  %v1985 = vunpack.c.l.b16 %v478
  %v1986 = vunpack.c.h.b16 %v478
  %v1987 = vunpack.c.l.b16 %v479
  %v1988 = vunpack.c.h.b16 %v479
  %v1989 = vunpack.c.l.b16 %v480
  %v1990 = vunpack.c.h.b16 %v480
  %v1991 = vunpack.c.l.b16 %v481
  %v1992 = vunpack.c.h.b16 %v481
  %v1993 = vunpack.c.l.b16 %v482
  %v1994 = vunpack.c.h.b16 %v482
  %v1995 = vunpack.c.l.b16 %v483
  %v1996 = vunpack.c.h.b16 %v483
  %v1997 = vunpack.c.l.b16 %v484
  %v1998 = vunpack.c.h.b16 %v484
  %v1999 = vunpack.c.l.b16 %v485
  %v2000 = vunpack.c.h.b16 %v485
  %v2001 = vunpack.c.l.b16 %v486
  %v2002 = vunpack.c.h.b16 %v486
  %v2003 = vunpack.c.l.b16 %v487
  %v2004 = vunpack.c.h.b16 %v487
  %v2005 = vunpack.c.l.b16 %v488
  %v2006 = vunpack.c.h.b16 %v488
  %v2007 = vunpack.c.l.b16 %v489
  %v2008 = vunpack.c.h.b16 %v489
  %v2009 = vunpack.c.l.b16 %v490
  %v2010 = vunpack.c.h.b16 %v490
  %v2011 = vunpack.c.l.b16 %v491
  %v2012 = vunpack.c.h.b16 %v491
  %v2013 = vunpack.c.l.b16 %v492
  %v2014 = vunpack.c.h.b16 %v492
  %v2015 = vunpack.c.l.b16 %v493
  %v2016 = vunpack.c.h.b16 %v493
  %v2017 = vunpack.c.l.b16 %v494
  %v2018 = vunpack.c.h.b16 %v494
  %v2019 = vunpack.c.l.b16 %v495
  %v2020 = vunpack.c.h.b16 %v495
  %v2021 = vunpack.c.l.b16 %v496
  %v2022 = vunpack.c.h.b16 %v496
  %v2023 = vunpack.c.l.b16 %v497
  %v2024 = vunpack.c.h.b16 %v497
  %v2025 = vunpack.c.l.b16 %v498
  %v2026 = vunpack.c.h.b16 %v498
  %v2027 = vunpack.c.l.b16 %v499
  %v2028 = vunpack.c.h.b16 %v499
  %v2029 = vunpack.c.l.b16 %v500
  %v2030 = vunpack.c.h.b16 %v500
  %v2031 = vunpack.c.l.b16 %v501
  %v2032 = vunpack.c.h.b16 %v501
  %v2033 = vunpack.c.l.b16 %v502
  %v2034 = vunpack.c.h.b16 %v502
  %v2035 = vunpack.c.l.b16 %v503
  %v2036 = vunpack.c.h.b16 %v503
  %v2037 = vunpack.c.l.b16 %v504
  %v2038 = vunpack.c.h.b16 %v504
  %v2039 = vunpack.c.l.b16 %v505
  %v2040 = vunpack.c.h.b16 %v505
  %v2041 = vunpack.c.l.b16 %v506
  %v2042 = vunpack.c.h.b16 %v506
  %v2043 = vunpack.c.l.b16 %v507
  %v2044 = vunpack.c.h.b16 %v507
  %v2045 = vunpack.c.l.b16 %v508
  %v2046 = vunpack.c.h.b16 %v508
  %v2047 = vunpack.c.l.b16 %v509
  %v2048 = vunpack.c.h.b16 %v509
  %v2049 = vunpack.c.l.b16 %v510
  %v2050 = vunpack.c.h.b16 %v510
  %v2051 = vunpack.c.l.b16 %v511
  %v2052 = vunpack.c.h.b16 %v511
  %v2053 = vunpack.c.l.b16 %v512
  %v2054 = vunpack.c.h.b16 %v512
  %v2055 = vunpack.c.l.b16 %v513
  %v2056 = vunpack.c.h.b16 %v513
  %v2057 = vunpack.c.l.b16 %v514
  %v2058 = vunpack.c.h.b16 %v514
  %v2059 = vunpack.c.l.b16 %v515
  %v2060 = vunpack.c.h.b16 %v515
  %v2061 = vunpack.c.l.b16 %v516
  %v2062 = vunpack.c.h.b16 %v516
  %v2063 = vunpack.c.l.b16 %v517
  %v2064 = vunpack.c.h.b16 %v517
  %v2065 = vunpack.c.l.b16 %v518
  %v2066 = vunpack.c.h.b16 %v518
  %v2067 = vunpack.c.l.b16 %v519
  %v2068 = vunpack.c.h.b16 %v519
  %v2069 = vunpack.c.l.b16 %v520
  %v2070 = vunpack.c.h.b16 %v520
  %v2071 = vunpack.c.l.b16 %v521
  %v2072 = vunpack.c.h.b16 %v521
  %v2073 = vunpack.c.l.b16 %v522
  %v2074 = vunpack.c.h.b16 %v522
  %v2075 = vunpack.c.l.b16 %v523
  %v2076 = vunpack.c.h.b16 %v523
  %v2077 = vunpack.c.l.b16 %v524
  %v2078 = vunpack.c.h.b16 %v524
  %v2079 = vunpack.c.l.b16 %v525
  %v2080 = vunpack.c.h.b16 %v525
  %v2081 = vunpack.c.l.b16 %v526
  %v2082 = vunpack.c.h.b16 %v526
  %v2083 = vunpack.c.l.b16 %v527
  %v2084 = vunpack.c.h.b16 %v527
  %v2085 = vunpack.c.l.b16 %v528
  %v2086 = vunpack.c.h.b16 %v528
  %v2087 = vunpack.c.l.b16 %v529
  %v2088 = vunpack.c.h.b16 %v529
  %v2089 = vunpack.c.l.b16 %v530
  %v2090 = vunpack.c.h.b16 %v530
  %v2091 = vunpack.c.l.b16 %v531
  %v2092 = vunpack.c.h.b16 %v531
  %v2093 = vunpack.c.l.b16 %v532
  %v2094 = vunpack.c.h.b16 %v532
  %v2095 = vunpack.c.l.b16 %v533
  %v2096 = vunpack.c.h.b16 %v533
  %v2097 = vunpack.c.l.b16 %v534
  %v2098 = vunpack.c.h.b16 %v534
  %v2099 = vunpack.c.l.b16 %v535
  %v2100 = vunpack.c.h.b16 %v535
  %v2101 = vunpack.c.l.b16 %v536
  %v2102 = vunpack.c.h.b16 %v536
  %v2103 = vunpack.c.l.b16 %v537
  %v2104 = vunpack.c.h.b16 %v537
  %v2105 = vunpack.c.l.b16 %v538
  %v2106 = vunpack.c.h.b16 %v538
  %v2107 = vunpack.c.l.b16 %v539
  %v2108 = vunpack.c.h.b16 %v539
  %v2109 = vunpack.c.l.b16 %v540
  %v2110 = vunpack.c.h.b16 %v540
  %v2111 = vunpack.c.l.b16 %v541
  %v2112 = vunpack.c.h.b16 %v541
  %v2113 = vunpack.c.l.b16 %v542
  %v2114 = vunpack.c.h.b16 %v542
  %v2115 = vunpack.c.l.b16 %v543
  %v2116 = vunpack.c.h.b16 %v543
  %v2117 = vunpack.c.l.b16 %v544
  %v2118 = vunpack.c.h.b16 %v544
  %v2119 = vunpack.c.l.b16 %v545
  %v2120 = vunpack.c.h.b16 %v545
  %v2121 = vunpack.c.l.b16 %v546
  %v2122 = vunpack.c.h.b16 %v546
  %v2123 = vunpack.c.l.b16 %v547
  %v2124 = vunpack.c.h.b16 %v547
  %v2125 = vunpack.c.l.b16 %v548
  %v2126 = vunpack.c.h.b16 %v548
  %v2127 = vpack.c.b16 %v1111, %v1103
  %v2128 = vpack.c.b16 %v1112, %v1104
  %v2129 = vpack.c.b16 %v1113, %v1105
  %v2130 = vpack.c.b16 %v1114, %v1106
  %v2131 = vpack.c.b16 %v1115, %v1107
  %v2132 = vpack.c.b16 %v1116, %v1108
  %v2133 = vpack.c.b16 %v1117, %v1109
  %v2134 = vpack.c.b16 %v1118, %v1110
  %v2135 = vpack.c.b16 %v1127, %v1119
  %v2136 = vpack.c.b16 %v1128, %v1120
  %v2137 = vpack.c.b16 %v1129, %v1121
  %v2138 = vpack.c.b16 %v1130, %v1122
  %v2139 = vpack.c.b16 %v1131, %v1123
  %v2140 = vpack.c.b16 %v1132, %v1124
  %v2141 = vpack.c.b16 %v1133, %v1125
  %v2142 = vpack.c.b16 %v1134, %v1126
  %v2143 = vpack.c.b16 %v1143, %v1135
  %v2144 = vpack.c.b16 %v1144, %v1136
  %v2145 = vpack.c.b16 %v1145, %v1137
  %v2146 = vpack.c.b16 %v1146, %v1138
  %v2147 = vpack.c.b16 %v1147, %v1139
  %v2148 = vpack.c.b16 %v1148, %v1140
  %v2149 = vpack.c.b16 %v1149, %v1141
  %v2150 = vpack.c.b16 %v1150, %v1142
  %v2151 = vpack.c.b16 %v1159, %v1151
  %v2152 = vpack.c.b16 %v1160, %v1152
  %v2153 = vpack.c.b16 %v1161, %v1153
  %v2154 = vpack.c.b16 %v1162, %v1154
  %v2155 = vpack.c.b16 %v1163, %v1155
  %v2156 = vpack.c.b16 %v1164, %v1156
  %v2157 = vpack.c.b16 %v1165, %v1157
  %v2158 = vpack.c.b16 %v1166, %v1158
  %v2159 = vpack.c.b16 %v1175, %v1167
  %v2160 = vpack.c.b16 %v1176, %v1168
  %v2161 = vpack.c.b16 %v1177, %v1169
  %v2162 = vpack.c.b16 %v1178, %v1170
  %v2163 = vpack.c.b16 %v1179, %v1171
  %v2164 = vpack.c.b16 %v1180, %v1172
  %v2165 = vpack.c.b16 %v1181, %v1173
  %v2166 = vpack.c.b16 %v1182, %v1174
  %v2167 = vpack.c.b16 %v1191, %v1183
  %v2168 = vpack.c.b16 %v1192, %v1184
  %v2169 = vpack.c.b16 %v1193, %v1185
  %v2170 = vpack.c.b16 %v1194, %v1186
  %v2171 = vpack.c.b16 %v1195, %v1187
  %v2172 = vpack.c.b16 %v1196, %v1188
  %v2173 = vpack.c.b16 %v1197, %v1189
  %v2174 = vpack.c.b16 %v1198, %v1190
  %v2175 = vpack.c.b16 %v1207, %v1199
  %v2176 = vpack.c.b16 %v1208, %v1200
  %v2177 = vpack.c.b16 %v1209, %v1201
  %v2178 = vpack.c.b16 %v1210, %v1202
  %v2179 = vpack.c.b16 %v1211, %v1203
  %v2180 = vpack.c.b16 %v1212, %v1204
  %v2181 = vpack.c.b16 %v1213, %v1205
  %v2182 = vpack.c.b16 %v1214, %v1206
  %v2183 = vpack.c.b16 %v1223, %v1215
  %v2184 = vpack.c.b16 %v1224, %v1216
  %v2185 = vpack.c.b16 %v1225, %v1217
  %v2186 = vpack.c.b16 %v1226, %v1218
  %v2187 = vpack.c.b16 %v1227, %v1219
  %v2188 = vpack.c.b16 %v1228, %v1220
  %v2189 = vpack.c.b16 %v1229, %v1221
  %v2190 = vpack.c.b16 %v1230, %v1222
  %v2191 = vpack.c.b16 %v1239, %v1231
  %v2192 = vpack.c.b16 %v1240, %v1232
  %v2193 = vpack.c.b16 %v1241, %v1233
  %v2194 = vpack.c.b16 %v1242, %v1234
  %v2195 = vpack.c.b16 %v1243, %v1235
  %v2196 = vpack.c.b16 %v1244, %v1236
  %v2197 = vpack.c.b16 %v1245, %v1237
  %v2198 = vpack.c.b16 %v1246, %v1238
  %v2199 = vpack.c.b16 %v1255, %v1247
  %v2200 = vpack.c.b16 %v1256, %v1248
  %v2201 = vpack.c.b16 %v1257, %v1249
  %v2202 = vpack.c.b16 %v1258, %v1250
  %v2203 = vpack.c.b16 %v1259, %v1251
  %v2204 = vpack.c.b16 %v1260, %v1252
  %v2205 = vpack.c.b16 %v1261, %v1253
  %v2206 = vpack.c.b16 %v1262, %v1254
  %v2207 = vpack.c.b16 %v1271, %v1263
  %v2208 = vpack.c.b16 %v1272, %v1264
  %v2209 = vpack.c.b16 %v1273, %v1265
  %v2210 = vpack.c.b16 %v1274, %v1266
  %v2211 = vpack.c.b16 %v1275, %v1267
  %v2212 = vpack.c.b16 %v1276, %v1268
  %v2213 = vpack.c.b16 %v1277, %v1269
  %v2214 = vpack.c.b16 %v1278, %v1270
  %v2215 = vpack.c.b16 %v1287, %v1279
  %v2216 = vpack.c.b16 %v1288, %v1280
  %v2217 = vpack.c.b16 %v1289, %v1281
  %v2218 = vpack.c.b16 %v1290, %v1282
  %v2219 = vpack.c.b16 %v1291, %v1283
  %v2220 = vpack.c.b16 %v1292, %v1284
  %v2221 = vpack.c.b16 %v1293, %v1285
  %v2222 = vpack.c.b16 %v1294, %v1286
  %v2223 = vpack.c.b16 %v1303, %v1295
  %v2224 = vpack.c.b16 %v1304, %v1296
  %v2225 = vpack.c.b16 %v1305, %v1297
  %v2226 = vpack.c.b16 %v1306, %v1298
  %v2227 = vpack.c.b16 %v1307, %v1299
  %v2228 = vpack.c.b16 %v1308, %v1300
  %v2229 = vpack.c.b16 %v1309, %v1301
  %v2230 = vpack.c.b16 %v1310, %v1302
  %v2231 = vpack.c.b16 %v1319, %v1311
  %v2232 = vpack.c.b16 %v1320, %v1312
  %v2233 = vpack.c.b16 %v1321, %v1313
  %v2234 = vpack.c.b16 %v1322, %v1314
  %v2235 = vpack.c.b16 %v1323, %v1315
  %v2236 = vpack.c.b16 %v1324, %v1316
  %v2237 = vpack.c.b16 %v1325, %v1317
  %v2238 = vpack.c.b16 %v1326, %v1318
  %v2239 = vpack.c.b16 %v1335, %v1327
  %v2240 = vpack.c.b16 %v1336, %v1328
  %v2241 = vpack.c.b16 %v1337, %v1329
  %v2242 = vpack.c.b16 %v1338, %v1330
  %v2243 = vpack.c.b16 %v1339, %v1331
  %v2244 = vpack.c.b16 %v1340, %v1332
  %v2245 = vpack.c.b16 %v1341, %v1333
  %v2246 = vpack.c.b16 %v1342, %v1334
  %v2247 = vpack.c.b16 %v1351, %v1343
  %v2248 = vpack.c.b16 %v1352, %v1344
  %v2249 = vpack.c.b16 %v1353, %v1345
  %v2250 = vpack.c.b16 %v1354, %v1346
  %v2251 = vpack.c.b16 %v1355, %v1347
  %v2252 = vpack.c.b16 %v1356, %v1348
  %v2253 = vpack.c.b16 %v1357, %v1349
  %v2254 = vpack.c.b16 %v1358, %v1350
  %v2255 = vpack.c.b16 %v1367, %v1359
  %v2256 = vpack.c.b16 %v1368, %v1360
  %v2257 = vpack.c.b16 %v1369, %v1361
  %v2258 = vpack.c.b16 %v1370, %v1362
  %v2259 = vpack.c.b16 %v1371, %v1363
  %v2260 = vpack.c.b16 %v1372, %v1364
  %v2261 = vpack.c.b16 %v1373, %v1365
  %v2262 = vpack.c.b16 %v1374, %v1366
  %v2263 = vpack.c.b16 %v1383, %v1375
  %v2264 = vpack.c.b16 %v1384, %v1376
  %v2265 = vpack.c.b16 %v1385, %v1377
  %v2266 = vpack.c.b16 %v1386, %v1378
  %v2267 = vpack.c.b16 %v1387, %v1379
  %v2268 = vpack.c.b16 %v1388, %v1380
  %v2269 = vpack.c.b16 %v1389, %v1381
  %v2270 = vpack.c.b16 %v1390, %v1382
  %v2271 = vpack.c.b16 %v1399, %v1391
  %v2272 = vpack.c.b16 %v1400, %v1392
  %v2273 = vpack.c.b16 %v1401, %v1393
  %v2274 = vpack.c.b16 %v1402, %v1394
  %v2275 = vpack.c.b16 %v1403, %v1395
  %v2276 = vpack.c.b16 %v1404, %v1396
  %v2277 = vpack.c.b16 %v1405, %v1397
  %v2278 = vpack.c.b16 %v1406, %v1398
  %v2279 = vpack.c.b16 %v1415, %v1407
  %v2280 = vpack.c.b16 %v1416, %v1408
  %v2281 = vpack.c.b16 %v1417, %v1409
  %v2282 = vpack.c.b16 %v1418, %v1410
  %v2283 = vpack.c.b16 %v1419, %v1411
  %v2284 = vpack.c.b16 %v1420, %v1412
  %v2285 = vpack.c.b16 %v1421, %v1413
  %v2286 = vpack.c.b16 %v1422, %v1414
  %v2287 = vpack.c.b16 %v1431, %v1423
  %v2288 = vpack.c.b16 %v1432, %v1424
  %v2289 = vpack.c.b16 %v1433, %v1425
  %v2290 = vpack.c.b16 %v1434, %v1426
  %v2291 = vpack.c.b16 %v1435, %v1427
  %v2292 = vpack.c.b16 %v1436, %v1428
  %v2293 = vpack.c.b16 %v1437, %v1429
  %v2294 = vpack.c.b16 %v1438, %v1430
  %v2295 = vpack.c.b16 %v1447, %v1439
  %v2296 = vpack.c.b16 %v1448, %v1440
  %v2297 = vpack.c.b16 %v1449, %v1441
  %v2298 = vpack.c.b16 %v1450, %v1442
  %v2299 = vpack.c.b16 %v1451, %v1443
  %v2300 = vpack.c.b16 %v1452, %v1444
  %v2301 = vpack.c.b16 %v1453, %v1445
  %v2302 = vpack.c.b16 %v1454, %v1446
  %v2303 = vpack.c.b16 %v1463, %v1455
  %v2304 = vpack.c.b16 %v1464, %v1456
  %v2305 = vpack.c.b16 %v1465, %v1457
  %v2306 = vpack.c.b16 %v1466, %v1458
  %v2307 = vpack.c.b16 %v1467, %v1459
  %v2308 = vpack.c.b16 %v1468, %v1460
  %v2309 = vpack.c.b16 %v1469, %v1461
  %v2310 = vpack.c.b16 %v1470, %v1462
  %v2311 = vpack.c.b16 %v1479, %v1471
  %v2312 = vpack.c.b16 %v1480, %v1472
  %v2313 = vpack.c.b16 %v1481, %v1473
  %v2314 = vpack.c.b16 %v1482, %v1474
  %v2315 = vpack.c.b16 %v1483, %v1475
  %v2316 = vpack.c.b16 %v1484, %v1476
  %v2317 = vpack.c.b16 %v1485, %v1477
  %v2318 = vpack.c.b16 %v1486, %v1478
  %v2319 = vpack.c.b16 %v1495, %v1487
  %v2320 = vpack.c.b16 %v1496, %v1488
  %v2321 = vpack.c.b16 %v1497, %v1489
  %v2322 = vpack.c.b16 %v1498, %v1490
  %v2323 = vpack.c.b16 %v1499, %v1491
  %v2324 = vpack.c.b16 %v1500, %v1492
  %v2325 = vpack.c.b16 %v1501, %v1493
  %v2326 = vpack.c.b16 %v1502, %v1494
  %v2327 = vpack.c.b16 %v1511, %v1503
  %v2328 = vpack.c.b16 %v1512, %v1504
  %v2329 = vpack.c.b16 %v1513, %v1505
  %v2330 = vpack.c.b16 %v1514, %v1506
  %v2331 = vpack.c.b16 %v1515, %v1507
  %v2332 = vpack.c.b16 %v1516, %v1508
  %v2333 = vpack.c.b16 %v1517, %v1509
  %v2334 = vpack.c.b16 %v1518, %v1510
  %v2335 = vpack.c.b16 %v1527, %v1519
  %v2336 = vpack.c.b16 %v1528, %v1520
  %v2337 = vpack.c.b16 %v1529, %v1521
  %v2338 = vpack.c.b16 %v1530, %v1522
  %v2339 = vpack.c.b16 %v1531, %v1523
  %v2340 = vpack.c.b16 %v1532, %v1524
  %v2341 = vpack.c.b16 %v1533, %v1525
  %v2342 = vpack.c.b16 %v1534, %v1526
  %v2343 = vpack.c.b16 %v1543, %v1535
  %v2344 = vpack.c.b16 %v1544, %v1536
  %v2345 = vpack.c.b16 %v1545, %v1537
  %v2346 = vpack.c.b16 %v1546, %v1538
  %v2347 = vpack.c.b16 %v1547, %v1539
  %v2348 = vpack.c.b16 %v1548, %v1540
  %v2349 = vpack.c.b16 %v1549, %v1541
  %v2350 = vpack.c.b16 %v1550, %v1542
  %v2351 = vpack.c.b16 %v1559, %v1551
  %v2352 = vpack.c.b16 %v1560, %v1552
  %v2353 = vpack.c.b16 %v1561, %v1553
  %v2354 = vpack.c.b16 %v1562, %v1554
  %v2355 = vpack.c.b16 %v1563, %v1555
  %v2356 = vpack.c.b16 %v1564, %v1556
  %v2357 = vpack.c.b16 %v1565, %v1557
  %v2358 = vpack.c.b16 %v1566, %v1558
  %v2359 = vpack.c.b16 %v1575, %v1567
  %v2360 = vpack.c.b16 %v1576, %v1568
  %v2361 = vpack.c.b16 %v1577, %v1569
  %v2362 = vpack.c.b16 %v1578, %v1570
  %v2363 = vpack.c.b16 %v1579, %v1571
  %v2364 = vpack.c.b16 %v1580, %v1572
  %v2365 = vpack.c.b16 %v1581, %v1573
  %v2366 = vpack.c.b16 %v1582, %v1574
  %v2367 = vpack.c.b16 %v1591, %v1583
  %v2368 = vpack.c.b16 %v1592, %v1584
  %v2369 = vpack.c.b16 %v1593, %v1585
  %v2370 = vpack.c.b16 %v1594, %v1586
  %v2371 = vpack.c.b16 %v1595, %v1587
  %v2372 = vpack.c.b16 %v1596, %v1588
  %v2373 = vpack.c.b16 %v1597, %v1589
  %v2374 = vpack.c.b16 %v1598, %v1590
  %v2375 = vpack.c.b16 %v1607, %v1599
  %v2376 = vpack.c.b16 %v1608, %v1600
  %v2377 = vpack.c.b16 %v1609, %v1601
  %v2378 = vpack.c.b16 %v1610, %v1602
  %v2379 = vpack.c.b16 %v1611, %v1603
  %v2380 = vpack.c.b16 %v1612, %v1604
  %v2381 = vpack.c.b16 %v1613, %v1605
  %v2382 = vpack.c.b16 %v1614, %v1606
  %v2383 = vpack.c.b16 %v1623, %v1615
  %v2384 = vpack.c.b16 %v1624, %v1616
  %v2385 = vpack.c.b16 %v1625, %v1617
  %v2386 = vpack.c.b16 %v1626, %v1618
  %v2387 = vpack.c.b16 %v1627, %v1619
  %v2388 = vpack.c.b16 %v1628, %v1620
  %v2389 = vpack.c.b16 %v1629, %v1621
  %v2390 = vpack.c.b16 %v1630, %v1622
  %v2391 = vpack.c.b16 %v1639, %v1631
  %v2392 = vpack.c.b16 %v1640, %v1632
  %v2393 = vpack.c.b16 %v1641, %v1633
  %v2394 = vpack.c.b16 %v1642, %v1634
  %v2395 = vpack.c.b16 %v1643, %v1635
  %v2396 = vpack.c.b16 %v1644, %v1636
  %v2397 = vpack.c.b16 %v1645, %v1637
  %v2398 = vpack.c.b16 %v1646, %v1638
  %v2399 = vpack.c.b16 %v1655, %v1647
  %v2400 = vpack.c.b16 %v1656, %v1648
  %v2401 = vpack.c.b16 %v1657, %v1649
  %v2402 = vpack.c.b16 %v1658, %v1650
  %v2403 = vpack.c.b16 %v1659, %v1651
  %v2404 = vpack.c.b16 %v1660, %v1652
  %v2405 = vpack.c.b16 %v1661, %v1653
  %v2406 = vpack.c.b16 %v1662, %v1654
  %v2407 = vpack.c.b16 %v1671, %v1663
  %v2408 = vpack.c.b16 %v1672, %v1664
  %v2409 = vpack.c.b16 %v1673, %v1665
  %v2410 = vpack.c.b16 %v1674, %v1666
  %v2411 = vpack.c.b16 %v1675, %v1667
  %v2412 = vpack.c.b16 %v1676, %v1668
  %v2413 = vpack.c.b16 %v1677, %v1669
  %v2414 = vpack.c.b16 %v1678, %v1670
  %v2415 = vpack.c.b16 %v1687, %v1679
  %v2416 = vpack.c.b16 %v1688, %v1680
  %v2417 = vpack.c.b16 %v1689, %v1681
  %v2418 = vpack.c.b16 %v1690, %v1682
  %v2419 = vpack.c.b16 %v1691, %v1683
  %v2420 = vpack.c.b16 %v1692, %v1684
  %v2421 = vpack.c.b16 %v1693, %v1685
  %v2422 = vpack.c.b16 %v1694, %v1686
  %v2423 = vpack.c.b16 %v1703, %v1695
  %v2424 = vpack.c.b16 %v1704, %v1696
  %v2425 = vpack.c.b16 %v1705, %v1697
  %v2426 = vpack.c.b16 %v1706, %v1698
  %v2427 = vpack.c.b16 %v1707, %v1699
  %v2428 = vpack.c.b16 %v1708, %v1700
  %v2429 = vpack.c.b16 %v1709, %v1701
  %v2430 = vpack.c.b16 %v1710, %v1702
  %v2431 = vpack.c.b16 %v1719, %v1711
  %v2432 = vpack.c.b16 %v1720, %v1712
  %v2433 = vpack.c.b16 %v1721, %v1713
  %v2434 = vpack.c.b16 %v1722, %v1714
  %v2435 = vpack.c.b16 %v1723, %v1715
  %v2436 = vpack.c.b16 %v1724, %v1716
  %v2437 = vpack.c.b16 %v1725, %v1717
  %v2438 = vpack.c.b16 %v1726, %v1718
  %v2439 = vpack.c.b16 %v1735, %v1727
  %v2440 = vpack.c.b16 %v1736, %v1728
  %v2441 = vpack.c.b16 %v1737, %v1729
  %v2442 = vpack.c.b16 %v1738, %v1730
  %v2443 = vpack.c.b16 %v1739, %v1731
  %v2444 = vpack.c.b16 %v1740, %v1732
  %v2445 = vpack.c.b16 %v1741, %v1733
  %v2446 = vpack.c.b16 %v1742, %v1734
  %v2447 = vpack.c.b16 %v1751, %v1743
  %v2448 = vpack.c.b16 %v1752, %v1744
  %v2449 = vpack.c.b16 %v1753, %v1745
  %v2450 = vpack.c.b16 %v1754, %v1746
  %v2451 = vpack.c.b16 %v1755, %v1747
  %v2452 = vpack.c.b16 %v1756, %v1748
  %v2453 = vpack.c.b16 %v1757, %v1749
  %v2454 = vpack.c.b16 %v1758, %v1750
  %v2455 = vpack.c.b16 %v1767, %v1759
  %v2456 = vpack.c.b16 %v1768, %v1760
  %v2457 = vpack.c.b16 %v1769, %v1761
  %v2458 = vpack.c.b16 %v1770, %v1762
  %v2459 = vpack.c.b16 %v1771, %v1763
  %v2460 = vpack.c.b16 %v1772, %v1764
  %v2461 = vpack.c.b16 %v1773, %v1765
  %v2462 = vpack.c.b16 %v1774, %v1766
  %v2463 = vpack.c.b16 %v1783, %v1775
  %v2464 = vpack.c.b16 %v1784, %v1776
  %v2465 = vpack.c.b16 %v1785, %v1777
  %v2466 = vpack.c.b16 %v1786, %v1778
  %v2467 = vpack.c.b16 %v1787, %v1779
  %v2468 = vpack.c.b16 %v1788, %v1780
  %v2469 = vpack.c.b16 %v1789, %v1781
  %v2470 = vpack.c.b16 %v1790, %v1782
  %v2471 = vpack.c.b16 %v1799, %v1791
  %v2472 = vpack.c.b16 %v1800, %v1792
  %v2473 = vpack.c.b16 %v1801, %v1793
  %v2474 = vpack.c.b16 %v1802, %v1794
  %v2475 = vpack.c.b16 %v1803, %v1795
  %v2476 = vpack.c.b16 %v1804, %v1796
  %v2477 = vpack.c.b16 %v1805, %v1797
  %v2478 = vpack.c.b16 %v1806, %v1798
  %v2479 = vpack.c.b16 %v1815, %v1807
  %v2480 = vpack.c.b16 %v1816, %v1808
  %v2481 = vpack.c.b16 %v1817, %v1809
  %v2482 = vpack.c.b16 %v1818, %v1810
  %v2483 = vpack.c.b16 %v1819, %v1811
  %v2484 = vpack.c.b16 %v1820, %v1812
  %v2485 = vpack.c.b16 %v1821, %v1813
  %v2486 = vpack.c.b16 %v1822, %v1814
  %v2487 = vpack.c.b16 %v1831, %v1823
  %v2488 = vpack.c.b16 %v1832, %v1824
  %v2489 = vpack.c.b16 %v1833, %v1825
  %v2490 = vpack.c.b16 %v1834, %v1826
  %v2491 = vpack.c.b16 %v1835, %v1827
  %v2492 = vpack.c.b16 %v1836, %v1828
  %v2493 = vpack.c.b16 %v1837, %v1829
  %v2494 = vpack.c.b16 %v1838, %v1830
  %v2495 = vpack.c.b16 %v1847, %v1839
  %v2496 = vpack.c.b16 %v1848, %v1840
  %v2497 = vpack.c.b16 %v1849, %v1841
  %v2498 = vpack.c.b16 %v1850, %v1842
  %v2499 = vpack.c.b16 %v1851, %v1843
  %v2500 = vpack.c.b16 %v1852, %v1844
  %v2501 = vpack.c.b16 %v1853, %v1845
  %v2502 = vpack.c.b16 %v1854, %v1846
  %v2503 = vpack.c.b16 %v1863, %v1855
  %v2504 = vpack.c.b16 %v1864, %v1856
  %v2505 = vpack.c.b16 %v1865, %v1857
  %v2506 = vpack.c.b16 %v1866, %v1858
  %v2507 = vpack.c.b16 %v1867, %v1859
  %v2508 = vpack.c.b16 %v1868, %v1860
  %v2509 = vpack.c.b16 %v1869, %v1861
  %v2510 = vpack.c.b16 %v1870, %v1862
  %v2511 = vpack.c.b16 %v1879, %v1871
  %v2512 = vpack.c.b16 %v1880, %v1872
  %v2513 = vpack.c.b16 %v1881, %v1873
  %v2514 = vpack.c.b16 %v1882, %v1874
  %v2515 = vpack.c.b16 %v1883, %v1875
  %v2516 = vpack.c.b16 %v1884, %v1876
  %v2517 = vpack.c.b16 %v1885, %v1877
  %v2518 = vpack.c.b16 %v1886, %v1878
  %v2519 = vpack.c.b16 %v1895, %v1887
  %v2520 = vpack.c.b16 %v1896, %v1888
  %v2521 = vpack.c.b16 %v1897, %v1889
  %v2522 = vpack.c.b16 %v1898, %v1890
  %v2523 = vpack.c.b16 %v1899, %v1891
  %v2524 = vpack.c.b16 %v1900, %v1892
  %v2525 = vpack.c.b16 %v1901, %v1893
  %v2526 = vpack.c.b16 %v1902, %v1894
  %v2527 = vpack.c.b16 %v1911, %v1903
  %v2528 = vpack.c.b16 %v1912, %v1904
  %v2529 = vpack.c.b16 %v1913, %v1905
  %v2530 = vpack.c.b16 %v1914, %v1906
  %v2531 = vpack.c.b16 %v1915, %v1907
  %v2532 = vpack.c.b16 %v1916, %v1908
  %v2533 = vpack.c.b16 %v1917, %v1909
  %v2534 = vpack.c.b16 %v1918, %v1910
  %v2535 = vpack.c.b16 %v1927, %v1919
  %v2536 = vpack.c.b16 %v1928, %v1920
  %v2537 = vpack.c.b16 %v1929, %v1921
  %v2538 = vpack.c.b16 %v1930, %v1922
  %v2539 = vpack.c.b16 %v1931, %v1923
  %v2540 = vpack.c.b16 %v1932, %v1924
  %v2541 = vpack.c.b16 %v1933, %v1925
  %v2542 = vpack.c.b16 %v1934, %v1926
  %v2543 = vpack.c.b16 %v1943, %v1935
  %v2544 = vpack.c.b16 %v1944, %v1936
  %v2545 = vpack.c.b16 %v1945, %v1937
  %v2546 = vpack.c.b16 %v1946, %v1938
  %v2547 = vpack.c.b16 %v1947, %v1939
  %v2548 = vpack.c.b16 %v1948, %v1940
  %v2549 = vpack.c.b16 %v1949, %v1941
  %v2550 = vpack.c.b16 %v1950, %v1942
  %v2551 = vpack.c.b16 %v1959, %v1951
  %v2552 = vpack.c.b16 %v1960, %v1952
  %v2553 = vpack.c.b16 %v1961, %v1953
  %v2554 = vpack.c.b16 %v1962, %v1954
  %v2555 = vpack.c.b16 %v1963, %v1955
  %v2556 = vpack.c.b16 %v1964, %v1956
  %v2557 = vpack.c.b16 %v1965, %v1957
  %v2558 = vpack.c.b16 %v1966, %v1958
  %v2559 = vpack.c.b16 %v1975, %v1967
  %v2560 = vpack.c.b16 %v1976, %v1968
  %v2561 = vpack.c.b16 %v1977, %v1969
  %v2562 = vpack.c.b16 %v1978, %v1970
  %v2563 = vpack.c.b16 %v1979, %v1971
  %v2564 = vpack.c.b16 %v1980, %v1972
  %v2565 = vpack.c.b16 %v1981, %v1973
  %v2566 = vpack.c.b16 %v1982, %v1974
  %v2567 = vpack.c.b16 %v1991, %v1983
  %v2568 = vpack.c.b16 %v1992, %v1984
  %v2569 = vpack.c.b16 %v1993, %v1985
  %v2570 = vpack.c.b16 %v1994, %v1986
  %v2571 = vpack.c.b16 %v1995, %v1987
  %v2572 = vpack.c.b16 %v1996, %v1988
  %v2573 = vpack.c.b16 %v1997, %v1989
  %v2574 = vpack.c.b16 %v1998, %v1990
  %v2575 = vpack.c.b16 %v2007, %v1999
  %v2576 = vpack.c.b16 %v2008, %v2000
  %v2577 = vpack.c.b16 %v2009, %v2001
  %v2578 = vpack.c.b16 %v2010, %v2002
  %v2579 = vpack.c.b16 %v2011, %v2003
  %v2580 = vpack.c.b16 %v2012, %v2004
  %v2581 = vpack.c.b16 %v2013, %v2005
  %v2582 = vpack.c.b16 %v2014, %v2006
  %v2583 = vpack.c.b16 %v2023, %v2015
  %v2584 = vpack.c.b16 %v2024, %v2016
  %v2585 = vpack.c.b16 %v2025, %v2017
  %v2586 = vpack.c.b16 %v2026, %v2018
  %v2587 = vpack.c.b16 %v2027, %v2019
  %v2588 = vpack.c.b16 %v2028, %v2020
  %v2589 = vpack.c.b16 %v2029, %v2021
  %v2590 = vpack.c.b16 %v2030, %v2022
  %v2591 = vpack.c.b16 %v2039, %v2031
  %v2592 = vpack.c.b16 %v2040, %v2032
  %v2593 = vpack.c.b16 %v2041, %v2033
  %v2594 = vpack.c.b16 %v2042, %v2034
  %v2595 = vpack.c.b16 %v2043, %v2035
  %v2596 = vpack.c.b16 %v2044, %v2036
  %v2597 = vpack.c.b16 %v2045, %v2037
  %v2598 = vpack.c.b16 %v2046, %v2038
  %v2599 = vpack.c.b16 %v2055, %v2047
  %v2600 = vpack.c.b16 %v2056, %v2048
  %v2601 = vpack.c.b16 %v2057, %v2049
  %v2602 = vpack.c.b16 %v2058, %v2050
  %v2603 = vpack.c.b16 %v2059, %v2051
  %v2604 = vpack.c.b16 %v2060, %v2052
  %v2605 = vpack.c.b16 %v2061, %v2053
  %v2606 = vpack.c.b16 %v2062, %v2054
  %v2607 = vpack.c.b16 %v2071, %v2063
  %v2608 = vpack.c.b16 %v2072, %v2064
  %v2609 = vpack.c.b16 %v2073, %v2065
  %v2610 = vpack.c.b16 %v2074, %v2066
  %v2611 = vpack.c.b16 %v2075, %v2067
  %v2612 = vpack.c.b16 %v2076, %v2068
  %v2613 = vpack.c.b16 %v2077, %v2069
  %v2614 = vpack.c.b16 %v2078, %v2070
  %v2615 = vpack.c.b16 %v2087, %v2079
  %v2616 = vpack.c.b16 %v2088, %v2080
  %v2617 = vpack.c.b16 %v2089, %v2081
  %v2618 = vpack.c.b16 %v2090, %v2082
  %v2619 = vpack.c.b16 %v2091, %v2083
  %v2620 = vpack.c.b16 %v2092, %v2084
  %v2621 = vpack.c.b16 %v2093, %v2085
  %v2622 = vpack.c.b16 %v2094, %v2086
  %v2623 = vpack.c.b16 %v2103, %v2095
  %v2624 = vpack.c.b16 %v2104, %v2096
  %v2625 = vpack.c.b16 %v2105, %v2097
  %v2626 = vpack.c.b16 %v2106, %v2098
  %v2627 = vpack.c.b16 %v2107, %v2099
  %v2628 = vpack.c.b16 %v2108, %v2100
  %v2629 = vpack.c.b16 %v2109, %v2101
  %v2630 = vpack.c.b16 %v2110, %v2102
  %v2631 = vpack.c.b16 %v2119, %v2111
  %v2632 = vpack.c.b16 %v2120, %v2112
  %v2633 = vpack.c.b16 %v2121, %v2113
  %v2634 = vpack.c.b16 %v2122, %v2114
  %v2635 = vpack.c.b16 %v2123, %v2115
  %v2636 = vpack.c.b16 %v2124, %v2116
  %v2637 = vpack.c.b16 %v2125, %v2117
  %v2638 = vpack.c.b16 %v2126, %v2118
  %3151 = vmatprep.subr.bf16.mxu0 %v2128
  %3152 = vmatpush1.bf16.msra.mxu0 %v2127
  %3153 = vmatprep.subr.bf16.mxu0 %v2136
  %3154 = vmatpush1.bf16.msra.mxu0 %v2135
  %3155 = vmatprep.subr.bf16.mxu0 %v2144
  %3156 = vmatpush1.bf16.msra.mxu0 %v2143
  %3157 = vmatprep.subr.bf16.mxu0 %v2152
  %3158 = vmatpush1.bf16.msra.mxu0 %v2151
  %3159 = vmatprep.subr.bf16.mxu0 %v2160
  %3160 = vmatpush1.bf16.msra.mxu0 %v2159
  %3161 = vmatprep.subr.bf16.mxu0 %v2168
  %3162 = vmatpush1.bf16.msra.mxu0 %v2167
  %3163 = vmatprep.subr.bf16.mxu0 %v2176
  %3164 = vmatpush1.bf16.msra.mxu0 %v2175
  %3165 = vmatprep.subr.bf16.mxu0 %v2184
  %3166 = vmatpush1.bf16.msra.mxu0 %v2183
  %3167 = vmatprep.subr.bf16.mxu0 %v2192
  %3168 = vmatpush1.bf16.msra.mxu0 %v2191
  %3169 = vmatprep.subr.bf16.mxu0 %v2200
  %3170 = vmatpush1.bf16.msra.mxu0 %v2199
  %3171 = vmatprep.subr.bf16.mxu0 %v2208
  %3172 = vmatpush1.bf16.msra.mxu0 %v2207
  %3173 = vmatprep.subr.bf16.mxu0 %v2216
  %3174 = vmatpush1.bf16.msra.mxu0 %v2215
  %3175 = vmatprep.subr.bf16.mxu0 %v2224
  %3176 = vmatpush1.bf16.msra.mxu0 %v2223
  %3177 = vmatprep.subr.bf16.mxu0 %v2232
  %3178 = vmatpush1.bf16.msra.mxu0 %v2231
  %3179 = vmatprep.subr.bf16.mxu0 %v2240
  %3180 = vmatpush1.bf16.msra.mxu0 %v2239
  %3181 = vmatprep.subr.bf16.mxu0 %v2248
  %3182 = vmatpush1.bf16.msra.mxu0 %v2247
  %3183 = vmatprep.mubr.bf16.mxu0 %v30
  %3184 = vmatmul.mubr.bf16.gmra.mrb[0].mxu0 %v29
  %v3185 = vpop.f32.mrb[0].mxu0
  %v3186 = vadd.f32 %v554, %v3185
  %v3187 = vpop.f32.mrb[0].mxu0
  %v3188 = vadd.f32 %v558, %v3187
  %v3189 = vpop.f32.mrb[0].mxu0
  %v3190 = vpop.f32.mrb[0].mxu0
  %3191 = vdwg.mxu0
  %3192 = vmatprep.subr.bf16.mxu0 %v2256
  %3193 = vmatpush1.bf16.msra.mxu0 %v2255
  %3194 = vmatprep.subr.bf16.mxu0 %v2264
  %3195 = vmatpush1.bf16.msra.mxu0 %v2263
  %3196 = vmatprep.subr.bf16.mxu0 %v2272
  %3197 = vmatpush1.bf16.msra.mxu0 %v2271
  %3198 = vmatprep.subr.bf16.mxu0 %v2280
  %3199 = vmatpush1.bf16.msra.mxu0 %v2279
  %3200 = vmatprep.subr.bf16.mxu0 %v2288
  %3201 = vmatpush1.bf16.msra.mxu0 %v2287
  %3202 = vmatprep.subr.bf16.mxu0 %v2296
  %3203 = vmatpush1.bf16.msra.mxu0 %v2295
  %3204 = vmatprep.subr.bf16.mxu0 %v2304
  %3205 = vmatpush1.bf16.msra.mxu0 %v2303
  %3206 = vmatprep.subr.bf16.mxu0 %v2312
  %3207 = vmatpush1.bf16.msra.mxu0 %v2311
  %3208 = vmatprep.subr.bf16.mxu0 %v2320
  %3209 = vmatpush1.bf16.msra.mxu0 %v2319
  %3210 = vmatprep.subr.bf16.mxu0 %v2328
  %3211 = vmatpush1.bf16.msra.mxu0 %v2327
  %3212 = vmatprep.subr.bf16.mxu0 %v2336
  %3213 = vmatpush1.bf16.msra.mxu0 %v2335
  %3214 = vmatprep.subr.bf16.mxu0 %v2344
  %3215 = vmatpush1.bf16.msra.mxu0 %v2343
  %3216 = vmatprep.subr.bf16.mxu0 %v2352
  %3217 = vmatpush1.bf16.msra.mxu0 %v2351
  %3218 = vmatprep.subr.bf16.mxu0 %v2360
  %3219 = vmatpush1.bf16.msra.mxu0 %v2359
  %3220 = vmatprep.subr.bf16.mxu0 %v2368
  %3221 = vmatpush1.bf16.msra.mxu0 %v2367
  %3222 = vmatprep.subr.bf16.mxu0 %v2376
  %3223 = vmatpush1.bf16.msra.mxu0 %v2375
  %3224 = vmatprep.mubr.bf16.mxu0 %v32
  %3225 = vmatmul.mubr.bf16.gmra.mrb[0].mxu0 %v31
  %v3226 = vpop.f32.mrb[0].mxu0
  %v3227 = vadd.f32 %v3186, %v3226
  %v3228 = vpop.f32.mrb[0].mxu0
  %v3229 = vadd.f32 %v3188, %v3228
  %v3230 = vpop.f32.mrb[0].mxu0
  %v3231 = vpop.f32.mrb[0].mxu0
  %3232 = vdwg.mxu0
  %3233 = vmatprep.subr.bf16.mxu0 %v2384
  %3234 = vmatpush1.bf16.msra.mxu0 %v2383
  %3235 = vmatprep.subr.bf16.mxu0 %v2392
  %3236 = vmatpush1.bf16.msra.mxu0 %v2391
  %3237 = vmatprep.subr.bf16.mxu0 %v2400
  %3238 = vmatpush1.bf16.msra.mxu0 %v2399
  %3239 = vmatprep.subr.bf16.mxu0 %v2408
  %3240 = vmatpush1.bf16.msra.mxu0 %v2407
  %3241 = vmatprep.subr.bf16.mxu0 %v2416
  %3242 = vmatpush1.bf16.msra.mxu0 %v2415
  %3243 = vmatprep.subr.bf16.mxu0 %v2424
  %3244 = vmatpush1.bf16.msra.mxu0 %v2423
  %3245 = vmatprep.subr.bf16.mxu0 %v2432
  %3246 = vmatpush1.bf16.msra.mxu0 %v2431
  %3247 = vmatprep.subr.bf16.mxu0 %v2440
  %3248 = vmatpush1.bf16.msra.mxu0 %v2439
  %3249 = vmatprep.subr.bf16.mxu0 %v2448
  %3250 = vmatpush1.bf16.msra.mxu0 %v2447
  %3251 = vmatprep.subr.bf16.mxu0 %v2456
  %3252 = vmatpush1.bf16.msra.mxu0 %v2455
  %3253 = vmatprep.subr.bf16.mxu0 %v2464
  %3254 = vmatpush1.bf16.msra.mxu0 %v2463
  %3255 = vmatprep.subr.bf16.mxu0 %v2472
  %3256 = vmatpush1.bf16.msra.mxu0 %v2471
  %3257 = vmatprep.subr.bf16.mxu0 %v2480
  %3258 = vmatpush1.bf16.msra.mxu0 %v2479
  %3259 = vmatprep.subr.bf16.mxu0 %v2488
  %3260 = vmatpush1.bf16.msra.mxu0 %v2487
  %3261 = vmatprep.subr.bf16.mxu0 %v2496
  %3262 = vmatpush1.bf16.msra.mxu0 %v2495
  %3263 = vmatprep.subr.bf16.mxu0 %v2504
  %3264 = vmatpush1.bf16.msra.mxu0 %v2503
  %3265 = vmatprep.mubr.bf16.mxu0 %v34
  %3266 = vmatmul.mubr.bf16.gmra.mrb[0].mxu0 %v33
  %v3267 = vpop.f32.mrb[0].mxu0
  %v3268 = vadd.f32 %v3227, %v3267
  %v3269 = vpop.f32.mrb[0].mxu0
  %v3270 = vadd.f32 %v3229, %v3269
  %v3271 = vpop.f32.mrb[0].mxu0
  %v3272 = vpop.f32.mrb[0].mxu0
  %3273 = vdwg.mxu0
  %3274 = vmatprep.subr.bf16.mxu0 %v2512
  %3275 = vmatpush1.bf16.msra.mxu0 %v2511
  %3276 = vmatprep.subr.bf16.mxu0 %v2520
  %3277 = vmatpush1.bf16.msra.mxu0 %v2519
  %3278 = vmatprep.subr.bf16.mxu0 %v2528
  %3279 = vmatpush1.bf16.msra.mxu0 %v2527
  %3280 = vmatprep.subr.bf16.mxu0 %v2536
  %3281 = vmatpush1.bf16.msra.mxu0 %v2535
  %3282 = vmatprep.subr.bf16.mxu0 %v2544
  %3283 = vmatpush1.bf16.msra.mxu0 %v2543
  %3284 = vmatprep.subr.bf16.mxu0 %v2552
  %3285 = vmatpush1.bf16.msra.mxu0 %v2551
  %3286 = vmatprep.subr.bf16.mxu0 %v2560
  %3287 = vmatpush1.bf16.msra.mxu0 %v2559
  %3288 = vmatprep.subr.bf16.mxu0 %v2568
  %3289 = vmatpush1.bf16.msra.mxu0 %v2567
  %3290 = vmatprep.subr.bf16.mxu0 %v2576
  %3291 = vmatpush1.bf16.msra.mxu0 %v2575
  %3292 = vmatprep.subr.bf16.mxu0 %v2584
  %3293 = vmatpush1.bf16.msra.mxu0 %v2583
  %3294 = vmatprep.subr.bf16.mxu0 %v2592
  %3295 = vmatpush1.bf16.msra.mxu0 %v2591
  %3296 = vmatprep.subr.bf16.mxu0 %v2600
  %3297 = vmatpush1.bf16.msra.mxu0 %v2599
  %3298 = vmatprep.subr.bf16.mxu0 %v2608
  %3299 = vmatpush1.bf16.msra.mxu0 %v2607
  %3300 = vmatprep.subr.bf16.mxu0 %v2616
  %3301 = vmatpush1.bf16.msra.mxu0 %v2615
  %3302 = vmatprep.subr.bf16.mxu0 %v2624
  %3303 = vmatpush1.bf16.msra.mxu0 %v2623
  %3304 = vmatprep.subr.bf16.mxu0 %v2632
  %3305 = vmatpush1.bf16.msra.mxu0 %v2631
  %3306 = vmatprep.mubr.bf16.mxu0 %v36
  %3307 = vmatmul.mubr.bf16.gmra.mrb[0].mxu0 %v35
  %v3308 = vpop.f32.mrb[0].mxu0
  %v3309 = vadd.f32 %v3268, %v3308
  %v3310 = vpop.f32.mrb[0].mxu0
  %v3311 = vadd.f32 %v3270, %v3310
  %v3312 = vpop.f32.mrb[0].mxu0
  %v3313 = vpop.f32.mrb[0].mxu0
  %3314 = vdwg.mxu0
  %3315 = vmatprep.subr.bf16.mxu0 %v2130
  %3316 = vmatpush1.bf16.msra.mxu0 %v2129
  %3317 = vmatprep.subr.bf16.mxu0 %v2138
  %3318 = vmatpush1.bf16.msra.mxu0 %v2137
  %3319 = vmatprep.subr.bf16.mxu0 %v2146
  %3320 = vmatpush1.bf16.msra.mxu0 %v2145
  %3321 = vmatprep.subr.bf16.mxu0 %v2154
  %3322 = vmatpush1.bf16.msra.mxu0 %v2153
  %3323 = vmatprep.subr.bf16.mxu0 %v2162
  %3324 = vmatpush1.bf16.msra.mxu0 %v2161
  %3325 = vmatprep.subr.bf16.mxu0 %v2170
  %3326 = vmatpush1.bf16.msra.mxu0 %v2169
  %3327 = vmatprep.subr.bf16.mxu0 %v2178
  %3328 = vmatpush1.bf16.msra.mxu0 %v2177
  %3329 = vmatprep.subr.bf16.mxu0 %v2186
  %3330 = vmatpush1.bf16.msra.mxu0 %v2185
  %3331 = vmatprep.subr.bf16.mxu0 %v2194
  %3332 = vmatpush1.bf16.msra.mxu0 %v2193
  %3333 = vmatprep.subr.bf16.mxu0 %v2202
  %3334 = vmatpush1.bf16.msra.mxu0 %v2201
  %3335 = vmatprep.subr.bf16.mxu0 %v2210
  %3336 = vmatpush1.bf16.msra.mxu0 %v2209
  %3337 = vmatprep.subr.bf16.mxu0 %v2218
  %3338 = vmatpush1.bf16.msra.mxu0 %v2217
  %3339 = vmatprep.subr.bf16.mxu0 %v2226
  %3340 = vmatpush1.bf16.msra.mxu0 %v2225
  %3341 = vmatprep.subr.bf16.mxu0 %v2234
  %3342 = vmatpush1.bf16.msra.mxu0 %v2233
  %3343 = vmatprep.subr.bf16.mxu0 %v2242
  %3344 = vmatpush1.bf16.msra.mxu0 %v2241
  %3345 = vmatprep.subr.bf16.mxu0 %v2250
  %3346 = vmatpush1.bf16.msra.mxu0 %v2249
  %3347 = vmatprep.mubr.bf16.mxu0 %v30
  %3348 = vmatmul.mubr.bf16.gmra.mrb[0].mxu0 %v29
  %v3349 = vpop.f32.mrb[0].mxu0
  %v3350 = vadd.f32 %v562, %v3349
  %v3351 = vpop.f32.mrb[0].mxu0
  %v3352 = vadd.f32 %v566, %v3351
  %v3353 = vpop.f32.mrb[0].mxu0
  %v3354 = vpop.f32.mrb[0].mxu0
  %3355 = vdwg.mxu0
  %3356 = vmatprep.subr.bf16.mxu0 %v2258
  %3357 = vmatpush1.bf16.msra.mxu0 %v2257
  %3358 = vmatprep.subr.bf16.mxu0 %v2266
  %3359 = vmatpush1.bf16.msra.mxu0 %v2265
  %3360 = vmatprep.subr.bf16.mxu0 %v2274
  %3361 = vmatpush1.bf16.msra.mxu0 %v2273
  %3362 = vmatprep.subr.bf16.mxu0 %v2282
  %3363 = vmatpush1.bf16.msra.mxu0 %v2281
  %3364 = vmatprep.subr.bf16.mxu0 %v2290
  %3365 = vmatpush1.bf16.msra.mxu0 %v2289
  %3366 = vmatprep.subr.bf16.mxu0 %v2298
  %3367 = vmatpush1.bf16.msra.mxu0 %v2297
  %3368 = vmatprep.subr.bf16.mxu0 %v2306
  %3369 = vmatpush1.bf16.msra.mxu0 %v2305
  %3370 = vmatprep.subr.bf16.mxu0 %v2314
  %3371 = vmatpush1.bf16.msra.mxu0 %v2313
  %3372 = vmatprep.subr.bf16.mxu0 %v2322
  %3373 = vmatpush1.bf16.msra.mxu0 %v2321
  %3374 = vmatprep.subr.bf16.mxu0 %v2330
  %3375 = vmatpush1.bf16.msra.mxu0 %v2329
  %3376 = vmatprep.subr.bf16.mxu0 %v2338
  %3377 = vmatpush1.bf16.msra.mxu0 %v2337
  %3378 = vmatprep.subr.bf16.mxu0 %v2346
  %3379 = vmatpush1.bf16.msra.mxu0 %v2345
  %3380 = vmatprep.subr.bf16.mxu0 %v2354
  %3381 = vmatpush1.bf16.msra.mxu0 %v2353
  %3382 = vmatprep.subr.bf16.mxu0 %v2362
  %3383 = vmatpush1.bf16.msra.mxu0 %v2361
  %3384 = vmatprep.subr.bf16.mxu0 %v2370
  %3385 = vmatpush1.bf16.msra.mxu0 %v2369
  %3386 = vmatprep.subr.bf16.mxu0 %v2378
  %3387 = vmatpush1.bf16.msra.mxu0 %v2377
  %3388 = vmatprep.mubr.bf16.mxu0 %v32
  %3389 = vmatmul.mubr.bf16.gmra.mrb[0].mxu0 %v31
  %v3390 = vpop.f32.mrb[0].mxu0
  %v3391 = vadd.f32 %v3350, %v3390
  %v3392 = vpop.f32.mrb[0].mxu0
  %v3393 = vadd.f32 %v3352, %v3392
  %v3394 = vpop.f32.mrb[0].mxu0
  %v3395 = vpop.f32.mrb[0].mxu0
  %3396 = vdwg.mxu0
  %3397 = vmatprep.subr.bf16.mxu0 %v2386
  %3398 = vmatpush1.bf16.msra.mxu0 %v2385
  %3399 = vmatprep.subr.bf16.mxu0 %v2394
  %3400 = vmatpush1.bf16.msra.mxu0 %v2393
  %3401 = vmatprep.subr.bf16.mxu0 %v2402
  %3402 = vmatpush1.bf16.msra.mxu0 %v2401
  %3403 = vmatprep.subr.bf16.mxu0 %v2410
  %3404 = vmatpush1.bf16.msra.mxu0 %v2409
  %3405 = vmatprep.subr.bf16.mxu0 %v2418
  %3406 = vmatpush1.bf16.msra.mxu0 %v2417
  %3407 = vmatprep.subr.bf16.mxu0 %v2426
  %3408 = vmatpush1.bf16.msra.mxu0 %v2425
  %3409 = vmatprep.subr.bf16.mxu0 %v2434
  %3410 = vmatpush1.bf16.msra.mxu0 %v2433
  %3411 = vmatprep.subr.bf16.mxu0 %v2442
  %3412 = vmatpush1.bf16.msra.mxu0 %v2441
  %3413 = vmatprep.subr.bf16.mxu0 %v2450
  %3414 = vmatpush1.bf16.msra.mxu0 %v2449
  %3415 = vmatprep.subr.bf16.mxu0 %v2458
  %3416 = vmatpush1.bf16.msra.mxu0 %v2457
  %3417 = vmatprep.subr.bf16.mxu0 %v2466
  %3418 = vmatpush1.bf16.msra.mxu0 %v2465
  %3419 = vmatprep.subr.bf16.mxu0 %v2474
  %3420 = vmatpush1.bf16.msra.mxu0 %v2473
  %3421 = vmatprep.subr.bf16.mxu0 %v2482
  %3422 = vmatpush1.bf16.msra.mxu0 %v2481
  %3423 = vmatprep.subr.bf16.mxu0 %v2490
  %3424 = vmatpush1.bf16.msra.mxu0 %v2489
  %3425 = vmatprep.subr.bf16.mxu0 %v2498
  %3426 = vmatpush1.bf16.msra.mxu0 %v2497
  %3427 = vmatprep.subr.bf16.mxu0 %v2506
  %3428 = vmatpush1.bf16.msra.mxu0 %v2505
  %3429 = vmatprep.mubr.bf16.mxu0 %v34
  %3430 = vmatmul.mubr.bf16.gmra.mrb[0].mxu0 %v33
  %v3431 = vpop.f32.mrb[0].mxu0
  %v3432 = vadd.f32 %v3391, %v3431
  %v3433 = vpop.f32.mrb[0].mxu0
  %v3434 = vadd.f32 %v3393, %v3433
  %v3435 = vpop.f32.mrb[0].mxu0
  %v3436 = vpop.f32.mrb[0].mxu0
  %3437 = vdwg.mxu0
  %3438 = vmatprep.subr.bf16.mxu0 %v2514
  %3439 = vmatpush1.bf16.msra.mxu0 %v2513
  %3440 = vmatprep.subr.bf16.mxu0 %v2522
  %3441 = vmatpush1.bf16.msra.mxu0 %v2521
  %3442 = vmatprep.subr.bf16.mxu0 %v2530
  %3443 = vmatpush1.bf16.msra.mxu0 %v2529
  %3444 = vmatprep.subr.bf16.mxu0 %v2538
  %3445 = vmatpush1.bf16.msra.mxu0 %v2537
  %3446 = vmatprep.subr.bf16.mxu0 %v2546
  %3447 = vmatpush1.bf16.msra.mxu0 %v2545
  %3448 = vmatprep.subr.bf16.mxu0 %v2554
  %3449 = vmatpush1.bf16.msra.mxu0 %v2553
  %3450 = vmatprep.subr.bf16.mxu0 %v2562
  %3451 = vmatpush1.bf16.msra.mxu0 %v2561
  %3452 = vmatprep.subr.bf16.mxu0 %v2570
  %3453 = vmatpush1.bf16.msra.mxu0 %v2569
  %3454 = vmatprep.subr.bf16.mxu0 %v2578
  %3455 = vmatpush1.bf16.msra.mxu0 %v2577
  %3456 = vmatprep.subr.bf16.mxu0 %v2586
  %3457 = vmatpush1.bf16.msra.mxu0 %v2585
  %3458 = vmatprep.subr.bf16.mxu0 %v2594
  %3459 = vmatpush1.bf16.msra.mxu0 %v2593
  %3460 = vmatprep.subr.bf16.mxu0 %v2602
  %3461 = vmatpush1.bf16.msra.mxu0 %v2601
  %3462 = vmatprep.subr.bf16.mxu0 %v2610
  %3463 = vmatpush1.bf16.msra.mxu0 %v2609
  %3464 = vmatprep.subr.bf16.mxu0 %v2618
  %3465 = vmatpush1.bf16.msra.mxu0 %v2617
  %3466 = vmatprep.subr.bf16.mxu0 %v2626
  %3467 = vmatpush1.bf16.msra.mxu0 %v2625
  %3468 = vmatprep.subr.bf16.mxu0 %v2634
  %3469 = vmatpush1.bf16.msra.mxu0 %v2633
  %3470 = vmatprep.mubr.bf16.mxu0 %v36
  %3471 = vmatmul.mubr.bf16.gmra.mrb[0].mxu0 %v35
  %v3472 = vpop.f32.mrb[0].mxu0
  %v3473 = vadd.f32 %v3432, %v3472
  %v3474 = vpop.f32.mrb[0].mxu0
  %v3475 = vadd.f32 %v3434, %v3474
  %v3476 = vpop.f32.mrb[0].mxu0
  %v3477 = vpop.f32.mrb[0].mxu0
  %3478 = vdwg.mxu0
  %3479 = vmatprep.subr.bf16.mxu0 %v2132
  %3480 = vmatpush1.bf16.msra.mxu0 %v2131
  %3481 = vmatprep.subr.bf16.mxu0 %v2140
  %3482 = vmatpush1.bf16.msra.mxu0 %v2139
  %3483 = vmatprep.subr.bf16.mxu0 %v2148
  %3484 = vmatpush1.bf16.msra.mxu0 %v2147
  %3485 = vmatprep.subr.bf16.mxu0 %v2156
  %3486 = vmatpush1.bf16.msra.mxu0 %v2155
  %3487 = vmatprep.subr.bf16.mxu0 %v2164
  %3488 = vmatpush1.bf16.msra.mxu0 %v2163
  %3489 = vmatprep.subr.bf16.mxu0 %v2172
  %3490 = vmatpush1.bf16.msra.mxu0 %v2171
  %3491 = vmatprep.subr.bf16.mxu0 %v2180
  %3492 = vmatpush1.bf16.msra.mxu0 %v2179
  %3493 = vmatprep.subr.bf16.mxu0 %v2188
  %3494 = vmatpush1.bf16.msra.mxu0 %v2187
  %3495 = vmatprep.subr.bf16.mxu0 %v2196
  %3496 = vmatpush1.bf16.msra.mxu0 %v2195
  %3497 = vmatprep.subr.bf16.mxu0 %v2204
  %3498 = vmatpush1.bf16.msra.mxu0 %v2203
  %3499 = vmatprep.subr.bf16.mxu0 %v2212
  %3500 = vmatpush1.bf16.msra.mxu0 %v2211
  %3501 = vmatprep.subr.bf16.mxu0 %v2220
  %3502 = vmatpush1.bf16.msra.mxu0 %v2219
  %3503 = vmatprep.subr.bf16.mxu0 %v2228
  %3504 = vmatpush1.bf16.msra.mxu0 %v2227
  %3505 = vmatprep.subr.bf16.mxu0 %v2236
  %3506 = vmatpush1.bf16.msra.mxu0 %v2235
  %3507 = vmatprep.subr.bf16.mxu0 %v2244
  %3508 = vmatpush1.bf16.msra.mxu0 %v2243
  %3509 = vmatprep.subr.bf16.mxu0 %v2252
  %3510 = vmatpush1.bf16.msra.mxu0 %v2251
  %3511 = vmatprep.mubr.bf16.mxu0 %v30
  %3512 = vmatmul.mubr.bf16.gmra.mrb[0].mxu0 %v29
  %v3513 = vpop.f32.mrb[0].mxu0
  %v3514 = vadd.f32 %v570, %v3513
  %v3515 = vpop.f32.mrb[0].mxu0
  %v3516 = vadd.f32 %v574, %v3515
  %v3517 = vpop.f32.mrb[0].mxu0
  %v3518 = vpop.f32.mrb[0].mxu0
  %3519 = vdwg.mxu0
  %3520 = vmatprep.subr.bf16.mxu0 %v2260
  %3521 = vmatpush1.bf16.msra.mxu0 %v2259
  %3522 = vmatprep.subr.bf16.mxu0 %v2268
  %3523 = vmatpush1.bf16.msra.mxu0 %v2267
  %3524 = vmatprep.subr.bf16.mxu0 %v2276
  %3525 = vmatpush1.bf16.msra.mxu0 %v2275
  %3526 = vmatprep.subr.bf16.mxu0 %v2284
  %3527 = vmatpush1.bf16.msra.mxu0 %v2283
  %3528 = vmatprep.subr.bf16.mxu0 %v2292
  %3529 = vmatpush1.bf16.msra.mxu0 %v2291
  %3530 = vmatprep.subr.bf16.mxu0 %v2300
  %3531 = vmatpush1.bf16.msra.mxu0 %v2299
  %3532 = vmatprep.subr.bf16.mxu0 %v2308
  %3533 = vmatpush1.bf16.msra.mxu0 %v2307
  %3534 = vmatprep.subr.bf16.mxu0 %v2316
  %3535 = vmatpush1.bf16.msra.mxu0 %v2315
  %3536 = vmatprep.subr.bf16.mxu0 %v2324
  %3537 = vmatpush1.bf16.msra.mxu0 %v2323
  %3538 = vmatprep.subr.bf16.mxu0 %v2332
  %3539 = vmatpush1.bf16.msra.mxu0 %v2331
  %3540 = vmatprep.subr.bf16.mxu0 %v2340
  %3541 = vmatpush1.bf16.msra.mxu0 %v2339
  %3542 = vmatprep.subr.bf16.mxu0 %v2348
  %3543 = vmatpush1.bf16.msra.mxu0 %v2347
  %3544 = vmatprep.subr.bf16.mxu0 %v2356
  %3545 = vmatpush1.bf16.msra.mxu0 %v2355
  %3546 = vmatprep.subr.bf16.mxu0 %v2364
  %3547 = vmatpush1.bf16.msra.mxu0 %v2363
  %3548 = vmatprep.subr.bf16.mxu0 %v2372
  %3549 = vmatpush1.bf16.msra.mxu0 %v2371
  %3550 = vmatprep.subr.bf16.mxu0 %v2380
  %3551 = vmatpush1.bf16.msra.mxu0 %v2379
  %3552 = vmatprep.mubr.bf16.mxu0 %v32
  %3553 = vmatmul.mubr.bf16.gmra.mrb[0].mxu0 %v31
  %v3554 = vpop.f32.mrb[0].mxu0
  %v3555 = vadd.f32 %v3514, %v3554
  %v3556 = vpop.f32.mrb[0].mxu0
  %v3557 = vadd.f32 %v3516, %v3556
  %v3558 = vpop.f32.mrb[0].mxu0
  %v3559 = vpop.f32.mrb[0].mxu0
  %3560 = vdwg.mxu0
  %3561 = vmatprep.subr.bf16.mxu0 %v2388
  %3562 = vmatpush1.bf16.msra.mxu0 %v2387
  %3563 = vmatprep.subr.bf16.mxu0 %v2396
  %3564 = vmatpush1.bf16.msra.mxu0 %v2395
  %3565 = vmatprep.subr.bf16.mxu0 %v2404
  %3566 = vmatpush1.bf16.msra.mxu0 %v2403
  %3567 = vmatprep.subr.bf16.mxu0 %v2412
  %3568 = vmatpush1.bf16.msra.mxu0 %v2411
  %3569 = vmatprep.subr.bf16.mxu0 %v2420
  %3570 = vmatpush1.bf16.msra.mxu0 %v2419
  %3571 = vmatprep.subr.bf16.mxu0 %v2428
  %3572 = vmatpush1.bf16.msra.mxu0 %v2427
  %3573 = vmatprep.subr.bf16.mxu0 %v2436
  %3574 = vmatpush1.bf16.msra.mxu0 %v2435
  %3575 = vmatprep.subr.bf16.mxu0 %v2444
  %3576 = vmatpush1.bf16.msra.mxu0 %v2443
  %3577 = vmatprep.subr.bf16.mxu0 %v2452
  %3578 = vmatpush1.bf16.msra.mxu0 %v2451
  %3579 = vmatprep.subr.bf16.mxu0 %v2460
  %3580 = vmatpush1.bf16.msra.mxu0 %v2459
  %3581 = vmatprep.subr.bf16.mxu0 %v2468
  %3582 = vmatpush1.bf16.msra.mxu0 %v2467
  %3583 = vmatprep.subr.bf16.mxu0 %v2476
  %3584 = vmatpush1.bf16.msra.mxu0 %v2475
  %3585 = vmatprep.subr.bf16.mxu0 %v2484
  %3586 = vmatpush1.bf16.msra.mxu0 %v2483
  %3587 = vmatprep.subr.bf16.mxu0 %v2492
  %3588 = vmatpush1.bf16.msra.mxu0 %v2491
  %3589 = vmatprep.subr.bf16.mxu0 %v2500
  %3590 = vmatpush1.bf16.msra.mxu0 %v2499
  %3591 = vmatprep.subr.bf16.mxu0 %v2508
  %3592 = vmatpush1.bf16.msra.mxu0 %v2507
  %3593 = vmatprep.mubr.bf16.mxu0 %v34
  %3594 = vmatmul.mubr.bf16.gmra.mrb[0].mxu0 %v33
  %v3595 = vpop.f32.mrb[0].mxu0
  %v3596 = vadd.f32 %v3555, %v3595
  %v3597 = vpop.f32.mrb[0].mxu0
  %v3598 = vadd.f32 %v3557, %v3597
  %v3599 = vpop.f32.mrb[0].mxu0
  %v3600 = vpop.f32.mrb[0].mxu0
  %3601 = vdwg.mxu0
  %3602 = vmatprep.subr.bf16.mxu0 %v2516
  %3603 = vmatpush1.bf16.msra.mxu0 %v2515
  %3604 = vmatprep.subr.bf16.mxu0 %v2524
  %3605 = vmatpush1.bf16.msra.mxu0 %v2523
  %3606 = vmatprep.subr.bf16.mxu0 %v2532
  %3607 = vmatpush1.bf16.msra.mxu0 %v2531
  %3608 = vmatprep.subr.bf16.mxu0 %v2540
  %3609 = vmatpush1.bf16.msra.mxu0 %v2539
  %3610 = vmatprep.subr.bf16.mxu0 %v2548
  %3611 = vmatpush1.bf16.msra.mxu0 %v2547
  %3612 = vmatprep.subr.bf16.mxu0 %v2556
  %3613 = vmatpush1.bf16.msra.mxu0 %v2555
  %3614 = vmatprep.subr.bf16.mxu0 %v2564
  %3615 = vmatpush1.bf16.msra.mxu0 %v2563
  %3616 = vmatprep.subr.bf16.mxu0 %v2572
  %3617 = vmatpush1.bf16.msra.mxu0 %v2571
  %3618 = vmatprep.subr.bf16.mxu0 %v2580
  %3619 = vmatpush1.bf16.msra.mxu0 %v2579
  %3620 = vmatprep.subr.bf16.mxu0 %v2588
  %3621 = vmatpush1.bf16.msra.mxu0 %v2587
  %3622 = vmatprep.subr.bf16.mxu0 %v2596
  %3623 = vmatpush1.bf16.msra.mxu0 %v2595
  %3624 = vmatprep.subr.bf16.mxu0 %v2604
  %3625 = vmatpush1.bf16.msra.mxu0 %v2603
  %3626 = vmatprep.subr.bf16.mxu0 %v2612
  %3627 = vmatpush1.bf16.msra.mxu0 %v2611
  %3628 = vmatprep.subr.bf16.mxu0 %v2620
  %3629 = vmatpush1.bf16.msra.mxu0 %v2619
  %3630 = vmatprep.subr.bf16.mxu0 %v2628
  %3631 = vmatpush1.bf16.msra.mxu0 %v2627
  %3632 = vmatprep.subr.bf16.mxu0 %v2636
  %3633 = vmatpush1.bf16.msra.mxu0 %v2635
  %3634 = vmatprep.mubr.bf16.mxu0 %v36
  %3635 = vmatmul.mubr.bf16.gmra.mrb[0].mxu0 %v35
  %v3636 = vpop.f32.mrb[0].mxu0
  %v3637 = vadd.f32 %v3596, %v3636
  %v3638 = vpop.f32.mrb[0].mxu0
  %v3639 = vadd.f32 %v3598, %v3638
  %v3640 = vpop.f32.mrb[0].mxu0
  %v3641 = vpop.f32.mrb[0].mxu0
  %3642 = vdwg.mxu0
  %3643 = vmatprep.subr.bf16.mxu0 %v2134
  %3644 = vmatpush1.bf16.msra.mxu0 %v2133
  %3645 = vmatprep.subr.bf16.mxu0 %v2142
  %3646 = vmatpush1.bf16.msra.mxu0 %v2141
  %3647 = vmatprep.subr.bf16.mxu0 %v2150
  %3648 = vmatpush1.bf16.msra.mxu0 %v2149
  %3649 = vmatprep.subr.bf16.mxu0 %v2158
  %3650 = vmatpush1.bf16.msra.mxu0 %v2157
  %3651 = vmatprep.subr.bf16.mxu0 %v2166
  %3652 = vmatpush1.bf16.msra.mxu0 %v2165
  %3653 = vmatprep.subr.bf16.mxu0 %v2174
  %3654 = vmatpush1.bf16.msra.mxu0 %v2173
  %3655 = vmatprep.subr.bf16.mxu0 %v2182
  %3656 = vmatpush1.bf16.msra.mxu0 %v2181
  %3657 = vmatprep.subr.bf16.mxu0 %v2190
  %3658 = vmatpush1.bf16.msra.mxu0 %v2189
  %3659 = vmatprep.subr.bf16.mxu0 %v2198
  %3660 = vmatpush1.bf16.msra.mxu0 %v2197
  %3661 = vmatprep.subr.bf16.mxu0 %v2206
  %3662 = vmatpush1.bf16.msra.mxu0 %v2205
  %3663 = vmatprep.subr.bf16.mxu0 %v2214
  %3664 = vmatpush1.bf16.msra.mxu0 %v2213
  %3665 = vmatprep.subr.bf16.mxu0 %v2222
  %3666 = vmatpush1.bf16.msra.mxu0 %v2221
  %3667 = vmatprep.subr.bf16.mxu0 %v2230
  %3668 = vmatpush1.bf16.msra.mxu0 %v2229
  %3669 = vmatprep.subr.bf16.mxu0 %v2238
  %3670 = vmatpush1.bf16.msra.mxu0 %v2237
  %3671 = vmatprep.subr.bf16.mxu0 %v2246
  %3672 = vmatpush1.bf16.msra.mxu0 %v2245
  %3673 = vmatprep.subr.bf16.mxu0 %v2254
  %3674 = vmatpush1.bf16.msra.mxu0 %v2253
  %3675 = vmatprep.mubr.bf16.mxu0 %v30
  %3676 = vmatmul.mubr.bf16.gmra.mrb[0].mxu0 %v29
  %v3677 = vpop.f32.mrb[0].mxu0
  %v3678 = vadd.f32 %v578, %v3677
  %v3679 = vpop.f32.mrb[0].mxu0
  %v3680 = vadd.f32 %v582, %v3679
  %v3681 = vpop.f32.mrb[0].mxu0
  %v3682 = vpop.f32.mrb[0].mxu0
  %3683 = vdwg.mxu0
  %3684 = vmatprep.subr.bf16.mxu0 %v2262
  %3685 = vmatpush1.bf16.msra.mxu0 %v2261
  %3686 = vmatprep.subr.bf16.mxu0 %v2270
  %3687 = vmatpush1.bf16.msra.mxu0 %v2269
  %3688 = vmatprep.subr.bf16.mxu0 %v2278
  %3689 = vmatpush1.bf16.msra.mxu0 %v2277
  %3690 = vmatprep.subr.bf16.mxu0 %v2286
  %3691 = vmatpush1.bf16.msra.mxu0 %v2285
  %3692 = vmatprep.subr.bf16.mxu0 %v2294
  %3693 = vmatpush1.bf16.msra.mxu0 %v2293
  %3694 = vmatprep.subr.bf16.mxu0 %v2302
  %3695 = vmatpush1.bf16.msra.mxu0 %v2301
  %3696 = vmatprep.subr.bf16.mxu0 %v2310
  %3697 = vmatpush1.bf16.msra.mxu0 %v2309
  %3698 = vmatprep.subr.bf16.mxu0 %v2318
  %3699 = vmatpush1.bf16.msra.mxu0 %v2317
  %3700 = vmatprep.subr.bf16.mxu0 %v2326
  %3701 = vmatpush1.bf16.msra.mxu0 %v2325
  %3702 = vmatprep.subr.bf16.mxu0 %v2334
  %3703 = vmatpush1.bf16.msra.mxu0 %v2333
  %3704 = vmatprep.subr.bf16.mxu0 %v2342
  %3705 = vmatpush1.bf16.msra.mxu0 %v2341
  %3706 = vmatprep.subr.bf16.mxu0 %v2350
  %3707 = vmatpush1.bf16.msra.mxu0 %v2349
  %3708 = vmatprep.subr.bf16.mxu0 %v2358
  %3709 = vmatpush1.bf16.msra.mxu0 %v2357
  %3710 = vmatprep.subr.bf16.mxu0 %v2366
  %3711 = vmatpush1.bf16.msra.mxu0 %v2365
  %3712 = vmatprep.subr.bf16.mxu0 %v2374
  %3713 = vmatpush1.bf16.msra.mxu0 %v2373
  %3714 = vmatprep.subr.bf16.mxu0 %v2382
  %3715 = vmatpush1.bf16.msra.mxu0 %v2381
  %3716 = vmatprep.mubr.bf16.mxu0 %v32
  %3717 = vmatmul.mubr.bf16.gmra.mrb[0].mxu0 %v31
  %v3718 = vpop.f32.mrb[0].mxu0
  %v3719 = vadd.f32 %v3678, %v3718
  %v3720 = vpop.f32.mrb[0].mxu0
  %v3721 = vadd.f32 %v3680, %v3720
  %v3722 = vpop.f32.mrb[0].mxu0
  %v3723 = vpop.f32.mrb[0].mxu0
  %3724 = vdwg.mxu0
  %3725 = vmatprep.subr.bf16.mxu0 %v2390
  %3726 = vmatpush1.bf16.msra.mxu0 %v2389
  %3727 = vmatprep.subr.bf16.mxu0 %v2398
  %3728 = vmatpush1.bf16.msra.mxu0 %v2397
  %3729 = vmatprep.subr.bf16.mxu0 %v2406
  %3730 = vmatpush1.bf16.msra.mxu0 %v2405
  %3731 = vmatprep.subr.bf16.mxu0 %v2414
  %3732 = vmatpush1.bf16.msra.mxu0 %v2413
  %3733 = vmatprep.subr.bf16.mxu0 %v2422
  %3734 = vmatpush1.bf16.msra.mxu0 %v2421
  %3735 = vmatprep.subr.bf16.mxu0 %v2430
  %3736 = vmatpush1.bf16.msra.mxu0 %v2429
  %3737 = vmatprep.subr.bf16.mxu0 %v2438
  %3738 = vmatpush1.bf16.msra.mxu0 %v2437
  %3739 = vmatprep.subr.bf16.mxu0 %v2446
  %3740 = vmatpush1.bf16.msra.mxu0 %v2445
  %3741 = vmatprep.subr.bf16.mxu0 %v2454
  %3742 = vmatpush1.bf16.msra.mxu0 %v2453
  %3743 = vmatprep.subr.bf16.mxu0 %v2462
  %3744 = vmatpush1.bf16.msra.mxu0 %v2461
  %3745 = vmatprep.subr.bf16.mxu0 %v2470
  %3746 = vmatpush1.bf16.msra.mxu0 %v2469
  %3747 = vmatprep.subr.bf16.mxu0 %v2478
  %3748 = vmatpush1.bf16.msra.mxu0 %v2477
  %3749 = vmatprep.subr.bf16.mxu0 %v2486
  %3750 = vmatpush1.bf16.msra.mxu0 %v2485
  %3751 = vmatprep.subr.bf16.mxu0 %v2494
  %3752 = vmatpush1.bf16.msra.mxu0 %v2493
  %3753 = vmatprep.subr.bf16.mxu0 %v2502
  %3754 = vmatpush1.bf16.msra.mxu0 %v2501
  %3755 = vmatprep.subr.bf16.mxu0 %v2510
  %3756 = vmatpush1.bf16.msra.mxu0 %v2509
  %3757 = vmatprep.mubr.bf16.mxu0 %v34
  %3758 = vmatmul.mubr.bf16.gmra.mrb[0].mxu0 %v33
  %v3759 = vpop.f32.mrb[0].mxu0
  %v3760 = vadd.f32 %v3719, %v3759
  %v3761 = vpop.f32.mrb[0].mxu0
  %v3762 = vadd.f32 %v3721, %v3761
  %v3763 = vpop.f32.mrb[0].mxu0
  %v3764 = vpop.f32.mrb[0].mxu0
  %3765 = vdwg.mxu0
  %3766 = vmatprep.subr.bf16.mxu0 %v2518
  %3767 = vmatpush1.bf16.msra.mxu0 %v2517
  %3768 = vmatprep.subr.bf16.mxu0 %v2526
  %3769 = vmatpush1.bf16.msra.mxu0 %v2525
  %3770 = vmatprep.subr.bf16.mxu0 %v2534
  %3771 = vmatpush1.bf16.msra.mxu0 %v2533
  %3772 = vmatprep.subr.bf16.mxu0 %v2542
  %3773 = vmatpush1.bf16.msra.mxu0 %v2541
  %3774 = vmatprep.subr.bf16.mxu0 %v2550
  %3775 = vmatpush1.bf16.msra.mxu0 %v2549
  %3776 = vmatprep.subr.bf16.mxu0 %v2558
  %3777 = vmatpush1.bf16.msra.mxu0 %v2557
  %3778 = vmatprep.subr.bf16.mxu0 %v2566
  %3779 = vmatpush1.bf16.msra.mxu0 %v2565
  %3780 = vmatprep.subr.bf16.mxu0 %v2574
  %3781 = vmatpush1.bf16.msra.mxu0 %v2573
  %3782 = vmatprep.subr.bf16.mxu0 %v2582
  %3783 = vmatpush1.bf16.msra.mxu0 %v2581
  %3784 = vmatprep.subr.bf16.mxu0 %v2590
  %3785 = vmatpush1.bf16.msra.mxu0 %v2589
  %3786 = vmatprep.subr.bf16.mxu0 %v2598
  %3787 = vmatpush1.bf16.msra.mxu0 %v2597
  %3788 = vmatprep.subr.bf16.mxu0 %v2606
  %3789 = vmatpush1.bf16.msra.mxu0 %v2605
  %3790 = vmatprep.subr.bf16.mxu0 %v2614
  %3791 = vmatpush1.bf16.msra.mxu0 %v2613
  %3792 = vmatprep.subr.bf16.mxu0 %v2622
  %3793 = vmatpush1.bf16.msra.mxu0 %v2621
  %3794 = vmatprep.subr.bf16.mxu0 %v2630
  %3795 = vmatpush1.bf16.msra.mxu0 %v2629
  %3796 = vmatprep.subr.bf16.mxu0 %v2638
  %3797 = vmatpush1.bf16.msra.mxu0 %v2637
  %3798 = vmatprep.mubr.bf16.mxu0 %v36
  %3799 = vmatmul.mubr.bf16.gmra.mrb[0].mxu0 %v35
  %v3800 = vpop.f32.mrb[0].mxu0
  %v3801 = vadd.f32 %v3760, %v3800
  %v3802 = vpop.f32.mrb[0].mxu0
  %v3803 = vadd.f32 %v3762, %v3802
  %v3804 = vpop.f32.mrb[0].mxu0
  %v3805 = vpop.f32.mrb[0].mxu0
  %3806 = vdwg.mxu0
  %v3807 = vmax.f32 %v3309, 0.0
  %v3808 = vmax.f32 %v3311, 0.0
  %v3809 = vmax.f32 %v3473, 0.0
  %v3810 = vmax.f32 %v3475, 0.0
  %v3811 = vmax.f32 %v3637, 0.0
  %v3812 = vmax.f32 %v3639, 0.0
  %v3813 = vmax.f32 %v3801, 0.0
  %v3814 = vmax.f32 %v3803, 0.0
  %v3815 = vpack.c.bf16 %v3807, %v3807
  %v3816 = vpack.c.bf16 %v3808, %v3808
  %v3817 = vpack.c.bf16 %v3809, %v3809
  %v3818 = vpack.c.bf16 %v3810, %v3810
  %v3819 = vpack.c.bf16 %v3811, %v3811
  %v3820 = vpack.c.bf16 %v3812, %v3812
  %v3821 = vpack.c.bf16 %v3813, %v3813
  %v3822 = vpack.c.bf16 %v3814, %v3814
  %v3823 = vld [vmem:[%s3] sm:$0xf]
  %v3824 = vld [vmem:[%s3 + $0x4] sm:$0xf]
  %v3825 = vld [vmem:[%s3 + $0x8] sm:$0xf]
  %v3826 = vld [vmem:[%s3 + $0xc] sm:$0xf]
  %v3827 = vld [vmem:[%s3 + $0x10] sm:$0xf]
  %v3828 = vld [vmem:[%s3 + $0x14] sm:$0xf]
  %v3829 = vld [vmem:[%s3 + $0x18] sm:$0xf]
  %v3830 = vld [vmem:[%s3 + $0x1c] sm:$0xf]
  %v3831 = vld [vmem:[%s3 + $0x20] sm:$0xf]
  %v3832 = vld [vmem:[%s3 + $0x24] sm:$0xf]
  %v3833 = vld [vmem:[%s3 + $0x28] sm:$0xf]
  %v3834 = vld [vmem:[%s3 + $0x2c] sm:$0xf]
  %v3835 = vld [vmem:[%s3 + $0x30] sm:$0xf]
  %v3836 = vld [vmem:[%s3 + $0x34] sm:$0xf]
  %v3837 = vld [vmem:[%s3 + $0x38] sm:$0xf]
  %v3838 = vld [vmem:[%s3 + $0x3c] sm:$0xf]
  %v3839 = vld [vmem:[%s3 + $0x40] sm:$0xf]
  %v3840 = vld [vmem:[%s3 + $0x44] sm:$0xf]
  %v3841 = vld [vmem:[%s3 + $0x48] sm:$0xf]
  %v3842 = vld [vmem:[%s3 + $0x4c] sm:$0xf]
  %v3843 = vld [vmem:[%s3 + $0x50] sm:$0xf]
  %v3844 = vld [vmem:[%s3 + $0x54] sm:$0xf]
  %v3845 = vld [vmem:[%s3 + $0x58] sm:$0xf]
  %v3846 = vld [vmem:[%s3 + $0x5c] sm:$0xf]
  %v3847 = vld [vmem:[%s3 + $0x60] sm:$0xf]
  %v3848 = vld [vmem:[%s3 + $0x64] sm:$0xf]
  %v3849 = vld [vmem:[%s3 + $0x68] sm:$0xf]
  %v3850 = vld [vmem:[%s3 + $0x6c] sm:$0xf]
  %v3851 = vld [vmem:[%s3 + $0x70] sm:$0xf]
  %v3852 = vld [vmem:[%s3 + $0x74] sm:$0xf]
  %v3853 = vld [vmem:[%s3 + $0x78] sm:$0xf]
  %v3854 = vld [vmem:[%s3 + $0x7c] sm:$0xf]
  %v3855 = vld [vmem:[%s3 + $0x80] sm:$0xf]
  %v3856 = vld [vmem:[%s3 + $0x84] sm:$0xf]
  %v3857 = vld [vmem:[%s3 + $0x88] sm:$0xf]
  %v3858 = vld [vmem:[%s3 + $0x8c] sm:$0xf]
  %v3859 = vld [vmem:[%s3 + $0x90] sm:$0xf]
  %v3860 = vld [vmem:[%s3 + $0x94] sm:$0xf]
  %v3861 = vld [vmem:[%s3 + $0x98] sm:$0xf]
  %v3862 = vld [vmem:[%s3 + $0x9c] sm:$0xf]
  %v3863 = vld [vmem:[%s3 + $0xa0] sm:$0xf]
  %v3864 = vld [vmem:[%s3 + $0xa4] sm:$0xf]
  %v3865 = vld [vmem:[%s3 + $0xa8] sm:$0xf]
  %v3866 = vld [vmem:[%s3 + $0xac] sm:$0xf]
  %v3867 = vld [vmem:[%s3 + $0xb0] sm:$0xf]
  %v3868 = vld [vmem:[%s3 + $0xb4] sm:$0xf]
  %v3869 = vld [vmem:[%s3 + $0xb8] sm:$0xf]
  %v3870 = vld [vmem:[%s3 + $0xbc] sm:$0xf]
  %v3871 = vld [vmem:[%s3 + $0xc0] sm:$0xf]
  %v3872 = vld [vmem:[%s3 + $0xc4] sm:$0xf]
  %v3873 = vld [vmem:[%s3 + $0xc8] sm:$0xf]
  %v3874 = vld [vmem:[%s3 + $0xcc] sm:$0xf]
  %v3875 = vld [vmem:[%s3 + $0xd0] sm:$0xf]
  %v3876 = vld [vmem:[%s3 + $0xd4] sm:$0xf]
  %v3877 = vld [vmem:[%s3 + $0xd8] sm:$0xf]
  %v3878 = vld [vmem:[%s3 + $0xdc] sm:$0xf]
  %v3879 = vld [vmem:[%s3 + $0xe0] sm:$0xf]
  %v3880 = vld [vmem:[%s3 + $0xe4] sm:$0xf]
  %v3881 = vld [vmem:[%s3 + $0xe8] sm:$0xf]
  %v3882 = vld [vmem:[%s3 + $0xec] sm:$0xf]
  %v3883 = vld [vmem:[%s3 + $0xf0] sm:$0xf]
  %v3884 = vld [vmem:[%s3 + $0xf4] sm:$0xf]
  %v3885 = vld [vmem:[%s3 + $0xf8] sm:$0xf]
  %v3886 = vld [vmem:[%s3 + $0xfc] sm:$0xf]
  %v3887 = vld [vmem:[%s3 + $0x100] sm:$0xf]
  %v3888 = vld [vmem:[%s3 + $0x104] sm:$0xf]
  %v3889 = vld [vmem:[%s3 + $0x108] sm:$0xf]
  %v3890 = vld [vmem:[%s3 + $0x10c] sm:$0xf]
  %v3891 = vld [vmem:[%s3 + $0x110] sm:$0xf]
  %v3892 = vld [vmem:[%s3 + $0x114] sm:$0xf]
  %v3893 = vld [vmem:[%s3 + $0x118] sm:$0xf]
  %v3894 = vld [vmem:[%s3 + $0x11c] sm:$0xf]
  %v3895 = vld [vmem:[%s3 + $0x120] sm:$0xf]
  %v3896 = vld [vmem:[%s3 + $0x124] sm:$0xf]
  %v3897 = vld [vmem:[%s3 + $0x128] sm:$0xf]
  %v3898 = vld [vmem:[%s3 + $0x12c] sm:$0xf]
  %v3899 = vld [vmem:[%s3 + $0x130] sm:$0xf]
  %v3900 = vld [vmem:[%s3 + $0x134] sm:$0xf]
  %v3901 = vld [vmem:[%s3 + $0x138] sm:$0xf]
  %v3902 = vld [vmem:[%s3 + $0x13c] sm:$0xf]
  %v3903 = vld [vmem:[%s3 + $0x140] sm:$0xf]
  %v3904 = vld [vmem:[%s3 + $0x144] sm:$0xf]
  %v3905 = vld [vmem:[%s3 + $0x148] sm:$0xf]
  %v3906 = vld [vmem:[%s3 + $0x14c] sm:$0xf]
  %v3907 = vld [vmem:[%s3 + $0x150] sm:$0xf]
  %v3908 = vld [vmem:[%s3 + $0x154] sm:$0xf]
  %v3909 = vld [vmem:[%s3 + $0x158] sm:$0xf]
  %v3910 = vld [vmem:[%s3 + $0x15c] sm:$0xf]
  %v3911 = vld [vmem:[%s3 + $0x160] sm:$0xf]
  %v3912 = vld [vmem:[%s3 + $0x164] sm:$0xf]
  %v3913 = vld [vmem:[%s3 + $0x168] sm:$0xf]
  %v3914 = vld [vmem:[%s3 + $0x16c] sm:$0xf]
  %v3915 = vld [vmem:[%s3 + $0x170] sm:$0xf]
  %v3916 = vld [vmem:[%s3 + $0x174] sm:$0xf]
  %v3917 = vld [vmem:[%s3 + $0x178] sm:$0xf]
  %v3918 = vld [vmem:[%s3 + $0x17c] sm:$0xf]
  %v3919 = vld [vmem:[%s3 + $0x180] sm:$0xf]
  %v3920 = vld [vmem:[%s3 + $0x184] sm:$0xf]
  %v3921 = vld [vmem:[%s3 + $0x188] sm:$0xf]
  %v3922 = vld [vmem:[%s3 + $0x18c] sm:$0xf]
  %v3923 = vld [vmem:[%s3 + $0x190] sm:$0xf]
  %v3924 = vld [vmem:[%s3 + $0x194] sm:$0xf]
  %v3925 = vld [vmem:[%s3 + $0x198] sm:$0xf]
  %v3926 = vld [vmem:[%s3 + $0x19c] sm:$0xf]
  %v3927 = vld [vmem:[%s3 + $0x1a0] sm:$0xf]
  %v3928 = vld [vmem:[%s3 + $0x1a4] sm:$0xf]
  %v3929 = vld [vmem:[%s3 + $0x1a8] sm:$0xf]
  %v3930 = vld [vmem:[%s3 + $0x1ac] sm:$0xf]
  %v3931 = vld [vmem:[%s3 + $0x1b0] sm:$0xf]
  %v3932 = vld [vmem:[%s3 + $0x1b4] sm:$0xf]
  %v3933 = vld [vmem:[%s3 + $0x1b8] sm:$0xf]
  %v3934 = vld [vmem:[%s3 + $0x1bc] sm:$0xf]
  %v3935 = vld [vmem:[%s3 + $0x1c0] sm:$0xf]
  %v3936 = vld [vmem:[%s3 + $0x1c4] sm:$0xf]
  %v3937 = vld [vmem:[%s3 + $0x1c8] sm:$0xf]
  %v3938 = vld [vmem:[%s3 + $0x1cc] sm:$0xf]
  %v3939 = vld [vmem:[%s3 + $0x1d0] sm:$0xf]
  %v3940 = vld [vmem:[%s3 + $0x1d4] sm:$0xf]
  %v3941 = vld [vmem:[%s3 + $0x1d8] sm:$0xf]
  %v3942 = vld [vmem:[%s3 + $0x1dc] sm:$0xf]
  %v3943 = vld [vmem:[%s3 + $0x1e0] sm:$0xf]
  %v3944 = vld [vmem:[%s3 + $0x1e4] sm:$0xf]
  %v3945 = vld [vmem:[%s3 + $0x1e8] sm:$0xf]
  %v3946 = vld [vmem:[%s3 + $0x1ec] sm:$0xf]
  %v3947 = vld [vmem:[%s3 + $0x1f0] sm:$0xf]
  %v3948 = vld [vmem:[%s3 + $0x1f4] sm:$0xf]
  %v3949 = vld [vmem:[%s3 + $0x1f8] sm:$0xf]
  %v3950 = vld [vmem:[%s3 + $0x1fc] sm:$0xf]
  %v3951 = vld [vmem:[%s4] sm:$0x1]
  %v3953 = vlaneseq
  %v3954 = vshrl.u32 %v3953, 7
  %v3955 = vsub.s32 0, %v3954
  %v3956 = vrot.slane %v3951, %v3955
  %v4086 = vunpack.c.l.b16 %v3823
  %v4087 = vunpack.c.l.b16 %v3824
  %v4088 = vunpack.c.l.b16 %v3825
  %v4089 = vunpack.c.l.b16 %v3826
  %v4090 = vunpack.c.l.b16 %v3827
  %v4091 = vunpack.c.l.b16 %v3828
  %v4092 = vunpack.c.l.b16 %v3829
  %v4093 = vunpack.c.l.b16 %v3830
  %v4094 = vunpack.c.l.b16 %v3831
  %v4095 = vunpack.c.l.b16 %v3832
  %v4096 = vunpack.c.l.b16 %v3833
  %v4097 = vunpack.c.l.b16 %v3834
  %v4098 = vunpack.c.l.b16 %v3835
  %v4099 = vunpack.c.l.b16 %v3836
  %v4100 = vunpack.c.l.b16 %v3837
  %v4101 = vunpack.c.l.b16 %v3838
  %v4102 = vunpack.c.l.b16 %v3839
  %v4103 = vunpack.c.l.b16 %v3840
  %v4104 = vunpack.c.l.b16 %v3841
  %v4105 = vunpack.c.l.b16 %v3842
  %v4106 = vunpack.c.l.b16 %v3843
  %v4107 = vunpack.c.l.b16 %v3844
  %v4108 = vunpack.c.l.b16 %v3845
  %v4109 = vunpack.c.l.b16 %v3846
  %v4110 = vunpack.c.l.b16 %v3847
  %v4111 = vunpack.c.l.b16 %v3848
  %v4112 = vunpack.c.l.b16 %v3849
  %v4113 = vunpack.c.l.b16 %v3850
  %v4114 = vunpack.c.l.b16 %v3851
  %v4115 = vunpack.c.l.b16 %v3852
  %v4116 = vunpack.c.l.b16 %v3853
  %v4117 = vunpack.c.l.b16 %v3854
  %v4118 = vunpack.c.l.b16 %v3855
  %v4119 = vunpack.c.l.b16 %v3856
  %v4120 = vunpack.c.l.b16 %v3857
  %v4121 = vunpack.c.l.b16 %v3858
  %v4122 = vunpack.c.l.b16 %v3859
  %v4123 = vunpack.c.l.b16 %v3860
  %v4124 = vunpack.c.l.b16 %v3861
  %v4125 = vunpack.c.l.b16 %v3862
  %v4126 = vunpack.c.l.b16 %v3863
  %v4127 = vunpack.c.l.b16 %v3864
  %v4128 = vunpack.c.l.b16 %v3865
  %v4129 = vunpack.c.l.b16 %v3866
  %v4130 = vunpack.c.l.b16 %v3867
  %v4131 = vunpack.c.l.b16 %v3868
  %v4132 = vunpack.c.l.b16 %v3869
  %v4133 = vunpack.c.l.b16 %v3870
  %v4134 = vunpack.c.l.b16 %v3871
  %v4135 = vunpack.c.l.b16 %v3872
  %v4136 = vunpack.c.l.b16 %v3873
  %v4137 = vunpack.c.l.b16 %v3874
  %v4138 = vunpack.c.l.b16 %v3875
  %v4139 = vunpack.c.l.b16 %v3876
  %v4140 = vunpack.c.l.b16 %v3877
  %v4141 = vunpack.c.l.b16 %v3878
  %v4142 = vunpack.c.l.b16 %v3879
  %v4143 = vunpack.c.l.b16 %v3880
  %v4144 = vunpack.c.l.b16 %v3881
  %v4145 = vunpack.c.l.b16 %v3882
  %v4146 = vunpack.c.l.b16 %v3883
  %v4147 = vunpack.c.l.b16 %v3884
  %v4148 = vunpack.c.l.b16 %v3885
  %v4149 = vunpack.c.l.b16 %v3886
  %v4150 = vunpack.c.l.b16 %v3887
  %v4151 = vunpack.c.l.b16 %v3888
  %v4152 = vunpack.c.l.b16 %v3889
  %v4153 = vunpack.c.l.b16 %v3890
  %v4154 = vunpack.c.l.b16 %v3891
  %v4155 = vunpack.c.l.b16 %v3892
  %v4156 = vunpack.c.l.b16 %v3893
  %v4157 = vunpack.c.l.b16 %v3894
  %v4158 = vunpack.c.l.b16 %v3895
  %v4159 = vunpack.c.l.b16 %v3896
  %v4160 = vunpack.c.l.b16 %v3897
  %v4161 = vunpack.c.l.b16 %v3898
  %v4162 = vunpack.c.l.b16 %v3899
  %v4163 = vunpack.c.l.b16 %v3900
  %v4164 = vunpack.c.l.b16 %v3901
  %v4165 = vunpack.c.l.b16 %v3902
  %v4166 = vunpack.c.l.b16 %v3903
  %v4167 = vunpack.c.l.b16 %v3904
  %v4168 = vunpack.c.l.b16 %v3905
  %v4169 = vunpack.c.l.b16 %v3906
  %v4170 = vunpack.c.l.b16 %v3907
  %v4171 = vunpack.c.l.b16 %v3908
  %v4172 = vunpack.c.l.b16 %v3909
  %v4173 = vunpack.c.l.b16 %v3910
  %v4174 = vunpack.c.l.b16 %v3911
  %v4175 = vunpack.c.l.b16 %v3912
  %v4176 = vunpack.c.l.b16 %v3913
  %v4177 = vunpack.c.l.b16 %v3914
  %v4178 = vunpack.c.l.b16 %v3915
  %v4179 = vunpack.c.l.b16 %v3916
  %v4180 = vunpack.c.l.b16 %v3917
  %v4181 = vunpack.c.l.b16 %v3918
  %v4182 = vunpack.c.l.b16 %v3919
  %v4183 = vunpack.c.l.b16 %v3920
  %v4184 = vunpack.c.l.b16 %v3921
  %v4185 = vunpack.c.l.b16 %v3922
  %v4186 = vunpack.c.l.b16 %v3923
  %v4187 = vunpack.c.l.b16 %v3924
  %v4188 = vunpack.c.l.b16 %v3925
  %v4189 = vunpack.c.l.b16 %v3926
  %v4190 = vunpack.c.l.b16 %v3927
  %v4191 = vunpack.c.l.b16 %v3928
  %v4192 = vunpack.c.l.b16 %v3929
  %v4193 = vunpack.c.l.b16 %v3930
  %v4194 = vunpack.c.l.b16 %v3931
  %v4195 = vunpack.c.l.b16 %v3932
  %v4196 = vunpack.c.l.b16 %v3933
  %v4197 = vunpack.c.l.b16 %v3934
  %v4198 = vunpack.c.l.b16 %v3935
  %v4199 = vunpack.c.l.b16 %v3936
  %v4200 = vunpack.c.l.b16 %v3937
  %v4201 = vunpack.c.l.b16 %v3938
  %v4202 = vunpack.c.l.b16 %v3939
  %v4203 = vunpack.c.l.b16 %v3940
  %v4204 = vunpack.c.l.b16 %v3941
  %v4205 = vunpack.c.l.b16 %v3942
  %v4206 = vunpack.c.l.b16 %v3943
  %v4207 = vunpack.c.l.b16 %v3944
  %v4208 = vunpack.c.l.b16 %v3945
  %v4209 = vunpack.c.l.b16 %v3946
  %v4210 = vunpack.c.l.b16 %v3947
  %v4211 = vunpack.c.l.b16 %v3948
  %v4212 = vunpack.c.l.b16 %v3949
  %v4213 = vunpack.c.l.b16 %v3950
  %v4214 = vpack.c.b16 %v4087, %v4086
  %v4215 = vpack.c.b16 %v4089, %v4088
  %v4216 = vpack.c.b16 %v4091, %v4090
  %v4217 = vpack.c.b16 %v4093, %v4092
  %v4218 = vpack.c.b16 %v4095, %v4094
  %v4219 = vpack.c.b16 %v4097, %v4096
  %v4220 = vpack.c.b16 %v4099, %v4098
  %v4221 = vpack.c.b16 %v4101, %v4100
  %v4222 = vpack.c.b16 %v4103, %v4102
  %v4223 = vpack.c.b16 %v4105, %v4104
  %v4224 = vpack.c.b16 %v4107, %v4106
  %v4225 = vpack.c.b16 %v4109, %v4108
  %v4226 = vpack.c.b16 %v4111, %v4110
  %v4227 = vpack.c.b16 %v4113, %v4112
  %v4228 = vpack.c.b16 %v4115, %v4114
  %v4229 = vpack.c.b16 %v4117, %v4116
  %v4230 = vpack.c.b16 %v4119, %v4118
  %v4231 = vpack.c.b16 %v4121, %v4120
  %v4232 = vpack.c.b16 %v4123, %v4122
  %v4233 = vpack.c.b16 %v4125, %v4124
  %v4234 = vpack.c.b16 %v4127, %v4126
  %v4235 = vpack.c.b16 %v4129, %v4128
  %v4236 = vpack.c.b16 %v4131, %v4130
  %v4237 = vpack.c.b16 %v4133, %v4132
  %v4238 = vpack.c.b16 %v4135, %v4134
  %v4239 = vpack.c.b16 %v4137, %v4136
  %v4240 = vpack.c.b16 %v4139, %v4138
  %v4241 = vpack.c.b16 %v4141, %v4140
  %v4242 = vpack.c.b16 %v4143, %v4142
  %v4243 = vpack.c.b16 %v4145, %v4144
  %v4244 = vpack.c.b16 %v4147, %v4146
  %v4245 = vpack.c.b16 %v4149, %v4148
  %v4246 = vpack.c.b16 %v4151, %v4150
  %v4247 = vpack.c.b16 %v4153, %v4152
  %v4248 = vpack.c.b16 %v4155, %v4154
  %v4249 = vpack.c.b16 %v4157, %v4156
  %v4250 = vpack.c.b16 %v4159, %v4158
  %v4251 = vpack.c.b16 %v4161, %v4160
  %v4252 = vpack.c.b16 %v4163, %v4162
  %v4253 = vpack.c.b16 %v4165, %v4164
  %v4254 = vpack.c.b16 %v4167, %v4166
  %v4255 = vpack.c.b16 %v4169, %v4168
  %v4256 = vpack.c.b16 %v4171, %v4170
  %v4257 = vpack.c.b16 %v4173, %v4172
  %v4258 = vpack.c.b16 %v4175, %v4174
  %v4259 = vpack.c.b16 %v4177, %v4176
  %v4260 = vpack.c.b16 %v4179, %v4178
  %v4261 = vpack.c.b16 %v4181, %v4180
  %v4262 = vpack.c.b16 %v4183, %v4182
  %v4263 = vpack.c.b16 %v4185, %v4184
  %v4264 = vpack.c.b16 %v4187, %v4186
  %v4265 = vpack.c.b16 %v4189, %v4188
  %v4266 = vpack.c.b16 %v4191, %v4190
  %v4267 = vpack.c.b16 %v4193, %v4192
  %v4268 = vpack.c.b16 %v4195, %v4194
  %v4269 = vpack.c.b16 %v4197, %v4196
  %v4270 = vpack.c.b16 %v4199, %v4198
  %v4271 = vpack.c.b16 %v4201, %v4200
  %v4272 = vpack.c.b16 %v4203, %v4202
  %v4273 = vpack.c.b16 %v4205, %v4204
  %v4274 = vpack.c.b16 %v4207, %v4206
  %v4275 = vpack.c.b16 %v4209, %v4208
  %v4276 = vpack.c.b16 %v4211, %v4210
  %v4277 = vpack.c.b16 %v4213, %v4212
  %4342 = vmatprep.subr.bf16.mxu0 0
  %4343 = vmatpush1.bf16.msra.mxu0 %v4214
  %4344 = vmatprep.subr.bf16.mxu0 0
  %4345 = vmatpush1.bf16.msra.mxu0 %v4215
  %4346 = vmatprep.subr.bf16.mxu0 0
  %4347 = vmatpush1.bf16.msra.mxu0 %v4216
  %4348 = vmatprep.subr.bf16.mxu0 0
  %4349 = vmatpush1.bf16.msra.mxu0 %v4217
  %4350 = vmatprep.subr.bf16.mxu0 0
  %4351 = vmatpush1.bf16.msra.mxu0 %v4218
  %4352 = vmatprep.subr.bf16.mxu0 0
  %4353 = vmatpush1.bf16.msra.mxu0 %v4219
  %4354 = vmatprep.subr.bf16.mxu0 0
  %4355 = vmatpush1.bf16.msra.mxu0 %v4220
  %4356 = vmatprep.subr.bf16.mxu0 0
  %4357 = vmatpush1.bf16.msra.mxu0 %v4221
  %4358 = vmatprep.subr.bf16.mxu0 0
  %4359 = vmatpush1.bf16.msra.mxu0 %v4222
  %4360 = vmatprep.subr.bf16.mxu0 0
  %4361 = vmatpush1.bf16.msra.mxu0 %v4223
  %4362 = vmatprep.subr.bf16.mxu0 0
  %4363 = vmatpush1.bf16.msra.mxu0 %v4224
  %4364 = vmatprep.subr.bf16.mxu0 0
  %4365 = vmatpush1.bf16.msra.mxu0 %v4225
  %4366 = vmatprep.subr.bf16.mxu0 0
  %4367 = vmatpush1.bf16.msra.mxu0 %v4226
  %4368 = vmatprep.subr.bf16.mxu0 0
  %4369 = vmatpush1.bf16.msra.mxu0 %v4227
  %4370 = vmatprep.subr.bf16.mxu0 0
  %4371 = vmatpush1.bf16.msra.mxu0 %v4228
  %4372 = vmatprep.subr.bf16.mxu0 0
  %4373 = vmatpush1.bf16.msra.mxu0 %v4229
  %4374 = vmatprep.mubr.bf16.mxu0 %v3816
  %4375 = vmatmul.mubr.bf16.gmra.mrb[0].mxu0 %v3815
  %v4376 = vpop.f32.mrb[0].mxu0
  %v4377 = vadd.f32 %v3956, %v4376
  %v4378 = vpop.f32.mrb[0].mxu0
  %v4379 = vpop.f32.mrb[0].mxu0
  %v4380 = vpop.f32.mrb[0].mxu0
  %4381 = vdwg.mxu0
  %4382 = vmatprep.subr.bf16.mxu0 0
  %4383 = vmatpush1.bf16.msra.mxu0 %v4230
  %4384 = vmatprep.subr.bf16.mxu0 0
  %4385 = vmatpush1.bf16.msra.mxu0 %v4231
  %4386 = vmatprep.subr.bf16.mxu0 0
  %4387 = vmatpush1.bf16.msra.mxu0 %v4232
  %4388 = vmatprep.subr.bf16.mxu0 0
  %4389 = vmatpush1.bf16.msra.mxu0 %v4233
  %4390 = vmatprep.subr.bf16.mxu0 0
  %4391 = vmatpush1.bf16.msra.mxu0 %v4234
  %4392 = vmatprep.subr.bf16.mxu0 0
  %4393 = vmatpush1.bf16.msra.mxu0 %v4235
  %4394 = vmatprep.subr.bf16.mxu0 0
  %4395 = vmatpush1.bf16.msra.mxu0 %v4236
  %4396 = vmatprep.subr.bf16.mxu0 0
  %4397 = vmatpush1.bf16.msra.mxu0 %v4237
  %4398 = vmatprep.subr.bf16.mxu0 0
  %4399 = vmatpush1.bf16.msra.mxu0 %v4238
  %4400 = vmatprep.subr.bf16.mxu0 0
  %4401 = vmatpush1.bf16.msra.mxu0 %v4239
  %4402 = vmatprep.subr.bf16.mxu0 0
  %4403 = vmatpush1.bf16.msra.mxu0 %v4240
  %4404 = vmatprep.subr.bf16.mxu0 0
  %4405 = vmatpush1.bf16.msra.mxu0 %v4241
  %4406 = vmatprep.subr.bf16.mxu0 0
  %4407 = vmatpush1.bf16.msra.mxu0 %v4242
  %4408 = vmatprep.subr.bf16.mxu0 0
  %4409 = vmatpush1.bf16.msra.mxu0 %v4243
  %4410 = vmatprep.subr.bf16.mxu0 0
  %4411 = vmatpush1.bf16.msra.mxu0 %v4244
  %4412 = vmatprep.subr.bf16.mxu0 0
  %4413 = vmatpush1.bf16.msra.mxu0 %v4245
  %4414 = vmatprep.mubr.bf16.mxu0 %v3818
  %4415 = vmatmul.mubr.bf16.gmra.mrb[0].mxu0 %v3817
  %v4416 = vpop.f32.mrb[0].mxu0
  %v4417 = vadd.f32 %v4377, %v4416
  %v4418 = vpop.f32.mrb[0].mxu0
  %v4419 = vpop.f32.mrb[0].mxu0
  %v4420 = vpop.f32.mrb[0].mxu0
  %4421 = vdwg.mxu0
  %4422 = vmatprep.subr.bf16.mxu0 0
  %4423 = vmatpush1.bf16.msra.mxu0 %v4246
  %4424 = vmatprep.subr.bf16.mxu0 0
  %4425 = vmatpush1.bf16.msra.mxu0 %v4247
  %4426 = vmatprep.subr.bf16.mxu0 0
  %4427 = vmatpush1.bf16.msra.mxu0 %v4248
  %4428 = vmatprep.subr.bf16.mxu0 0
  %4429 = vmatpush1.bf16.msra.mxu0 %v4249
  %4430 = vmatprep.subr.bf16.mxu0 0
  %4431 = vmatpush1.bf16.msra.mxu0 %v4250
  %4432 = vmatprep.subr.bf16.mxu0 0
  %4433 = vmatpush1.bf16.msra.mxu0 %v4251
  %4434 = vmatprep.subr.bf16.mxu0 0
  %4435 = vmatpush1.bf16.msra.mxu0 %v4252
  %4436 = vmatprep.subr.bf16.mxu0 0
  %4437 = vmatpush1.bf16.msra.mxu0 %v4253
  %4438 = vmatprep.subr.bf16.mxu0 0
  %4439 = vmatpush1.bf16.msra.mxu0 %v4254
  %4440 = vmatprep.subr.bf16.mxu0 0
  %4441 = vmatpush1.bf16.msra.mxu0 %v4255
  %4442 = vmatprep.subr.bf16.mxu0 0
  %4443 = vmatpush1.bf16.msra.mxu0 %v4256
  %4444 = vmatprep.subr.bf16.mxu0 0
  %4445 = vmatpush1.bf16.msra.mxu0 %v4257
  %4446 = vmatprep.subr.bf16.mxu0 0
  %4447 = vmatpush1.bf16.msra.mxu0 %v4258
  %4448 = vmatprep.subr.bf16.mxu0 0
  %4449 = vmatpush1.bf16.msra.mxu0 %v4259
  %4450 = vmatprep.subr.bf16.mxu0 0
  %4451 = vmatpush1.bf16.msra.mxu0 %v4260
  %4452 = vmatprep.subr.bf16.mxu0 0
  %4453 = vmatpush1.bf16.msra.mxu0 %v4261
  %4454 = vmatprep.mubr.bf16.mxu0 %v3820
  %4455 = vmatmul.mubr.bf16.gmra.mrb[0].mxu0 %v3819
  %v4456 = vpop.f32.mrb[0].mxu0
  %v4457 = vadd.f32 %v4417, %v4456
  %v4458 = vpop.f32.mrb[0].mxu0
  %v4459 = vpop.f32.mrb[0].mxu0
  %v4460 = vpop.f32.mrb[0].mxu0
  %4461 = vdwg.mxu0
  %4462 = vmatprep.subr.bf16.mxu0 0
  %4463 = vmatpush1.bf16.msra.mxu0 %v4262
  %4464 = vmatprep.subr.bf16.mxu0 0
  %4465 = vmatpush1.bf16.msra.mxu0 %v4263
  %4466 = vmatprep.subr.bf16.mxu0 0
  %4467 = vmatpush1.bf16.msra.mxu0 %v4264
  %4468 = vmatprep.subr.bf16.mxu0 0
  %4469 = vmatpush1.bf16.msra.mxu0 %v4265
  %4470 = vmatprep.subr.bf16.mxu0 0
  %4471 = vmatpush1.bf16.msra.mxu0 %v4266
  %4472 = vmatprep.subr.bf16.mxu0 0
  %4473 = vmatpush1.bf16.msra.mxu0 %v4267
  %4474 = vmatprep.subr.bf16.mxu0 0
  %4475 = vmatpush1.bf16.msra.mxu0 %v4268
  %4476 = vmatprep.subr.bf16.mxu0 0
  %4477 = vmatpush1.bf16.msra.mxu0 %v4269
  %4478 = vmatprep.subr.bf16.mxu0 0
  %4479 = vmatpush1.bf16.msra.mxu0 %v4270
  %4480 = vmatprep.subr.bf16.mxu0 0
  %4481 = vmatpush1.bf16.msra.mxu0 %v4271
  %4482 = vmatprep.subr.bf16.mxu0 0
  %4483 = vmatpush1.bf16.msra.mxu0 %v4272
  %4484 = vmatprep.subr.bf16.mxu0 0
  %4485 = vmatpush1.bf16.msra.mxu0 %v4273
  %4486 = vmatprep.subr.bf16.mxu0 0
  %4487 = vmatpush1.bf16.msra.mxu0 %v4274
  %4488 = vmatprep.subr.bf16.mxu0 0
  %4489 = vmatpush1.bf16.msra.mxu0 %v4275
  %4490 = vmatprep.subr.bf16.mxu0 0
  %4491 = vmatpush1.bf16.msra.mxu0 %v4276
  %4492 = vmatprep.subr.bf16.mxu0 0
  %4493 = vmatpush1.bf16.msra.mxu0 %v4277
  %4494 = vmatprep.mubr.bf16.mxu0 %v3822
  %4495 = vmatmul.mubr.bf16.gmra.mrb[0].mxu0 %v3821
  %v4496 = vpop.f32.mrb[0].mxu0
  %v4497 = vadd.f32 %v4457, %v4496
  %v4498 = vpop.f32.mrb[0].mxu0
  %v4499 = vpop.f32.mrb[0].mxu0
  %v4500 = vpop.f32.mrb[0].mxu0
  %4501 = vdwg.mxu0
  %4502 = vst [vmem:[%s5] sm:$0xff] %v4497
  // Predicated region
  $region22: #{critic_forward.5} parent=0 // pred_check
    _
  $region23: #{critic_forward.5} parent=0 // pred_check_branch
    %4504 = sbr.rel (0) target = $region25
  $region24: #{critic_forward.5} parent=0 // pred_region
    _
  $region25: #{critic_forward.5} parent=0 // pred_fallthru
    _
  // Predicated region
  $region26: #{critic_forward.5} parent=0 // pred_check
    _
  $region27: #{critic_forward.5} parent=0 // pred_check_branch
    %4506 = sbr.rel (0) target = $region29
  $region28: #{critic_forward.5} parent=0 // pred_region
    _
  $region29: #{critic_forward.5} parent=0 // pred_fallthru
    _

// kernel: critic_forward.4
$region0: #{critic_forward.4}
  #allocation0 [shape = 'u32[]', space=smem, size = 0x4, offset = 0x4, fixed_abs, tag = 'smem constant byte address 0x4 - core index']
  #allocation1 [shape = 'u32[144,128]{1,0:T(1,128)}', space=vmem, size = 0x12000, scoped, tag = 'internal scratch']
  #allocation2 [shape = 'f32[8,1024]{1,0:T(8,128)}', space=vmem, size = 0x8000, scoped, tag = 'scratch operand']
  %s0 = inlined_call_operand.vmem [shape: f32[8,64], index: 0, kind: input, shape index: {}]
  %s1 = inlined_call_operand.vmem [shape: bf16[64,64], index: 1, kind: input, shape index: {}]
  %s2 = inlined_call_operand.vmem [shape: f32[1,64], index: 2, kind: input, shape index: {}]
  %s3 = inlined_call_operand.vmem [shape: bf16[64,1024], index: 3, kind: input, shape index: {}]
  %s4 = inlined_call_operand.vmem [shape: f32[1,1024], index: 4, kind: input, shape index: {}]
  %s5 = inlined_call_operand.vmem [shape: f32[8,9216], index: 5, kind: input, shape index: {}]
  %s6 = inlined_call_operand.vmem [shape: s8[9216,1024], index: 6, kind: input, shape index: {}]
  %s7 = inlined_call_operand.vmem [shape: f32[1,1024], index: 7, kind: input, shape index: {}]
  %s8 = inlined_call_operand.vmem [shape: f32[8,1024], index: 8, kind: output, shape index: {}]
  %s9 = sld [smem:[#allocation0]]
  $region73: #{critic_forward.4} parent=0
    _
  %s11 = ssub.s32 1, %s9
  %s12 = scalar_select 0, %s11, %s9
  loop: start=0, step=1, limit=6
  $region2: #{critic_forward.4} parent=0 // loop_pre_header
    _
  $region3: #{critic_forward.4} parent=0 // loop_header
    %s14 = sphi 0, %s18
    %p15 = scmp.ge.s32.totalorder %s14, 6
    %s21 = sphi 0, %s33
    %s22 = sphi 0, %s29
    %s23 = sphi 0, %s21
    %s24 = sphi 0, %s22
    %s25 = sphi 0, %s23
    %s26 = sphi 0, %s24
    %s34 = sphi 0, %s34
    %s36 = sphi 0, %s34
    %s37 = sphi 0, %s36
    %s51 = sphi 0, %s37
    %s55 = sphi 0, %s55
    %s57 = sphi 0, %s55
    %s58 = sphi 0, %s57
    %s72 = sphi 0, %s58
    %s76 = sphi 0, %s76
    %s78 = sphi 0, %s76
    %s79 = sphi 0, %s78
    %s93 = sphi 0, %s79
    %s99 = sphi 0, %s101
    %s102 = sphi 0, %s99
    %s103 = sphi 0, %s102
    %s119 = sphi 0, %s103
    %s125 = sphi 0, %s127
    %s128 = sphi 0, %s125
    %s129 = sphi 0, %s128
    %s145 = sphi 0, %s129
    %s151 = sphi 0, %s153
    %s154 = sphi 0, %s151
    %s155 = sphi 0, %s154
    %s171 = sphi 0, %s155
    %s179 = sphi 0, %s181
    %s182 = sphi 0, %s179
    %s183 = sphi 0, %s182
    %s199 = sphi 0, %s183
    %s205 = sphi 0, %s207
    %s208 = sphi 0, %s205
    %s209 = sphi 0, %s208
    %s225 = sphi 0, %s209
    %s231 = sphi 0, %s233
    %s234 = sphi 0, %s231
    %s235 = sphi 0, %s234
    %s251 = sphi 0, %s235
  $region4: #{critic_forward.4} parent=0 // loop_header_branch
    %17 = sbr.rel (%p15) target = $region8
  $region5: #{critic_forward.4} parent=0 // loop_body
    %s19 = ssub.s32 %s14, 1
    %s20 = ssub.s32 %s14, 2
    %s27 = sadd.s32 1, %s22
    %p28 = scmp.ge.s32.totalorder %s27, 4
    %s29 = scalar_select %p28, 0, %s27
    %s30 = sadd.s32 1, %s21
    %s31 = scalar_select %p28, %s30, %s21
    %p32 = scmp.ge.s32.totalorder %s31, 1
    %s33 = scalar_select %p32, 0, %s31
    %s35 = sadd.s32 %s34, 1
    %p38 = scmp.eq.s32.totalorder %s14, 3
    %p39 = scmp.ne.s32.totalorder %s34, %s36
    %p40 = scmp.eq.s32.totalorder %s14, 0
    %p41 = por %p39, %p40
    %p42 = scmp.ne.s32.totalorder %s34, %s36
    %p43 = scmp.eq.s32.totalorder %s19, 3
    %p44 = por %p42, %p43
    %p45 = scmp.ne.s32.totalorder %s36, %s37
    %p46 = scmp.eq.s32.totalorder %s19, 0
    %p47 = por %p45, %p46
    %p48 = scmp.ne.s32.totalorder %s36, %s37
    %p49 = scmp.eq.s32.totalorder %s20, 3
    %p50 = por %p48, %p49
    %p52 = scmp.ne.s32.totalorder %s37, %s51
    %p53 = scmp.eq.s32.totalorder %s20, 0
    %p54 = por %p52, %p53
    %s56 = sadd.s32 %s55, 1
    %p59 = scmp.eq.s32.totalorder %s14, 3
    %p60 = scmp.ne.s32.totalorder %s55, %s57
    %p61 = scmp.eq.s32.totalorder %s14, 0
    %p62 = por %p60, %p61
    %p63 = scmp.ne.s32.totalorder %s55, %s57
    %p64 = scmp.eq.s32.totalorder %s19, 3
    %p65 = por %p63, %p64
    %p66 = scmp.ne.s32.totalorder %s57, %s58
    %p67 = scmp.eq.s32.totalorder %s19, 0
    %p68 = por %p66, %p67
    %p69 = scmp.ne.s32.totalorder %s57, %s58
    %p70 = scmp.eq.s32.totalorder %s20, 3
    %p71 = por %p69, %p70
    %p73 = scmp.ne.s32.totalorder %s58, %s72
    %p74 = scmp.eq.s32.totalorder %s20, 0
    %p75 = por %p73, %p74
    %s77 = sadd.s32 %s76, 1
    %p80 = scmp.eq.s32.totalorder %s14, 3
    %p81 = scmp.ne.s32.totalorder %s76, %s78
    %p82 = scmp.eq.s32.totalorder %s14, 0
    %p83 = por %p81, %p82
    %p84 = scmp.ne.s32.totalorder %s76, %s78
    %p85 = scmp.eq.s32.totalorder %s19, 3
    %p86 = por %p84, %p85
    %p87 = scmp.ne.s32.totalorder %s78, %s79
    %p88 = scmp.eq.s32.totalorder %s19, 0
    %p89 = por %p87, %p88
    %p90 = scmp.ne.s32.totalorder %s78, %s79
    %p91 = scmp.eq.s32.totalorder %s20, 3
    %p92 = por %p90, %p91
    %p94 = scmp.ne.s32.totalorder %s79, %s93
    %p95 = scmp.eq.s32.totalorder %s20, 0
    %p96 = por %p94, %p95
    %s97 = ssub.s32 %s21, %s33
    %p98 = scmp.eq.s32.totalorder %s97, 0
    %s100 = sadd.s32 %s99, 1
    %s101 = scalar_select %p98, %s99, %s100
    %p104 = pneg %p98
    %p105 = scmp.eq.s32.totalorder %s14, 3
    %p106 = por %p104, %p105
    %p107 = scmp.ne.s32.totalorder %s99, %s102
    %p108 = scmp.eq.s32.totalorder %s14, 0
    %p109 = por %p107, %p108
    %p110 = scmp.ne.s32.totalorder %s99, %s102
    %p111 = scmp.eq.s32.totalorder %s19, 3
    %p112 = por %p110, %p111
    %p113 = scmp.ne.s32.totalorder %s102, %s103
    %p114 = scmp.eq.s32.totalorder %s19, 0
    %p115 = por %p113, %p114
    %p116 = scmp.ne.s32.totalorder %s102, %s103
    %p117 = scmp.eq.s32.totalorder %s20, 3
    %p118 = por %p116, %p117
    %p120 = scmp.ne.s32.totalorder %s103, %s119
    %p121 = scmp.eq.s32.totalorder %s20, 0
    %p122 = por %p120, %p121
    %s123 = ssub.s32 %s21, %s33
    %p124 = scmp.eq.s32.totalorder %s123, 0
    %s126 = sadd.s32 %s125, 1
    %s127 = scalar_select %p124, %s125, %s126
    %p130 = pneg %p124
    %p131 = scmp.eq.s32.totalorder %s14, 3
    %p132 = por %p130, %p131
    %p133 = scmp.ne.s32.totalorder %s125, %s128
    %p134 = scmp.eq.s32.totalorder %s14, 0
    %p135 = por %p133, %p134
    %p136 = scmp.ne.s32.totalorder %s125, %s128
    %p137 = scmp.eq.s32.totalorder %s19, 3
    %p138 = por %p136, %p137
    %p139 = scmp.ne.s32.totalorder %s128, %s129
    %p140 = scmp.eq.s32.totalorder %s19, 0
    %p141 = por %p139, %p140
    %p142 = scmp.ne.s32.totalorder %s128, %s129
    %p143 = scmp.eq.s32.totalorder %s20, 3
    %p144 = por %p142, %p143
    %p146 = scmp.ne.s32.totalorder %s129, %s145
    %p147 = scmp.eq.s32.totalorder %s20, 0
    %p148 = por %p146, %p147
    %s149 = ssub.s32 %s22, %s29
    %p150 = scmp.eq.s32.totalorder %s149, 0
    %s152 = sadd.s32 %s151, 1
    %s153 = scalar_select %p150, %s151, %s152
    %p156 = pneg %p150
    %p157 = scmp.eq.s32.totalorder %s14, 3
    %p158 = por %p156, %p157
    %p159 = scmp.ne.s32.totalorder %s151, %s154
    %p160 = scmp.eq.s32.totalorder %s14, 0
    %p161 = por %p159, %p160
    %p162 = scmp.ne.s32.totalorder %s151, %s154
    %p163 = scmp.eq.s32.totalorder %s19, 3
    %p164 = por %p162, %p163
    %p165 = scmp.ne.s32.totalorder %s154, %s155
    %p166 = scmp.eq.s32.totalorder %s19, 0
    %p167 = por %p165, %p166
    %p168 = scmp.ne.s32.totalorder %s154, %s155
    %p169 = scmp.eq.s32.totalorder %s20, 3
    %p170 = por %p168, %p169
    %p172 = scmp.ne.s32.totalorder %s155, %s171
    %p173 = scmp.eq.s32.totalorder %s20, 0
    %p174 = por %p172, %p173
    %s175 = ssub.s32 %s22, %s29
    %s176 = ssub.s32 %s21, %s33
    %s177 = sor.u32 %s175, %s176
    %p178 = scmp.eq.s32.totalorder %s177, 0
    %s180 = sadd.s32 %s179, 1
    %s181 = scalar_select %p178, %s179, %s180
    %p184 = pneg %p178
    %p185 = scmp.eq.s32.totalorder %s14, 3
    %p186 = por %p184, %p185
    %p187 = scmp.ne.s32.totalorder %s179, %s182
    %p188 = scmp.eq.s32.totalorder %s14, 0
    %p189 = por %p187, %p188
    %p190 = scmp.ne.s32.totalorder %s179, %s182
    %p191 = scmp.eq.s32.totalorder %s19, 3
    %p192 = por %p190, %p191
    %p193 = scmp.ne.s32.totalorder %s182, %s183
    %p194 = scmp.eq.s32.totalorder %s19, 0
    %p195 = por %p193, %p194
    %p196 = scmp.ne.s32.totalorder %s182, %s183
    %p197 = scmp.eq.s32.totalorder %s20, 3
    %p198 = por %p196, %p197
    %p200 = scmp.ne.s32.totalorder %s183, %s199
    %p201 = scmp.eq.s32.totalorder %s20, 0
    %p202 = por %p200, %p201
    %s203 = ssub.s32 %s21, %s33
    %p204 = scmp.eq.s32.totalorder %s203, 0
    %s206 = sadd.s32 %s205, 1
    %s207 = scalar_select %p204, %s205, %s206
    %p210 = pneg %p204
    %p211 = scmp.eq.s32.totalorder %s14, 3
    %p212 = por %p210, %p211
    %p213 = scmp.ne.s32.totalorder %s205, %s208
    %p214 = scmp.eq.s32.totalorder %s14, 0
    %p215 = por %p213, %p214
    %p216 = scmp.ne.s32.totalorder %s205, %s208
    %p217 = scmp.eq.s32.totalorder %s19, 3
    %p218 = por %p216, %p217
    %p219 = scmp.ne.s32.totalorder %s208, %s209
    %p220 = scmp.eq.s32.totalorder %s19, 0
    %p221 = por %p219, %p220
    %p222 = scmp.ne.s32.totalorder %s208, %s209
    %p223 = scmp.eq.s32.totalorder %s20, 3
    %p224 = por %p222, %p223
    %p226 = scmp.ne.s32.totalorder %s209, %s225
    %p227 = scmp.eq.s32.totalorder %s20, 0
    %p228 = por %p226, %p227
    %s229 = ssub.s32 %s21, %s33
    %p230 = scmp.eq.s32.totalorder %s229, 0
    %s232 = sadd.s32 %s231, 1
    %s233 = scalar_select %p230, %s231, %s232
    %p236 = pneg %p230
    %p237 = scmp.eq.s32.totalorder %s14, 3
    %p238 = por %p236, %p237
    %p239 = scmp.ne.s32.totalorder %s231, %s234
    %p240 = scmp.eq.s32.totalorder %s14, 0
    %p241 = por %p239, %p240
    %p242 = scmp.ne.s32.totalorder %s231, %s234
    %p243 = scmp.eq.s32.totalorder %s19, 3
    %p244 = por %p242, %p243
    %p245 = scmp.ne.s32.totalorder %s234, %s235
    %p246 = scmp.eq.s32.totalorder %s19, 0
    %p247 = por %p245, %p246
    %p248 = scmp.ne.s32.totalorder %s234, %s235
    %p249 = scmp.eq.s32.totalorder %s20, 3
    %p250 = por %p248, %p249
    %p252 = scmp.ne.s32.totalorder %s235, %s251
    %p253 = scmp.eq.s32.totalorder %s20, 0
    %p254 = por %p252, %p253
    %p255 = scmp.le.s32.totalorder 1, %s14
    %p256 = scmp.lt.s32.totalorder %s14, 5
    %p257 = pnand %p255, %p256
    %p258 = pneg %p257
    // Predicated region
    $region9: #{critic_forward.4} parent=5 // pred_check
      _
    $region10: #{critic_forward.4} parent=5 // pred_check_branch
      %260 = sbr.rel (%p257) target = $region12
    $region11: #{critic_forward.4} parent=5 // pred_region
      %s261 = ssub.s32 %s14, 1
      // Predicated region
      $region13: #{critic_forward.4} parent=11 // pred_check
        %p262 = pneg %p47
      $region14: #{critic_forward.4} parent=11 // pred_check_branch
        %264 = sbr.rel (%p262) target = $region16
      $region15: #{critic_forward.4} parent=11 // pred_region
        _
      $region16: #{critic_forward.4} parent=11 // pred_fallthru
        _
      // Predicated region
      $region17: #{critic_forward.4} parent=11 // pred_check
        %p265 = pneg %p68
      $region18: #{critic_forward.4} parent=11 // pred_check_branch
        %267 = sbr.rel (%p265) target = $region20
      $region19: #{critic_forward.4} parent=11 // pred_region
        _
      $region20: #{critic_forward.4} parent=11 // pred_fallthru
        _
      // Predicated region
      $region21: #{critic_forward.4} parent=11 // pred_check
        %p268 = pneg %p89
      $region22: #{critic_forward.4} parent=11 // pred_check_branch
        %270 = sbr.rel (%p268) target = $region24
      $region23: #{critic_forward.4} parent=11 // pred_region
        _
      $region24: #{critic_forward.4} parent=11 // pred_fallthru
        _
      // Predicated region
      $region25: #{critic_forward.4} parent=11 // pred_check
        %p271 = pneg %p115
      $region26: #{critic_forward.4} parent=11 // pred_check_branch
        %273 = sbr.rel (%p271) target = $region28
      $region27: #{critic_forward.4} parent=11 // pred_region
        %s274 = smul.u32 8, %s23
        %p275 = scmp.lt.s32.totalorder %s274, 7
        %s276 = scalar_select %p275, %s274, 7
        %s277 = smul.addr %s276, 4
        %s278 = scalar_lea.vmem %s3, %s277
        %s279 = smul.u32 8, %s23
      $region28: #{critic_forward.4} parent=11 // pred_fallthru
        _
      // Predicated region
      $region29: #{critic_forward.4} parent=11 // pred_check
        %p280 = pneg %p141
      $region30: #{critic_forward.4} parent=11 // pred_check_branch
        %282 = sbr.rel (%p280) target = $region32
      $region31: #{critic_forward.4} parent=11 // pred_region
        %s283 = smul.u32 8, %s23
        %p284 = scmp.lt.s32.totalorder %s283, 7
        %s285 = scalar_select %p284, %s283, 7
        %s286 = scalar_lea.vmem %s4, %s285
        %s287 = smul.u32 8, %s23
      $region32: #{critic_forward.4} parent=11 // pred_fallthru
        _
      // Predicated region
      $region33: #{critic_forward.4} parent=11 // pred_check
        %p288 = pneg %p221
      $region34: #{critic_forward.4} parent=11 // pred_check_branch
        %290 = sbr.rel (%p288) target = $region36
      $region35: #{critic_forward.4} parent=11 // pred_region
        %s291 = smul.u32 8, %s23
        %p292 = scmp.lt.s32.totalorder %s291, 7
        %s293 = scalar_select %p292, %s291, 7
        %s294 = scalar_lea.vmem %s7, %s293
        %s295 = smul.u32 8, %s23
      $region36: #{critic_forward.4} parent=11 // pred_fallthru
        _
    $region12: #{critic_forward.4} parent=5 // pred_fallthru
      _
    %p296 = scmp.lt.s32.totalorder %s14, 4
    // Predicated region
    $region37: #{critic_forward.4} parent=5 // pred_check
      %p297 = pneg %p296
    $region38: #{critic_forward.4} parent=5 // pred_check_branch
      %299 = sbr.rel (%p297) target = $region40
    $region39: #{critic_forward.4} parent=5 // pred_region
      // Predicated region
      $region41: #{critic_forward.4} parent=39 // pred_check
        %p300 = pneg %p161
      $region42: #{critic_forward.4} parent=39 // pred_check_branch
        %302 = sbr.rel (%p300) target = $region44
      $region43: #{critic_forward.4} parent=39 // pred_region
        %s303 = smul.u32 18, %s22
        %p304 = scmp.lt.s32.totalorder %s303, 71
        %s305 = scalar_select %p304, %s303, 71
        %s306 = smul.addr %s305, 8
        %s307 = scalar_lea.vmem %s5, %s306
        %s308 = smul.u32 18, %s22
      $region44: #{critic_forward.4} parent=39 // pred_fallthru
        _
      // Predicated region
      $region45: #{critic_forward.4} parent=39 // pred_check
        %p309 = pneg %p189
      $region46: #{critic_forward.4} parent=39 // pred_check_branch
        %311 = sbr.rel (%p309) target = $region48
      $region47: #{critic_forward.4} parent=39 // pred_region
        %s312 = smul.u32 72, %s22
        %s313 = smul.u32 8, %s21
        %p314 = scmp.lt.s32.totalorder %s312, 287
        %s315 = scalar_select %p314, %s312, 287
        %p316 = scmp.lt.s32.totalorder %s313, 7
        %s317 = scalar_select %p316, %s313, 7
        %s318 = smul.addr %s315, 8
        %s319 = sadd.s32 %s317, %s318
        %s320 = smul.addr %s319, 8
        %s321 = scalar_lea.vmem %s6, %s320
        %s322 = smul.u32 72, %s22
        %s323 = smul.u32 8, %s21
      $region48: #{critic_forward.4} parent=39 // pred_fallthru
        _
    $region40: #{critic_forward.4} parent=5 // pred_fallthru
      _
    %p324 = scmp.le.s32.totalorder 1, %s14
    %p325 = scmp.lt.s32.totalorder %s14, 5
    %p326 = pnand %p324, %p325
    %p327 = pneg %p326
    // Predicated region
    $region49: #{critic_forward.4} parent=5 // pred_check
      _
    $region50: #{critic_forward.4} parent=5 // pred_check_branch
      %329 = sbr.rel (%p326) target = $region52
    $region51: #{critic_forward.4} parent=5 // pred_region
      %s330 = ssub.s32 %s14, 1
      %p331 = pneg %p47
      %p332 = pneg %p44
      %p333 = pneg %p68
      %p334 = pneg %p65
      %p335 = pneg %p89
      %p336 = pneg %p86
      %s337 = smul.u32 8, %s23
      %p338 = scmp.lt.s32.totalorder %s337, 7
      %s339 = scalar_select %p338, %s337, 7
      %s340 = smul.addr %s339, 4
      %s341 = scalar_lea.vmem %s3, %s340
      %p342 = pneg %p115
      %p343 = pneg %p112
      %s344 = smul.u32 8, %s23
      %p345 = scmp.lt.s32.totalorder %s344, 7
      %s346 = scalar_select %p345, %s344, 7
      %s347 = scalar_lea.vmem %s4, %s346
      %p348 = pneg %p141
      %p349 = pneg %p138
      %s350 = smul.u32 18, %s24
      %p351 = scmp.lt.s32.totalorder %s350, 71
      %s352 = scalar_select %p351, %s350, 71
      %s353 = smul.addr %s352, 8
      %s354 = scalar_lea.vmem %s5, %s353
      %p355 = pneg %p167
      %p356 = pneg %p164
      %s357 = smul.u32 72, %s24
      %s358 = smul.u32 8, %s23
      %p359 = scmp.lt.s32.totalorder %s357, 287
      %s360 = scalar_select %p359, %s357, 287
      %p361 = scmp.lt.s32.totalorder %s358, 7
      %s362 = scalar_select %p361, %s358, 7
      %s363 = smul.addr %s360, 8
      %s364 = sadd.s32 %s362, %s363
      %s365 = smul.addr %s364, 8
      %s366 = scalar_lea.vmem %s6, %s365
      %p367 = pneg %p195
      %p368 = pneg %p192
      %s369 = smul.u32 8, %s23
      %p370 = scmp.lt.s32.totalorder %s369, 7
      %s371 = scalar_select %p370, %s369, 7
      %s372 = scalar_lea.vmem %s7, %s371
      %p373 = pneg %p221
      %p374 = pneg %p218
      %p375 = pneg %p247
      %p376 = pneg %p244
      %s377 = smul.u32 8, %s23
      %p378 = scmp.lt.s32.totalorder %s377, 7
      %s379 = scalar_select %p378, %s377, 7
      %s380 = smul.addr %s379, 8
      %s381 = scalar_lea.vmem %s8, %s380
      %s382 = smul.u32 8, %s23
      %p383 = scmp.lt.s32.totalorder %s382, 7
      %s384 = scalar_select %p383, %s382, 7
      %s385 = smul.addr %s384, 4
      %s386 = scalar_lea.vmem %s3, %s385
      %s387 = smul.u32 8, %s23
      %s388 = smul.u32 8, %s23
      %p389 = scmp.lt.s32.totalorder %s388, 7
      %s390 = scalar_select %p389, %s388, 7
      %s391 = scalar_lea.vmem %s4, %s390
      %s392 = smul.u32 8, %s23
      %s393 = smul.u32 18, %s24
      %p394 = scmp.lt.s32.totalorder %s393, 71
      %s395 = scalar_select %p394, %s393, 71
      %s396 = smul.addr %s395, 8
      %s397 = scalar_lea.vmem %s5, %s396
      %s398 = smul.u32 18, %s24
      %s399 = smul.u32 72, %s24
      %s400 = smul.u32 8, %s23
      %p401 = scmp.lt.s32.totalorder %s399, 287
      %s402 = scalar_select %p401, %s399, 287
      %p403 = scmp.lt.s32.totalorder %s400, 7
      %s404 = scalar_select %p403, %s400, 7
      %s405 = smul.addr %s402, 8
      %s406 = sadd.s32 %s404, %s405
      %s407 = smul.addr %s406, 8
      %s408 = scalar_lea.vmem %s6, %s407
      %s409 = smul.u32 72, %s24
      %s410 = smul.u32 8, %s23
      %s411 = smul.u32 8, %s23
      %p412 = scmp.lt.s32.totalorder %s411, 7
      %s413 = scalar_select %p412, %s411, 7
      %s414 = scalar_lea.vmem %s7, %s413
      %s415 = smul.u32 8, %s23
      %s416 = smul.u32 8, %s23
      %p417 = scmp.lt.s32.totalorder %s416, 7
      %s418 = scalar_select %p417, %s416, 7
      %s419 = smul.addr %s418, 8
      %s420 = scalar_lea.vmem %s8, %s419
      %s421 = smul.u32 8, %s23
      %p423 = scmp.eq.s32.totalorder %s24, 0
      // Predicated region
      $region53: #{critic_forward.4} parent=51 // pred_check
        %p424 = pneg %p423
      $region54: #{critic_forward.4} parent=51 // pred_check_branch
        %426 = sbr.rel (%p424) target = $region56
      $region55: #{critic_forward.4} parent=51 // pred_region
        %v427 = vld [vmem:[%s0] sm:$0xff]
        %v428 = vpack.c.bf16 %v427, %v427
        %v429 = vld [vmem:[%s1] sm:$0xf]
        %v430 = vld [vmem:[%s1 + $0x4] sm:$0xf]
        %v431 = vld [vmem:[%s1 + $0x8] sm:$0xf]
        %v432 = vld [vmem:[%s1 + $0xc] sm:$0xf]
        %v433 = vld [vmem:[%s1 + $0x10] sm:$0xf]
        %v434 = vld [vmem:[%s1 + $0x14] sm:$0xf]
        %v435 = vld [vmem:[%s1 + $0x18] sm:$0xf]
        %v436 = vld [vmem:[%s1 + $0x1c] sm:$0xf]
        %v437 = vld [vmem:[%s2] sm:$0x1]
        %v439 = vlaneseq
        %v440 = vshrl.u32 %v439, 7
        %v441 = vsub.s32 0, %v440
        %v442 = vrot.slane %v437, %v441
        %v452 = vunpack.c.l.b16 %v429
        %v453 = vunpack.c.l.b16 %v430
        %v454 = vunpack.c.l.b16 %v431
        %v455 = vunpack.c.l.b16 %v432
        %v456 = vunpack.c.l.b16 %v433
        %v457 = vunpack.c.l.b16 %v434
        %v458 = vunpack.c.l.b16 %v435
        %v459 = vunpack.c.l.b16 %v436
        %v460 = vpack.c.b16 %v453, %v452
        %v461 = vpack.c.b16 %v455, %v454
        %v462 = vpack.c.b16 %v457, %v456
        %v463 = vpack.c.b16 %v459, %v458
        %vm468 = vcmask 523264
        %v470 = vsel %vm468, %v428, 0
        %472 = vmatprep.subr.bf16.mxu0 0
        %473 = vmatpush1.bf16.msra.mxu0 %v460
        %474 = vmatprep.subr.bf16.mxu0 0
        %475 = vmatpush1.bf16.msra.mxu0 %v461
        %476 = vmatprep.subr.bf16.mxu0 0
        %477 = vmatpush1.bf16.msra.mxu0 %v462
        %478 = vmatprep.subr.bf16.mxu0 0
        %479 = vmatpush1.bf16.msra.mxu0 %v463
        %480 = vmatprep.subr.bf16.mxu0 0
        %481 = vmatpush1.bf16.msra.mxu0 0
        %482 = vmatprep.subr.bf16.mxu0 0
        %483 = vmatpush1.bf16.msra.mxu0 0
        %484 = vmatprep.subr.bf16.mxu0 0
        %485 = vmatpush1.bf16.msra.mxu0 0
        %486 = vmatprep.subr.bf16.mxu0 0
        %487 = vmatpush1.bf16.msra.mxu0 0
        %488 = vmatprep.subr.bf16.mxu0 0
        %489 = vmatpush1.bf16.msra.mxu0 0
        %490 = vmatprep.subr.bf16.mxu0 0
        %491 = vmatpush1.bf16.msra.mxu0 0
        %492 = vmatprep.subr.bf16.mxu0 0
        %493 = vmatpush1.bf16.msra.mxu0 0
        %494 = vmatprep.subr.bf16.mxu0 0
        %495 = vmatpush1.bf16.msra.mxu0 0
        %496 = vmatprep.subr.bf16.mxu0 0
        %497 = vmatpush1.bf16.msra.mxu0 0
        %498 = vmatprep.subr.bf16.mxu0 0
        %499 = vmatpush1.bf16.msra.mxu0 0
        %500 = vmatprep.subr.bf16.mxu0 0
        %501 = vmatpush1.bf16.msra.mxu0 0
        %502 = vmatprep.subr.bf16.mxu0 0
        %503 = vmatpush1.bf16.msra.mxu0 0
        %504 = vmatprep.mubr.bf16.mxu0 0
        %505 = vmatmul.mubr.bf16.gmra.mrb[0].mxu0 %v470
        %v506 = vpop.f32.mrb[0].mxu0
        %v507 = vadd.f32 %v442, %v506
        %v508 = vpop.f32.mrb[0].mxu0
        %v509 = vpop.f32.mrb[0].mxu0
        %v510 = vpop.f32.mrb[0].mxu0
        %511 = vdwg.mxu0
        %v512 = vmax.f32 %v507, 0.0
        %v513 = vpack.c.bf16 %v512, %v512
        %v514 = vld [vmem:[%s386] sm:$0xff]
        %v515 = vld [vmem:[%s386 + $0x8] sm:$0xff]
        %v516 = vld [vmem:[%s386 + $0x10] sm:$0xff]
        %v517 = vld [vmem:[%s386 + $0x18] sm:$0xff]
        %v518 = vld [vmem:[%s386 + $0x20] sm:$0xff]
        %v519 = vld [vmem:[%s386 + $0x28] sm:$0xff]
        %v520 = vld [vmem:[%s386 + $0x30] sm:$0xff]
        %v521 = vld [vmem:[%s386 + $0x38] sm:$0xff]
        %v522 = vld [vmem:[%s386 + $0x40] sm:$0xff]
        %v523 = vld [vmem:[%s386 + $0x48] sm:$0xff]
        %v524 = vld [vmem:[%s386 + $0x50] sm:$0xff]
        %v525 = vld [vmem:[%s386 + $0x58] sm:$0xff]
        %v526 = vld [vmem:[%s386 + $0x60] sm:$0xff]
        %v527 = vld [vmem:[%s386 + $0x68] sm:$0xff]
        %v528 = vld [vmem:[%s386 + $0x70] sm:$0xff]
        %v529 = vld [vmem:[%s386 + $0x78] sm:$0xff]
        %v530 = vld [vmem:[%s386 + $0x80] sm:$0xff]
        %v531 = vld [vmem:[%s386 + $0x88] sm:$0xff]
        %v532 = vld [vmem:[%s386 + $0x90] sm:$0xff]
        %v533 = vld [vmem:[%s386 + $0x98] sm:$0xff]
        %v534 = vld [vmem:[%s386 + $0xa0] sm:$0xff]
        %v535 = vld [vmem:[%s386 + $0xa8] sm:$0xff]
        %v536 = vld [vmem:[%s386 + $0xb0] sm:$0xff]
        %v537 = vld [vmem:[%s386 + $0xb8] sm:$0xff]
        %v538 = vld [vmem:[%s386 + $0xc0] sm:$0xff]
        %v539 = vld [vmem:[%s386 + $0xc8] sm:$0xff]
        %v540 = vld [vmem:[%s386 + $0xd0] sm:$0xff]
        %v541 = vld [vmem:[%s386 + $0xd8] sm:$0xff]
        %v542 = vld [vmem:[%s386 + $0xe0] sm:$0xff]
        %v543 = vld [vmem:[%s386 + $0xe8] sm:$0xff]
        %v544 = vld [vmem:[%s386 + $0xf0] sm:$0xff]
        %v545 = vld [vmem:[%s386 + $0xf8] sm:$0xff]
        %v546 = vld [vmem:[%s391] sm:$0xff]
        %v548 = vlaneseq
        %v549 = vshrl.u32 %v548, 7
        %v550 = vsub.s32 0, %v549
        %v551 = vrot.slane %v546, %v550
        %v552 = vlaneseq
        %v553 = vshrl.u32 %v552, 7
        %v554 = vsub.s32 1, %v553
        %v555 = vrot.slane %v546, %v554
        %v556 = vlaneseq
        %v557 = vshrl.u32 %v556, 7
        %v558 = vsub.s32 2, %v557
        %v559 = vrot.slane %v546, %v558
        %v560 = vlaneseq
        %v561 = vshrl.u32 %v560, 7
        %v562 = vsub.s32 3, %v561
        %v563 = vrot.slane %v546, %v562
        %v564 = vlaneseq
        %v565 = vshrl.u32 %v564, 7
        %v566 = vsub.s32 4, %v565
        %v567 = vrot.slane %v546, %v566
        %v568 = vlaneseq
        %v569 = vshrl.u32 %v568, 7
        %v570 = vsub.s32 5, %v569
        %v571 = vrot.slane %v546, %v570
        %v572 = vlaneseq
        %v573 = vshrl.u32 %v572, 7
        %v574 = vsub.s32 6, %v573
        %v575 = vrot.slane %v546, %v574
        %v576 = vlaneseq
        %v577 = vshrl.u32 %v576, 7
        %v578 = vsub.s32 7, %v577
        %v579 = vrot.slane %v546, %v578
        %v620 = vunpack.c.l.b16 %v514
        %v621 = vunpack.c.h.b16 %v514
        %v622 = vunpack.c.l.b16 %v515
        %v623 = vunpack.c.h.b16 %v515
        %v624 = vunpack.c.l.b16 %v516
        %v625 = vunpack.c.h.b16 %v516
        %v626 = vunpack.c.l.b16 %v517
        %v627 = vunpack.c.h.b16 %v517
        %v628 = vunpack.c.l.b16 %v518
        %v629 = vunpack.c.h.b16 %v518
        %v630 = vunpack.c.l.b16 %v519
        %v631 = vunpack.c.h.b16 %v519
        %v632 = vunpack.c.l.b16 %v520
        %v633 = vunpack.c.h.b16 %v520
        %v634 = vunpack.c.l.b16 %v521
        %v635 = vunpack.c.h.b16 %v521
        %v636 = vunpack.c.l.b16 %v522
        %v637 = vunpack.c.h.b16 %v522
        %v638 = vunpack.c.l.b16 %v523
        %v639 = vunpack.c.h.b16 %v523
        %v640 = vunpack.c.l.b16 %v524
        %v641 = vunpack.c.h.b16 %v524
        %v642 = vunpack.c.l.b16 %v525
        %v643 = vunpack.c.h.b16 %v525
        %v644 = vunpack.c.l.b16 %v526
        %v645 = vunpack.c.h.b16 %v526
        %v646 = vunpack.c.l.b16 %v527
        %v647 = vunpack.c.h.b16 %v527
        %v648 = vunpack.c.l.b16 %v528
        %v649 = vunpack.c.h.b16 %v528
        %v650 = vunpack.c.l.b16 %v529
        %v651 = vunpack.c.h.b16 %v529
        %v652 = vunpack.c.l.b16 %v530
        %v653 = vunpack.c.h.b16 %v530
        %v654 = vunpack.c.l.b16 %v531
        %v655 = vunpack.c.h.b16 %v531
        %v656 = vunpack.c.l.b16 %v532
        %v657 = vunpack.c.h.b16 %v532
        %v658 = vunpack.c.l.b16 %v533
        %v659 = vunpack.c.h.b16 %v533
        %v660 = vunpack.c.l.b16 %v534
        %v661 = vunpack.c.h.b16 %v534
        %v662 = vunpack.c.l.b16 %v535
        %v663 = vunpack.c.h.b16 %v535
        %v664 = vunpack.c.l.b16 %v536
        %v665 = vunpack.c.h.b16 %v536
        %v666 = vunpack.c.l.b16 %v537
        %v667 = vunpack.c.h.b16 %v537
        %v668 = vunpack.c.l.b16 %v538
        %v669 = vunpack.c.h.b16 %v538
        %v670 = vunpack.c.l.b16 %v539
        %v671 = vunpack.c.h.b16 %v539
        %v672 = vunpack.c.l.b16 %v540
        %v673 = vunpack.c.h.b16 %v540
        %v674 = vunpack.c.l.b16 %v541
        %v675 = vunpack.c.h.b16 %v541
        %v676 = vunpack.c.l.b16 %v542
        %v677 = vunpack.c.h.b16 %v542
        %v678 = vunpack.c.l.b16 %v543
        %v679 = vunpack.c.h.b16 %v543
        %v680 = vunpack.c.l.b16 %v544
        %v681 = vunpack.c.h.b16 %v544
        %v682 = vunpack.c.l.b16 %v545
        %v683 = vunpack.c.h.b16 %v545
        %v684 = vpack.c.b16 %v628, %v620
        %v685 = vpack.c.b16 %v629, %v621
        %v686 = vpack.c.b16 %v630, %v622
        %v687 = vpack.c.b16 %v631, %v623
        %v688 = vpack.c.b16 %v632, %v624
        %v689 = vpack.c.b16 %v633, %v625
        %v690 = vpack.c.b16 %v634, %v626
        %v691 = vpack.c.b16 %v635, %v627
        %v692 = vpack.c.b16 %v644, %v636
        %v693 = vpack.c.b16 %v645, %v637
        %v694 = vpack.c.b16 %v646, %v638
        %v695 = vpack.c.b16 %v647, %v639
        %v696 = vpack.c.b16 %v648, %v640
        %v697 = vpack.c.b16 %v649, %v641
        %v698 = vpack.c.b16 %v650, %v642
        %v699 = vpack.c.b16 %v651, %v643
        %v700 = vpack.c.b16 %v660, %v652
        %v701 = vpack.c.b16 %v661, %v653
        %v702 = vpack.c.b16 %v662, %v654
        %v703 = vpack.c.b16 %v663, %v655
        %v704 = vpack.c.b16 %v664, %v656
        %v705 = vpack.c.b16 %v665, %v657
        %v706 = vpack.c.b16 %v666, %v658
        %v707 = vpack.c.b16 %v667, %v659
        %v708 = vpack.c.b16 %v676, %v668
        %v709 = vpack.c.b16 %v677, %v669
        %v710 = vpack.c.b16 %v678, %v670
        %v711 = vpack.c.b16 %v679, %v671
        %v712 = vpack.c.b16 %v680, %v672
        %v713 = vpack.c.b16 %v681, %v673
        %v714 = vpack.c.b16 %v682, %v674
        %v715 = vpack.c.b16 %v683, %v675
        %v749 = vsel %vm468, %v513, 0
        %751 = vmatprep.subr.bf16.mxu0 %v685
        %752 = vmatpush1.bf16.msra.mxu0 %v684
        %753 = vmatprep.subr.bf16.mxu0 %v693
        %754 = vmatpush1.bf16.msra.mxu0 %v692
        %755 = vmatprep.subr.bf16.mxu0 %v701
        %756 = vmatpush1.bf16.msra.mxu0 %v700
        %757 = vmatprep.subr.bf16.mxu0 %v709
        %758 = vmatpush1.bf16.msra.mxu0 %v708
        %759 = vmatprep.subr.bf16.mxu0 0
        %760 = vmatpush1.bf16.msra.mxu0 0
        %761 = vmatprep.subr.bf16.mxu0 0
        %762 = vmatpush1.bf16.msra.mxu0 0
        %763 = vmatprep.subr.bf16.mxu0 0
        %764 = vmatpush1.bf16.msra.mxu0 0
        %765 = vmatprep.subr.bf16.mxu0 0
        %766 = vmatpush1.bf16.msra.mxu0 0
        %767 = vmatprep.subr.bf16.mxu0 0
        %768 = vmatpush1.bf16.msra.mxu0 0
        %769 = vmatprep.subr.bf16.mxu0 0
        %770 = vmatpush1.bf16.msra.mxu0 0
        %771 = vmatprep.subr.bf16.mxu0 0
        %772 = vmatpush1.bf16.msra.mxu0 0
        %773 = vmatprep.subr.bf16.mxu0 0
        %774 = vmatpush1.bf16.msra.mxu0 0
        %775 = vmatprep.subr.bf16.mxu0 0
        %776 = vmatpush1.bf16.msra.mxu0 0
        %777 = vmatprep.subr.bf16.mxu0 0
        %778 = vmatpush1.bf16.msra.mxu0 0
        %779 = vmatprep.subr.bf16.mxu0 0
        %780 = vmatpush1.bf16.msra.mxu0 0
        %781 = vmatprep.subr.bf16.mxu0 0
        %782 = vmatpush1.bf16.msra.mxu0 0
        %783 = vmatprep.mubr.bf16.mxu0 0
        %784 = vmatmul.mubr.bf16.gmra.mrb[0].mxu0 %v749
        %v785 = vpop.f32.mrb[0].mxu0
        %v786 = vadd.f32 %v551, %v785
        %v787 = vpop.f32.mrb[0].mxu0
        %v788 = vadd.f32 %v555, %v787
        %v789 = vpop.f32.mrb[0].mxu0
        %v790 = vpop.f32.mrb[0].mxu0
        %791 = vdwg.mxu0
        %792 = vmatprep.subr.bf16.mxu0 %v687
        %793 = vmatpush1.bf16.msra.mxu0 %v686
        %794 = vmatprep.subr.bf16.mxu0 %v695
        %795 = vmatpush1.bf16.msra.mxu0 %v694
        %796 = vmatprep.subr.bf16.mxu0 %v703
        %797 = vmatpush1.bf16.msra.mxu0 %v702
        %798 = vmatprep.subr.bf16.mxu0 %v711
        %799 = vmatpush1.bf16.msra.mxu0 %v710
        %800 = vmatprep.subr.bf16.mxu0 0
        %801 = vmatpush1.bf16.msra.mxu0 0
        %802 = vmatprep.subr.bf16.mxu0 0
        %803 = vmatpush1.bf16.msra.mxu0 0
        %804 = vmatprep.subr.bf16.mxu0 0
        %805 = vmatpush1.bf16.msra.mxu0 0
        %806 = vmatprep.subr.bf16.mxu0 0
        %807 = vmatpush1.bf16.msra.mxu0 0
        %808 = vmatprep.subr.bf16.mxu0 0
        %809 = vmatpush1.bf16.msra.mxu0 0
        %810 = vmatprep.subr.bf16.mxu0 0
        %811 = vmatpush1.bf16.msra.mxu0 0
        %812 = vmatprep.subr.bf16.mxu0 0
        %813 = vmatpush1.bf16.msra.mxu0 0
        %814 = vmatprep.subr.bf16.mxu0 0
        %815 = vmatpush1.bf16.msra.mxu0 0
        %816 = vmatprep.subr.bf16.mxu0 0
        %817 = vmatpush1.bf16.msra.mxu0 0
        %818 = vmatprep.subr.bf16.mxu0 0
        %819 = vmatpush1.bf16.msra.mxu0 0
        %820 = vmatprep.subr.bf16.mxu0 0
        %821 = vmatpush1.bf16.msra.mxu0 0
        %822 = vmatprep.subr.bf16.mxu0 0
        %823 = vmatpush1.bf16.msra.mxu0 0
        %824 = vmatprep.mubr.bf16.mxu0 0
        %825 = vmatmul.mubr.bf16.gmra.mrb[0].mxu0 %v749
        %v826 = vpop.f32.mrb[0].mxu0
        %v827 = vadd.f32 %v559, %v826
        %v828 = vpop.f32.mrb[0].mxu0
        %v829 = vadd.f32 %v563, %v828
        %v830 = vpop.f32.mrb[0].mxu0
        %v831 = vpop.f32.mrb[0].mxu0
        %832 = vdwg.mxu0
        %833 = vmatprep.subr.bf16.mxu0 %v689
        %834 = vmatpush1.bf16.msra.mxu0 %v688
        %835 = vmatprep.subr.bf16.mxu0 %v697
        %836 = vmatpush1.bf16.msra.mxu0 %v696
        %837 = vmatprep.subr.bf16.mxu0 %v705
        %838 = vmatpush1.bf16.msra.mxu0 %v704
        %839 = vmatprep.subr.bf16.mxu0 %v713
        %840 = vmatpush1.bf16.msra.mxu0 %v712
        %841 = vmatprep.subr.bf16.mxu0 0
        %842 = vmatpush1.bf16.msra.mxu0 0
        %843 = vmatprep.subr.bf16.mxu0 0
        %844 = vmatpush1.bf16.msra.mxu0 0
        %845 = vmatprep.subr.bf16.mxu0 0
        %846 = vmatpush1.bf16.msra.mxu0 0
        %847 = vmatprep.subr.bf16.mxu0 0
        %848 = vmatpush1.bf16.msra.mxu0 0
        %849 = vmatprep.subr.bf16.mxu0 0
        %850 = vmatpush1.bf16.msra.mxu0 0
        %851 = vmatprep.subr.bf16.mxu0 0
        %852 = vmatpush1.bf16.msra.mxu0 0
        %853 = vmatprep.subr.bf16.mxu0 0
        %854 = vmatpush1.bf16.msra.mxu0 0
        %855 = vmatprep.subr.bf16.mxu0 0
        %856 = vmatpush1.bf16.msra.mxu0 0
        %857 = vmatprep.subr.bf16.mxu0 0
        %858 = vmatpush1.bf16.msra.mxu0 0
        %859 = vmatprep.subr.bf16.mxu0 0
        %860 = vmatpush1.bf16.msra.mxu0 0
        %861 = vmatprep.subr.bf16.mxu0 0
        %862 = vmatpush1.bf16.msra.mxu0 0
        %863 = vmatprep.subr.bf16.mxu0 0
        %864 = vmatpush1.bf16.msra.mxu0 0
        %865 = vmatprep.mubr.bf16.mxu0 0
        %866 = vmatmul.mubr.bf16.gmra.mrb[0].mxu0 %v749
        %v867 = vpop.f32.mrb[0].mxu0
        %v868 = vadd.f32 %v567, %v867
        %v869 = vpop.f32.mrb[0].mxu0
        %v870 = vadd.f32 %v571, %v869
        %v871 = vpop.f32.mrb[0].mxu0
        %v872 = vpop.f32.mrb[0].mxu0
        %873 = vdwg.mxu0
        %874 = vmatprep.subr.bf16.mxu0 %v691
        %875 = vmatpush1.bf16.msra.mxu0 %v690
        %876 = vmatprep.subr.bf16.mxu0 %v699
        %877 = vmatpush1.bf16.msra.mxu0 %v698
        %878 = vmatprep.subr.bf16.mxu0 %v707
        %879 = vmatpush1.bf16.msra.mxu0 %v706
        %880 = vmatprep.subr.bf16.mxu0 %v715
        %881 = vmatpush1.bf16.msra.mxu0 %v714
        %882 = vmatprep.subr.bf16.mxu0 0
        %883 = vmatpush1.bf16.msra.mxu0 0
        %884 = vmatprep.subr.bf16.mxu0 0
        %885 = vmatpush1.bf16.msra.mxu0 0
        %886 = vmatprep.subr.bf16.mxu0 0
        %887 = vmatpush1.bf16.msra.mxu0 0
        %888 = vmatprep.subr.bf16.mxu0 0
        %889 = vmatpush1.bf16.msra.mxu0 0
        %890 = vmatprep.subr.bf16.mxu0 0
        %891 = vmatpush1.bf16.msra.mxu0 0
        %892 = vmatprep.subr.bf16.mxu0 0
        %893 = vmatpush1.bf16.msra.mxu0 0
        %894 = vmatprep.subr.bf16.mxu0 0
        %895 = vmatpush1.bf16.msra.mxu0 0
        %896 = vmatprep.subr.bf16.mxu0 0
        %897 = vmatpush1.bf16.msra.mxu0 0
        %898 = vmatprep.subr.bf16.mxu0 0
        %899 = vmatpush1.bf16.msra.mxu0 0
        %900 = vmatprep.subr.bf16.mxu0 0
        %901 = vmatpush1.bf16.msra.mxu0 0
        %902 = vmatprep.subr.bf16.mxu0 0
        %903 = vmatpush1.bf16.msra.mxu0 0
        %904 = vmatprep.subr.bf16.mxu0 0
        %905 = vmatpush1.bf16.msra.mxu0 0
        %906 = vmatprep.mubr.bf16.mxu0 0
        %907 = vmatmul.mubr.bf16.gmra.mrb[0].mxu0 %v749
        %v908 = vpop.f32.mrb[0].mxu0
        %v909 = vadd.f32 %v575, %v908
        %v910 = vpop.f32.mrb[0].mxu0
        %v911 = vadd.f32 %v579, %v910
        %v912 = vpop.f32.mrb[0].mxu0
        %v913 = vpop.f32.mrb[0].mxu0
        %914 = vdwg.mxu0
        %915 = vst [vmem:[#allocation2] sm:$0xff] %v786
        %916 = vst [vmem:[#allocation2 + $0x8] sm:$0xff] %v788
        %917 = vst [vmem:[#allocation2 + $0x10] sm:$0xff] %v827
        %918 = vst [vmem:[#allocation2 + $0x18] sm:$0xff] %v829
        %919 = vst [vmem:[#allocation2 + $0x20] sm:$0xff] %v868
        %920 = vst [vmem:[#allocation2 + $0x28] sm:$0xff] %v870
        %921 = vst [vmem:[#allocation2 + $0x30] sm:$0xff] %v909
        %922 = vst [vmem:[#allocation2 + $0x38] sm:$0xff] %v911
      $region56: #{critic_forward.4} parent=51 // pred_fallthru
        _
      %v923 = vld [vmem:[%s408] sm:$0xff]
      %v924 = vld [vmem:[%s408 + $0x8] sm:$0xff]
      %v925 = vld [vmem:[%s408 + $0x10] sm:$0xff]
      %v926 = vld [vmem:[%s408 + $0x18] sm:$0xff]
      %v927 = vld [vmem:[%s408 + $0x20] sm:$0xff]
      %v928 = vld [vmem:[%s408 + $0x28] sm:$0xff]
      %v929 = vld [vmem:[%s408 + $0x30] sm:$0xff]
      %v930 = vld [vmem:[%s408 + $0x38] sm:$0xff]
      %v931 = vld [vmem:[%s408 + $0x40] sm:$0xff]
      %v932 = vld [vmem:[%s408 + $0x48] sm:$0xff]
      %v933 = vld [vmem:[%s408 + $0x50] sm:$0xff]
      %v934 = vld [vmem:[%s408 + $0x58] sm:$0xff]
      %v935 = vld [vmem:[%s408 + $0x60] sm:$0xff]
      %v936 = vld [vmem:[%s408 + $0x68] sm:$0xff]
      %v937 = vld [vmem:[%s408 + $0x70] sm:$0xff]
      %v938 = vld [vmem:[%s408 + $0x78] sm:$0xff]
      %v939 = vld [vmem:[%s408 + $0x80] sm:$0xff]
      %v940 = vld [vmem:[%s408 + $0x88] sm:$0xff]
      %v941 = vld [vmem:[%s408 + $0x90] sm:$0xff]
      %v942 = vld [vmem:[%s408 + $0x98] sm:$0xff]
      %v943 = vld [vmem:[%s408 + $0xa0] sm:$0xff]
      %v944 = vld [vmem:[%s408 + $0xa8] sm:$0xff]
      %v945 = vld [vmem:[%s408 + $0xb0] sm:$0xff]
      %v946 = vld [vmem:[%s408 + $0xb8] sm:$0xff]
      %v947 = vld [vmem:[%s408 + $0xc0] sm:$0xff]
      %v948 = vld [vmem:[%s408 + $0xc8] sm:$0xff]
      %v949 = vld [vmem:[%s408 + $0xd0] sm:$0xff]
      %v950 = vld [vmem:[%s408 + $0xd8] sm:$0xff]
      %v951 = vld [vmem:[%s408 + $0xe0] sm:$0xff]
      %v952 = vld [vmem:[%s408 + $0xe8] sm:$0xff]
      %v953 = vld [vmem:[%s408 + $0xf0] sm:$0xff]
      %v954 = vld [vmem:[%s408 + $0xf8] sm:$0xff]
      %v955 = vld [vmem:[%s408 + $0x100] sm:$0xff]
      %v956 = vld [vmem:[%s408 + $0x108] sm:$0xff]
      %v957 = vld [vmem:[%s408 + $0x110] sm:$0xff]
      %v958 = vld [vmem:[%s408 + $0x118] sm:$0xff]
      %v959 = vld [vmem:[%s408 + $0x120] sm:$0xff]
      %v960 = vld [vmem:[%s408 + $0x128] sm:$0xff]
      %v961 = vld [vmem:[%s408 + $0x130] sm:$0xff]
      %v962 = vld [vmem:[%s408 + $0x138] sm:$0xff]
      %v963 = vld [vmem:[%s408 + $0x140] sm:$0xff]
      %v964 = vld [vmem:[%s408 + $0x148] sm:$0xff]
      %v965 = vld [vmem:[%s408 + $0x150] sm:$0xff]
      %v966 = vld [vmem:[%s408 + $0x158] sm:$0xff]
      %v967 = vld [vmem:[%s408 + $0x160] sm:$0xff]
      %v968 = vld [vmem:[%s408 + $0x168] sm:$0xff]
      %v969 = vld [vmem:[%s408 + $0x170] sm:$0xff]
      %v970 = vld [vmem:[%s408 + $0x178] sm:$0xff]
      %v971 = vld [vmem:[%s408 + $0x180] sm:$0xff]
      %v972 = vld [vmem:[%s408 + $0x188] sm:$0xff]
      %v973 = vld [vmem:[%s408 + $0x190] sm:$0xff]
      %v974 = vld [vmem:[%s408 + $0x198] sm:$0xff]
      %v975 = vld [vmem:[%s408 + $0x1a0] sm:$0xff]
      %v976 = vld [vmem:[%s408 + $0x1a8] sm:$0xff]
      %v977 = vld [vmem:[%s408 + $0x1b0] sm:$0xff]
      %v978 = vld [vmem:[%s408 + $0x1b8] sm:$0xff]
      %v979 = vld [vmem:[%s408 + $0x1c0] sm:$0xff]
      %v980 = vld [vmem:[%s408 + $0x1c8] sm:$0xff]
      %v981 = vld [vmem:[%s408 + $0x1d0] sm:$0xff]
      %v982 = vld [vmem:[%s408 + $0x1d8] sm:$0xff]
      %v983 = vld [vmem:[%s408 + $0x1e0] sm:$0xff]
      %v984 = vld [vmem:[%s408 + $0x1e8] sm:$0xff]
      %v985 = vld [vmem:[%s408 + $0x1f0] sm:$0xff]
      %v986 = vld [vmem:[%s408 + $0x1f8] sm:$0xff]
      %v987 = vld [vmem:[%s408 + $0x200] sm:$0xff]
      %v988 = vld [vmem:[%s408 + $0x208] sm:$0xff]
      %v989 = vld [vmem:[%s408 + $0x210] sm:$0xff]
      %v990 = vld [vmem:[%s408 + $0x218] sm:$0xff]
      %v991 = vld [vmem:[%s408 + $0x220] sm:$0xff]
      %v992 = vld [vmem:[%s408 + $0x228] sm:$0xff]
      %v993 = vld [vmem:[%s408 + $0x230] sm:$0xff]
      %v994 = vld [vmem:[%s408 + $0x238] sm:$0xff]
      %v995 = vld [vmem:[%s408 + $0x240] sm:$0xff]
      %v996 = vld [vmem:[%s408 + $0x248] sm:$0xff]
      %v997 = vld [vmem:[%s408 + $0x250] sm:$0xff]
      %v998 = vld [vmem:[%s408 + $0x258] sm:$0xff]
      %v999 = vld [vmem:[%s408 + $0x260] sm:$0xff]
      %v1000 = vld [vmem:[%s408 + $0x268] sm:$0xff]
      %v1001 = vld [vmem:[%s408 + $0x270] sm:$0xff]
      %v1002 = vld [vmem:[%s408 + $0x278] sm:$0xff]
      %v1003 = vld [vmem:[%s408 + $0x280] sm:$0xff]
      %v1004 = vld [vmem:[%s408 + $0x288] sm:$0xff]
      %v1005 = vld [vmem:[%s408 + $0x290] sm:$0xff]
      %v1006 = vld [vmem:[%s408 + $0x298] sm:$0xff]
      %v1007 = vld [vmem:[%s408 + $0x2a0] sm:$0xff]
      %v1008 = vld [vmem:[%s408 + $0x2a8] sm:$0xff]
      %v1009 = vld [vmem:[%s408 + $0x2b0] sm:$0xff]
      %v1010 = vld [vmem:[%s408 + $0x2b8] sm:$0xff]
      %v1011 = vld [vmem:[%s408 + $0x2c0] sm:$0xff]
      %v1012 = vld [vmem:[%s408 + $0x2c8] sm:$0xff]
      %v1013 = vld [vmem:[%s408 + $0x2d0] sm:$0xff]
      %v1014 = vld [vmem:[%s408 + $0x2d8] sm:$0xff]
      %v1015 = vld [vmem:[%s408 + $0x2e0] sm:$0xff]
      %v1016 = vld [vmem:[%s408 + $0x2e8] sm:$0xff]
      %v1017 = vld [vmem:[%s408 + $0x2f0] sm:$0xff]
      %v1018 = vld [vmem:[%s408 + $0x2f8] sm:$0xff]
      %v1019 = vld [vmem:[%s408 + $0x300] sm:$0xff]
      %v1020 = vld [vmem:[%s408 + $0x308] sm:$0xff]
      %v1021 = vld [vmem:[%s408 + $0x310] sm:$0xff]
      %v1022 = vld [vmem:[%s408 + $0x318] sm:$0xff]
      %v1023 = vld [vmem:[%s408 + $0x320] sm:$0xff]
      %v1024 = vld [vmem:[%s408 + $0x328] sm:$0xff]
      %v1025 = vld [vmem:[%s408 + $0x330] sm:$0xff]
      %v1026 = vld [vmem:[%s408 + $0x338] sm:$0xff]
      %v1027 = vld [vmem:[%s408 + $0x340] sm:$0xff]
      %v1028 = vld [vmem:[%s408 + $0x348] sm:$0xff]
      %v1029 = vld [vmem:[%s408 + $0x350] sm:$0xff]
      %v1030 = vld [vmem:[%s408 + $0x358] sm:$0xff]
      %v1031 = vld [vmem:[%s408 + $0x360] sm:$0xff]
      %v1032 = vld [vmem:[%s408 + $0x368] sm:$0xff]
      %v1033 = vld [vmem:[%s408 + $0x370] sm:$0xff]
      %v1034 = vld [vmem:[%s408 + $0x378] sm:$0xff]
      %v1035 = vld [vmem:[%s408 + $0x380] sm:$0xff]
      %v1036 = vld [vmem:[%s408 + $0x388] sm:$0xff]
      %v1037 = vld [vmem:[%s408 + $0x390] sm:$0xff]
      %v1038 = vld [vmem:[%s408 + $0x398] sm:$0xff]
      %v1039 = vld [vmem:[%s408 + $0x3a0] sm:$0xff]
      %v1040 = vld [vmem:[%s408 + $0x3a8] sm:$0xff]
      %v1041 = vld [vmem:[%s408 + $0x3b0] sm:$0xff]
      %v1042 = vld [vmem:[%s408 + $0x3b8] sm:$0xff]
      %v1043 = vld [vmem:[%s408 + $0x3c0] sm:$0xff]
      %v1044 = vld [vmem:[%s408 + $0x3c8] sm:$0xff]
      %v1045 = vld [vmem:[%s408 + $0x3d0] sm:$0xff]
      %v1046 = vld [vmem:[%s408 + $0x3d8] sm:$0xff]
      %v1047 = vld [vmem:[%s408 + $0x3e0] sm:$0xff]
      %v1048 = vld [vmem:[%s408 + $0x3e8] sm:$0xff]
      %v1049 = vld [vmem:[%s408 + $0x3f0] sm:$0xff]
      %v1050 = vld [vmem:[%s408 + $0x3f8] sm:$0xff]
      %v1051 = vld [vmem:[%s408 + $0x400] sm:$0xff]
      %v1052 = vld [vmem:[%s408 + $0x408] sm:$0xff]
      %v1053 = vld [vmem:[%s408 + $0x410] sm:$0xff]
      %v1054 = vld [vmem:[%s408 + $0x418] sm:$0xff]
      %v1055 = vld [vmem:[%s408 + $0x420] sm:$0xff]
      %v1056 = vld [vmem:[%s408 + $0x428] sm:$0xff]
      %v1057 = vld [vmem:[%s408 + $0x430] sm:$0xff]
      %v1058 = vld [vmem:[%s408 + $0x438] sm:$0xff]
      %v1059 = vld [vmem:[%s408 + $0x440] sm:$0xff]
      %v1060 = vld [vmem:[%s408 + $0x448] sm:$0xff]
      %v1061 = vld [vmem:[%s408 + $0x450] sm:$0xff]
      %v1062 = vld [vmem:[%s408 + $0x458] sm:$0xff]
      %v1063 = vld [vmem:[%s408 + $0x460] sm:$0xff]
      %v1064 = vld [vmem:[%s408 + $0x468] sm:$0xff]
      %v1065 = vld [vmem:[%s408 + $0x470] sm:$0xff]
      %v1066 = vld [vmem:[%s408 + $0x478] sm:$0xff]
      %v1067 = vld [vmem:[%s408 + $0x480] sm:$0xff]
      %v1068 = vld [vmem:[%s408 + $0x488] sm:$0xff]
      %v1069 = vld [vmem:[%s408 + $0x490] sm:$0xff]
      %v1070 = vld [vmem:[%s408 + $0x498] sm:$0xff]
      %v1071 = vld [vmem:[%s408 + $0x4a0] sm:$0xff]
      %v1072 = vld [vmem:[%s408 + $0x4a8] sm:$0xff]
      %v1073 = vld [vmem:[%s408 + $0x4b0] sm:$0xff]
      %v1074 = vld [vmem:[%s408 + $0x4b8] sm:$0xff]
      %v1075 = vld [vmem:[%s408 + $0x4c0] sm:$0xff]
      %v1076 = vld [vmem:[%s408 + $0x4c8] sm:$0xff]
      %v1077 = vld [vmem:[%s408 + $0x4d0] sm:$0xff]
      %v1078 = vld [vmem:[%s408 + $0x4d8] sm:$0xff]
      %v1079 = vld [vmem:[%s408 + $0x4e0] sm:$0xff]
      %v1080 = vld [vmem:[%s408 + $0x4e8] sm:$0xff]
      %v1081 = vld [vmem:[%s408 + $0x4f0] sm:$0xff]
      %v1082 = vld [vmem:[%s408 + $0x4f8] sm:$0xff]
      %v1083 = vld [vmem:[%s408 + $0x500] sm:$0xff]
      %v1084 = vld [vmem:[%s408 + $0x508] sm:$0xff]
      %v1085 = vld [vmem:[%s408 + $0x510] sm:$0xff]
      %v1086 = vld [vmem:[%s408 + $0x518] sm:$0xff]
      %v1087 = vld [vmem:[%s408 + $0x520] sm:$0xff]
      %v1088 = vld [vmem:[%s408 + $0x528] sm:$0xff]
      %v1089 = vld [vmem:[%s408 + $0x530] sm:$0xff]
      %v1090 = vld [vmem:[%s408 + $0x538] sm:$0xff]
      %v1091 = vld [vmem:[%s408 + $0x540] sm:$0xff]
      %v1092 = vld [vmem:[%s408 + $0x548] sm:$0xff]
      %v1093 = vld [vmem:[%s408 + $0x550] sm:$0xff]
      %v1094 = vld [vmem:[%s408 + $0x558] sm:$0xff]
      %v1095 = vld [vmem:[%s408 + $0x560] sm:$0xff]
      %v1096 = vld [vmem:[%s408 + $0x568] sm:$0xff]
      %v1097 = vld [vmem:[%s408 + $0x570] sm:$0xff]
      %v1098 = vld [vmem:[%s408 + $0x578] sm:$0xff]
      %v1099 = vld [vmem:[%s408 + $0x580] sm:$0xff]
      %v1100 = vld [vmem:[%s408 + $0x588] sm:$0xff]
      %v1101 = vld [vmem:[%s408 + $0x590] sm:$0xff]
      %v1102 = vld [vmem:[%s408 + $0x598] sm:$0xff]
      %v1103 = vld [vmem:[%s408 + $0x5a0] sm:$0xff]
      %v1104 = vld [vmem:[%s408 + $0x5a8] sm:$0xff]
      %v1105 = vld [vmem:[%s408 + $0x5b0] sm:$0xff]
      %v1106 = vld [vmem:[%s408 + $0x5b8] sm:$0xff]
      %v1107 = vld [vmem:[%s408 + $0x5c0] sm:$0xff]
      %v1108 = vld [vmem:[%s408 + $0x5c8] sm:$0xff]
      %v1109 = vld [vmem:[%s408 + $0x5d0] sm:$0xff]
      %v1110 = vld [vmem:[%s408 + $0x5d8] sm:$0xff]
      %v1111 = vld [vmem:[%s408 + $0x5e0] sm:$0xff]
      %v1112 = vld [vmem:[%s408 + $0x5e8] sm:$0xff]
      %v1113 = vld [vmem:[%s408 + $0x5f0] sm:$0xff]
      %v1114 = vld [vmem:[%s408 + $0x5f8] sm:$0xff]
      %v1115 = vld [vmem:[%s408 + $0x600] sm:$0xff]
      %v1116 = vld [vmem:[%s408 + $0x608] sm:$0xff]
      %v1117 = vld [vmem:[%s408 + $0x610] sm:$0xff]
      %v1118 = vld [vmem:[%s408 + $0x618] sm:$0xff]
      %v1119 = vld [vmem:[%s408 + $0x620] sm:$0xff]
      %v1120 = vld [vmem:[%s408 + $0x628] sm:$0xff]
      %v1121 = vld [vmem:[%s408 + $0x630] sm:$0xff]
      %v1122 = vld [vmem:[%s408 + $0x638] sm:$0xff]
      %v1123 = vld [vmem:[%s408 + $0x640] sm:$0xff]
      %v1124 = vld [vmem:[%s408 + $0x648] sm:$0xff]
      %v1125 = vld [vmem:[%s408 + $0x650] sm:$0xff]
      %v1126 = vld [vmem:[%s408 + $0x658] sm:$0xff]
      %v1127 = vld [vmem:[%s408 + $0x660] sm:$0xff]
      %v1128 = vld [vmem:[%s408 + $0x668] sm:$0xff]
      %v1129 = vld [vmem:[%s408 + $0x670] sm:$0xff]
      %v1130 = vld [vmem:[%s408 + $0x678] sm:$0xff]
      %v1131 = vld [vmem:[%s408 + $0x680] sm:$0xff]
      %v1132 = vld [vmem:[%s408 + $0x688] sm:$0xff]
      %v1133 = vld [vmem:[%s408 + $0x690] sm:$0xff]
      %v1134 = vld [vmem:[%s408 + $0x698] sm:$0xff]
      %v1135 = vld [vmem:[%s408 + $0x6a0] sm:$0xff]
      %v1136 = vld [vmem:[%s408 + $0x6a8] sm:$0xff]
      %v1137 = vld [vmem:[%s408 + $0x6b0] sm:$0xff]
      %v1138 = vld [vmem:[%s408 + $0x6b8] sm:$0xff]
      %v1139 = vld [vmem:[%s408 + $0x6c0] sm:$0xff]
      %v1140 = vld [vmem:[%s408 + $0x6c8] sm:$0xff]
      %v1141 = vld [vmem:[%s408 + $0x6d0] sm:$0xff]
      %v1142 = vld [vmem:[%s408 + $0x6d8] sm:$0xff]
      %v1143 = vld [vmem:[%s408 + $0x6e0] sm:$0xff]
      %v1144 = vld [vmem:[%s408 + $0x6e8] sm:$0xff]
      %v1145 = vld [vmem:[%s408 + $0x6f0] sm:$0xff]
      %v1146 = vld [vmem:[%s408 + $0x6f8] sm:$0xff]
      %v1147 = vld [vmem:[%s408 + $0x700] sm:$0xff]
      %v1148 = vld [vmem:[%s408 + $0x708] sm:$0xff]
      %v1149 = vld [vmem:[%s408 + $0x710] sm:$0xff]
      %v1150 = vld [vmem:[%s408 + $0x718] sm:$0xff]
      %v1151 = vld [vmem:[%s408 + $0x720] sm:$0xff]
      %v1152 = vld [vmem:[%s408 + $0x728] sm:$0xff]
      %v1153 = vld [vmem:[%s408 + $0x730] sm:$0xff]
      %v1154 = vld [vmem:[%s408 + $0x738] sm:$0xff]
      %v1155 = vld [vmem:[%s408 + $0x740] sm:$0xff]
      %v1156 = vld [vmem:[%s408 + $0x748] sm:$0xff]
      %v1157 = vld [vmem:[%s408 + $0x750] sm:$0xff]
      %v1158 = vld [vmem:[%s408 + $0x758] sm:$0xff]
      %v1159 = vld [vmem:[%s408 + $0x760] sm:$0xff]
      %v1160 = vld [vmem:[%s408 + $0x768] sm:$0xff]
      %v1161 = vld [vmem:[%s408 + $0x770] sm:$0xff]
      %v1162 = vld [vmem:[%s408 + $0x778] sm:$0xff]
      %v1163 = vld [vmem:[%s408 + $0x780] sm:$0xff]
      %v1164 = vld [vmem:[%s408 + $0x788] sm:$0xff]
      %v1165 = vld [vmem:[%s408 + $0x790] sm:$0xff]
      %v1166 = vld [vmem:[%s408 + $0x798] sm:$0xff]
      %v1167 = vld [vmem:[%s408 + $0x7a0] sm:$0xff]
      %v1168 = vld [vmem:[%s408 + $0x7a8] sm:$0xff]
      %v1169 = vld [vmem:[%s408 + $0x7b0] sm:$0xff]
      %v1170 = vld [vmem:[%s408 + $0x7b8] sm:$0xff]
      %v1171 = vld [vmem:[%s408 + $0x7c0] sm:$0xff]
      %v1172 = vld [vmem:[%s408 + $0x7c8] sm:$0xff]
      %v1173 = vld [vmem:[%s408 + $0x7d0] sm:$0xff]
      %v1174 = vld [vmem:[%s408 + $0x7d8] sm:$0xff]
      %v1175 = vld [vmem:[%s408 + $0x7e0] sm:$0xff]
      %v1176 = vld [vmem:[%s408 + $0x7e8] sm:$0xff]
      %v1177 = vld [vmem:[%s408 + $0x7f0] sm:$0xff]
      %v1178 = vld [vmem:[%s408 + $0x7f8] sm:$0xff]
      %v1179 = vld [vmem:[%s408 + $0x800] sm:$0xff]
      %v1180 = vld [vmem:[%s408 + $0x808] sm:$0xff]
      %v1181 = vld [vmem:[%s408 + $0x810] sm:$0xff]
      %v1182 = vld [vmem:[%s408 + $0x818] sm:$0xff]
      %v1183 = vld [vmem:[%s408 + $0x820] sm:$0xff]
      %v1184 = vld [vmem:[%s408 + $0x828] sm:$0xff]
      %v1185 = vld [vmem:[%s408 + $0x830] sm:$0xff]
      %v1186 = vld [vmem:[%s408 + $0x838] sm:$0xff]
      %v1187 = vld [vmem:[%s408 + $0x840] sm:$0xff]
      %v1188 = vld [vmem:[%s408 + $0x848] sm:$0xff]
      %v1189 = vld [vmem:[%s408 + $0x850] sm:$0xff]
      %v1190 = vld [vmem:[%s408 + $0x858] sm:$0xff]
      %v1191 = vld [vmem:[%s408 + $0x860] sm:$0xff]
      %v1192 = vld [vmem:[%s408 + $0x868] sm:$0xff]
      %v1193 = vld [vmem:[%s408 + $0x870] sm:$0xff]
      %v1194 = vld [vmem:[%s408 + $0x878] sm:$0xff]
      %v1195 = vld [vmem:[%s408 + $0x880] sm:$0xff]
      %v1196 = vld [vmem:[%s408 + $0x888] sm:$0xff]
      %v1197 = vld [vmem:[%s408 + $0x890] sm:$0xff]
      %v1198 = vld [vmem:[%s408 + $0x898] sm:$0xff]
      %v1199 = vld [vmem:[%s408 + $0x8a0] sm:$0xff]
      %v1200 = vld [vmem:[%s408 + $0x8a8] sm:$0xff]
      %v1201 = vld [vmem:[%s408 + $0x8b0] sm:$0xff]
      %v1202 = vld [vmem:[%s408 + $0x8b8] sm:$0xff]
      %v1203 = vld [vmem:[%s408 + $0x8c0] sm:$0xff]
      %v1204 = vld [vmem:[%s408 + $0x8c8] sm:$0xff]
      %v1205 = vld [vmem:[%s408 + $0x8d0] sm:$0xff]
      %v1206 = vld [vmem:[%s408 + $0x8d8] sm:$0xff]
      %v1207 = vld [vmem:[%s408 + $0x8e0] sm:$0xff]
      %v1208 = vld [vmem:[%s408 + $0x8e8] sm:$0xff]
      %v1209 = vld [vmem:[%s408 + $0x8f0] sm:$0xff]
      %v1210 = vld [vmem:[%s408 + $0x8f8] sm:$0xff]
      %v1211 = vld [vmem:[%s408 + $0x900] sm:$0xff]
      %v1212 = vld [vmem:[%s408 + $0x908] sm:$0xff]
      %v1213 = vld [vmem:[%s408 + $0x910] sm:$0xff]
      %v1214 = vld [vmem:[%s408 + $0x918] sm:$0xff]
      %v1215 = vld [vmem:[%s408 + $0x920] sm:$0xff]
      %v1216 = vld [vmem:[%s408 + $0x928] sm:$0xff]
      %v1217 = vld [vmem:[%s408 + $0x930] sm:$0xff]
      %v1218 = vld [vmem:[%s408 + $0x938] sm:$0xff]
      %v1219 = vld [vmem:[%s408 + $0x940] sm:$0xff]
      %v1220 = vld [vmem:[%s408 + $0x948] sm:$0xff]
      %v1221 = vld [vmem:[%s408 + $0x950] sm:$0xff]
      %v1222 = vld [vmem:[%s408 + $0x958] sm:$0xff]
      %v1223 = vld [vmem:[%s408 + $0x960] sm:$0xff]
      %v1224 = vld [vmem:[%s408 + $0x968] sm:$0xff]
      %v1225 = vld [vmem:[%s408 + $0x970] sm:$0xff]
      %v1226 = vld [vmem:[%s408 + $0x978] sm:$0xff]
      %v1227 = vld [vmem:[%s408 + $0x980] sm:$0xff]
      %v1228 = vld [vmem:[%s408 + $0x988] sm:$0xff]
      %v1229 = vld [vmem:[%s408 + $0x990] sm:$0xff]
      %v1230 = vld [vmem:[%s408 + $0x998] sm:$0xff]
      %v1231 = vld [vmem:[%s408 + $0x9a0] sm:$0xff]
      %v1232 = vld [vmem:[%s408 + $0x9a8] sm:$0xff]
      %v1233 = vld [vmem:[%s408 + $0x9b0] sm:$0xff]
      %v1234 = vld [vmem:[%s408 + $0x9b8] sm:$0xff]
      %v1235 = vld [vmem:[%s408 + $0x9c0] sm:$0xff]
      %v1236 = vld [vmem:[%s408 + $0x9c8] sm:$0xff]
      %v1237 = vld [vmem:[%s408 + $0x9d0] sm:$0xff]
      %v1238 = vld [vmem:[%s408 + $0x9d8] sm:$0xff]
      %v1239 = vld [vmem:[%s408 + $0x9e0] sm:$0xff]
      %v1240 = vld [vmem:[%s408 + $0x9e8] sm:$0xff]
      %v1241 = vld [vmem:[%s408 + $0x9f0] sm:$0xff]
      %v1242 = vld [vmem:[%s408 + $0x9f8] sm:$0xff]
      %v1243 = vld [vmem:[%s408 + $0xa00] sm:$0xff]
      %v1244 = vld [vmem:[%s408 + $0xa08] sm:$0xff]
      %v1245 = vld [vmem:[%s408 + $0xa10] sm:$0xff]
      %v1246 = vld [vmem:[%s408 + $0xa18] sm:$0xff]
      %v1247 = vld [vmem:[%s408 + $0xa20] sm:$0xff]
      %v1248 = vld [vmem:[%s408 + $0xa28] sm:$0xff]
      %v1249 = vld [vmem:[%s408 + $0xa30] sm:$0xff]
      %v1250 = vld [vmem:[%s408 + $0xa38] sm:$0xff]
      %v1251 = vld [vmem:[%s408 + $0xa40] sm:$0xff]
      %v1252 = vld [vmem:[%s408 + $0xa48] sm:$0xff]
      %v1253 = vld [vmem:[%s408 + $0xa50] sm:$0xff]
      %v1254 = vld [vmem:[%s408 + $0xa58] sm:$0xff]
      %v1255 = vld [vmem:[%s408 + $0xa60] sm:$0xff]
      %v1256 = vld [vmem:[%s408 + $0xa68] sm:$0xff]
      %v1257 = vld [vmem:[%s408 + $0xa70] sm:$0xff]
      %v1258 = vld [vmem:[%s408 + $0xa78] sm:$0xff]
      %v1259 = vld [vmem:[%s408 + $0xa80] sm:$0xff]
      %v1260 = vld [vmem:[%s408 + $0xa88] sm:$0xff]
      %v1261 = vld [vmem:[%s408 + $0xa90] sm:$0xff]
      %v1262 = vld [vmem:[%s408 + $0xa98] sm:$0xff]
      %v1263 = vld [vmem:[%s408 + $0xaa0] sm:$0xff]
      %v1264 = vld [vmem:[%s408 + $0xaa8] sm:$0xff]
      %v1265 = vld [vmem:[%s408 + $0xab0] sm:$0xff]
      %v1266 = vld [vmem:[%s408 + $0xab8] sm:$0xff]
      %v1267 = vld [vmem:[%s408 + $0xac0] sm:$0xff]
      %v1268 = vld [vmem:[%s408 + $0xac8] sm:$0xff]
      %v1269 = vld [vmem:[%s408 + $0xad0] sm:$0xff]
      %v1270 = vld [vmem:[%s408 + $0xad8] sm:$0xff]
      %v1271 = vld [vmem:[%s408 + $0xae0] sm:$0xff]
      %v1272 = vld [vmem:[%s408 + $0xae8] sm:$0xff]
      %v1273 = vld [vmem:[%s408 + $0xaf0] sm:$0xff]
      %v1274 = vld [vmem:[%s408 + $0xaf8] sm:$0xff]
      %v1275 = vld [vmem:[%s408 + $0xb00] sm:$0xff]
      %v1276 = vld [vmem:[%s408 + $0xb08] sm:$0xff]
      %v1277 = vld [vmem:[%s408 + $0xb10] sm:$0xff]
      %v1278 = vld [vmem:[%s408 + $0xb18] sm:$0xff]
      %v1279 = vld [vmem:[%s408 + $0xb20] sm:$0xff]
      %v1280 = vld [vmem:[%s408 + $0xb28] sm:$0xff]
      %v1281 = vld [vmem:[%s408 + $0xb30] sm:$0xff]
      %v1282 = vld [vmem:[%s408 + $0xb38] sm:$0xff]
      %v1283 = vld [vmem:[%s408 + $0xb40] sm:$0xff]
      %v1284 = vld [vmem:[%s408 + $0xb48] sm:$0xff]
      %v1285 = vld [vmem:[%s408 + $0xb50] sm:$0xff]
      %v1286 = vld [vmem:[%s408 + $0xb58] sm:$0xff]
      %v1287 = vld [vmem:[%s408 + $0xb60] sm:$0xff]
      %v1288 = vld [vmem:[%s408 + $0xb68] sm:$0xff]
      %v1289 = vld [vmem:[%s408 + $0xb70] sm:$0xff]
      %v1290 = vld [vmem:[%s408 + $0xb78] sm:$0xff]
      %v1291 = vld [vmem:[%s408 + $0xb80] sm:$0xff]
      %v1292 = vld [vmem:[%s408 + $0xb88] sm:$0xff]
      %v1293 = vld [vmem:[%s408 + $0xb90] sm:$0xff]
      %v1294 = vld [vmem:[%s408 + $0xb98] sm:$0xff]
      %v1295 = vld [vmem:[%s408 + $0xba0] sm:$0xff]
      %v1296 = vld [vmem:[%s408 + $0xba8] sm:$0xff]
      %v1297 = vld [vmem:[%s408 + $0xbb0] sm:$0xff]
      %v1298 = vld [vmem:[%s408 + $0xbb8] sm:$0xff]
      %v1299 = vld [vmem:[%s408 + $0xbc0] sm:$0xff]
      %v1300 = vld [vmem:[%s408 + $0xbc8] sm:$0xff]
      %v1301 = vld [vmem:[%s408 + $0xbd0] sm:$0xff]
      %v1302 = vld [vmem:[%s408 + $0xbd8] sm:$0xff]
      %v1303 = vld [vmem:[%s408 + $0xbe0] sm:$0xff]
      %v1304 = vld [vmem:[%s408 + $0xbe8] sm:$0xff]
      %v1305 = vld [vmem:[%s408 + $0xbf0] sm:$0xff]
      %v1306 = vld [vmem:[%s408 + $0xbf8] sm:$0xff]
      %v1307 = vld [vmem:[%s408 + $0xc00] sm:$0xff]
      %v1308 = vld [vmem:[%s408 + $0xc08] sm:$0xff]
      %v1309 = vld [vmem:[%s408 + $0xc10] sm:$0xff]
      %v1310 = vld [vmem:[%s408 + $0xc18] sm:$0xff]
      %v1311 = vld [vmem:[%s408 + $0xc20] sm:$0xff]
      %v1312 = vld [vmem:[%s408 + $0xc28] sm:$0xff]
      %v1313 = vld [vmem:[%s408 + $0xc30] sm:$0xff]
      %v1314 = vld [vmem:[%s408 + $0xc38] sm:$0xff]
      %v1315 = vld [vmem:[%s408 + $0xc40] sm:$0xff]
      %v1316 = vld [vmem:[%s408 + $0xc48] sm:$0xff]
      %v1317 = vld [vmem:[%s408 + $0xc50] sm:$0xff]
      %v1318 = vld [vmem:[%s408 + $0xc58] sm:$0xff]
      %v1319 = vld [vmem:[%s408 + $0xc60] sm:$0xff]
      %v1320 = vld [vmem:[%s408 + $0xc68] sm:$0xff]
      %v1321 = vld [vmem:[%s408 + $0xc70] sm:$0xff]
      %v1322 = vld [vmem:[%s408 + $0xc78] sm:$0xff]
      %v1323 = vld [vmem:[%s408 + $0xc80] sm:$0xff]
      %v1324 = vld [vmem:[%s408 + $0xc88] sm:$0xff]
      %v1325 = vld [vmem:[%s408 + $0xc90] sm:$0xff]
      %v1326 = vld [vmem:[%s408 + $0xc98] sm:$0xff]
      %v1327 = vld [vmem:[%s408 + $0xca0] sm:$0xff]
      %v1328 = vld [vmem:[%s408 + $0xca8] sm:$0xff]
      %v1329 = vld [vmem:[%s408 + $0xcb0] sm:$0xff]
      %v1330 = vld [vmem:[%s408 + $0xcb8] sm:$0xff]
      %v1331 = vld [vmem:[%s408 + $0xcc0] sm:$0xff]
      %v1332 = vld [vmem:[%s408 + $0xcc8] sm:$0xff]
      %v1333 = vld [vmem:[%s408 + $0xcd0] sm:$0xff]
      %v1334 = vld [vmem:[%s408 + $0xcd8] sm:$0xff]
      %v1335 = vld [vmem:[%s408 + $0xce0] sm:$0xff]
      %v1336 = vld [vmem:[%s408 + $0xce8] sm:$0xff]
      %v1337 = vld [vmem:[%s408 + $0xcf0] sm:$0xff]
      %v1338 = vld [vmem:[%s408 + $0xcf8] sm:$0xff]
      %v1339 = vld [vmem:[%s408 + $0xd00] sm:$0xff]
      %v1340 = vld [vmem:[%s408 + $0xd08] sm:$0xff]
      %v1341 = vld [vmem:[%s408 + $0xd10] sm:$0xff]
      %v1342 = vld [vmem:[%s408 + $0xd18] sm:$0xff]
      %v1343 = vld [vmem:[%s408 + $0xd20] sm:$0xff]
      %v1344 = vld [vmem:[%s408 + $0xd28] sm:$0xff]
      %v1345 = vld [vmem:[%s408 + $0xd30] sm:$0xff]
      %v1346 = vld [vmem:[%s408 + $0xd38] sm:$0xff]
      %v1347 = vld [vmem:[%s408 + $0xd40] sm:$0xff]
      %v1348 = vld [vmem:[%s408 + $0xd48] sm:$0xff]
      %v1349 = vld [vmem:[%s408 + $0xd50] sm:$0xff]
      %v1350 = vld [vmem:[%s408 + $0xd58] sm:$0xff]
      %v1351 = vld [vmem:[%s408 + $0xd60] sm:$0xff]
      %v1352 = vld [vmem:[%s408 + $0xd68] sm:$0xff]
      %v1353 = vld [vmem:[%s408 + $0xd70] sm:$0xff]
      %v1354 = vld [vmem:[%s408 + $0xd78] sm:$0xff]
      %v1355 = vld [vmem:[%s408 + $0xd80] sm:$0xff]
      %v1356 = vld [vmem:[%s408 + $0xd88] sm:$0xff]
      %v1357 = vld [vmem:[%s408 + $0xd90] sm:$0xff]
      %v1358 = vld [vmem:[%s408 + $0xd98] sm:$0xff]
      %v1359 = vld [vmem:[%s408 + $0xda0] sm:$0xff]
      %v1360 = vld [vmem:[%s408 + $0xda8] sm:$0xff]
      %v1361 = vld [vmem:[%s408 + $0xdb0] sm:$0xff]
      %v1362 = vld [vmem:[%s408 + $0xdb8] sm:$0xff]
      %v1363 = vld [vmem:[%s408 + $0xdc0] sm:$0xff]
      %v1364 = vld [vmem:[%s408 + $0xdc8] sm:$0xff]
      %v1365 = vld [vmem:[%s408 + $0xdd0] sm:$0xff]
      %v1366 = vld [vmem:[%s408 + $0xdd8] sm:$0xff]
      %v1367 = vld [vmem:[%s408 + $0xde0] sm:$0xff]
      %v1368 = vld [vmem:[%s408 + $0xde8] sm:$0xff]
      %v1369 = vld [vmem:[%s408 + $0xdf0] sm:$0xff]
      %v1370 = vld [vmem:[%s408 + $0xdf8] sm:$0xff]
      %v1371 = vld [vmem:[%s408 + $0xe00] sm:$0xff]
      %v1372 = vld [vmem:[%s408 + $0xe08] sm:$0xff]
      %v1373 = vld [vmem:[%s408 + $0xe10] sm:$0xff]
      %v1374 = vld [vmem:[%s408 + $0xe18] sm:$0xff]
      %v1375 = vld [vmem:[%s408 + $0xe20] sm:$0xff]
      %v1376 = vld [vmem:[%s408 + $0xe28] sm:$0xff]
      %v1377 = vld [vmem:[%s408 + $0xe30] sm:$0xff]
      %v1378 = vld [vmem:[%s408 + $0xe38] sm:$0xff]
      %v1379 = vld [vmem:[%s408 + $0xe40] sm:$0xff]
      %v1380 = vld [vmem:[%s408 + $0xe48] sm:$0xff]
      %v1381 = vld [vmem:[%s408 + $0xe50] sm:$0xff]
      %v1382 = vld [vmem:[%s408 + $0xe58] sm:$0xff]
      %v1383 = vld [vmem:[%s408 + $0xe60] sm:$0xff]
      %v1384 = vld [vmem:[%s408 + $0xe68] sm:$0xff]
      %v1385 = vld [vmem:[%s408 + $0xe70] sm:$0xff]
      %v1386 = vld [vmem:[%s408 + $0xe78] sm:$0xff]
      %v1387 = vld [vmem:[%s408 + $0xe80] sm:$0xff]
      %v1388 = vld [vmem:[%s408 + $0xe88] sm:$0xff]
      %v1389 = vld [vmem:[%s408 + $0xe90] sm:$0xff]
      %v1390 = vld [vmem:[%s408 + $0xe98] sm:$0xff]
      %v1391 = vld [vmem:[%s408 + $0xea0] sm:$0xff]
      %v1392 = vld [vmem:[%s408 + $0xea8] sm:$0xff]
      %v1393 = vld [vmem:[%s408 + $0xeb0] sm:$0xff]
      %v1394 = vld [vmem:[%s408 + $0xeb8] sm:$0xff]
      %v1395 = vld [vmem:[%s408 + $0xec0] sm:$0xff]
      %v1396 = vld [vmem:[%s408 + $0xec8] sm:$0xff]
      %v1397 = vld [vmem:[%s408 + $0xed0] sm:$0xff]
      %v1398 = vld [vmem:[%s408 + $0xed8] sm:$0xff]
      %v1399 = vld [vmem:[%s408 + $0xee0] sm:$0xff]
      %v1400 = vld [vmem:[%s408 + $0xee8] sm:$0xff]
      %v1401 = vld [vmem:[%s408 + $0xef0] sm:$0xff]
      %v1402 = vld [vmem:[%s408 + $0xef8] sm:$0xff]
      %v1403 = vld [vmem:[%s408 + $0xf00] sm:$0xff]
      %v1404 = vld [vmem:[%s408 + $0xf08] sm:$0xff]
      %v1405 = vld [vmem:[%s408 + $0xf10] sm:$0xff]
      %v1406 = vld [vmem:[%s408 + $0xf18] sm:$0xff]
      %v1407 = vld [vmem:[%s408 + $0xf20] sm:$0xff]
      %v1408 = vld [vmem:[%s408 + $0xf28] sm:$0xff]
      %v1409 = vld [vmem:[%s408 + $0xf30] sm:$0xff]
      %v1410 = vld [vmem:[%s408 + $0xf38] sm:$0xff]
      %v1411 = vld [vmem:[%s408 + $0xf40] sm:$0xff]
      %v1412 = vld [vmem:[%s408 + $0xf48] sm:$0xff]
      %v1413 = vld [vmem:[%s408 + $0xf50] sm:$0xff]
      %v1414 = vld [vmem:[%s408 + $0xf58] sm:$0xff]
      %v1415 = vld [vmem:[%s408 + $0xf60] sm:$0xff]
      %v1416 = vld [vmem:[%s408 + $0xf68] sm:$0xff]
      %v1417 = vld [vmem:[%s408 + $0xf70] sm:$0xff]
      %v1418 = vld [vmem:[%s408 + $0xf78] sm:$0xff]
      %v1419 = vld [vmem:[%s408 + $0xf80] sm:$0xff]
      %v1420 = vld [vmem:[%s408 + $0xf88] sm:$0xff]
      %v1421 = vld [vmem:[%s408 + $0xf90] sm:$0xff]
      %v1422 = vld [vmem:[%s408 + $0xf98] sm:$0xff]
      %v1423 = vld [vmem:[%s408 + $0xfa0] sm:$0xff]
      %v1424 = vld [vmem:[%s408 + $0xfa8] sm:$0xff]
      %v1425 = vld [vmem:[%s408 + $0xfb0] sm:$0xff]
      %v1426 = vld [vmem:[%s408 + $0xfb8] sm:$0xff]
      %v1427 = vld [vmem:[%s408 + $0xfc0] sm:$0xff]
      %v1428 = vld [vmem:[%s408 + $0xfc8] sm:$0xff]
      %v1429 = vld [vmem:[%s408 + $0xfd0] sm:$0xff]
      %v1430 = vld [vmem:[%s408 + $0xfd8] sm:$0xff]
      %v1431 = vld [vmem:[%s408 + $0xfe0] sm:$0xff]
      %v1432 = vld [vmem:[%s408 + $0xfe8] sm:$0xff]
      %v1433 = vld [vmem:[%s408 + $0xff0] sm:$0xff]
      %v1434 = vld [vmem:[%s408 + $0xff8] sm:$0xff]
      %v1435 = vld [vmem:[%s408 + $0x1000] sm:$0xff]
      %v1436 = vld [vmem:[%s408 + $0x1008] sm:$0xff]
      %v1437 = vld [vmem:[%s408 + $0x1010] sm:$0xff]
      %v1438 = vld [vmem:[%s408 + $0x1018] sm:$0xff]
      %v1439 = vld [vmem:[%s408 + $0x1020] sm:$0xff]
      %v1440 = vld [vmem:[%s408 + $0x1028] sm:$0xff]
      %v1441 = vld [vmem:[%s408 + $0x1030] sm:$0xff]
      %v1442 = vld [vmem:[%s408 + $0x1038] sm:$0xff]
      %v1443 = vld [vmem:[%s408 + $0x1040] sm:$0xff]
      %v1444 = vld [vmem:[%s408 + $0x1048] sm:$0xff]
      %v1445 = vld [vmem:[%s408 + $0x1050] sm:$0xff]
      %v1446 = vld [vmem:[%s408 + $0x1058] sm:$0xff]
      %v1447 = vld [vmem:[%s408 + $0x1060] sm:$0xff]
      %v1448 = vld [vmem:[%s408 + $0x1068] sm:$0xff]
      %v1449 = vld [vmem:[%s408 + $0x1070] sm:$0xff]
      %v1450 = vld [vmem:[%s408 + $0x1078] sm:$0xff]
      %v1451 = vld [vmem:[%s408 + $0x1080] sm:$0xff]
      %v1452 = vld [vmem:[%s408 + $0x1088] sm:$0xff]
      %v1453 = vld [vmem:[%s408 + $0x1090] sm:$0xff]
      %v1454 = vld [vmem:[%s408 + $0x1098] sm:$0xff]
      %v1455 = vld [vmem:[%s408 + $0x10a0] sm:$0xff]
      %v1456 = vld [vmem:[%s408 + $0x10a8] sm:$0xff]
      %v1457 = vld [vmem:[%s408 + $0x10b0] sm:$0xff]
      %v1458 = vld [vmem:[%s408 + $0x10b8] sm:$0xff]
      %v1459 = vld [vmem:[%s408 + $0x10c0] sm:$0xff]
      %v1460 = vld [vmem:[%s408 + $0x10c8] sm:$0xff]
      %v1461 = vld [vmem:[%s408 + $0x10d0] sm:$0xff]
      %v1462 = vld [vmem:[%s408 + $0x10d8] sm:$0xff]
      %v1463 = vld [vmem:[%s408 + $0x10e0] sm:$0xff]
      %v1464 = vld [vmem:[%s408 + $0x10e8] sm:$0xff]
      %v1465 = vld [vmem:[%s408 + $0x10f0] sm:$0xff]
      %v1466 = vld [vmem:[%s408 + $0x10f8] sm:$0xff]
      %v1467 = vld [vmem:[%s408 + $0x1100] sm:$0xff]
      %v1468 = vld [vmem:[%s408 + $0x1108] sm:$0xff]
      %v1469 = vld [vmem:[%s408 + $0x1110] sm:$0xff]
      %v1470 = vld [vmem:[%s408 + $0x1118] sm:$0xff]
      %v1471 = vld [vmem:[%s408 + $0x1120] sm:$0xff]
      %v1472 = vld [vmem:[%s408 + $0x1128] sm:$0xff]
      %v1473 = vld [vmem:[%s408 + $0x1130] sm:$0xff]
      %v1474 = vld [vmem:[%s408 + $0x1138] sm:$0xff]
      %v1475 = vld [vmem:[%s408 + $0x1140] sm:$0xff]
      %v1476 = vld [vmem:[%s408 + $0x1148] sm:$0xff]
      %v1477 = vld [vmem:[%s408 + $0x1150] sm:$0xff]
      %v1478 = vld [vmem:[%s408 + $0x1158] sm:$0xff]
      %v1479 = vld [vmem:[%s408 + $0x1160] sm:$0xff]
      %v1480 = vld [vmem:[%s408 + $0x1168] sm:$0xff]
      %v1481 = vld [vmem:[%s408 + $0x1170] sm:$0xff]
      %v1482 = vld [vmem:[%s408 + $0x1178] sm:$0xff]
      %v1483 = vld [vmem:[%s408 + $0x1180] sm:$0xff]
      %v1484 = vld [vmem:[%s408 + $0x1188] sm:$0xff]
      %v1485 = vld [vmem:[%s408 + $0x1190] sm:$0xff]
      %v1486 = vld [vmem:[%s408 + $0x1198] sm:$0xff]
      %v1487 = vld [vmem:[%s408 + $0x11a0] sm:$0xff]
      %v1488 = vld [vmem:[%s408 + $0x11a8] sm:$0xff]
      %v1489 = vld [vmem:[%s408 + $0x11b0] sm:$0xff]
      %v1490 = vld [vmem:[%s408 + $0x11b8] sm:$0xff]
      %v1491 = vld [vmem:[%s408 + $0x11c0] sm:$0xff]
      %v1492 = vld [vmem:[%s408 + $0x11c8] sm:$0xff]
      %v1493 = vld [vmem:[%s408 + $0x11d0] sm:$0xff]
      %v1494 = vld [vmem:[%s408 + $0x11d8] sm:$0xff]
      %v1495 = vld [vmem:[%s408 + $0x11e0] sm:$0xff]
      %v1496 = vld [vmem:[%s408 + $0x11e8] sm:$0xff]
      %v1497 = vld [vmem:[%s408 + $0x11f0] sm:$0xff]
      %v1498 = vld [vmem:[%s408 + $0x11f8] sm:$0xff]
      %v1499 = vunpack.c.l.s8.bf16 %v923
      %v1500 = vunpack.c.l.s8.bf16 %v924
      %v1501 = vunpack.c.l.s8.bf16 %v925
      %v1502 = vunpack.c.l.s8.bf16 %v926
      %v1503 = vunpack.c.l.s8.bf16 %v927
      %v1504 = vunpack.c.l.s8.bf16 %v928
      %v1505 = vunpack.c.l.s8.bf16 %v929
      %v1506 = vunpack.c.l.s8.bf16 %v930
      %v1507 = vunpack.c.h.s8.bf16 %v923
      %v1508 = vunpack.c.h.s8.bf16 %v924
      %v1509 = vunpack.c.h.s8.bf16 %v925
      %v1510 = vunpack.c.h.s8.bf16 %v926
      %v1511 = vunpack.c.h.s8.bf16 %v927
      %v1512 = vunpack.c.h.s8.bf16 %v928
      %v1513 = vunpack.c.h.s8.bf16 %v929
      %v1514 = vunpack.c.h.s8.bf16 %v930
      %v1515 = vunpack.c.l.s8.bf16 %v931
      %v1516 = vunpack.c.l.s8.bf16 %v932
      %v1517 = vunpack.c.l.s8.bf16 %v933
      %v1518 = vunpack.c.l.s8.bf16 %v934
      %v1519 = vunpack.c.l.s8.bf16 %v935
      %v1520 = vunpack.c.l.s8.bf16 %v936
      %v1521 = vunpack.c.l.s8.bf16 %v937
      %v1522 = vunpack.c.l.s8.bf16 %v938
      %v1523 = vunpack.c.h.s8.bf16 %v931
      %v1524 = vunpack.c.h.s8.bf16 %v932
      %v1525 = vunpack.c.h.s8.bf16 %v933
      %v1526 = vunpack.c.h.s8.bf16 %v934
      %v1527 = vunpack.c.h.s8.bf16 %v935
      %v1528 = vunpack.c.h.s8.bf16 %v936
      %v1529 = vunpack.c.h.s8.bf16 %v937
      %v1530 = vunpack.c.h.s8.bf16 %v938
      %v1531 = vunpack.c.l.s8.bf16 %v939
      %v1532 = vunpack.c.l.s8.bf16 %v940
      %v1533 = vunpack.c.l.s8.bf16 %v941
      %v1534 = vunpack.c.l.s8.bf16 %v942
      %v1535 = vunpack.c.l.s8.bf16 %v943
      %v1536 = vunpack.c.l.s8.bf16 %v944
      %v1537 = vunpack.c.l.s8.bf16 %v945
      %v1538 = vunpack.c.l.s8.bf16 %v946
      %v1539 = vunpack.c.h.s8.bf16 %v939
      %v1540 = vunpack.c.h.s8.bf16 %v940
      %v1541 = vunpack.c.h.s8.bf16 %v941
      %v1542 = vunpack.c.h.s8.bf16 %v942
      %v1543 = vunpack.c.h.s8.bf16 %v943
      %v1544 = vunpack.c.h.s8.bf16 %v944
      %v1545 = vunpack.c.h.s8.bf16 %v945
      %v1546 = vunpack.c.h.s8.bf16 %v946
      %v1547 = vunpack.c.l.s8.bf16 %v947
      %v1548 = vunpack.c.l.s8.bf16 %v948
      %v1549 = vunpack.c.l.s8.bf16 %v949
      %v1550 = vunpack.c.l.s8.bf16 %v950
      %v1551 = vunpack.c.l.s8.bf16 %v951
      %v1552 = vunpack.c.l.s8.bf16 %v952
      %v1553 = vunpack.c.l.s8.bf16 %v953
      %v1554 = vunpack.c.l.s8.bf16 %v954
      %v1555 = vunpack.c.h.s8.bf16 %v947
      %v1556 = vunpack.c.h.s8.bf16 %v948
      %v1557 = vunpack.c.h.s8.bf16 %v949
      %v1558 = vunpack.c.h.s8.bf16 %v950
      %v1559 = vunpack.c.h.s8.bf16 %v951
      %v1560 = vunpack.c.h.s8.bf16 %v952
      %v1561 = vunpack.c.h.s8.bf16 %v953
      %v1562 = vunpack.c.h.s8.bf16 %v954
      %v1563 = vunpack.c.l.s8.bf16 %v955
      %v1564 = vunpack.c.l.s8.bf16 %v956
      %v1565 = vunpack.c.l.s8.bf16 %v957
      %v1566 = vunpack.c.l.s8.bf16 %v958
      %v1567 = vunpack.c.l.s8.bf16 %v959
      %v1568 = vunpack.c.l.s8.bf16 %v960
      %v1569 = vunpack.c.l.s8.bf16 %v961
      %v1570 = vunpack.c.l.s8.bf16 %v962
      %v1571 = vunpack.c.h.s8.bf16 %v955
      %v1572 = vunpack.c.h.s8.bf16 %v956
      %v1573 = vunpack.c.h.s8.bf16 %v957
      %v1574 = vunpack.c.h.s8.bf16 %v958
      %v1575 = vunpack.c.h.s8.bf16 %v959
      %v1576 = vunpack.c.h.s8.bf16 %v960
      %v1577 = vunpack.c.h.s8.bf16 %v961
      %v1578 = vunpack.c.h.s8.bf16 %v962
      %v1579 = vunpack.c.l.s8.bf16 %v963
      %v1580 = vunpack.c.l.s8.bf16 %v964
      %v1581 = vunpack.c.l.s8.bf16 %v965
      %v1582 = vunpack.c.l.s8.bf16 %v966
      %v1583 = vunpack.c.l.s8.bf16 %v967
      %v1584 = vunpack.c.l.s8.bf16 %v968
      %v1585 = vunpack.c.l.s8.bf16 %v969
      %v1586 = vunpack.c.l.s8.bf16 %v970
      %v1587 = vunpack.c.h.s8.bf16 %v963
      %v1588 = vunpack.c.h.s8.bf16 %v964
      %v1589 = vunpack.c.h.s8.bf16 %v965
      %v1590 = vunpack.c.h.s8.bf16 %v966
      %v1591 = vunpack.c.h.s8.bf16 %v967
      %v1592 = vunpack.c.h.s8.bf16 %v968
      %v1593 = vunpack.c.h.s8.bf16 %v969
      %v1594 = vunpack.c.h.s8.bf16 %v970
      %v1595 = vunpack.c.l.s8.bf16 %v971
      %v1596 = vunpack.c.l.s8.bf16 %v972
      %v1597 = vunpack.c.l.s8.bf16 %v973
      %v1598 = vunpack.c.l.s8.bf16 %v974
      %v1599 = vunpack.c.l.s8.bf16 %v975
      %v1600 = vunpack.c.l.s8.bf16 %v976
      %v1601 = vunpack.c.l.s8.bf16 %v977
      %v1602 = vunpack.c.l.s8.bf16 %v978
      %v1603 = vunpack.c.h.s8.bf16 %v971
      %v1604 = vunpack.c.h.s8.bf16 %v972
      %v1605 = vunpack.c.h.s8.bf16 %v973
      %v1606 = vunpack.c.h.s8.bf16 %v974
      %v1607 = vunpack.c.h.s8.bf16 %v975
      %v1608 = vunpack.c.h.s8.bf16 %v976
      %v1609 = vunpack.c.h.s8.bf16 %v977
      %v1610 = vunpack.c.h.s8.bf16 %v978
      %v1611 = vunpack.c.l.s8.bf16 %v979
      %v1612 = vunpack.c.l.s8.bf16 %v980
      %v1613 = vunpack.c.l.s8.bf16 %v981
      %v1614 = vunpack.c.l.s8.bf16 %v982
      %v1615 = vunpack.c.l.s8.bf16 %v983
      %v1616 = vunpack.c.l.s8.bf16 %v984
      %v1617 = vunpack.c.l.s8.bf16 %v985
      %v1618 = vunpack.c.l.s8.bf16 %v986
      %v1619 = vunpack.c.h.s8.bf16 %v979
      %v1620 = vunpack.c.h.s8.bf16 %v980
      %v1621 = vunpack.c.h.s8.bf16 %v981
      %v1622 = vunpack.c.h.s8.bf16 %v982
      %v1623 = vunpack.c.h.s8.bf16 %v983
      %v1624 = vunpack.c.h.s8.bf16 %v984
      %v1625 = vunpack.c.h.s8.bf16 %v985
      %v1626 = vunpack.c.h.s8.bf16 %v986
      %v1627 = vunpack.c.l.s8.bf16 %v987
      %v1628 = vunpack.c.l.s8.bf16 %v988
      %v1629 = vunpack.c.l.s8.bf16 %v989
      %v1630 = vunpack.c.l.s8.bf16 %v990
      %v1631 = vunpack.c.l.s8.bf16 %v991
      %v1632 = vunpack.c.l.s8.bf16 %v992
      %v1633 = vunpack.c.l.s8.bf16 %v993
      %v1634 = vunpack.c.l.s8.bf16 %v994
      %v1635 = vunpack.c.h.s8.bf16 %v987
      %v1636 = vunpack.c.h.s8.bf16 %v988
      %v1637 = vunpack.c.h.s8.bf16 %v989
      %v1638 = vunpack.c.h.s8.bf16 %v990
      %v1639 = vunpack.c.h.s8.bf16 %v991
      %v1640 = vunpack.c.h.s8.bf16 %v992
      %v1641 = vunpack.c.h.s8.bf16 %v993
      %v1642 = vunpack.c.h.s8.bf16 %v994
      %v1643 = vunpack.c.l.s8.bf16 %v995
      %v1644 = vunpack.c.l.s8.bf16 %v996
      %v1645 = vunpack.c.l.s8.bf16 %v997
      %v1646 = vunpack.c.l.s8.bf16 %v998
      %v1647 = vunpack.c.l.s8.bf16 %v999
      %v1648 = vunpack.c.l.s8.bf16 %v1000
      %v1649 = vunpack.c.l.s8.bf16 %v1001
      %v1650 = vunpack.c.l.s8.bf16 %v1002
      %v1651 = vunpack.c.h.s8.bf16 %v995
      %v1652 = vunpack.c.h.s8.bf16 %v996
      %v1653 = vunpack.c.h.s8.bf16 %v997
      %v1654 = vunpack.c.h.s8.bf16 %v998
      %v1655 = vunpack.c.h.s8.bf16 %v999
      %v1656 = vunpack.c.h.s8.bf16 %v1000
      %v1657 = vunpack.c.h.s8.bf16 %v1001
      %v1658 = vunpack.c.h.s8.bf16 %v1002
      %v1659 = vunpack.c.l.s8.bf16 %v1003
      %v1660 = vunpack.c.l.s8.bf16 %v1004
      %v1661 = vunpack.c.l.s8.bf16 %v1005
      %v1662 = vunpack.c.l.s8.bf16 %v1006
      %v1663 = vunpack.c.l.s8.bf16 %v1007
      %v1664 = vunpack.c.l.s8.bf16 %v1008
      %v1665 = vunpack.c.l.s8.bf16 %v1009
      %v1666 = vunpack.c.l.s8.bf16 %v1010
      %v1667 = vunpack.c.h.s8.bf16 %v1003
      %v1668 = vunpack.c.h.s8.bf16 %v1004
      %v1669 = vunpack.c.h.s8.bf16 %v1005
      %v1670 = vunpack.c.h.s8.bf16 %v1006
      %v1671 = vunpack.c.h.s8.bf16 %v1007
      %v1672 = vunpack.c.h.s8.bf16 %v1008
      %v1673 = vunpack.c.h.s8.bf16 %v1009
      %v1674 = vunpack.c.h.s8.bf16 %v1010
      %v1675 = vunpack.c.l.s8.bf16 %v1011
      %v1676 = vunpack.c.l.s8.bf16 %v1012
      %v1677 = vunpack.c.l.s8.bf16 %v1013
      %v1678 = vunpack.c.l.s8.bf16 %v1014
      %v1679 = vunpack.c.l.s8.bf16 %v1015
      %v1680 = vunpack.c.l.s8.bf16 %v1016
      %v1681 = vunpack.c.l.s8.bf16 %v1017
      %v1682 = vunpack.c.l.s8.bf16 %v1018
      %v1683 = vunpack.c.h.s8.bf16 %v1011
      %v1684 = vunpack.c.h.s8.bf16 %v1012
      %v1685 = vunpack.c.h.s8.bf16 %v1013
      %v1686 = vunpack.c.h.s8.bf16 %v1014
      %v1687 = vunpack.c.h.s8.bf16 %v1015
      %v1688 = vunpack.c.h.s8.bf16 %v1016
      %v1689 = vunpack.c.h.s8.bf16 %v1017
      %v1690 = vunpack.c.h.s8.bf16 %v1018
      %v1691 = vunpack.c.l.s8.bf16 %v1019
      %v1692 = vunpack.c.l.s8.bf16 %v1020
      %v1693 = vunpack.c.l.s8.bf16 %v1021
      %v1694 = vunpack.c.l.s8.bf16 %v1022
      %v1695 = vunpack.c.l.s8.bf16 %v1023
      %v1696 = vunpack.c.l.s8.bf16 %v1024
      %v1697 = vunpack.c.l.s8.bf16 %v1025
      %v1698 = vunpack.c.l.s8.bf16 %v1026
      %v1699 = vunpack.c.h.s8.bf16 %v1019
      %v1700 = vunpack.c.h.s8.bf16 %v1020
      %v1701 = vunpack.c.h.s8.bf16 %v1021
      %v1702 = vunpack.c.h.s8.bf16 %v1022
      %v1703 = vunpack.c.h.s8.bf16 %v1023
      %v1704 = vunpack.c.h.s8.bf16 %v1024
      %v1705 = vunpack.c.h.s8.bf16 %v1025
      %v1706 = vunpack.c.h.s8.bf16 %v1026
      %v1707 = vunpack.c.l.s8.bf16 %v1027
      %v1708 = vunpack.c.l.s8.bf16 %v1028
      %v1709 = vunpack.c.l.s8.bf16 %v1029
      %v1710 = vunpack.c.l.s8.bf16 %v1030
      %v1711 = vunpack.c.l.s8.bf16 %v1031
      %v1712 = vunpack.c.l.s8.bf16 %v1032
      %v1713 = vunpack.c.l.s8.bf16 %v1033
      %v1714 = vunpack.c.l.s8.bf16 %v1034
      %v1715 = vunpack.c.h.s8.bf16 %v1027
      %v1716 = vunpack.c.h.s8.bf16 %v1028
      %v1717 = vunpack.c.h.s8.bf16 %v1029
      %v1718 = vunpack.c.h.s8.bf16 %v1030
      %v1719 = vunpack.c.h.s8.bf16 %v1031
      %v1720 = vunpack.c.h.s8.bf16 %v1032
      %v1721 = vunpack.c.h.s8.bf16 %v1033
      %v1722 = vunpack.c.h.s8.bf16 %v1034
      %v1723 = vunpack.c.l.s8.bf16 %v1035
      %v1724 = vunpack.c.l.s8.bf16 %v1036
      %v1725 = vunpack.c.l.s8.bf16 %v1037
      %v1726 = vunpack.c.l.s8.bf16 %v1038
      %v1727 = vunpack.c.l.s8.bf16 %v1039
      %v1728 = vunpack.c.l.s8.bf16 %v1040
      %v1729 = vunpack.c.l.s8.bf16 %v1041
      %v1730 = vunpack.c.l.s8.bf16 %v1042
      %v1731 = vunpack.c.h.s8.bf16 %v1035
      %v1732 = vunpack.c.h.s8.bf16 %v1036
      %v1733 = vunpack.c.h.s8.bf16 %v1037
      %v1734 = vunpack.c.h.s8.bf16 %v1038
      %v1735 = vunpack.c.h.s8.bf16 %v1039
      %v1736 = vunpack.c.h.s8.bf16 %v1040
      %v1737 = vunpack.c.h.s8.bf16 %v1041
      %v1738 = vunpack.c.h.s8.bf16 %v1042
      %v1739 = vunpack.c.l.s8.bf16 %v1043
      %v1740 = vunpack.c.l.s8.bf16 %v1044
      %v1741 = vunpack.c.l.s8.bf16 %v1045
      %v1742 = vunpack.c.l.s8.bf16 %v1046
      %v1743 = vunpack.c.l.s8.bf16 %v1047
      %v1744 = vunpack.c.l.s8.bf16 %v1048
      %v1745 = vunpack.c.l.s8.bf16 %v1049
      %v1746 = vunpack.c.l.s8.bf16 %v1050
      %v1747 = vunpack.c.h.s8.bf16 %v1043
      %v1748 = vunpack.c.h.s8.bf16 %v1044
      %v1749 = vunpack.c.h.s8.bf16 %v1045
      %v1750 = vunpack.c.h.s8.bf16 %v1046
      %v1751 = vunpack.c.h.s8.bf16 %v1047
      %v1752 = vunpack.c.h.s8.bf16 %v1048
      %v1753 = vunpack.c.h.s8.bf16 %v1049
      %v1754 = vunpack.c.h.s8.bf16 %v1050
      %v1755 = vunpack.c.l.s8.bf16 %v1051
      %v1756 = vunpack.c.l.s8.bf16 %v1052
      %v1757 = vunpack.c.l.s8.bf16 %v1053
      %v1758 = vunpack.c.l.s8.bf16 %v1054
      %v1759 = vunpack.c.l.s8.bf16 %v1055
      %v1760 = vunpack.c.l.s8.bf16 %v1056
      %v1761 = vunpack.c.l.s8.bf16 %v1057
      %v1762 = vunpack.c.l.s8.bf16 %v1058
      %v1763 = vunpack.c.h.s8.bf16 %v1051
      %v1764 = vunpack.c.h.s8.bf16 %v1052
      %v1765 = vunpack.c.h.s8.bf16 %v1053
      %v1766 = vunpack.c.h.s8.bf16 %v1054
      %v1767 = vunpack.c.h.s8.bf16 %v1055
      %v1768 = vunpack.c.h.s8.bf16 %v1056
      %v1769 = vunpack.c.h.s8.bf16 %v1057
      %v1770 = vunpack.c.h.s8.bf16 %v1058
      %v1771 = vunpack.c.l.s8.bf16 %v1059
      %v1772 = vunpack.c.l.s8.bf16 %v1060
      %v1773 = vunpack.c.l.s8.bf16 %v1061
      %v1774 = vunpack.c.l.s8.bf16 %v1062
      %v1775 = vunpack.c.l.s8.bf16 %v1063
      %v1776 = vunpack.c.l.s8.bf16 %v1064
      %v1777 = vunpack.c.l.s8.bf16 %v1065
      %v1778 = vunpack.c.l.s8.bf16 %v1066
      %v1779 = vunpack.c.h.s8.bf16 %v1059
      %v1780 = vunpack.c.h.s8.bf16 %v1060
      %v1781 = vunpack.c.h.s8.bf16 %v1061
      %v1782 = vunpack.c.h.s8.bf16 %v1062
      %v1783 = vunpack.c.h.s8.bf16 %v1063
      %v1784 = vunpack.c.h.s8.bf16 %v1064
      %v1785 = vunpack.c.h.s8.bf16 %v1065
      %v1786 = vunpack.c.h.s8.bf16 %v1066
      %v1787 = vunpack.c.l.s8.bf16 %v1067
      %v1788 = vunpack.c.l.s8.bf16 %v1068
      %v1789 = vunpack.c.l.s8.bf16 %v1069
      %v1790 = vunpack.c.l.s8.bf16 %v1070
      %v1791 = vunpack.c.l.s8.bf16 %v1071
      %v1792 = vunpack.c.l.s8.bf16 %v1072
      %v1793 = vunpack.c.l.s8.bf16 %v1073
      %v1794 = vunpack.c.l.s8.bf16 %v1074
      %v1795 = vunpack.c.h.s8.bf16 %v1067
      %v1796 = vunpack.c.h.s8.bf16 %v1068
      %v1797 = vunpack.c.h.s8.bf16 %v1069
      %v1798 = vunpack.c.h.s8.bf16 %v1070
      %v1799 = vunpack.c.h.s8.bf16 %v1071
      %v1800 = vunpack.c.h.s8.bf16 %v1072
      %v1801 = vunpack.c.h.s8.bf16 %v1073
      %v1802 = vunpack.c.h.s8.bf16 %v1074
      %v1803 = vunpack.c.l.s8.bf16 %v1075
      %v1804 = vunpack.c.l.s8.bf16 %v1076
      %v1805 = vunpack.c.l.s8.bf16 %v1077
      %v1806 = vunpack.c.l.s8.bf16 %v1078
      %v1807 = vunpack.c.l.s8.bf16 %v1079
      %v1808 = vunpack.c.l.s8.bf16 %v1080
      %v1809 = vunpack.c.l.s8.bf16 %v1081
      %v1810 = vunpack.c.l.s8.bf16 %v1082
      %v1811 = vunpack.c.h.s8.bf16 %v1075
      %v1812 = vunpack.c.h.s8.bf16 %v1076
      %v1813 = vunpack.c.h.s8.bf16 %v1077
      %v1814 = vunpack.c.h.s8.bf16 %v1078
      %v1815 = vunpack.c.h.s8.bf16 %v1079
      %v1816 = vunpack.c.h.s8.bf16 %v1080
      %v1817 = vunpack.c.h.s8.bf16 %v1081
      %v1818 = vunpack.c.h.s8.bf16 %v1082
      %v1819 = vunpack.c.l.s8.bf16 %v1083
      %v1820 = vunpack.c.l.s8.bf16 %v1084
      %v1821 = vunpack.c.l.s8.bf16 %v1085
      %v1822 = vunpack.c.l.s8.bf16 %v1086
      %v1823 = vunpack.c.l.s8.bf16 %v1087
      %v1824 = vunpack.c.l.s8.bf16 %v1088
      %v1825 = vunpack.c.l.s8.bf16 %v1089
      %v1826 = vunpack.c.l.s8.bf16 %v1090
      %v1827 = vunpack.c.h.s8.bf16 %v1083
      %v1828 = vunpack.c.h.s8.bf16 %v1084
      %v1829 = vunpack.c.h.s8.bf16 %v1085
      %v1830 = vunpack.c.h.s8.bf16 %v1086
      %v1831 = vunpack.c.h.s8.bf16 %v1087
      %v1832 = vunpack.c.h.s8.bf16 %v1088
      %v1833 = vunpack.c.h.s8.bf16 %v1089
      %v1834 = vunpack.c.h.s8.bf16 %v1090
      %v1835 = vunpack.c.l.s8.bf16 %v1091
      %v1836 = vunpack.c.l.s8.bf16 %v1092
      %v1837 = vunpack.c.l.s8.bf16 %v1093
      %v1838 = vunpack.c.l.s8.bf16 %v1094
      %v1839 = vunpack.c.l.s8.bf16 %v1095
      %v1840 = vunpack.c.l.s8.bf16 %v1096
      %v1841 = vunpack.c.l.s8.bf16 %v1097
      %v1842 = vunpack.c.l.s8.bf16 %v1098
      %v1843 = vunpack.c.h.s8.bf16 %v1091
      %v1844 = vunpack.c.h.s8.bf16 %v1092
      %v1845 = vunpack.c.h.s8.bf16 %v1093
      %v1846 = vunpack.c.h.s8.bf16 %v1094
      %v1847 = vunpack.c.h.s8.bf16 %v1095
      %v1848 = vunpack.c.h.s8.bf16 %v1096
      %v1849 = vunpack.c.h.s8.bf16 %v1097
      %v1850 = vunpack.c.h.s8.bf16 %v1098
      %v1851 = vunpack.c.l.s8.bf16 %v1099
      %v1852 = vunpack.c.l.s8.bf16 %v1100
      %v1853 = vunpack.c.l.s8.bf16 %v1101
      %v1854 = vunpack.c.l.s8.bf16 %v1102
      %v1855 = vunpack.c.l.s8.bf16 %v1103
      %v1856 = vunpack.c.l.s8.bf16 %v1104
      %v1857 = vunpack.c.l.s8.bf16 %v1105
      %v1858 = vunpack.c.l.s8.bf16 %v1106
      %v1859 = vunpack.c.h.s8.bf16 %v1099
      %v1860 = vunpack.c.h.s8.bf16 %v1100
      %v1861 = vunpack.c.h.s8.bf16 %v1101
      %v1862 = vunpack.c.h.s8.bf16 %v1102
      %v1863 = vunpack.c.h.s8.bf16 %v1103
      %v1864 = vunpack.c.h.s8.bf16 %v1104
      %v1865 = vunpack.c.h.s8.bf16 %v1105
      %v1866 = vunpack.c.h.s8.bf16 %v1106
      %v1867 = vunpack.c.l.s8.bf16 %v1107
      %v1868 = vunpack.c.l.s8.bf16 %v1108
      %v1869 = vunpack.c.l.s8.bf16 %v1109
      %v1870 = vunpack.c.l.s8.bf16 %v1110
      %v1871 = vunpack.c.l.s8.bf16 %v1111
      %v1872 = vunpack.c.l.s8.bf16 %v1112
      %v1873 = vunpack.c.l.s8.bf16 %v1113
      %v1874 = vunpack.c.l.s8.bf16 %v1114
      %v1875 = vunpack.c.h.s8.bf16 %v1107
      %v1876 = vunpack.c.h.s8.bf16 %v1108
      %v1877 = vunpack.c.h.s8.bf16 %v1109
      %v1878 = vunpack.c.h.s8.bf16 %v1110
      %v1879 = vunpack.c.h.s8.bf16 %v1111
      %v1880 = vunpack.c.h.s8.bf16 %v1112
      %v1881 = vunpack.c.h.s8.bf16 %v1113
      %v1882 = vunpack.c.h.s8.bf16 %v1114
      %v1883 = vunpack.c.l.s8.bf16 %v1115
      %v1884 = vunpack.c.l.s8.bf16 %v1116
      %v1885 = vunpack.c.l.s8.bf16 %v1117
      %v1886 = vunpack.c.l.s8.bf16 %v1118
      %v1887 = vunpack.c.l.s8.bf16 %v1119
      %v1888 = vunpack.c.l.s8.bf16 %v1120
      %v1889 = vunpack.c.l.s8.bf16 %v1121
      %v1890 = vunpack.c.l.s8.bf16 %v1122
      %v1891 = vunpack.c.h.s8.bf16 %v1115
      %v1892 = vunpack.c.h.s8.bf16 %v1116
      %v1893 = vunpack.c.h.s8.bf16 %v1117
      %v1894 = vunpack.c.h.s8.bf16 %v1118
      %v1895 = vunpack.c.h.s8.bf16 %v1119
      %v1896 = vunpack.c.h.s8.bf16 %v1120
      %v1897 = vunpack.c.h.s8.bf16 %v1121
      %v1898 = vunpack.c.h.s8.bf16 %v1122
      %v1899 = vunpack.c.l.s8.bf16 %v1123
      %v1900 = vunpack.c.l.s8.bf16 %v1124
      %v1901 = vunpack.c.l.s8.bf16 %v1125
      %v1902 = vunpack.c.l.s8.bf16 %v1126
      %v1903 = vunpack.c.l.s8.bf16 %v1127
      %v1904 = vunpack.c.l.s8.bf16 %v1128
      %v1905 = vunpack.c.l.s8.bf16 %v1129
      %v1906 = vunpack.c.l.s8.bf16 %v1130
      %v1907 = vunpack.c.h.s8.bf16 %v1123
      %v1908 = vunpack.c.h.s8.bf16 %v1124
      %v1909 = vunpack.c.h.s8.bf16 %v1125
      %v1910 = vunpack.c.h.s8.bf16 %v1126
      %v1911 = vunpack.c.h.s8.bf16 %v1127
      %v1912 = vunpack.c.h.s8.bf16 %v1128
      %v1913 = vunpack.c.h.s8.bf16 %v1129
      %v1914 = vunpack.c.h.s8.bf16 %v1130
      %v1915 = vunpack.c.l.s8.bf16 %v1131
      %v1916 = vunpack.c.l.s8.bf16 %v1132
      %v1917 = vunpack.c.l.s8.bf16 %v1133
      %v1918 = vunpack.c.l.s8.bf16 %v1134
      %v1919 = vunpack.c.l.s8.bf16 %v1135
      %v1920 = vunpack.c.l.s8.bf16 %v1136
      %v1921 = vunpack.c.l.s8.bf16 %v1137
      %v1922 = vunpack.c.l.s8.bf16 %v1138
      %v1923 = vunpack.c.h.s8.bf16 %v1131
      %v1924 = vunpack.c.h.s8.bf16 %v1132
      %v1925 = vunpack.c.h.s8.bf16 %v1133
      %v1926 = vunpack.c.h.s8.bf16 %v1134
      %v1927 = vunpack.c.h.s8.bf16 %v1135
      %v1928 = vunpack.c.h.s8.bf16 %v1136
      %v1929 = vunpack.c.h.s8.bf16 %v1137
      %v1930 = vunpack.c.h.s8.bf16 %v1138
      %v1931 = vunpack.c.l.s8.bf16 %v1139
      %v1932 = vunpack.c.l.s8.bf16 %v1140
      %v1933 = vunpack.c.l.s8.bf16 %v1141
      %v1934 = vunpack.c.l.s8.bf16 %v1142
      %v1935 = vunpack.c.l.s8.bf16 %v1143
      %v1936 = vunpack.c.l.s8.bf16 %v1144
      %v1937 = vunpack.c.l.s8.bf16 %v1145
      %v1938 = vunpack.c.l.s8.bf16 %v1146
      %v1939 = vunpack.c.h.s8.bf16 %v1139
      %v1940 = vunpack.c.h.s8.bf16 %v1140
      %v1941 = vunpack.c.h.s8.bf16 %v1141
      %v1942 = vunpack.c.h.s8.bf16 %v1142
      %v1943 = vunpack.c.h.s8.bf16 %v1143
      %v1944 = vunpack.c.h.s8.bf16 %v1144
      %v1945 = vunpack.c.h.s8.bf16 %v1145
      %v1946 = vunpack.c.h.s8.bf16 %v1146
      %v1947 = vunpack.c.l.s8.bf16 %v1147
      %v1948 = vunpack.c.l.s8.bf16 %v1148
      %v1949 = vunpack.c.l.s8.bf16 %v1149
      %v1950 = vunpack.c.l.s8.bf16 %v1150
      %v1951 = vunpack.c.l.s8.bf16 %v1151
      %v1952 = vunpack.c.l.s8.bf16 %v1152
      %v1953 = vunpack.c.l.s8.bf16 %v1153
      %v1954 = vunpack.c.l.s8.bf16 %v1154
      %v1955 = vunpack.c.h.s8.bf16 %v1147
      %v1956 = vunpack.c.h.s8.bf16 %v1148
      %v1957 = vunpack.c.h.s8.bf16 %v1149
      %v1958 = vunpack.c.h.s8.bf16 %v1150
      %v1959 = vunpack.c.h.s8.bf16 %v1151
      %v1960 = vunpack.c.h.s8.bf16 %v1152
      %v1961 = vunpack.c.h.s8.bf16 %v1153
      %v1962 = vunpack.c.h.s8.bf16 %v1154
      %v1963 = vunpack.c.l.s8.bf16 %v1155
      %v1964 = vunpack.c.l.s8.bf16 %v1156
      %v1965 = vunpack.c.l.s8.bf16 %v1157
      %v1966 = vunpack.c.l.s8.bf16 %v1158
      %v1967 = vunpack.c.l.s8.bf16 %v1159
      %v1968 = vunpack.c.l.s8.bf16 %v1160
      %v1969 = vunpack.c.l.s8.bf16 %v1161
      %v1970 = vunpack.c.l.s8.bf16 %v1162
      %v1971 = vunpack.c.h.s8.bf16 %v1155
      %v1972 = vunpack.c.h.s8.bf16 %v1156
      %v1973 = vunpack.c.h.s8.bf16 %v1157
      %v1974 = vunpack.c.h.s8.bf16 %v1158
      %v1975 = vunpack.c.h.s8.bf16 %v1159
      %v1976 = vunpack.c.h.s8.bf16 %v1160
      %v1977 = vunpack.c.h.s8.bf16 %v1161
      %v1978 = vunpack.c.h.s8.bf16 %v1162
      %v1979 = vunpack.c.l.s8.bf16 %v1163
      %v1980 = vunpack.c.l.s8.bf16 %v1164
      %v1981 = vunpack.c.l.s8.bf16 %v1165
      %v1982 = vunpack.c.l.s8.bf16 %v1166
      %v1983 = vunpack.c.l.s8.bf16 %v1167
      %v1984 = vunpack.c.l.s8.bf16 %v1168
      %v1985 = vunpack.c.l.s8.bf16 %v1169
      %v1986 = vunpack.c.l.s8.bf16 %v1170
      %v1987 = vunpack.c.h.s8.bf16 %v1163
      %v1988 = vunpack.c.h.s8.bf16 %v1164
      %v1989 = vunpack.c.h.s8.bf16 %v1165
      %v1990 = vunpack.c.h.s8.bf16 %v1166
      %v1991 = vunpack.c.h.s8.bf16 %v1167
      %v1992 = vunpack.c.h.s8.bf16 %v1168
      %v1993 = vunpack.c.h.s8.bf16 %v1169
      %v1994 = vunpack.c.h.s8.bf16 %v1170
      %v1995 = vunpack.c.l.s8.bf16 %v1171
      %v1996 = vunpack.c.l.s8.bf16 %v1172
      %v1997 = vunpack.c.l.s8.bf16 %v1173
      %v1998 = vunpack.c.l.s8.bf16 %v1174
      %v1999 = vunpack.c.l.s8.bf16 %v1175
      %v2000 = vunpack.c.l.s8.bf16 %v1176
      %v2001 = vunpack.c.l.s8.bf16 %v1177
      %v2002 = vunpack.c.l.s8.bf16 %v1178
      %v2003 = vunpack.c.h.s8.bf16 %v1171
      %v2004 = vunpack.c.h.s8.bf16 %v1172
      %v2005 = vunpack.c.h.s8.bf16 %v1173
      %v2006 = vunpack.c.h.s8.bf16 %v1174
      %v2007 = vunpack.c.h.s8.bf16 %v1175
      %v2008 = vunpack.c.h.s8.bf16 %v1176
      %v2009 = vunpack.c.h.s8.bf16 %v1177
      %v2010 = vunpack.c.h.s8.bf16 %v1178
      %v2011 = vunpack.c.l.s8.bf16 %v1179
      %v2012 = vunpack.c.l.s8.bf16 %v1180
      %v2013 = vunpack.c.l.s8.bf16 %v1181
      %v2014 = vunpack.c.l.s8.bf16 %v1182
      %v2015 = vunpack.c.l.s8.bf16 %v1183
      %v2016 = vunpack.c.l.s8.bf16 %v1184
      %v2017 = vunpack.c.l.s8.bf16 %v1185
      %v2018 = vunpack.c.l.s8.bf16 %v1186
      %v2019 = vunpack.c.h.s8.bf16 %v1179
      %v2020 = vunpack.c.h.s8.bf16 %v1180
      %v2021 = vunpack.c.h.s8.bf16 %v1181
      %v2022 = vunpack.c.h.s8.bf16 %v1182
      %v2023 = vunpack.c.h.s8.bf16 %v1183
      %v2024 = vunpack.c.h.s8.bf16 %v1184
      %v2025 = vunpack.c.h.s8.bf16 %v1185
      %v2026 = vunpack.c.h.s8.bf16 %v1186
      %v2027 = vunpack.c.l.s8.bf16 %v1187
      %v2028 = vunpack.c.l.s8.bf16 %v1188
      %v2029 = vunpack.c.l.s8.bf16 %v1189
      %v2030 = vunpack.c.l.s8.bf16 %v1190
      %v2031 = vunpack.c.l.s8.bf16 %v1191
      %v2032 = vunpack.c.l.s8.bf16 %v1192
      %v2033 = vunpack.c.l.s8.bf16 %v1193
      %v2034 = vunpack.c.l.s8.bf16 %v1194
      %v2035 = vunpack.c.h.s8.bf16 %v1187
      %v2036 = vunpack.c.h.s8.bf16 %v1188
      %v2037 = vunpack.c.h.s8.bf16 %v1189
      %v2038 = vunpack.c.h.s8.bf16 %v1190
      %v2039 = vunpack.c.h.s8.bf16 %v1191
      %v2040 = vunpack.c.h.s8.bf16 %v1192
      %v2041 = vunpack.c.h.s8.bf16 %v1193
      %v2042 = vunpack.c.h.s8.bf16 %v1194
      %v2043 = vunpack.c.l.s8.bf16 %v1195
      %v2044 = vunpack.c.l.s8.bf16 %v1196
      %v2045 = vunpack.c.l.s8.bf16 %v1197
      %v2046 = vunpack.c.l.s8.bf16 %v1198
      %v2047 = vunpack.c.l.s8.bf16 %v1199
      %v2048 = vunpack.c.l.s8.bf16 %v1200
      %v2049 = vunpack.c.l.s8.bf16 %v1201
      %v2050 = vunpack.c.l.s8.bf16 %v1202
      %v2051 = vunpack.c.h.s8.bf16 %v1195
      %v2052 = vunpack.c.h.s8.bf16 %v1196
      %v2053 = vunpack.c.h.s8.bf16 %v1197
      %v2054 = vunpack.c.h.s8.bf16 %v1198
      %v2055 = vunpack.c.h.s8.bf16 %v1199
      %v2056 = vunpack.c.h.s8.bf16 %v1200
      %v2057 = vunpack.c.h.s8.bf16 %v1201
      %v2058 = vunpack.c.h.s8.bf16 %v1202
      %v2059 = vunpack.c.l.s8.bf16 %v1203
      %v2060 = vunpack.c.l.s8.bf16 %v1204
      %v2061 = vunpack.c.l.s8.bf16 %v1205
      %v2062 = vunpack.c.l.s8.bf16 %v1206
      %v2063 = vunpack.c.l.s8.bf16 %v1207
      %v2064 = vunpack.c.l.s8.bf16 %v1208
      %v2065 = vunpack.c.l.s8.bf16 %v1209
      %v2066 = vunpack.c.l.s8.bf16 %v1210
      %v2067 = vunpack.c.h.s8.bf16 %v1203
      %v2068 = vunpack.c.h.s8.bf16 %v1204
      %v2069 = vunpack.c.h.s8.bf16 %v1205
      %v2070 = vunpack.c.h.s8.bf16 %v1206
      %v2071 = vunpack.c.h.s8.bf16 %v1207
      %v2072 = vunpack.c.h.s8.bf16 %v1208
      %v2073 = vunpack.c.h.s8.bf16 %v1209
      %v2074 = vunpack.c.h.s8.bf16 %v1210
      %v2075 = vunpack.c.l.s8.bf16 %v1211
      %v2076 = vunpack.c.l.s8.bf16 %v1212
      %v2077 = vunpack.c.l.s8.bf16 %v1213
      %v2078 = vunpack.c.l.s8.bf16 %v1214
      %v2079 = vunpack.c.l.s8.bf16 %v1215
      %v2080 = vunpack.c.l.s8.bf16 %v1216
      %v2081 = vunpack.c.l.s8.bf16 %v1217
      %v2082 = vunpack.c.l.s8.bf16 %v1218
      %v2083 = vunpack.c.h.s8.bf16 %v1211
      %v2084 = vunpack.c.h.s8.bf16 %v1212
      %v2085 = vunpack.c.h.s8.bf16 %v1213
      %v2086 = vunpack.c.h.s8.bf16 %v1214
      %v2087 = vunpack.c.h.s8.bf16 %v1215
      %v2088 = vunpack.c.h.s8.bf16 %v1216
      %v2089 = vunpack.c.h.s8.bf16 %v1217
      %v2090 = vunpack.c.h.s8.bf16 %v1218
      %v2091 = vunpack.c.l.s8.bf16 %v1219
      %v2092 = vunpack.c.l.s8.bf16 %v1220
      %v2093 = vunpack.c.l.s8.bf16 %v1221
      %v2094 = vunpack.c.l.s8.bf16 %v1222
      %v2095 = vunpack.c.l.s8.bf16 %v1223
      %v2096 = vunpack.c.l.s8.bf16 %v1224
      %v2097 = vunpack.c.l.s8.bf16 %v1225
      %v2098 = vunpack.c.l.s8.bf16 %v1226
      %v2099 = vunpack.c.h.s8.bf16 %v1219
      %v2100 = vunpack.c.h.s8.bf16 %v1220
      %v2101 = vunpack.c.h.s8.bf16 %v1221
      %v2102 = vunpack.c.h.s8.bf16 %v1222
      %v2103 = vunpack.c.h.s8.bf16 %v1223
      %v2104 = vunpack.c.h.s8.bf16 %v1224
      %v2105 = vunpack.c.h.s8.bf16 %v1225
      %v2106 = vunpack.c.h.s8.bf16 %v1226
      %v2107 = vunpack.c.l.s8.bf16 %v1227
      %v2108 = vunpack.c.l.s8.bf16 %v1228
      %v2109 = vunpack.c.l.s8.bf16 %v1229
      %v2110 = vunpack.c.l.s8.bf16 %v1230
      %v2111 = vunpack.c.l.s8.bf16 %v1231
      %v2112 = vunpack.c.l.s8.bf16 %v1232
      %v2113 = vunpack.c.l.s8.bf16 %v1233
      %v2114 = vunpack.c.l.s8.bf16 %v1234
      %v2115 = vunpack.c.h.s8.bf16 %v1227
      %v2116 = vunpack.c.h.s8.bf16 %v1228
      %v2117 = vunpack.c.h.s8.bf16 %v1229
      %v2118 = vunpack.c.h.s8.bf16 %v1230
      %v2119 = vunpack.c.h.s8.bf16 %v1231
      %v2120 = vunpack.c.h.s8.bf16 %v1232
      %v2121 = vunpack.c.h.s8.bf16 %v1233
      %v2122 = vunpack.c.h.s8.bf16 %v1234
      %v2123 = vunpack.c.l.s8.bf16 %v1235
      %v2124 = vunpack.c.l.s8.bf16 %v1236
      %v2125 = vunpack.c.l.s8.bf16 %v1237
      %v2126 = vunpack.c.l.s8.bf16 %v1238
      %v2127 = vunpack.c.l.s8.bf16 %v1239
      %v2128 = vunpack.c.l.s8.bf16 %v1240
      %v2129 = vunpack.c.l.s8.bf16 %v1241
      %v2130 = vunpack.c.l.s8.bf16 %v1242
      %v2131 = vunpack.c.h.s8.bf16 %v1235
      %v2132 = vunpack.c.h.s8.bf16 %v1236
      %v2133 = vunpack.c.h.s8.bf16 %v1237
      %v2134 = vunpack.c.h.s8.bf16 %v1238
      %v2135 = vunpack.c.h.s8.bf16 %v1239
      %v2136 = vunpack.c.h.s8.bf16 %v1240
      %v2137 = vunpack.c.h.s8.bf16 %v1241
      %v2138 = vunpack.c.h.s8.bf16 %v1242
      %v2139 = vunpack.c.l.s8.bf16 %v1243
      %v2140 = vunpack.c.l.s8.bf16 %v1244
      %v2141 = vunpack.c.l.s8.bf16 %v1245
      %v2142 = vunpack.c.l.s8.bf16 %v1246
      %v2143 = vunpack.c.l.s8.bf16 %v1247
      %v2144 = vunpack.c.l.s8.bf16 %v1248
      %v2145 = vunpack.c.l.s8.bf16 %v1249
      %v2146 = vunpack.c.l.s8.bf16 %v1250
      %v2147 = vunpack.c.h.s8.bf16 %v1243
      %v2148 = vunpack.c.h.s8.bf16 %v1244
      %v2149 = vunpack.c.h.s8.bf16 %v1245
      %v2150 = vunpack.c.h.s8.bf16 %v1246
      %v2151 = vunpack.c.h.s8.bf16 %v1247
      %v2152 = vunpack.c.h.s8.bf16 %v1248
      %v2153 = vunpack.c.h.s8.bf16 %v1249
      %v2154 = vunpack.c.h.s8.bf16 %v1250
      %v2155 = vunpack.c.l.s8.bf16 %v1251
      %v2156 = vunpack.c.l.s8.bf16 %v1252
      %v2157 = vunpack.c.l.s8.bf16 %v1253
      %v2158 = vunpack.c.l.s8.bf16 %v1254
      %v2159 = vunpack.c.l.s8.bf16 %v1255
      %v2160 = vunpack.c.l.s8.bf16 %v1256
      %v2161 = vunpack.c.l.s8.bf16 %v1257
      %v2162 = vunpack.c.l.s8.bf16 %v1258
      %v2163 = vunpack.c.h.s8.bf16 %v1251
      %v2164 = vunpack.c.h.s8.bf16 %v1252
      %v2165 = vunpack.c.h.s8.bf16 %v1253
      %v2166 = vunpack.c.h.s8.bf16 %v1254
      %v2167 = vunpack.c.h.s8.bf16 %v1255
      %v2168 = vunpack.c.h.s8.bf16 %v1256
      %v2169 = vunpack.c.h.s8.bf16 %v1257
      %v2170 = vunpack.c.h.s8.bf16 %v1258
      %v2171 = vunpack.c.l.s8.bf16 %v1259
      %v2172 = vunpack.c.l.s8.bf16 %v1260
      %v2173 = vunpack.c.l.s8.bf16 %v1261
      %v2174 = vunpack.c.l.s8.bf16 %v1262
      %v2175 = vunpack.c.l.s8.bf16 %v1263
      %v2176 = vunpack.c.l.s8.bf16 %v1264
      %v2177 = vunpack.c.l.s8.bf16 %v1265
      %v2178 = vunpack.c.l.s8.bf16 %v1266
      %v2179 = vunpack.c.h.s8.bf16 %v1259
      %v2180 = vunpack.c.h.s8.bf16 %v1260
      %v2181 = vunpack.c.h.s8.bf16 %v1261
      %v2182 = vunpack.c.h.s8.bf16 %v1262
      %v2183 = vunpack.c.h.s8.bf16 %v1263
      %v2184 = vunpack.c.h.s8.bf16 %v1264
      %v2185 = vunpack.c.h.s8.bf16 %v1265
      %v2186 = vunpack.c.h.s8.bf16 %v1266
      %v2187 = vunpack.c.l.s8.bf16 %v1267
      %v2188 = vunpack.c.l.s8.bf16 %v1268
      %v2189 = vunpack.c.l.s8.bf16 %v1269
      %v2190 = vunpack.c.l.s8.bf16 %v1270
      %v2191 = vunpack.c.l.s8.bf16 %v1271
      %v2192 = vunpack.c.l.s8.bf16 %v1272
      %v2193 = vunpack.c.l.s8.bf16 %v1273
      %v2194 = vunpack.c.l.s8.bf16 %v1274
      %v2195 = vunpack.c.h.s8.bf16 %v1267
      %v2196 = vunpack.c.h.s8.bf16 %v1268
      %v2197 = vunpack.c.h.s8.bf16 %v1269
      %v2198 = vunpack.c.h.s8.bf16 %v1270
      %v2199 = vunpack.c.h.s8.bf16 %v1271
      %v2200 = vunpack.c.h.s8.bf16 %v1272
      %v2201 = vunpack.c.h.s8.bf16 %v1273
      %v2202 = vunpack.c.h.s8.bf16 %v1274
      %v2203 = vunpack.c.l.s8.bf16 %v1275
      %v2204 = vunpack.c.l.s8.bf16 %v1276
      %v2205 = vunpack.c.l.s8.bf16 %v1277
      %v2206 = vunpack.c.l.s8.bf16 %v1278
      %v2207 = vunpack.c.l.s8.bf16 %v1279
      %v2208 = vunpack.c.l.s8.bf16 %v1280
      %v2209 = vunpack.c.l.s8.bf16 %v1281
      %v2210 = vunpack.c.l.s8.bf16 %v1282
      %v2211 = vunpack.c.h.s8.bf16 %v1275
      %v2212 = vunpack.c.h.s8.bf16 %v1276
      %v2213 = vunpack.c.h.s8.bf16 %v1277
      %v2214 = vunpack.c.h.s8.bf16 %v1278
      %v2215 = vunpack.c.h.s8.bf16 %v1279
      %v2216 = vunpack.c.h.s8.bf16 %v1280
      %v2217 = vunpack.c.h.s8.bf16 %v1281
      %v2218 = vunpack.c.h.s8.bf16 %v1282
      %v2219 = vunpack.c.l.s8.bf16 %v1283
      %v2220 = vunpack.c.l.s8.bf16 %v1284
      %v2221 = vunpack.c.l.s8.bf16 %v1285
      %v2222 = vunpack.c.l.s8.bf16 %v1286
      %v2223 = vunpack.c.l.s8.bf16 %v1287
      %v2224 = vunpack.c.l.s8.bf16 %v1288
      %v2225 = vunpack.c.l.s8.bf16 %v1289
      %v2226 = vunpack.c.l.s8.bf16 %v1290
      %v2227 = vunpack.c.h.s8.bf16 %v1283
      %v2228 = vunpack.c.h.s8.bf16 %v1284
      %v2229 = vunpack.c.h.s8.bf16 %v1285
      %v2230 = vunpack.c.h.s8.bf16 %v1286
      %v2231 = vunpack.c.h.s8.bf16 %v1287
      %v2232 = vunpack.c.h.s8.bf16 %v1288
      %v2233 = vunpack.c.h.s8.bf16 %v1289
      %v2234 = vunpack.c.h.s8.bf16 %v1290
      %v2235 = vunpack.c.l.s8.bf16 %v1291
      %v2236 = vunpack.c.l.s8.bf16 %v1292
      %v2237 = vunpack.c.l.s8.bf16 %v1293
      %v2238 = vunpack.c.l.s8.bf16 %v1294
      %v2239 = vunpack.c.l.s8.bf16 %v1295
      %v2240 = vunpack.c.l.s8.bf16 %v1296
      %v2241 = vunpack.c.l.s8.bf16 %v1297
      %v2242 = vunpack.c.l.s8.bf16 %v1298
      %v2243 = vunpack.c.h.s8.bf16 %v1291
      %v2244 = vunpack.c.h.s8.bf16 %v1292
      %v2245 = vunpack.c.h.s8.bf16 %v1293
      %v2246 = vunpack.c.h.s8.bf16 %v1294
      %v2247 = vunpack.c.h.s8.bf16 %v1295
      %v2248 = vunpack.c.h.s8.bf16 %v1296
      %v2249 = vunpack.c.h.s8.bf16 %v1297
      %v2250 = vunpack.c.h.s8.bf16 %v1298
      %v2251 = vunpack.c.l.s8.bf16 %v1299
      %v2252 = vunpack.c.l.s8.bf16 %v1300
      %v2253 = vunpack.c.l.s8.bf16 %v1301
      %v2254 = vunpack.c.l.s8.bf16 %v1302
      %v2255 = vunpack.c.l.s8.bf16 %v1303
      %v2256 = vunpack.c.l.s8.bf16 %v1304
      %v2257 = vunpack.c.l.s8.bf16 %v1305
      %v2258 = vunpack.c.l.s8.bf16 %v1306
      %v2259 = vunpack.c.h.s8.bf16 %v1299
      %v2260 = vunpack.c.h.s8.bf16 %v1300
      %v2261 = vunpack.c.h.s8.bf16 %v1301
      %v2262 = vunpack.c.h.s8.bf16 %v1302
      %v2263 = vunpack.c.h.s8.bf16 %v1303
      %v2264 = vunpack.c.h.s8.bf16 %v1304
      %v2265 = vunpack.c.h.s8.bf16 %v1305
      %v2266 = vunpack.c.h.s8.bf16 %v1306
      %v2267 = vunpack.c.l.s8.bf16 %v1307
      %v2268 = vunpack.c.l.s8.bf16 %v1308
      %v2269 = vunpack.c.l.s8.bf16 %v1309
      %v2270 = vunpack.c.l.s8.bf16 %v1310
      %v2271 = vunpack.c.l.s8.bf16 %v1311
      %v2272 = vunpack.c.l.s8.bf16 %v1312
      %v2273 = vunpack.c.l.s8.bf16 %v1313
      %v2274 = vunpack.c.l.s8.bf16 %v1314
      %v2275 = vunpack.c.h.s8.bf16 %v1307
      %v2276 = vunpack.c.h.s8.bf16 %v1308
      %v2277 = vunpack.c.h.s8.bf16 %v1309
      %v2278 = vunpack.c.h.s8.bf16 %v1310
      %v2279 = vunpack.c.h.s8.bf16 %v1311
      %v2280 = vunpack.c.h.s8.bf16 %v1312
      %v2281 = vunpack.c.h.s8.bf16 %v1313
      %v2282 = vunpack.c.h.s8.bf16 %v1314
      %v2283 = vunpack.c.l.s8.bf16 %v1315
      %v2284 = vunpack.c.l.s8.bf16 %v1316
      %v2285 = vunpack.c.l.s8.bf16 %v1317
      %v2286 = vunpack.c.l.s8.bf16 %v1318
      %v2287 = vunpack.c.l.s8.bf16 %v1319
      %v2288 = vunpack.c.l.s8.bf16 %v1320
      %v2289 = vunpack.c.l.s8.bf16 %v1321
      %v2290 = vunpack.c.l.s8.bf16 %v1322
      %v2291 = vunpack.c.h.s8.bf16 %v1315
      %v2292 = vunpack.c.h.s8.bf16 %v1316
      %v2293 = vunpack.c.h.s8.bf16 %v1317
      %v2294 = vunpack.c.h.s8.bf16 %v1318
      %v2295 = vunpack.c.h.s8.bf16 %v1319
      %v2296 = vunpack.c.h.s8.bf16 %v1320
      %v2297 = vunpack.c.h.s8.bf16 %v1321
      %v2298 = vunpack.c.h.s8.bf16 %v1322
      %v2299 = vunpack.c.l.s8.bf16 %v1323
      %v2300 = vunpack.c.l.s8.bf16 %v1324
      %v2301 = vunpack.c.l.s8.bf16 %v1325
      %v2302 = vunpack.c.l.s8.bf16 %v1326
      %v2303 = vunpack.c.l.s8.bf16 %v1327
      %v2304 = vunpack.c.l.s8.bf16 %v1328
      %v2305 = vunpack.c.l.s8.bf16 %v1329
      %v2306 = vunpack.c.l.s8.bf16 %v1330
      %v2307 = vunpack.c.h.s8.bf16 %v1323
      %v2308 = vunpack.c.h.s8.bf16 %v1324
      %v2309 = vunpack.c.h.s8.bf16 %v1325
      %v2310 = vunpack.c.h.s8.bf16 %v1326
      %v2311 = vunpack.c.h.s8.bf16 %v1327
      %v2312 = vunpack.c.h.s8.bf16 %v1328
      %v2313 = vunpack.c.h.s8.bf16 %v1329
      %v2314 = vunpack.c.h.s8.bf16 %v1330
      %v2315 = vunpack.c.l.s8.bf16 %v1331
      %v2316 = vunpack.c.l.s8.bf16 %v1332
      %v2317 = vunpack.c.l.s8.bf16 %v1333
      %v2318 = vunpack.c.l.s8.bf16 %v1334
      %v2319 = vunpack.c.l.s8.bf16 %v1335
      %v2320 = vunpack.c.l.s8.bf16 %v1336
      %v2321 = vunpack.c.l.s8.bf16 %v1337
      %v2322 = vunpack.c.l.s8.bf16 %v1338
      %v2323 = vunpack.c.h.s8.bf16 %v1331
      %v2324 = vunpack.c.h.s8.bf16 %v1332
      %v2325 = vunpack.c.h.s8.bf16 %v1333
      %v2326 = vunpack.c.h.s8.bf16 %v1334
      %v2327 = vunpack.c.h.s8.bf16 %v1335
      %v2328 = vunpack.c.h.s8.bf16 %v1336
      %v2329 = vunpack.c.h.s8.bf16 %v1337
      %v2330 = vunpack.c.h.s8.bf16 %v1338
      %v2331 = vunpack.c.l.s8.bf16 %v1339
      %v2332 = vunpack.c.l.s8.bf16 %v1340
      %v2333 = vunpack.c.l.s8.bf16 %v1341
      %v2334 = vunpack.c.l.s8.bf16 %v1342
      %v2335 = vunpack.c.l.s8.bf16 %v1343
      %v2336 = vunpack.c.l.s8.bf16 %v1344
      %v2337 = vunpack.c.l.s8.bf16 %v1345
      %v2338 = vunpack.c.l.s8.bf16 %v1346
      %v2339 = vunpack.c.h.s8.bf16 %v1339
      %v2340 = vunpack.c.h.s8.bf16 %v1340
      %v2341 = vunpack.c.h.s8.bf16 %v1341
      %v2342 = vunpack.c.h.s8.bf16 %v1342
      %v2343 = vunpack.c.h.s8.bf16 %v1343
      %v2344 = vunpack.c.h.s8.bf16 %v1344
      %v2345 = vunpack.c.h.s8.bf16 %v1345
      %v2346 = vunpack.c.h.s8.bf16 %v1346
      %v2347 = vunpack.c.l.s8.bf16 %v1347
      %v2348 = vunpack.c.l.s8.bf16 %v1348
      %v2349 = vunpack.c.l.s8.bf16 %v1349
      %v2350 = vunpack.c.l.s8.bf16 %v1350
      %v2351 = vunpack.c.l.s8.bf16 %v1351
      %v2352 = vunpack.c.l.s8.bf16 %v1352
      %v2353 = vunpack.c.l.s8.bf16 %v1353
      %v2354 = vunpack.c.l.s8.bf16 %v1354
      %v2355 = vunpack.c.h.s8.bf16 %v1347
      %v2356 = vunpack.c.h.s8.bf16 %v1348
      %v2357 = vunpack.c.h.s8.bf16 %v1349
      %v2358 = vunpack.c.h.s8.bf16 %v1350
      %v2359 = vunpack.c.h.s8.bf16 %v1351
      %v2360 = vunpack.c.h.s8.bf16 %v1352
      %v2361 = vunpack.c.h.s8.bf16 %v1353
      %v2362 = vunpack.c.h.s8.bf16 %v1354
      %v2363 = vunpack.c.l.s8.bf16 %v1355
      %v2364 = vunpack.c.l.s8.bf16 %v1356
      %v2365 = vunpack.c.l.s8.bf16 %v1357
      %v2366 = vunpack.c.l.s8.bf16 %v1358
      %v2367 = vunpack.c.l.s8.bf16 %v1359
      %v2368 = vunpack.c.l.s8.bf16 %v1360
      %v2369 = vunpack.c.l.s8.bf16 %v1361
      %v2370 = vunpack.c.l.s8.bf16 %v1362
      %v2371 = vunpack.c.h.s8.bf16 %v1355
      %v2372 = vunpack.c.h.s8.bf16 %v1356
      %v2373 = vunpack.c.h.s8.bf16 %v1357
      %v2374 = vunpack.c.h.s8.bf16 %v1358
      %v2375 = vunpack.c.h.s8.bf16 %v1359
      %v2376 = vunpack.c.h.s8.bf16 %v1360
      %v2377 = vunpack.c.h.s8.bf16 %v1361
      %v2378 = vunpack.c.h.s8.bf16 %v1362
      %v2379 = vunpack.c.l.s8.bf16 %v1363
      %v2380 = vunpack.c.l.s8.bf16 %v1364
      %v2381 = vunpack.c.l.s8.bf16 %v1365
      %v2382 = vunpack.c.l.s8.bf16 %v1366
      %v2383 = vunpack.c.l.s8.bf16 %v1367
      %v2384 = vunpack.c.l.s8.bf16 %v1368
      %v2385 = vunpack.c.l.s8.bf16 %v1369
      %v2386 = vunpack.c.l.s8.bf16 %v1370
      %v2387 = vunpack.c.h.s8.bf16 %v1363
      %v2388 = vunpack.c.h.s8.bf16 %v1364
      %v2389 = vunpack.c.h.s8.bf16 %v1365
      %v2390 = vunpack.c.h.s8.bf16 %v1366
      %v2391 = vunpack.c.h.s8.bf16 %v1367
      %v2392 = vunpack.c.h.s8.bf16 %v1368
      %v2393 = vunpack.c.h.s8.bf16 %v1369
      %v2394 = vunpack.c.h.s8.bf16 %v1370
      %v2395 = vunpack.c.l.s8.bf16 %v1371
      %v2396 = vunpack.c.l.s8.bf16 %v1372
      %v2397 = vunpack.c.l.s8.bf16 %v1373
      %v2398 = vunpack.c.l.s8.bf16 %v1374
      %v2399 = vunpack.c.l.s8.bf16 %v1375
      %v2400 = vunpack.c.l.s8.bf16 %v1376
      %v2401 = vunpack.c.l.s8.bf16 %v1377
      %v2402 = vunpack.c.l.s8.bf16 %v1378
      %v2403 = vunpack.c.h.s8.bf16 %v1371
      %v2404 = vunpack.c.h.s8.bf16 %v1372
      %v2405 = vunpack.c.h.s8.bf16 %v1373
      %v2406 = vunpack.c.h.s8.bf16 %v1374
      %v2407 = vunpack.c.h.s8.bf16 %v1375
      %v2408 = vunpack.c.h.s8.bf16 %v1376
      %v2409 = vunpack.c.h.s8.bf16 %v1377
      %v2410 = vunpack.c.h.s8.bf16 %v1378
      %v2411 = vunpack.c.l.s8.bf16 %v1379
      %v2412 = vunpack.c.l.s8.bf16 %v1380
      %v2413 = vunpack.c.l.s8.bf16 %v1381
      %v2414 = vunpack.c.l.s8.bf16 %v1382
      %v2415 = vunpack.c.l.s8.bf16 %v1383
      %v2416 = vunpack.c.l.s8.bf16 %v1384
      %v2417 = vunpack.c.l.s8.bf16 %v1385
      %v2418 = vunpack.c.l.s8.bf16 %v1386
      %v2419 = vunpack.c.h.s8.bf16 %v1379
      %v2420 = vunpack.c.h.s8.bf16 %v1380
      %v2421 = vunpack.c.h.s8.bf16 %v1381
      %v2422 = vunpack.c.h.s8.bf16 %v1382
      %v2423 = vunpack.c.h.s8.bf16 %v1383
      %v2424 = vunpack.c.h.s8.bf16 %v1384
      %v2425 = vunpack.c.h.s8.bf16 %v1385
      %v2426 = vunpack.c.h.s8.bf16 %v1386
      %v2427 = vunpack.c.l.s8.bf16 %v1387
      %v2428 = vunpack.c.l.s8.bf16 %v1388
      %v2429 = vunpack.c.l.s8.bf16 %v1389
      %v2430 = vunpack.c.l.s8.bf16 %v1390
      %v2431 = vunpack.c.l.s8.bf16 %v1391
      %v2432 = vunpack.c.l.s8.bf16 %v1392
      %v2433 = vunpack.c.l.s8.bf16 %v1393
      %v2434 = vunpack.c.l.s8.bf16 %v1394
      %v2435 = vunpack.c.h.s8.bf16 %v1387
      %v2436 = vunpack.c.h.s8.bf16 %v1388
      %v2437 = vunpack.c.h.s8.bf16 %v1389
      %v2438 = vunpack.c.h.s8.bf16 %v1390
      %v2439 = vunpack.c.h.s8.bf16 %v1391
      %v2440 = vunpack.c.h.s8.bf16 %v1392
      %v2441 = vunpack.c.h.s8.bf16 %v1393
      %v2442 = vunpack.c.h.s8.bf16 %v1394
      %v2443 = vunpack.c.l.s8.bf16 %v1395
      %v2444 = vunpack.c.l.s8.bf16 %v1396
      %v2445 = vunpack.c.l.s8.bf16 %v1397
      %v2446 = vunpack.c.l.s8.bf16 %v1398
      %v2447 = vunpack.c.l.s8.bf16 %v1399
      %v2448 = vunpack.c.l.s8.bf16 %v1400
      %v2449 = vunpack.c.l.s8.bf16 %v1401
      %v2450 = vunpack.c.l.s8.bf16 %v1402
      %v2451 = vunpack.c.h.s8.bf16 %v1395
      %v2452 = vunpack.c.h.s8.bf16 %v1396
      %v2453 = vunpack.c.h.s8.bf16 %v1397
      %v2454 = vunpack.c.h.s8.bf16 %v1398
      %v2455 = vunpack.c.h.s8.bf16 %v1399
      %v2456 = vunpack.c.h.s8.bf16 %v1400
      %v2457 = vunpack.c.h.s8.bf16 %v1401
      %v2458 = vunpack.c.h.s8.bf16 %v1402
      %v2459 = vunpack.c.l.s8.bf16 %v1403
      %v2460 = vunpack.c.l.s8.bf16 %v1404
      %v2461 = vunpack.c.l.s8.bf16 %v1405
      %v2462 = vunpack.c.l.s8.bf16 %v1406
      %v2463 = vunpack.c.l.s8.bf16 %v1407
      %v2464 = vunpack.c.l.s8.bf16 %v1408
      %v2465 = vunpack.c.l.s8.bf16 %v1409
      %v2466 = vunpack.c.l.s8.bf16 %v1410
      %v2467 = vunpack.c.h.s8.bf16 %v1403
      %v2468 = vunpack.c.h.s8.bf16 %v1404
      %v2469 = vunpack.c.h.s8.bf16 %v1405
      %v2470 = vunpack.c.h.s8.bf16 %v1406
      %v2471 = vunpack.c.h.s8.bf16 %v1407
      %v2472 = vunpack.c.h.s8.bf16 %v1408
      %v2473 = vunpack.c.h.s8.bf16 %v1409
      %v2474 = vunpack.c.h.s8.bf16 %v1410
      %v2475 = vunpack.c.l.s8.bf16 %v1411
      %v2476 = vunpack.c.l.s8.bf16 %v1412
      %v2477 = vunpack.c.l.s8.bf16 %v1413
      %v2478 = vunpack.c.l.s8.bf16 %v1414
      %v2479 = vunpack.c.l.s8.bf16 %v1415
      %v2480 = vunpack.c.l.s8.bf16 %v1416
      %v2481 = vunpack.c.l.s8.bf16 %v1417
      %v2482 = vunpack.c.l.s8.bf16 %v1418
      %v2483 = vunpack.c.h.s8.bf16 %v1411
      %v2484 = vunpack.c.h.s8.bf16 %v1412
      %v2485 = vunpack.c.h.s8.bf16 %v1413
      %v2486 = vunpack.c.h.s8.bf16 %v1414
      %v2487 = vunpack.c.h.s8.bf16 %v1415
      %v2488 = vunpack.c.h.s8.bf16 %v1416
      %v2489 = vunpack.c.h.s8.bf16 %v1417
      %v2490 = vunpack.c.h.s8.bf16 %v1418
      %v2491 = vunpack.c.l.s8.bf16 %v1419
      %v2492 = vunpack.c.l.s8.bf16 %v1420
      %v2493 = vunpack.c.l.s8.bf16 %v1421
      %v2494 = vunpack.c.l.s8.bf16 %v1422
      %v2495 = vunpack.c.l.s8.bf16 %v1423
      %v2496 = vunpack.c.l.s8.bf16 %v1424
      %v2497 = vunpack.c.l.s8.bf16 %v1425
      %v2498 = vunpack.c.l.s8.bf16 %v1426
      %v2499 = vunpack.c.h.s8.bf16 %v1419
      %v2500 = vunpack.c.h.s8.bf16 %v1420
      %v2501 = vunpack.c.h.s8.bf16 %v1421
      %v2502 = vunpack.c.h.s8.bf16 %v1422
      %v2503 = vunpack.c.h.s8.bf16 %v1423
      %v2504 = vunpack.c.h.s8.bf16 %v1424
      %v2505 = vunpack.c.h.s8.bf16 %v1425
      %v2506 = vunpack.c.h.s8.bf16 %v1426
      %v2507 = vunpack.c.l.s8.bf16 %v1427
      %v2508 = vunpack.c.l.s8.bf16 %v1428
      %v2509 = vunpack.c.l.s8.bf16 %v1429
      %v2510 = vunpack.c.l.s8.bf16 %v1430
      %v2511 = vunpack.c.l.s8.bf16 %v1431
      %v2512 = vunpack.c.l.s8.bf16 %v1432
      %v2513 = vunpack.c.l.s8.bf16 %v1433
      %v2514 = vunpack.c.l.s8.bf16 %v1434
      %v2515 = vunpack.c.h.s8.bf16 %v1427
      %v2516 = vunpack.c.h.s8.bf16 %v1428
      %v2517 = vunpack.c.h.s8.bf16 %v1429
      %v2518 = vunpack.c.h.s8.bf16 %v1430
      %v2519 = vunpack.c.h.s8.bf16 %v1431
      %v2520 = vunpack.c.h.s8.bf16 %v1432
      %v2521 = vunpack.c.h.s8.bf16 %v1433
      %v2522 = vunpack.c.h.s8.bf16 %v1434
      %v2523 = vunpack.c.l.s8.bf16 %v1435
      %v2524 = vunpack.c.l.s8.bf16 %v1436
      %v2525 = vunpack.c.l.s8.bf16 %v1437
      %v2526 = vunpack.c.l.s8.bf16 %v1438
      %v2527 = vunpack.c.l.s8.bf16 %v1439
      %v2528 = vunpack.c.l.s8.bf16 %v1440
      %v2529 = vunpack.c.l.s8.bf16 %v1441
      %v2530 = vunpack.c.l.s8.bf16 %v1442
      %v2531 = vunpack.c.h.s8.bf16 %v1435
      %v2532 = vunpack.c.h.s8.bf16 %v1436
      %v2533 = vunpack.c.h.s8.bf16 %v1437
      %v2534 = vunpack.c.h.s8.bf16 %v1438
      %v2535 = vunpack.c.h.s8.bf16 %v1439
      %v2536 = vunpack.c.h.s8.bf16 %v1440
      %v2537 = vunpack.c.h.s8.bf16 %v1441
      %v2538 = vunpack.c.h.s8.bf16 %v1442
      %v2539 = vunpack.c.l.s8.bf16 %v1443
      %v2540 = vunpack.c.l.s8.bf16 %v1444
      %v2541 = vunpack.c.l.s8.bf16 %v1445
      %v2542 = vunpack.c.l.s8.bf16 %v1446
      %v2543 = vunpack.c.l.s8.bf16 %v1447
      %v2544 = vunpack.c.l.s8.bf16 %v1448
      %v2545 = vunpack.c.l.s8.bf16 %v1449
      %v2546 = vunpack.c.l.s8.bf16 %v1450
      %v2547 = vunpack.c.h.s8.bf16 %v1443
      %v2548 = vunpack.c.h.s8.bf16 %v1444
      %v2549 = vunpack.c.h.s8.bf16 %v1445
      %v2550 = vunpack.c.h.s8.bf16 %v1446
      %v2551 = vunpack.c.h.s8.bf16 %v1447
      %v2552 = vunpack.c.h.s8.bf16 %v1448
      %v2553 = vunpack.c.h.s8.bf16 %v1449
      %v2554 = vunpack.c.h.s8.bf16 %v1450
      %v2555 = vunpack.c.l.s8.bf16 %v1451
      %v2556 = vunpack.c.l.s8.bf16 %v1452
      %v2557 = vunpack.c.l.s8.bf16 %v1453
      %v2558 = vunpack.c.l.s8.bf16 %v1454
      %v2559 = vunpack.c.l.s8.bf16 %v1455
      %v2560 = vunpack.c.l.s8.bf16 %v1456
      %v2561 = vunpack.c.l.s8.bf16 %v1457
      %v2562 = vunpack.c.l.s8.bf16 %v1458
      %v2563 = vunpack.c.h.s8.bf16 %v1451
      %v2564 = vunpack.c.h.s8.bf16 %v1452
      %v2565 = vunpack.c.h.s8.bf16 %v1453
      %v2566 = vunpack.c.h.s8.bf16 %v1454
      %v2567 = vunpack.c.h.s8.bf16 %v1455
      %v2568 = vunpack.c.h.s8.bf16 %v1456
      %v2569 = vunpack.c.h.s8.bf16 %v1457
      %v2570 = vunpack.c.h.s8.bf16 %v1458
      %v2571 = vunpack.c.l.s8.bf16 %v1459
      %v2572 = vunpack.c.l.s8.bf16 %v1460
      %v2573 = vunpack.c.l.s8.bf16 %v1461
      %v2574 = vunpack.c.l.s8.bf16 %v1462
      %v2575 = vunpack.c.l.s8.bf16 %v1463
      %v2576 = vunpack.c.l.s8.bf16 %v1464
      %v2577 = vunpack.c.l.s8.bf16 %v1465
      %v2578 = vunpack.c.l.s8.bf16 %v1466
      %v2579 = vunpack.c.h.s8.bf16 %v1459
      %v2580 = vunpack.c.h.s8.bf16 %v1460
      %v2581 = vunpack.c.h.s8.bf16 %v1461
      %v2582 = vunpack.c.h.s8.bf16 %v1462
      %v2583 = vunpack.c.h.s8.bf16 %v1463
      %v2584 = vunpack.c.h.s8.bf16 %v1464
      %v2585 = vunpack.c.h.s8.bf16 %v1465
      %v2586 = vunpack.c.h.s8.bf16 %v1466
      %v2587 = vunpack.c.l.s8.bf16 %v1467
      %v2588 = vunpack.c.l.s8.bf16 %v1468
      %v2589 = vunpack.c.l.s8.bf16 %v1469
      %v2590 = vunpack.c.l.s8.bf16 %v1470
      %v2591 = vunpack.c.l.s8.bf16 %v1471
      %v2592 = vunpack.c.l.s8.bf16 %v1472
      %v2593 = vunpack.c.l.s8.bf16 %v1473
      %v2594 = vunpack.c.l.s8.bf16 %v1474
      %v2595 = vunpack.c.h.s8.bf16 %v1467
      %v2596 = vunpack.c.h.s8.bf16 %v1468
      %v2597 = vunpack.c.h.s8.bf16 %v1469
      %v2598 = vunpack.c.h.s8.bf16 %v1470
      %v2599 = vunpack.c.h.s8.bf16 %v1471
      %v2600 = vunpack.c.h.s8.bf16 %v1472
      %v2601 = vunpack.c.h.s8.bf16 %v1473
      %v2602 = vunpack.c.h.s8.bf16 %v1474
      %v2603 = vunpack.c.l.s8.bf16 %v1475
      %v2604 = vunpack.c.l.s8.bf16 %v1476
      %v2605 = vunpack.c.l.s8.bf16 %v1477
      %v2606 = vunpack.c.l.s8.bf16 %v1478
      %v2607 = vunpack.c.l.s8.bf16 %v1479
      %v2608 = vunpack.c.l.s8.bf16 %v1480
      %v2609 = vunpack.c.l.s8.bf16 %v1481
      %v2610 = vunpack.c.l.s8.bf16 %v1482
      %v2611 = vunpack.c.h.s8.bf16 %v1475
      %v2612 = vunpack.c.h.s8.bf16 %v1476
      %v2613 = vunpack.c.h.s8.bf16 %v1477
      %v2614 = vunpack.c.h.s8.bf16 %v1478
      %v2615 = vunpack.c.h.s8.bf16 %v1479
      %v2616 = vunpack.c.h.s8.bf16 %v1480
      %v2617 = vunpack.c.h.s8.bf16 %v1481
      %v2618 = vunpack.c.h.s8.bf16 %v1482
      %v2619 = vunpack.c.l.s8.bf16 %v1483
      %v2620 = vunpack.c.l.s8.bf16 %v1484
      %v2621 = vunpack.c.l.s8.bf16 %v1485
      %v2622 = vunpack.c.l.s8.bf16 %v1486
      %v2623 = vunpack.c.l.s8.bf16 %v1487
      %v2624 = vunpack.c.l.s8.bf16 %v1488
      %v2625 = vunpack.c.l.s8.bf16 %v1489
      %v2626 = vunpack.c.l.s8.bf16 %v1490
      %v2627 = vunpack.c.h.s8.bf16 %v1483
      %v2628 = vunpack.c.h.s8.bf16 %v1484
      %v2629 = vunpack.c.h.s8.bf16 %v1485
      %v2630 = vunpack.c.h.s8.bf16 %v1486
      %v2631 = vunpack.c.h.s8.bf16 %v1487
      %v2632 = vunpack.c.h.s8.bf16 %v1488
      %v2633 = vunpack.c.h.s8.bf16 %v1489
      %v2634 = vunpack.c.h.s8.bf16 %v1490
      %v2635 = vunpack.c.l.s8.bf16 %v1491
      %v2636 = vunpack.c.l.s8.bf16 %v1492
      %v2637 = vunpack.c.l.s8.bf16 %v1493
      %v2638 = vunpack.c.l.s8.bf16 %v1494
      %v2639 = vunpack.c.l.s8.bf16 %v1495
      %v2640 = vunpack.c.l.s8.bf16 %v1496
      %v2641 = vunpack.c.l.s8.bf16 %v1497
      %v2642 = vunpack.c.l.s8.bf16 %v1498
      %v2643 = vunpack.c.h.s8.bf16 %v1491
      %v2644 = vunpack.c.h.s8.bf16 %v1492
      %v2645 = vunpack.c.h.s8.bf16 %v1493
      %v2646 = vunpack.c.h.s8.bf16 %v1494
      %v2647 = vunpack.c.h.s8.bf16 %v1495
      %v2648 = vunpack.c.h.s8.bf16 %v1496
      %v2649 = vunpack.c.h.s8.bf16 %v1497
      %v2650 = vunpack.c.h.s8.bf16 %v1498
      %v2651 = vld [vmem:[%s397] sm:$0xff]
      %v2652 = vld [vmem:[%s397 + $0x8] sm:$0xff]
      %v2653 = vld [vmem:[%s397 + $0x10] sm:$0xff]
      %v2654 = vld [vmem:[%s397 + $0x18] sm:$0xff]
      %v2655 = vld [vmem:[%s397 + $0x20] sm:$0xff]
      %v2656 = vld [vmem:[%s397 + $0x28] sm:$0xff]
      %v2657 = vld [vmem:[%s397 + $0x30] sm:$0xff]
      %v2658 = vld [vmem:[%s397 + $0x38] sm:$0xff]
      %v2659 = vld [vmem:[%s397 + $0x40] sm:$0xff]
      %v2660 = vld [vmem:[%s397 + $0x48] sm:$0xff]
      %v2661 = vld [vmem:[%s397 + $0x50] sm:$0xff]
      %v2662 = vld [vmem:[%s397 + $0x58] sm:$0xff]
      %v2663 = vld [vmem:[%s397 + $0x60] sm:$0xff]
      %v2664 = vld [vmem:[%s397 + $0x68] sm:$0xff]
      %v2665 = vld [vmem:[%s397 + $0x70] sm:$0xff]
      %v2666 = vld [vmem:[%s397 + $0x78] sm:$0xff]
      %v2667 = vld [vmem:[%s397 + $0x80] sm:$0xff]
      %v2668 = vld [vmem:[%s397 + $0x88] sm:$0xff]
      %v2669 = vpack.c.bf16 %v2651, %v2651
      %v2670 = vpack.c.bf16 %v2652, %v2652
      %v2671 = vpack.c.bf16 %v2653, %v2653
      %v2672 = vpack.c.bf16 %v2654, %v2654
      %v2673 = vpack.c.bf16 %v2655, %v2655
      %v2674 = vpack.c.bf16 %v2656, %v2656
      %v2675 = vpack.c.bf16 %v2657, %v2657
      %v2676 = vpack.c.bf16 %v2658, %v2658
      %v2677 = vpack.c.bf16 %v2659, %v2659
      %v2678 = vpack.c.bf16 %v2660, %v2660
      %v2679 = vpack.c.bf16 %v2661, %v2661
      %v2680 = vpack.c.bf16 %v2662, %v2662
      %v2681 = vpack.c.bf16 %v2663, %v2663
      %v2682 = vpack.c.bf16 %v2664, %v2664
      %v2683 = vpack.c.bf16 %v2665, %v2665
      %v2684 = vpack.c.bf16 %v2666, %v2666
      %v2685 = vpack.c.bf16 %v2667, %v2667
      %v2686 = vpack.c.bf16 %v2668, %v2668
      %2687 = vmatprep.subr.bf16.mxu0 %v1500
      %2688 = vmatpush1.bf16.msra.mxu0 %v1499
      %2689 = vmatprep.subr.bf16.mxu0 %v1508
      %2690 = vmatpush1.bf16.msra.mxu0 %v1507
      %2691 = vmatprep.subr.bf16.mxu0 %v1516
      %2692 = vmatpush1.bf16.msra.mxu0 %v1515
      %2693 = vmatprep.subr.bf16.mxu0 %v1524
      %2694 = vmatpush1.bf16.msra.mxu0 %v1523
      %2695 = vmatprep.subr.bf16.mxu0 %v1532
      %2696 = vmatpush1.bf16.msra.mxu0 %v1531
      %2697 = vmatprep.subr.bf16.mxu0 %v1540
      %2698 = vmatpush1.bf16.msra.mxu0 %v1539
      %2699 = vmatprep.subr.bf16.mxu0 %v1548
      %2700 = vmatpush1.bf16.msra.mxu0 %v1547
      %2701 = vmatprep.subr.bf16.mxu0 %v1556
      %2702 = vmatpush1.bf16.msra.mxu0 %v1555
      %2703 = vmatprep.subr.bf16.mxu0 %v1564
      %2704 = vmatpush1.bf16.msra.mxu0 %v1563
      %2705 = vmatprep.subr.bf16.mxu0 %v1572
      %2706 = vmatpush1.bf16.msra.mxu0 %v1571
      %2707 = vmatprep.subr.bf16.mxu0 %v1580
      %2708 = vmatpush1.bf16.msra.mxu0 %v1579
      %2709 = vmatprep.subr.bf16.mxu0 %v1588
      %2710 = vmatpush1.bf16.msra.mxu0 %v1587
      %2711 = vmatprep.subr.bf16.mxu0 %v1596
      %2712 = vmatpush1.bf16.msra.mxu0 %v1595
      %2713 = vmatprep.subr.bf16.mxu0 %v1604
      %2714 = vmatpush1.bf16.msra.mxu0 %v1603
      %2715 = vmatprep.subr.bf16.mxu0 %v1612
      %2716 = vmatpush1.bf16.msra.mxu0 %v1611
      %2717 = vmatprep.subr.bf16.mxu0 %v1620
      %2718 = vmatpush1.bf16.msra.mxu0 %v1619
      %2719 = vmatprep.mubr.bf16.mxu0 %v2670
      %2720 = vmatmul.mubr.bf16.gmra.mrb[0].mxu0 %v2669
      %v2721 = vpop.f32.mrb[0].mxu0
      %v2722 = vadd.f32 0.0, %v2721
      %v2723 = vpop.f32.mrb[0].mxu0
      %v2724 = vadd.f32 0.0, %v2723
      %v2725 = vpop.f32.mrb[0].mxu0
      %v2726 = vpop.f32.mrb[0].mxu0
      %2727 = vdwg.mxu0
      %2728 = vmatprep.subr.bf16.mxu0 %v1628
      %2729 = vmatpush1.bf16.msra.mxu0 %v1627
      %2730 = vmatprep.subr.bf16.mxu0 %v1636
      %2731 = vmatpush1.bf16.msra.mxu0 %v1635
      %2732 = vmatprep.subr.bf16.mxu0 %v1644
      %2733 = vmatpush1.bf16.msra.mxu0 %v1643
      %2734 = vmatprep.subr.bf16.mxu0 %v1652
      %2735 = vmatpush1.bf16.msra.mxu0 %v1651
      %2736 = vmatprep.subr.bf16.mxu0 %v1660
      %2737 = vmatpush1.bf16.msra.mxu0 %v1659
      %2738 = vmatprep.subr.bf16.mxu0 %v1668
      %2739 = vmatpush1.bf16.msra.mxu0 %v1667
      %2740 = vmatprep.subr.bf16.mxu0 %v1676
      %2741 = vmatpush1.bf16.msra.mxu0 %v1675
      %2742 = vmatprep.subr.bf16.mxu0 %v1684
      %2743 = vmatpush1.bf16.msra.mxu0 %v1683
      %2744 = vmatprep.subr.bf16.mxu0 %v1692
      %2745 = vmatpush1.bf16.msra.mxu0 %v1691
      %2746 = vmatprep.subr.bf16.mxu0 %v1700
      %2747 = vmatpush1.bf16.msra.mxu0 %v1699
      %2748 = vmatprep.subr.bf16.mxu0 %v1708
      %2749 = vmatpush1.bf16.msra.mxu0 %v1707
      %2750 = vmatprep.subr.bf16.mxu0 %v1716
      %2751 = vmatpush1.bf16.msra.mxu0 %v1715
      %2752 = vmatprep.subr.bf16.mxu0 %v1724
      %2753 = vmatpush1.bf16.msra.mxu0 %v1723
      %2754 = vmatprep.subr.bf16.mxu0 %v1732
      %2755 = vmatpush1.bf16.msra.mxu0 %v1731
      %2756 = vmatprep.subr.bf16.mxu0 %v1740
      %2757 = vmatpush1.bf16.msra.mxu0 %v1739
      %2758 = vmatprep.subr.bf16.mxu0 %v1748
      %2759 = vmatpush1.bf16.msra.mxu0 %v1747
      %2760 = vmatprep.mubr.bf16.mxu0 %v2672
      %2761 = vmatmul.mubr.bf16.gmra.mrb[0].mxu0 %v2671
      %v2762 = vpop.f32.mrb[0].mxu0
      %v2763 = vadd.f32 %v2722, %v2762
      %v2764 = vpop.f32.mrb[0].mxu0
      %v2765 = vadd.f32 %v2724, %v2764
      %v2766 = vpop.f32.mrb[0].mxu0
      %v2767 = vpop.f32.mrb[0].mxu0
      %2768 = vdwg.mxu0
      %2769 = vmatprep.subr.bf16.mxu0 %v1756
      %2770 = vmatpush1.bf16.msra.mxu0 %v1755
      %2771 = vmatprep.subr.bf16.mxu0 %v1764
      %2772 = vmatpush1.bf16.msra.mxu0 %v1763
      %2773 = vmatprep.subr.bf16.mxu0 %v1772
      %2774 = vmatpush1.bf16.msra.mxu0 %v1771
      %2775 = vmatprep.subr.bf16.mxu0 %v1780
      %2776 = vmatpush1.bf16.msra.mxu0 %v1779
      %2777 = vmatprep.subr.bf16.mxu0 %v1788
      %2778 = vmatpush1.bf16.msra.mxu0 %v1787
      %2779 = vmatprep.subr.bf16.mxu0 %v1796
      %2780 = vmatpush1.bf16.msra.mxu0 %v1795
      %2781 = vmatprep.subr.bf16.mxu0 %v1804
      %2782 = vmatpush1.bf16.msra.mxu0 %v1803
      %2783 = vmatprep.subr.bf16.mxu0 %v1812
      %2784 = vmatpush1.bf16.msra.mxu0 %v1811
      %2785 = vmatprep.subr.bf16.mxu0 %v1820
      %2786 = vmatpush1.bf16.msra.mxu0 %v1819
      %2787 = vmatprep.subr.bf16.mxu0 %v1828
      %2788 = vmatpush1.bf16.msra.mxu0 %v1827
      %2789 = vmatprep.subr.bf16.mxu0 %v1836
      %2790 = vmatpush1.bf16.msra.mxu0 %v1835
      %2791 = vmatprep.subr.bf16.mxu0 %v1844
      %2792 = vmatpush1.bf16.msra.mxu0 %v1843
      %2793 = vmatprep.subr.bf16.mxu0 %v1852
      %2794 = vmatpush1.bf16.msra.mxu0 %v1851
      %2795 = vmatprep.subr.bf16.mxu0 %v1860
      %2796 = vmatpush1.bf16.msra.mxu0 %v1859
      %2797 = vmatprep.subr.bf16.mxu0 %v1868
      %2798 = vmatpush1.bf16.msra.mxu0 %v1867
      %2799 = vmatprep.subr.bf16.mxu0 %v1876
      %2800 = vmatpush1.bf16.msra.mxu0 %v1875
      %2801 = vmatprep.mubr.bf16.mxu0 %v2674
      %2802 = vmatmul.mubr.bf16.gmra.mrb[0].mxu0 %v2673
      %v2803 = vpop.f32.mrb[0].mxu0
      %v2804 = vadd.f32 %v2763, %v2803
      %v2805 = vpop.f32.mrb[0].mxu0
      %v2806 = vadd.f32 %v2765, %v2805
      %v2807 = vpop.f32.mrb[0].mxu0
      %v2808 = vpop.f32.mrb[0].mxu0
      %2809 = vdwg.mxu0
      %2810 = vmatprep.subr.bf16.mxu0 %v1884
      %2811 = vmatpush1.bf16.msra.mxu0 %v1883
      %2812 = vmatprep.subr.bf16.mxu0 %v1892
      %2813 = vmatpush1.bf16.msra.mxu0 %v1891
      %2814 = vmatprep.subr.bf16.mxu0 %v1900
      %2815 = vmatpush1.bf16.msra.mxu0 %v1899
      %2816 = vmatprep.subr.bf16.mxu0 %v1908
      %2817 = vmatpush1.bf16.msra.mxu0 %v1907
      %2818 = vmatprep.subr.bf16.mxu0 %v1916
      %2819 = vmatpush1.bf16.msra.mxu0 %v1915
      %2820 = vmatprep.subr.bf16.mxu0 %v1924
      %2821 = vmatpush1.bf16.msra.mxu0 %v1923
      %2822 = vmatprep.subr.bf16.mxu0 %v1932
      %2823 = vmatpush1.bf16.msra.mxu0 %v1931
      %2824 = vmatprep.subr.bf16.mxu0 %v1940
      %2825 = vmatpush1.bf16.msra.mxu0 %v1939
      %2826 = vmatprep.subr.bf16.mxu0 %v1948
      %2827 = vmatpush1.bf16.msra.mxu0 %v1947
      %2828 = vmatprep.subr.bf16.mxu0 %v1956
      %2829 = vmatpush1.bf16.msra.mxu0 %v1955
      %2830 = vmatprep.subr.bf16.mxu0 %v1964
      %2831 = vmatpush1.bf16.msra.mxu0 %v1963
      %2832 = vmatprep.subr.bf16.mxu0 %v1972
      %2833 = vmatpush1.bf16.msra.mxu0 %v1971
      %2834 = vmatprep.subr.bf16.mxu0 %v1980
      %2835 = vmatpush1.bf16.msra.mxu0 %v1979
      %2836 = vmatprep.subr.bf16.mxu0 %v1988
      %2837 = vmatpush1.bf16.msra.mxu0 %v1987
      %2838 = vmatprep.subr.bf16.mxu0 %v1996
      %2839 = vmatpush1.bf16.msra.mxu0 %v1995
      %2840 = vmatprep.subr.bf16.mxu0 %v2004
      %2841 = vmatpush1.bf16.msra.mxu0 %v2003
      %2842 = vmatprep.mubr.bf16.mxu0 %v2676
      %2843 = vmatmul.mubr.bf16.gmra.mrb[0].mxu0 %v2675
      %v2844 = vpop.f32.mrb[0].mxu0
      %v2845 = vadd.f32 %v2804, %v2844
      %v2846 = vpop.f32.mrb[0].mxu0
      %v2847 = vadd.f32 %v2806, %v2846
      %v2848 = vpop.f32.mrb[0].mxu0
      %v2849 = vpop.f32.mrb[0].mxu0
      %2850 = vdwg.mxu0
      %2851 = vmatprep.subr.bf16.mxu0 %v2012
      %2852 = vmatpush1.bf16.msra.mxu0 %v2011
      %2853 = vmatprep.subr.bf16.mxu0 %v2020
      %2854 = vmatpush1.bf16.msra.mxu0 %v2019
      %2855 = vmatprep.subr.bf16.mxu0 %v2028
      %2856 = vmatpush1.bf16.msra.mxu0 %v2027
      %2857 = vmatprep.subr.bf16.mxu0 %v2036
      %2858 = vmatpush1.bf16.msra.mxu0 %v2035
      %2859 = vmatprep.subr.bf16.mxu0 %v2044
      %2860 = vmatpush1.bf16.msra.mxu0 %v2043
      %2861 = vmatprep.subr.bf16.mxu0 %v2052
      %2862 = vmatpush1.bf16.msra.mxu0 %v2051
      %2863 = vmatprep.subr.bf16.mxu0 %v2060
      %2864 = vmatpush1.bf16.msra.mxu0 %v2059
      %2865 = vmatprep.subr.bf16.mxu0 %v2068
      %2866 = vmatpush1.bf16.msra.mxu0 %v2067
      %2867 = vmatprep.subr.bf16.mxu0 %v2076
      %2868 = vmatpush1.bf16.msra.mxu0 %v2075
      %2869 = vmatprep.subr.bf16.mxu0 %v2084
      %2870 = vmatpush1.bf16.msra.mxu0 %v2083
      %2871 = vmatprep.subr.bf16.mxu0 %v2092
      %2872 = vmatpush1.bf16.msra.mxu0 %v2091
      %2873 = vmatprep.subr.bf16.mxu0 %v2100
      %2874 = vmatpush1.bf16.msra.mxu0 %v2099
      %2875 = vmatprep.subr.bf16.mxu0 %v2108
      %2876 = vmatpush1.bf16.msra.mxu0 %v2107
      %2877 = vmatprep.subr.bf16.mxu0 %v2116
      %2878 = vmatpush1.bf16.msra.mxu0 %v2115
      %2879 = vmatprep.subr.bf16.mxu0 %v2124
      %2880 = vmatpush1.bf16.msra.mxu0 %v2123
      %2881 = vmatprep.subr.bf16.mxu0 %v2132
      %2882 = vmatpush1.bf16.msra.mxu0 %v2131
      %2883 = vmatprep.mubr.bf16.mxu0 %v2678
      %2884 = vmatmul.mubr.bf16.gmra.mrb[0].mxu0 %v2677
      %v2885 = vpop.f32.mrb[0].mxu0
      %v2886 = vadd.f32 %v2845, %v2885
      %v2887 = vpop.f32.mrb[0].mxu0
      %v2888 = vadd.f32 %v2847, %v2887
      %v2889 = vpop.f32.mrb[0].mxu0
      %v2890 = vpop.f32.mrb[0].mxu0
      %2891 = vdwg.mxu0
      %2892 = vmatprep.subr.bf16.mxu0 %v2140
      %2893 = vmatpush1.bf16.msra.mxu0 %v2139
      %2894 = vmatprep.subr.bf16.mxu0 %v2148
      %2895 = vmatpush1.bf16.msra.mxu0 %v2147
      %2896 = vmatprep.subr.bf16.mxu0 %v2156
      %2897 = vmatpush1.bf16.msra.mxu0 %v2155
      %2898 = vmatprep.subr.bf16.mxu0 %v2164
      %2899 = vmatpush1.bf16.msra.mxu0 %v2163
      %2900 = vmatprep.subr.bf16.mxu0 %v2172
      %2901 = vmatpush1.bf16.msra.mxu0 %v2171
      %2902 = vmatprep.subr.bf16.mxu0 %v2180
      %2903 = vmatpush1.bf16.msra.mxu0 %v2179
      %2904 = vmatprep.subr.bf16.mxu0 %v2188
      %2905 = vmatpush1.bf16.msra.mxu0 %v2187
      %2906 = vmatprep.subr.bf16.mxu0 %v2196
      %2907 = vmatpush1.bf16.msra.mxu0 %v2195
      %2908 = vmatprep.subr.bf16.mxu0 %v2204
      %2909 = vmatpush1.bf16.msra.mxu0 %v2203
      %2910 = vmatprep.subr.bf16.mxu0 %v2212
      %2911 = vmatpush1.bf16.msra.mxu0 %v2211
      %2912 = vmatprep.subr.bf16.mxu0 %v2220
      %2913 = vmatpush1.bf16.msra.mxu0 %v2219
      %2914 = vmatprep.subr.bf16.mxu0 %v2228
      %2915 = vmatpush1.bf16.msra.mxu0 %v2227
      %2916 = vmatprep.subr.bf16.mxu0 %v2236
      %2917 = vmatpush1.bf16.msra.mxu0 %v2235
      %2918 = vmatprep.subr.bf16.mxu0 %v2244
      %2919 = vmatpush1.bf16.msra.mxu0 %v2243
      %2920 = vmatprep.subr.bf16.mxu0 %v2252
      %2921 = vmatpush1.bf16.msra.mxu0 %v2251
      %2922 = vmatprep.subr.bf16.mxu0 %v2260
      %2923 = vmatpush1.bf16.msra.mxu0 %v2259
      %2924 = vmatprep.mubr.bf16.mxu0 %v2680
      %2925 = vmatmul.mubr.bf16.gmra.mrb[0].mxu0 %v2679
      %v2926 = vpop.f32.mrb[0].mxu0
      %v2927 = vadd.f32 %v2886, %v2926
      %v2928 = vpop.f32.mrb[0].mxu0
      %v2929 = vadd.f32 %v2888, %v2928
      %v2930 = vpop.f32.mrb[0].mxu0
      %v2931 = vpop.f32.mrb[0].mxu0
      %2932 = vdwg.mxu0
      %2933 = vmatprep.subr.bf16.mxu0 %v2268
      %2934 = vmatpush1.bf16.msra.mxu0 %v2267
      %2935 = vmatprep.subr.bf16.mxu0 %v2276
      %2936 = vmatpush1.bf16.msra.mxu0 %v2275
      %2937 = vmatprep.subr.bf16.mxu0 %v2284
      %2938 = vmatpush1.bf16.msra.mxu0 %v2283
      %2939 = vmatprep.subr.bf16.mxu0 %v2292
      %2940 = vmatpush1.bf16.msra.mxu0 %v2291
      %2941 = vmatprep.subr.bf16.mxu0 %v2300
      %2942 = vmatpush1.bf16.msra.mxu0 %v2299
      %2943 = vmatprep.subr.bf16.mxu0 %v2308
      %2944 = vmatpush1.bf16.msra.mxu0 %v2307
      %2945 = vmatprep.subr.bf16.mxu0 %v2316
      %2946 = vmatpush1.bf16.msra.mxu0 %v2315
      %2947 = vmatprep.subr.bf16.mxu0 %v2324
      %2948 = vmatpush1.bf16.msra.mxu0 %v2323
      %2949 = vmatprep.subr.bf16.mxu0 %v2332
      %2950 = vmatpush1.bf16.msra.mxu0 %v2331
      %2951 = vmatprep.subr.bf16.mxu0 %v2340
      %2952 = vmatpush1.bf16.msra.mxu0 %v2339
      %2953 = vmatprep.subr.bf16.mxu0 %v2348
      %2954 = vmatpush1.bf16.msra.mxu0 %v2347
      %2955 = vmatprep.subr.bf16.mxu0 %v2356
      %2956 = vmatpush1.bf16.msra.mxu0 %v2355
      %2957 = vmatprep.subr.bf16.mxu0 %v2364
      %2958 = vmatpush1.bf16.msra.mxu0 %v2363
      %2959 = vmatprep.subr.bf16.mxu0 %v2372
      %2960 = vmatpush1.bf16.msra.mxu0 %v2371
      %2961 = vmatprep.subr.bf16.mxu0 %v2380
      %2962 = vmatpush1.bf16.msra.mxu0 %v2379
      %2963 = vmatprep.subr.bf16.mxu0 %v2388
      %2964 = vmatpush1.bf16.msra.mxu0 %v2387
      %2965 = vmatprep.mubr.bf16.mxu0 %v2682
      %2966 = vmatmul.mubr.bf16.gmra.mrb[0].mxu0 %v2681
      %v2967 = vpop.f32.mrb[0].mxu0
      %v2968 = vadd.f32 %v2927, %v2967
      %v2969 = vpop.f32.mrb[0].mxu0
      %v2970 = vadd.f32 %v2929, %v2969
      %v2971 = vpop.f32.mrb[0].mxu0
      %v2972 = vpop.f32.mrb[0].mxu0
      %2973 = vdwg.mxu0
      %2974 = vmatprep.subr.bf16.mxu0 %v2396
      %2975 = vmatpush1.bf16.msra.mxu0 %v2395
      %2976 = vmatprep.subr.bf16.mxu0 %v2404
      %2977 = vmatpush1.bf16.msra.mxu0 %v2403
      %2978 = vmatprep.subr.bf16.mxu0 %v2412
      %2979 = vmatpush1.bf16.msra.mxu0 %v2411
      %2980 = vmatprep.subr.bf16.mxu0 %v2420
      %2981 = vmatpush1.bf16.msra.mxu0 %v2419
      %2982 = vmatprep.subr.bf16.mxu0 %v2428
      %2983 = vmatpush1.bf16.msra.mxu0 %v2427
      %2984 = vmatprep.subr.bf16.mxu0 %v2436
      %2985 = vmatpush1.bf16.msra.mxu0 %v2435
      %2986 = vmatprep.subr.bf16.mxu0 %v2444
      %2987 = vmatpush1.bf16.msra.mxu0 %v2443
      %2988 = vmatprep.subr.bf16.mxu0 %v2452
      %2989 = vmatpush1.bf16.msra.mxu0 %v2451
      %2990 = vmatprep.subr.bf16.mxu0 %v2460
      %2991 = vmatpush1.bf16.msra.mxu0 %v2459
      %2992 = vmatprep.subr.bf16.mxu0 %v2468
      %2993 = vmatpush1.bf16.msra.mxu0 %v2467
      %2994 = vmatprep.subr.bf16.mxu0 %v2476
      %2995 = vmatpush1.bf16.msra.mxu0 %v2475
      %2996 = vmatprep.subr.bf16.mxu0 %v2484
      %2997 = vmatpush1.bf16.msra.mxu0 %v2483
      %2998 = vmatprep.subr.bf16.mxu0 %v2492
      %2999 = vmatpush1.bf16.msra.mxu0 %v2491
      %3000 = vmatprep.subr.bf16.mxu0 %v2500
      %3001 = vmatpush1.bf16.msra.mxu0 %v2499
      %3002 = vmatprep.subr.bf16.mxu0 %v2508
      %3003 = vmatpush1.bf16.msra.mxu0 %v2507
      %3004 = vmatprep.subr.bf16.mxu0 %v2516
      %3005 = vmatpush1.bf16.msra.mxu0 %v2515
      %3006 = vmatprep.mubr.bf16.mxu0 %v2684
      %3007 = vmatmul.mubr.bf16.gmra.mrb[0].mxu0 %v2683
      %v3008 = vpop.f32.mrb[0].mxu0
      %v3009 = vadd.f32 %v2968, %v3008
      %v3010 = vpop.f32.mrb[0].mxu0
      %v3011 = vadd.f32 %v2970, %v3010
      %v3012 = vpop.f32.mrb[0].mxu0
      %v3013 = vpop.f32.mrb[0].mxu0
      %3014 = vdwg.mxu0
      %3015 = vmatprep.subr.bf16.mxu0 %v2524
      %3016 = vmatpush1.bf16.msra.mxu0 %v2523
      %3017 = vmatprep.subr.bf16.mxu0 %v2532
      %3018 = vmatpush1.bf16.msra.mxu0 %v2531
      %3019 = vmatprep.subr.bf16.mxu0 %v2540
      %3020 = vmatpush1.bf16.msra.mxu0 %v2539
      %3021 = vmatprep.subr.bf16.mxu0 %v2548
      %3022 = vmatpush1.bf16.msra.mxu0 %v2547
      %3023 = vmatprep.subr.bf16.mxu0 %v2556
      %3024 = vmatpush1.bf16.msra.mxu0 %v2555
      %3025 = vmatprep.subr.bf16.mxu0 %v2564
      %3026 = vmatpush1.bf16.msra.mxu0 %v2563
      %3027 = vmatprep.subr.bf16.mxu0 %v2572
      %3028 = vmatpush1.bf16.msra.mxu0 %v2571
      %3029 = vmatprep.subr.bf16.mxu0 %v2580
      %3030 = vmatpush1.bf16.msra.mxu0 %v2579
      %3031 = vmatprep.subr.bf16.mxu0 %v2588
      %3032 = vmatpush1.bf16.msra.mxu0 %v2587
      %3033 = vmatprep.subr.bf16.mxu0 %v2596
      %3034 = vmatpush1.bf16.msra.mxu0 %v2595
      %3035 = vmatprep.subr.bf16.mxu0 %v2604
      %3036 = vmatpush1.bf16.msra.mxu0 %v2603
      %3037 = vmatprep.subr.bf16.mxu0 %v2612
      %3038 = vmatpush1.bf16.msra.mxu0 %v2611
      %3039 = vmatprep.subr.bf16.mxu0 %v2620
      %3040 = vmatpush1.bf16.msra.mxu0 %v2619
      %3041 = vmatprep.subr.bf16.mxu0 %v2628
      %3042 = vmatpush1.bf16.msra.mxu0 %v2627
      %3043 = vmatprep.subr.bf16.mxu0 %v2636
      %3044 = vmatpush1.bf16.msra.mxu0 %v2635
      %3045 = vmatprep.subr.bf16.mxu0 %v2644
      %3046 = vmatpush1.bf16.msra.mxu0 %v2643
      %3047 = vmatprep.mubr.bf16.mxu0 %v2686
      %3048 = vmatmul.mubr.bf16.gmra.mrb[0].mxu0 %v2685
      %v3049 = vpop.f32.mrb[0].mxu0
      %v3050 = vadd.f32 %v3009, %v3049
      %v3051 = vpop.f32.mrb[0].mxu0
      %v3052 = vadd.f32 %v3011, %v3051
      %v3053 = vpop.f32.mrb[0].mxu0
      %v3054 = vpop.f32.mrb[0].mxu0
      %3055 = vdwg.mxu0
      %3056 = vmatprep.subr.bf16.mxu0 %v1502
      %3057 = vmatpush1.bf16.msra.mxu0 %v1501
      %3058 = vmatprep.subr.bf16.mxu0 %v1510
      %3059 = vmatpush1.bf16.msra.mxu0 %v1509
      %3060 = vmatprep.subr.bf16.mxu0 %v1518
      %3061 = vmatpush1.bf16.msra.mxu0 %v1517
      %3062 = vmatprep.subr.bf16.mxu0 %v1526
      %3063 = vmatpush1.bf16.msra.mxu0 %v1525
      %3064 = vmatprep.subr.bf16.mxu0 %v1534
      %3065 = vmatpush1.bf16.msra.mxu0 %v1533
      %3066 = vmatprep.subr.bf16.mxu0 %v1542
      %3067 = vmatpush1.bf16.msra.mxu0 %v1541
      %3068 = vmatprep.subr.bf16.mxu0 %v1550
      %3069 = vmatpush1.bf16.msra.mxu0 %v1549
      %3070 = vmatprep.subr.bf16.mxu0 %v1558
      %3071 = vmatpush1.bf16.msra.mxu0 %v1557
      %3072 = vmatprep.subr.bf16.mxu0 %v1566
      %3073 = vmatpush1.bf16.msra.mxu0 %v1565
      %3074 = vmatprep.subr.bf16.mxu0 %v1574
      %3075 = vmatpush1.bf16.msra.mxu0 %v1573
      %3076 = vmatprep.subr.bf16.mxu0 %v1582
      %3077 = vmatpush1.bf16.msra.mxu0 %v1581
      %3078 = vmatprep.subr.bf16.mxu0 %v1590
      %3079 = vmatpush1.bf16.msra.mxu0 %v1589
      %3080 = vmatprep.subr.bf16.mxu0 %v1598
      %3081 = vmatpush1.bf16.msra.mxu0 %v1597
      %3082 = vmatprep.subr.bf16.mxu0 %v1606
      %3083 = vmatpush1.bf16.msra.mxu0 %v1605
      %3084 = vmatprep.subr.bf16.mxu0 %v1614
      %3085 = vmatpush1.bf16.msra.mxu0 %v1613
      %3086 = vmatprep.subr.bf16.mxu0 %v1622
      %3087 = vmatpush1.bf16.msra.mxu0 %v1621
      %3088 = vmatprep.mubr.bf16.mxu0 %v2670
      %3089 = vmatmul.mubr.bf16.gmra.mrb[0].mxu0 %v2669
      %v3090 = vpop.f32.mrb[0].mxu0
      %v3091 = vadd.f32 0.0, %v3090
      %v3092 = vpop.f32.mrb[0].mxu0
      %v3093 = vadd.f32 0.0, %v3092
      %v3094 = vpop.f32.mrb[0].mxu0
      %v3095 = vpop.f32.mrb[0].mxu0
      %3096 = vdwg.mxu0
      %3097 = vmatprep.subr.bf16.mxu0 %v1630
      %3098 = vmatpush1.bf16.msra.mxu0 %v1629
      %3099 = vmatprep.subr.bf16.mxu0 %v1638
      %3100 = vmatpush1.bf16.msra.mxu0 %v1637
      %3101 = vmatprep.subr.bf16.mxu0 %v1646
      %3102 = vmatpush1.bf16.msra.mxu0 %v1645
      %3103 = vmatprep.subr.bf16.mxu0 %v1654
      %3104 = vmatpush1.bf16.msra.mxu0 %v1653
      %3105 = vmatprep.subr.bf16.mxu0 %v1662
      %3106 = vmatpush1.bf16.msra.mxu0 %v1661
      %3107 = vmatprep.subr.bf16.mxu0 %v1670
      %3108 = vmatpush1.bf16.msra.mxu0 %v1669
      %3109 = vmatprep.subr.bf16.mxu0 %v1678
      %3110 = vmatpush1.bf16.msra.mxu0 %v1677
      %3111 = vmatprep.subr.bf16.mxu0 %v1686
      %3112 = vmatpush1.bf16.msra.mxu0 %v1685
      %3113 = vmatprep.subr.bf16.mxu0 %v1694
      %3114 = vmatpush1.bf16.msra.mxu0 %v1693
      %3115 = vmatprep.subr.bf16.mxu0 %v1702
      %3116 = vmatpush1.bf16.msra.mxu0 %v1701
      %3117 = vmatprep.subr.bf16.mxu0 %v1710
      %3118 = vmatpush1.bf16.msra.mxu0 %v1709
      %3119 = vmatprep.subr.bf16.mxu0 %v1718
      %3120 = vmatpush1.bf16.msra.mxu0 %v1717
      %3121 = vmatprep.subr.bf16.mxu0 %v1726
      %3122 = vmatpush1.bf16.msra.mxu0 %v1725
      %3123 = vmatprep.subr.bf16.mxu0 %v1734
      %3124 = vmatpush1.bf16.msra.mxu0 %v1733
      %3125 = vmatprep.subr.bf16.mxu0 %v1742
      %3126 = vmatpush1.bf16.msra.mxu0 %v1741
      %3127 = vmatprep.subr.bf16.mxu0 %v1750
      %3128 = vmatpush1.bf16.msra.mxu0 %v1749
      %3129 = vmatprep.mubr.bf16.mxu0 %v2672
      %3130 = vmatmul.mubr.bf16.gmra.mrb[0].mxu0 %v2671
      %v3131 = vpop.f32.mrb[0].mxu0
      %v3132 = vadd.f32 %v3091, %v3131
      %v3133 = vpop.f32.mrb[0].mxu0
      %v3134 = vadd.f32 %v3093, %v3133
      %v3135 = vpop.f32.mrb[0].mxu0
      %v3136 = vpop.f32.mrb[0].mxu0
      %3137 = vdwg.mxu0
      %3138 = vmatprep.subr.bf16.mxu0 %v1758
      %3139 = vmatpush1.bf16.msra.mxu0 %v1757
      %3140 = vmatprep.subr.bf16.mxu0 %v1766
      %3141 = vmatpush1.bf16.msra.mxu0 %v1765
      %3142 = vmatprep.subr.bf16.mxu0 %v1774
      %3143 = vmatpush1.bf16.msra.mxu0 %v1773
      %3144 = vmatprep.subr.bf16.mxu0 %v1782
      %3145 = vmatpush1.bf16.msra.mxu0 %v1781
      %3146 = vmatprep.subr.bf16.mxu0 %v1790
      %3147 = vmatpush1.bf16.msra.mxu0 %v1789
      %3148 = vmatprep.subr.bf16.mxu0 %v1798
      %3149 = vmatpush1.bf16.msra.mxu0 %v1797
      %3150 = vmatprep.subr.bf16.mxu0 %v1806
      %3151 = vmatpush1.bf16.msra.mxu0 %v1805
      %3152 = vmatprep.subr.bf16.mxu0 %v1814
      %3153 = vmatpush1.bf16.msra.mxu0 %v1813
      %3154 = vmatprep.subr.bf16.mxu0 %v1822
      %3155 = vmatpush1.bf16.msra.mxu0 %v1821
      %3156 = vmatprep.subr.bf16.mxu0 %v1830
      %3157 = vmatpush1.bf16.msra.mxu0 %v1829
      %3158 = vmatprep.subr.bf16.mxu0 %v1838
      %3159 = vmatpush1.bf16.msra.mxu0 %v1837
      %3160 = vmatprep.subr.bf16.mxu0 %v1846
      %3161 = vmatpush1.bf16.msra.mxu0 %v1845
      %3162 = vmatprep.subr.bf16.mxu0 %v1854
      %3163 = vmatpush1.bf16.msra.mxu0 %v1853
      %3164 = vmatprep.subr.bf16.mxu0 %v1862
      %3165 = vmatpush1.bf16.msra.mxu0 %v1861
      %3166 = vmatprep.subr.bf16.mxu0 %v1870
      %3167 = vmatpush1.bf16.msra.mxu0 %v1869
      %3168 = vmatprep.subr.bf16.mxu0 %v1878
      %3169 = vmatpush1.bf16.msra.mxu0 %v1877
      %3170 = vmatprep.mubr.bf16.mxu0 %v2674
      %3171 = vmatmul.mubr.bf16.gmra.mrb[0].mxu0 %v2673
      %v3172 = vpop.f32.mrb[0].mxu0
      %v3173 = vadd.f32 %v3132, %v3172
      %v3174 = vpop.f32.mrb[0].mxu0
      %v3175 = vadd.f32 %v3134, %v3174
      %v3176 = vpop.f32.mrb[0].mxu0
      %v3177 = vpop.f32.mrb[0].mxu0
      %3178 = vdwg.mxu0
      %3179 = vmatprep.subr.bf16.mxu0 %v1886
      %3180 = vmatpush1.bf16.msra.mxu0 %v1885
      %3181 = vmatprep.subr.bf16.mxu0 %v1894
      %3182 = vmatpush1.bf16.msra.mxu0 %v1893
      %3183 = vmatprep.subr.bf16.mxu0 %v1902
      %3184 = vmatpush1.bf16.msra.mxu0 %v1901
      %3185 = vmatprep.subr.bf16.mxu0 %v1910
      %3186 = vmatpush1.bf16.msra.mxu0 %v1909
      %3187 = vmatprep.subr.bf16.mxu0 %v1918
      %3188 = vmatpush1.bf16.msra.mxu0 %v1917
      %3189 = vmatprep.subr.bf16.mxu0 %v1926
      %3190 = vmatpush1.bf16.msra.mxu0 %v1925
      %3191 = vmatprep.subr.bf16.mxu0 %v1934
      %3192 = vmatpush1.bf16.msra.mxu0 %v1933
      %3193 = vmatprep.subr.bf16.mxu0 %v1942
      %3194 = vmatpush1.bf16.msra.mxu0 %v1941
      %3195 = vmatprep.subr.bf16.mxu0 %v1950
      %3196 = vmatpush1.bf16.msra.mxu0 %v1949
      %3197 = vmatprep.subr.bf16.mxu0 %v1958
      %3198 = vmatpush1.bf16.msra.mxu0 %v1957
      %3199 = vmatprep.subr.bf16.mxu0 %v1966
      %3200 = vmatpush1.bf16.msra.mxu0 %v1965
      %3201 = vmatprep.subr.bf16.mxu0 %v1974
      %3202 = vmatpush1.bf16.msra.mxu0 %v1973
      %3203 = vmatprep.subr.bf16.mxu0 %v1982
      %3204 = vmatpush1.bf16.msra.mxu0 %v1981
      %3205 = vmatprep.subr.bf16.mxu0 %v1990
      %3206 = vmatpush1.bf16.msra.mxu0 %v1989
      %3207 = vmatprep.subr.bf16.mxu0 %v1998
      %3208 = vmatpush1.bf16.msra.mxu0 %v1997
      %3209 = vmatprep.subr.bf16.mxu0 %v2006
      %3210 = vmatpush1.bf16.msra.mxu0 %v2005
      %3211 = vmatprep.mubr.bf16.mxu0 %v2676
      %3212 = vmatmul.mubr.bf16.gmra.mrb[0].mxu0 %v2675
      %v3213 = vpop.f32.mrb[0].mxu0
      %v3214 = vadd.f32 %v3173, %v3213
      %v3215 = vpop.f32.mrb[0].mxu0
      %v3216 = vadd.f32 %v3175, %v3215
      %v3217 = vpop.f32.mrb[0].mxu0
      %v3218 = vpop.f32.mrb[0].mxu0
      %3219 = vdwg.mxu0
      %3220 = vmatprep.subr.bf16.mxu0 %v2014
      %3221 = vmatpush1.bf16.msra.mxu0 %v2013
      %3222 = vmatprep.subr.bf16.mxu0 %v2022
      %3223 = vmatpush1.bf16.msra.mxu0 %v2021
      %3224 = vmatprep.subr.bf16.mxu0 %v2030
      %3225 = vmatpush1.bf16.msra.mxu0 %v2029
      %3226 = vmatprep.subr.bf16.mxu0 %v2038
      %3227 = vmatpush1.bf16.msra.mxu0 %v2037
      %3228 = vmatprep.subr.bf16.mxu0 %v2046
      %3229 = vmatpush1.bf16.msra.mxu0 %v2045
      %3230 = vmatprep.subr.bf16.mxu0 %v2054
      %3231 = vmatpush1.bf16.msra.mxu0 %v2053
      %3232 = vmatprep.subr.bf16.mxu0 %v2062
      %3233 = vmatpush1.bf16.msra.mxu0 %v2061
      %3234 = vmatprep.subr.bf16.mxu0 %v2070
      %3235 = vmatpush1.bf16.msra.mxu0 %v2069
      %3236 = vmatprep.subr.bf16.mxu0 %v2078
      %3237 = vmatpush1.bf16.msra.mxu0 %v2077
      %3238 = vmatprep.subr.bf16.mxu0 %v2086
      %3239 = vmatpush1.bf16.msra.mxu0 %v2085
      %3240 = vmatprep.subr.bf16.mxu0 %v2094
      %3241 = vmatpush1.bf16.msra.mxu0 %v2093
      %3242 = vmatprep.subr.bf16.mxu0 %v2102
      %3243 = vmatpush1.bf16.msra.mxu0 %v2101
      %3244 = vmatprep.subr.bf16.mxu0 %v2110
      %3245 = vmatpush1.bf16.msra.mxu0 %v2109
      %3246 = vmatprep.subr.bf16.mxu0 %v2118
      %3247 = vmatpush1.bf16.msra.mxu0 %v2117
      %3248 = vmatprep.subr.bf16.mxu0 %v2126
      %3249 = vmatpush1.bf16.msra.mxu0 %v2125
      %3250 = vmatprep.subr.bf16.mxu0 %v2134
      %3251 = vmatpush1.bf16.msra.mxu0 %v2133
      %3252 = vmatprep.mubr.bf16.mxu0 %v2678
      %3253 = vmatmul.mubr.bf16.gmra.mrb[0].mxu0 %v2677
      %v3254 = vpop.f32.mrb[0].mxu0
      %v3255 = vadd.f32 %v3214, %v3254
      %v3256 = vpop.f32.mrb[0].mxu0
      %v3257 = vadd.f32 %v3216, %v3256
      %v3258 = vpop.f32.mrb[0].mxu0
      %v3259 = vpop.f32.mrb[0].mxu0
      %3260 = vdwg.mxu0
      %3261 = vmatprep.subr.bf16.mxu0 %v2142
      %3262 = vmatpush1.bf16.msra.mxu0 %v2141
      %3263 = vmatprep.subr.bf16.mxu0 %v2150
      %3264 = vmatpush1.bf16.msra.mxu0 %v2149
      %3265 = vmatprep.subr.bf16.mxu0 %v2158
      %3266 = vmatpush1.bf16.msra.mxu0 %v2157
      %3267 = vmatprep.subr.bf16.mxu0 %v2166
      %3268 = vmatpush1.bf16.msra.mxu0 %v2165
      %3269 = vmatprep.subr.bf16.mxu0 %v2174
      %3270 = vmatpush1.bf16.msra.mxu0 %v2173
      %3271 = vmatprep.subr.bf16.mxu0 %v2182
      %3272 = vmatpush1.bf16.msra.mxu0 %v2181
      %3273 = vmatprep.subr.bf16.mxu0 %v2190
      %3274 = vmatpush1.bf16.msra.mxu0 %v2189
      %3275 = vmatprep.subr.bf16.mxu0 %v2198
      %3276 = vmatpush1.bf16.msra.mxu0 %v2197
      %3277 = vmatprep.subr.bf16.mxu0 %v2206
      %3278 = vmatpush1.bf16.msra.mxu0 %v2205
      %3279 = vmatprep.subr.bf16.mxu0 %v2214
      %3280 = vmatpush1.bf16.msra.mxu0 %v2213
      %3281 = vmatprep.subr.bf16.mxu0 %v2222
      %3282 = vmatpush1.bf16.msra.mxu0 %v2221
      %3283 = vmatprep.subr.bf16.mxu0 %v2230
      %3284 = vmatpush1.bf16.msra.mxu0 %v2229
      %3285 = vmatprep.subr.bf16.mxu0 %v2238
      %3286 = vmatpush1.bf16.msra.mxu0 %v2237
      %3287 = vmatprep.subr.bf16.mxu0 %v2246
      %3288 = vmatpush1.bf16.msra.mxu0 %v2245
      %3289 = vmatprep.subr.bf16.mxu0 %v2254
      %3290 = vmatpush1.bf16.msra.mxu0 %v2253
      %3291 = vmatprep.subr.bf16.mxu0 %v2262
      %3292 = vmatpush1.bf16.msra.mxu0 %v2261
      %3293 = vmatprep.mubr.bf16.mxu0 %v2680
      %3294 = vmatmul.mubr.bf16.gmra.mrb[0].mxu0 %v2679
      %v3295 = vpop.f32.mrb[0].mxu0
      %v3296 = vadd.f32 %v3255, %v3295
      %v3297 = vpop.f32.mrb[0].mxu0
      %v3298 = vadd.f32 %v3257, %v3297
      %v3299 = vpop.f32.mrb[0].mxu0
      %v3300 = vpop.f32.mrb[0].mxu0
      %3301 = vdwg.mxu0
      %3302 = vmatprep.subr.bf16.mxu0 %v2270
      %3303 = vmatpush1.bf16.msra.mxu0 %v2269
      %3304 = vmatprep.subr.bf16.mxu0 %v2278
      %3305 = vmatpush1.bf16.msra.mxu0 %v2277
      %3306 = vmatprep.subr.bf16.mxu0 %v2286
      %3307 = vmatpush1.bf16.msra.mxu0 %v2285
      %3308 = vmatprep.subr.bf16.mxu0 %v2294
      %3309 = vmatpush1.bf16.msra.mxu0 %v2293
      %3310 = vmatprep.subr.bf16.mxu0 %v2302
      %3311 = vmatpush1.bf16.msra.mxu0 %v2301
      %3312 = vmatprep.subr.bf16.mxu0 %v2310
      %3313 = vmatpush1.bf16.msra.mxu0 %v2309
      %3314 = vmatprep.subr.bf16.mxu0 %v2318
      %3315 = vmatpush1.bf16.msra.mxu0 %v2317
      %3316 = vmatprep.subr.bf16.mxu0 %v2326
      %3317 = vmatpush1.bf16.msra.mxu0 %v2325
      %3318 = vmatprep.subr.bf16.mxu0 %v2334
      %3319 = vmatpush1.bf16.msra.mxu0 %v2333
      %3320 = vmatprep.subr.bf16.mxu0 %v2342
      %3321 = vmatpush1.bf16.msra.mxu0 %v2341
      %3322 = vmatprep.subr.bf16.mxu0 %v2350
      %3323 = vmatpush1.bf16.msra.mxu0 %v2349
      %3324 = vmatprep.subr.bf16.mxu0 %v2358
      %3325 = vmatpush1.bf16.msra.mxu0 %v2357
      %3326 = vmatprep.subr.bf16.mxu0 %v2366
      %3327 = vmatpush1.bf16.msra.mxu0 %v2365
      %3328 = vmatprep.subr.bf16.mxu0 %v2374
      %3329 = vmatpush1.bf16.msra.mxu0 %v2373
      %3330 = vmatprep.subr.bf16.mxu0 %v2382
      %3331 = vmatpush1.bf16.msra.mxu0 %v2381
      %3332 = vmatprep.subr.bf16.mxu0 %v2390
      %3333 = vmatpush1.bf16.msra.mxu0 %v2389
      %3334 = vmatprep.mubr.bf16.mxu0 %v2682
      %3335 = vmatmul.mubr.bf16.gmra.mrb[0].mxu0 %v2681
      %v3336 = vpop.f32.mrb[0].mxu0
      %v3337 = vadd.f32 %v3296, %v3336
      %v3338 = vpop.f32.mrb[0].mxu0
      %v3339 = vadd.f32 %v3298, %v3338
      %v3340 = vpop.f32.mrb[0].mxu0
      %v3341 = vpop.f32.mrb[0].mxu0
      %3342 = vdwg.mxu0
      %3343 = vmatprep.subr.bf16.mxu0 %v2398
      %3344 = vmatpush1.bf16.msra.mxu0 %v2397
      %3345 = vmatprep.subr.bf16.mxu0 %v2406
      %3346 = vmatpush1.bf16.msra.mxu0 %v2405
      %3347 = vmatprep.subr.bf16.mxu0 %v2414
      %3348 = vmatpush1.bf16.msra.mxu0 %v2413
      %3349 = vmatprep.subr.bf16.mxu0 %v2422
      %3350 = vmatpush1.bf16.msra.mxu0 %v2421
      %3351 = vmatprep.subr.bf16.mxu0 %v2430
      %3352 = vmatpush1.bf16.msra.mxu0 %v2429
      %3353 = vmatprep.subr.bf16.mxu0 %v2438
      %3354 = vmatpush1.bf16.msra.mxu0 %v2437
      %3355 = vmatprep.subr.bf16.mxu0 %v2446
      %3356 = vmatpush1.bf16.msra.mxu0 %v2445
      %3357 = vmatprep.subr.bf16.mxu0 %v2454
      %3358 = vmatpush1.bf16.msra.mxu0 %v2453
      %3359 = vmatprep.subr.bf16.mxu0 %v2462
      %3360 = vmatpush1.bf16.msra.mxu0 %v2461
      %3361 = vmatprep.subr.bf16.mxu0 %v2470
      %3362 = vmatpush1.bf16.msra.mxu0 %v2469
      %3363 = vmatprep.subr.bf16.mxu0 %v2478
      %3364 = vmatpush1.bf16.msra.mxu0 %v2477
      %3365 = vmatprep.subr.bf16.mxu0 %v2486
      %3366 = vmatpush1.bf16.msra.mxu0 %v2485
      %3367 = vmatprep.subr.bf16.mxu0 %v2494
      %3368 = vmatpush1.bf16.msra.mxu0 %v2493
      %3369 = vmatprep.subr.bf16.mxu0 %v2502
      %3370 = vmatpush1.bf16.msra.mxu0 %v2501
      %3371 = vmatprep.subr.bf16.mxu0 %v2510
      %3372 = vmatpush1.bf16.msra.mxu0 %v2509
      %3373 = vmatprep.subr.bf16.mxu0 %v2518
      %3374 = vmatpush1.bf16.msra.mxu0 %v2517
      %3375 = vmatprep.mubr.bf16.mxu0 %v2684
      %3376 = vmatmul.mubr.bf16.gmra.mrb[0].mxu0 %v2683
      %v3377 = vpop.f32.mrb[0].mxu0
      %v3378 = vadd.f32 %v3337, %v3377
      %v3379 = vpop.f32.mrb[0].mxu0
      %v3380 = vadd.f32 %v3339, %v3379
      %v3381 = vpop.f32.mrb[0].mxu0
      %v3382 = vpop.f32.mrb[0].mxu0
      %3383 = vdwg.mxu0
      %3384 = vmatprep.subr.bf16.mxu0 %v2526
      %3385 = vmatpush1.bf16.msra.mxu0 %v2525
      %3386 = vmatprep.subr.bf16.mxu0 %v2534
      %3387 = vmatpush1.bf16.msra.mxu0 %v2533
      %3388 = vmatprep.subr.bf16.mxu0 %v2542
      %3389 = vmatpush1.bf16.msra.mxu0 %v2541
      %3390 = vmatprep.subr.bf16.mxu0 %v2550
      %3391 = vmatpush1.bf16.msra.mxu0 %v2549
      %3392 = vmatprep.subr.bf16.mxu0 %v2558
      %3393 = vmatpush1.bf16.msra.mxu0 %v2557
      %3394 = vmatprep.subr.bf16.mxu0 %v2566
      %3395 = vmatpush1.bf16.msra.mxu0 %v2565
      %3396 = vmatprep.subr.bf16.mxu0 %v2574
      %3397 = vmatpush1.bf16.msra.mxu0 %v2573
      %3398 = vmatprep.subr.bf16.mxu0 %v2582
      %3399 = vmatpush1.bf16.msra.mxu0 %v2581
      %3400 = vmatprep.subr.bf16.mxu0 %v2590
      %3401 = vmatpush1.bf16.msra.mxu0 %v2589
      %3402 = vmatprep.subr.bf16.mxu0 %v2598
      %3403 = vmatpush1.bf16.msra.mxu0 %v2597
      %3404 = vmatprep.subr.bf16.mxu0 %v2606
      %3405 = vmatpush1.bf16.msra.mxu0 %v2605
      %3406 = vmatprep.subr.bf16.mxu0 %v2614
      %3407 = vmatpush1.bf16.msra.mxu0 %v2613
      %3408 = vmatprep.subr.bf16.mxu0 %v2622
      %3409 = vmatpush1.bf16.msra.mxu0 %v2621
      %3410 = vmatprep.subr.bf16.mxu0 %v2630
      %3411 = vmatpush1.bf16.msra.mxu0 %v2629
      %3412 = vmatprep.subr.bf16.mxu0 %v2638
      %3413 = vmatpush1.bf16.msra.mxu0 %v2637
      %3414 = vmatprep.subr.bf16.mxu0 %v2646
      %3415 = vmatpush1.bf16.msra.mxu0 %v2645
      %3416 = vmatprep.mubr.bf16.mxu0 %v2686
      %3417 = vmatmul.mubr.bf16.gmra.mrb[0].mxu0 %v2685
      %v3418 = vpop.f32.mrb[0].mxu0
      %v3419 = vadd.f32 %v3378, %v3418
      %v3420 = vpop.f32.mrb[0].mxu0
      %v3421 = vadd.f32 %v3380, %v3420
      %v3422 = vpop.f32.mrb[0].mxu0
      %v3423 = vpop.f32.mrb[0].mxu0
      %3424 = vdwg.mxu0
      %3425 = vmatprep.subr.bf16.mxu0 %v1504
      %3426 = vmatpush1.bf16.msra.mxu0 %v1503
      %3427 = vmatprep.subr.bf16.mxu0 %v1512
      %3428 = vmatpush1.bf16.msra.mxu0 %v1511
      %3429 = vmatprep.subr.bf16.mxu0 %v1520
      %3430 = vmatpush1.bf16.msra.mxu0 %v1519
      %3431 = vmatprep.subr.bf16.mxu0 %v1528
      %3432 = vmatpush1.bf16.msra.mxu0 %v1527
      %3433 = vmatprep.subr.bf16.mxu0 %v1536
      %3434 = vmatpush1.bf16.msra.mxu0 %v1535
      %3435 = vmatprep.subr.bf16.mxu0 %v1544
      %3436 = vmatpush1.bf16.msra.mxu0 %v1543
      %3437 = vmatprep.subr.bf16.mxu0 %v1552
      %3438 = vmatpush1.bf16.msra.mxu0 %v1551
      %3439 = vmatprep.subr.bf16.mxu0 %v1560
      %3440 = vmatpush1.bf16.msra.mxu0 %v1559
      %3441 = vmatprep.subr.bf16.mxu0 %v1568
      %3442 = vmatpush1.bf16.msra.mxu0 %v1567
      %3443 = vmatprep.subr.bf16.mxu0 %v1576
      %3444 = vmatpush1.bf16.msra.mxu0 %v1575
      %3445 = vmatprep.subr.bf16.mxu0 %v1584
      %3446 = vmatpush1.bf16.msra.mxu0 %v1583
      %3447 = vmatprep.subr.bf16.mxu0 %v1592
      %3448 = vmatpush1.bf16.msra.mxu0 %v1591
      %3449 = vmatprep.subr.bf16.mxu0 %v1600
      %3450 = vmatpush1.bf16.msra.mxu0 %v1599
      %3451 = vmatprep.subr.bf16.mxu0 %v1608
      %3452 = vmatpush1.bf16.msra.mxu0 %v1607
      %3453 = vmatprep.subr.bf16.mxu0 %v1616
      %3454 = vmatpush1.bf16.msra.mxu0 %v1615
      %3455 = vmatprep.subr.bf16.mxu0 %v1624
      %3456 = vmatpush1.bf16.msra.mxu0 %v1623
      %3457 = vmatprep.mubr.bf16.mxu0 %v2670
      %3458 = vmatmul.mubr.bf16.gmra.mrb[0].mxu0 %v2669
      %v3459 = vpop.f32.mrb[0].mxu0
      %v3460 = vadd.f32 0.0, %v3459
      %v3461 = vpop.f32.mrb[0].mxu0
      %v3462 = vadd.f32 0.0, %v3461
      %v3463 = vpop.f32.mrb[0].mxu0
      %v3464 = vpop.f32.mrb[0].mxu0
      %3465 = vdwg.mxu0
      %3466 = vmatprep.subr.bf16.mxu0 %v1632
      %3467 = vmatpush1.bf16.msra.mxu0 %v1631
      %3468 = vmatprep.subr.bf16.mxu0 %v1640
      %3469 = vmatpush1.bf16.msra.mxu0 %v1639
      %3470 = vmatprep.subr.bf16.mxu0 %v1648
      %3471 = vmatpush1.bf16.msra.mxu0 %v1647
      %3472 = vmatprep.subr.bf16.mxu0 %v1656
      %3473 = vmatpush1.bf16.msra.mxu0 %v1655
      %3474 = vmatprep.subr.bf16.mxu0 %v1664
      %3475 = vmatpush1.bf16.msra.mxu0 %v1663
      %3476 = vmatprep.subr.bf16.mxu0 %v1672
      %3477 = vmatpush1.bf16.msra.mxu0 %v1671
      %3478 = vmatprep.subr.bf16.mxu0 %v1680
      %3479 = vmatpush1.bf16.msra.mxu0 %v1679
      %3480 = vmatprep.subr.bf16.mxu0 %v1688
      %3481 = vmatpush1.bf16.msra.mxu0 %v1687
      %3482 = vmatprep.subr.bf16.mxu0 %v1696
      %3483 = vmatpush1.bf16.msra.mxu0 %v1695
      %3484 = vmatprep.subr.bf16.mxu0 %v1704
      %3485 = vmatpush1.bf16.msra.mxu0 %v1703
      %3486 = vmatprep.subr.bf16.mxu0 %v1712
      %3487 = vmatpush1.bf16.msra.mxu0 %v1711
      %3488 = vmatprep.subr.bf16.mxu0 %v1720
      %3489 = vmatpush1.bf16.msra.mxu0 %v1719
      %3490 = vmatprep.subr.bf16.mxu0 %v1728
      %3491 = vmatpush1.bf16.msra.mxu0 %v1727
      %3492 = vmatprep.subr.bf16.mxu0 %v1736
      %3493 = vmatpush1.bf16.msra.mxu0 %v1735
      %3494 = vmatprep.subr.bf16.mxu0 %v1744
      %3495 = vmatpush1.bf16.msra.mxu0 %v1743
      %3496 = vmatprep.subr.bf16.mxu0 %v1752
      %3497 = vmatpush1.bf16.msra.mxu0 %v1751
      %3498 = vmatprep.mubr.bf16.mxu0 %v2672
      %3499 = vmatmul.mubr.bf16.gmra.mrb[0].mxu0 %v2671
      %v3500 = vpop.f32.mrb[0].mxu0
      %v3501 = vadd.f32 %v3460, %v3500
      %v3502 = vpop.f32.mrb[0].mxu0
      %v3503 = vadd.f32 %v3462, %v3502
      %v3504 = vpop.f32.mrb[0].mxu0
      %v3505 = vpop.f32.mrb[0].mxu0
      %3506 = vdwg.mxu0
      %3507 = vmatprep.subr.bf16.mxu0 %v1760
      %3508 = vmatpush1.bf16.msra.mxu0 %v1759
      %3509 = vmatprep.subr.bf16.mxu0 %v1768
      %3510 = vmatpush1.bf16.msra.mxu0 %v1767
      %3511 = vmatprep.subr.bf16.mxu0 %v1776
      %3512 = vmatpush1.bf16.msra.mxu0 %v1775
      %3513 = vmatprep.subr.bf16.mxu0 %v1784
      %3514 = vmatpush1.bf16.msra.mxu0 %v1783
      %3515 = vmatprep.subr.bf16.mxu0 %v1792
      %3516 = vmatpush1.bf16.msra.mxu0 %v1791
      %3517 = vmatprep.subr.bf16.mxu0 %v1800
      %3518 = vmatpush1.bf16.msra.mxu0 %v1799
      %3519 = vmatprep.subr.bf16.mxu0 %v1808
      %3520 = vmatpush1.bf16.msra.mxu0 %v1807
      %3521 = vmatprep.subr.bf16.mxu0 %v1816
      %3522 = vmatpush1.bf16.msra.mxu0 %v1815
      %3523 = vmatprep.subr.bf16.mxu0 %v1824
      %3524 = vmatpush1.bf16.msra.mxu0 %v1823
      %3525 = vmatprep.subr.bf16.mxu0 %v1832
      %3526 = vmatpush1.bf16.msra.mxu0 %v1831
      %3527 = vmatprep.subr.bf16.mxu0 %v1840
      %3528 = vmatpush1.bf16.msra.mxu0 %v1839
      %3529 = vmatprep.subr.bf16.mxu0 %v1848
      %3530 = vmatpush1.bf16.msra.mxu0 %v1847
      %3531 = vmatprep.subr.bf16.mxu0 %v1856
      %3532 = vmatpush1.bf16.msra.mxu0 %v1855
      %3533 = vmatprep.subr.bf16.mxu0 %v1864
      %3534 = vmatpush1.bf16.msra.mxu0 %v1863
      %3535 = vmatprep.subr.bf16.mxu0 %v1872
      %3536 = vmatpush1.bf16.msra.mxu0 %v1871
      %3537 = vmatprep.subr.bf16.mxu0 %v1880
      %3538 = vmatpush1.bf16.msra.mxu0 %v1879
      %3539 = vmatprep.mubr.bf16.mxu0 %v2674
      %3540 = vmatmul.mubr.bf16.gmra.mrb[0].mxu0 %v2673
      %v3541 = vpop.f32.mrb[0].mxu0
      %v3542 = vadd.f32 %v3501, %v3541
      %v3543 = vpop.f32.mrb[0].mxu0
      %v3544 = vadd.f32 %v3503, %v3543
      %v3545 = vpop.f32.mrb[0].mxu0
      %v3546 = vpop.f32.mrb[0].mxu0
      %3547 = vdwg.mxu0
      %3548 = vmatprep.subr.bf16.mxu0 %v1888
      %3549 = vmatpush1.bf16.msra.mxu0 %v1887
      %3550 = vmatprep.subr.bf16.mxu0 %v1896
      %3551 = vmatpush1.bf16.msra.mxu0 %v1895
      %3552 = vmatprep.subr.bf16.mxu0 %v1904
      %3553 = vmatpush1.bf16.msra.mxu0 %v1903
      %3554 = vmatprep.subr.bf16.mxu0 %v1912
      %3555 = vmatpush1.bf16.msra.mxu0 %v1911
      %3556 = vmatprep.subr.bf16.mxu0 %v1920
      %3557 = vmatpush1.bf16.msra.mxu0 %v1919
      %3558 = vmatprep.subr.bf16.mxu0 %v1928
      %3559 = vmatpush1.bf16.msra.mxu0 %v1927
      %3560 = vmatprep.subr.bf16.mxu0 %v1936
      %3561 = vmatpush1.bf16.msra.mxu0 %v1935
      %3562 = vmatprep.subr.bf16.mxu0 %v1944
      %3563 = vmatpush1.bf16.msra.mxu0 %v1943
      %3564 = vmatprep.subr.bf16.mxu0 %v1952
      %3565 = vmatpush1.bf16.msra.mxu0 %v1951
      %3566 = vmatprep.subr.bf16.mxu0 %v1960
      %3567 = vmatpush1.bf16.msra.mxu0 %v1959
      %3568 = vmatprep.subr.bf16.mxu0 %v1968
      %3569 = vmatpush1.bf16.msra.mxu0 %v1967
      %3570 = vmatprep.subr.bf16.mxu0 %v1976
      %3571 = vmatpush1.bf16.msra.mxu0 %v1975
      %3572 = vmatprep.subr.bf16.mxu0 %v1984
      %3573 = vmatpush1.bf16.msra.mxu0 %v1983
      %3574 = vmatprep.subr.bf16.mxu0 %v1992
      %3575 = vmatpush1.bf16.msra.mxu0 %v1991
      %3576 = vmatprep.subr.bf16.mxu0 %v2000
      %3577 = vmatpush1.bf16.msra.mxu0 %v1999
      %3578 = vmatprep.subr.bf16.mxu0 %v2008
      %3579 = vmatpush1.bf16.msra.mxu0 %v2007
      %3580 = vmatprep.mubr.bf16.mxu0 %v2676
      %3581 = vmatmul.mubr.bf16.gmra.mrb[0].mxu0 %v2675
      %v3582 = vpop.f32.mrb[0].mxu0
      %v3583 = vadd.f32 %v3542, %v3582
      %v3584 = vpop.f32.mrb[0].mxu0
      %v3585 = vadd.f32 %v3544, %v3584
      %v3586 = vpop.f32.mrb[0].mxu0
      %v3587 = vpop.f32.mrb[0].mxu0
      %3588 = vdwg.mxu0
      %3589 = vmatprep.subr.bf16.mxu0 %v2016
      %3590 = vmatpush1.bf16.msra.mxu0 %v2015
      %3591 = vmatprep.subr.bf16.mxu0 %v2024
      %3592 = vmatpush1.bf16.msra.mxu0 %v2023
      %3593 = vmatprep.subr.bf16.mxu0 %v2032
      %3594 = vmatpush1.bf16.msra.mxu0 %v2031
      %3595 = vmatprep.subr.bf16.mxu0 %v2040
      %3596 = vmatpush1.bf16.msra.mxu0 %v2039
      %3597 = vmatprep.subr.bf16.mxu0 %v2048
      %3598 = vmatpush1.bf16.msra.mxu0 %v2047
      %3599 = vmatprep.subr.bf16.mxu0 %v2056
      %3600 = vmatpush1.bf16.msra.mxu0 %v2055
      %3601 = vmatprep.subr.bf16.mxu0 %v2064
      %3602 = vmatpush1.bf16.msra.mxu0 %v2063
      %3603 = vmatprep.subr.bf16.mxu0 %v2072
      %3604 = vmatpush1.bf16.msra.mxu0 %v2071
      %3605 = vmatprep.subr.bf16.mxu0 %v2080
      %3606 = vmatpush1.bf16.msra.mxu0 %v2079
      %3607 = vmatprep.subr.bf16.mxu0 %v2088
      %3608 = vmatpush1.bf16.msra.mxu0 %v2087
      %3609 = vmatprep.subr.bf16.mxu0 %v2096
      %3610 = vmatpush1.bf16.msra.mxu0 %v2095
      %3611 = vmatprep.subr.bf16.mxu0 %v2104
      %3612 = vmatpush1.bf16.msra.mxu0 %v2103
      %3613 = vmatprep.subr.bf16.mxu0 %v2112
      %3614 = vmatpush1.bf16.msra.mxu0 %v2111
      %3615 = vmatprep.subr.bf16.mxu0 %v2120
      %3616 = vmatpush1.bf16.msra.mxu0 %v2119
      %3617 = vmatprep.subr.bf16.mxu0 %v2128
      %3618 = vmatpush1.bf16.msra.mxu0 %v2127
      %3619 = vmatprep.subr.bf16.mxu0 %v2136
      %3620 = vmatpush1.bf16.msra.mxu0 %v2135
      %3621 = vmatprep.mubr.bf16.mxu0 %v2678
      %3622 = vmatmul.mubr.bf16.gmra.mrb[0].mxu0 %v2677
      %v3623 = vpop.f32.mrb[0].mxu0
      %v3624 = vadd.f32 %v3583, %v3623
      %v3625 = vpop.f32.mrb[0].mxu0
      %v3626 = vadd.f32 %v3585, %v3625
      %v3627 = vpop.f32.mrb[0].mxu0
      %v3628 = vpop.f32.mrb[0].mxu0
      %3629 = vdwg.mxu0
      %3630 = vmatprep.subr.bf16.mxu0 %v2144
      %3631 = vmatpush1.bf16.msra.mxu0 %v2143
      %3632 = vmatprep.subr.bf16.mxu0 %v2152
      %3633 = vmatpush1.bf16.msra.mxu0 %v2151
      %3634 = vmatprep.subr.bf16.mxu0 %v2160
      %3635 = vmatpush1.bf16.msra.mxu0 %v2159
      %3636 = vmatprep.subr.bf16.mxu0 %v2168
      %3637 = vmatpush1.bf16.msra.mxu0 %v2167
      %3638 = vmatprep.subr.bf16.mxu0 %v2176
      %3639 = vmatpush1.bf16.msra.mxu0 %v2175
      %3640 = vmatprep.subr.bf16.mxu0 %v2184
      %3641 = vmatpush1.bf16.msra.mxu0 %v2183
      %3642 = vmatprep.subr.bf16.mxu0 %v2192
      %3643 = vmatpush1.bf16.msra.mxu0 %v2191
      %3644 = vmatprep.subr.bf16.mxu0 %v2200
      %3645 = vmatpush1.bf16.msra.mxu0 %v2199
      %3646 = vmatprep.subr.bf16.mxu0 %v2208
      %3647 = vmatpush1.bf16.msra.mxu0 %v2207
      %3648 = vmatprep.subr.bf16.mxu0 %v2216
      %3649 = vmatpush1.bf16.msra.mxu0 %v2215
      %3650 = vmatprep.subr.bf16.mxu0 %v2224
      %3651 = vmatpush1.bf16.msra.mxu0 %v2223
      %3652 = vmatprep.subr.bf16.mxu0 %v2232
      %3653 = vmatpush1.bf16.msra.mxu0 %v2231
      %3654 = vmatprep.subr.bf16.mxu0 %v2240
      %3655 = vmatpush1.bf16.msra.mxu0 %v2239
      %3656 = vmatprep.subr.bf16.mxu0 %v2248
      %3657 = vmatpush1.bf16.msra.mxu0 %v2247
      %3658 = vmatprep.subr.bf16.mxu0 %v2256
      %3659 = vmatpush1.bf16.msra.mxu0 %v2255
      %3660 = vmatprep.subr.bf16.mxu0 %v2264
      %3661 = vmatpush1.bf16.msra.mxu0 %v2263
      %3662 = vmatprep.mubr.bf16.mxu0 %v2680
      %3663 = vmatmul.mubr.bf16.gmra.mrb[0].mxu0 %v2679
      %v3664 = vpop.f32.mrb[0].mxu0
      %v3665 = vadd.f32 %v3624, %v3664
      %v3666 = vpop.f32.mrb[0].mxu0
      %v3667 = vadd.f32 %v3626, %v3666
      %v3668 = vpop.f32.mrb[0].mxu0
      %v3669 = vpop.f32.mrb[0].mxu0
      %3670 = vdwg.mxu0
      %3671 = vmatprep.subr.bf16.mxu0 %v2272
      %3672 = vmatpush1.bf16.msra.mxu0 %v2271
      %3673 = vmatprep.subr.bf16.mxu0 %v2280
      %3674 = vmatpush1.bf16.msra.mxu0 %v2279
      %3675 = vmatprep.subr.bf16.mxu0 %v2288
      %3676 = vmatpush1.bf16.msra.mxu0 %v2287
      %3677 = vmatprep.subr.bf16.mxu0 %v2296
      %3678 = vmatpush1.bf16.msra.mxu0 %v2295
      %3679 = vmatprep.subr.bf16.mxu0 %v2304
      %3680 = vmatpush1.bf16.msra.mxu0 %v2303
      %3681 = vmatprep.subr.bf16.mxu0 %v2312
      %3682 = vmatpush1.bf16.msra.mxu0 %v2311
      %3683 = vmatprep.subr.bf16.mxu0 %v2320
      %3684 = vmatpush1.bf16.msra.mxu0 %v2319
      %3685 = vmatprep.subr.bf16.mxu0 %v2328
      %3686 = vmatpush1.bf16.msra.mxu0 %v2327
      %3687 = vmatprep.subr.bf16.mxu0 %v2336
      %3688 = vmatpush1.bf16.msra.mxu0 %v2335
      %3689 = vmatprep.subr.bf16.mxu0 %v2344
      %3690 = vmatpush1.bf16.msra.mxu0 %v2343
      %3691 = vmatprep.subr.bf16.mxu0 %v2352
      %3692 = vmatpush1.bf16.msra.mxu0 %v2351
      %3693 = vmatprep.subr.bf16.mxu0 %v2360
      %3694 = vmatpush1.bf16.msra.mxu0 %v2359
      %3695 = vmatprep.subr.bf16.mxu0 %v2368
      %3696 = vmatpush1.bf16.msra.mxu0 %v2367
      %3697 = vmatprep.subr.bf16.mxu0 %v2376
      %3698 = vmatpush1.bf16.msra.mxu0 %v2375
      %3699 = vmatprep.subr.bf16.mxu0 %v2384
      %3700 = vmatpush1.bf16.msra.mxu0 %v2383
      %3701 = vmatprep.subr.bf16.mxu0 %v2392
      %3702 = vmatpush1.bf16.msra.mxu0 %v2391
      %3703 = vmatprep.mubr.bf16.mxu0 %v2682
      %3704 = vmatmul.mubr.bf16.gmra.mrb[0].mxu0 %v2681
      %v3705 = vpop.f32.mrb[0].mxu0
      %v3706 = vadd.f32 %v3665, %v3705
      %v3707 = vpop.f32.mrb[0].mxu0
      %v3708 = vadd.f32 %v3667, %v3707
      %v3709 = vpop.f32.mrb[0].mxu0
      %v3710 = vpop.f32.mrb[0].mxu0
      %3711 = vdwg.mxu0
      %3712 = vmatprep.subr.bf16.mxu0 %v2400
      %3713 = vmatpush1.bf16.msra.mxu0 %v2399
      %3714 = vmatprep.subr.bf16.mxu0 %v2408
      %3715 = vmatpush1.bf16.msra.mxu0 %v2407
      %3716 = vmatprep.subr.bf16.mxu0 %v2416
      %3717 = vmatpush1.bf16.msra.mxu0 %v2415
      %3718 = vmatprep.subr.bf16.mxu0 %v2424
      %3719 = vmatpush1.bf16.msra.mxu0 %v2423
      %3720 = vmatprep.subr.bf16.mxu0 %v2432
      %3721 = vmatpush1.bf16.msra.mxu0 %v2431
      %3722 = vmatprep.subr.bf16.mxu0 %v2440
      %3723 = vmatpush1.bf16.msra.mxu0 %v2439
      %3724 = vmatprep.subr.bf16.mxu0 %v2448
      %3725 = vmatpush1.bf16.msra.mxu0 %v2447
      %3726 = vmatprep.subr.bf16.mxu0 %v2456
      %3727 = vmatpush1.bf16.msra.mxu0 %v2455
      %3728 = vmatprep.subr.bf16.mxu0 %v2464
      %3729 = vmatpush1.bf16.msra.mxu0 %v2463
      %3730 = vmatprep.subr.bf16.mxu0 %v2472
      %3731 = vmatpush1.bf16.msra.mxu0 %v2471
      %3732 = vmatprep.subr.bf16.mxu0 %v2480
      %3733 = vmatpush1.bf16.msra.mxu0 %v2479
      %3734 = vmatprep.subr.bf16.mxu0 %v2488
      %3735 = vmatpush1.bf16.msra.mxu0 %v2487
      %3736 = vmatprep.subr.bf16.mxu0 %v2496
      %3737 = vmatpush1.bf16.msra.mxu0 %v2495
      %3738 = vmatprep.subr.bf16.mxu0 %v2504
      %3739 = vmatpush1.bf16.msra.mxu0 %v2503
      %3740 = vmatprep.subr.bf16.mxu0 %v2512
      %3741 = vmatpush1.bf16.msra.mxu0 %v2511
      %3742 = vmatprep.subr.bf16.mxu0 %v2520
      %3743 = vmatpush1.bf16.msra.mxu0 %v2519
      %3744 = vmatprep.mubr.bf16.mxu0 %v2684
      %3745 = vmatmul.mubr.bf16.gmra.mrb[0].mxu0 %v2683
      %v3746 = vpop.f32.mrb[0].mxu0
      %v3747 = vadd.f32 %v3706, %v3746
      %v3748 = vpop.f32.mrb[0].mxu0
      %v3749 = vadd.f32 %v3708, %v3748
      %v3750 = vpop.f32.mrb[0].mxu0
      %v3751 = vpop.f32.mrb[0].mxu0
      %3752 = vdwg.mxu0
      %3753 = vmatprep.subr.bf16.mxu0 %v2528
      %3754 = vmatpush1.bf16.msra.mxu0 %v2527
      %3755 = vmatprep.subr.bf16.mxu0 %v2536
      %3756 = vmatpush1.bf16.msra.mxu0 %v2535
      %3757 = vmatprep.subr.bf16.mxu0 %v2544
      %3758 = vmatpush1.bf16.msra.mxu0 %v2543
      %3759 = vmatprep.subr.bf16.mxu0 %v2552
      %3760 = vmatpush1.bf16.msra.mxu0 %v2551
      %3761 = vmatprep.subr.bf16.mxu0 %v2560
      %3762 = vmatpush1.bf16.msra.mxu0 %v2559
      %3763 = vmatprep.subr.bf16.mxu0 %v2568
      %3764 = vmatpush1.bf16.msra.mxu0 %v2567
      %3765 = vmatprep.subr.bf16.mxu0 %v2576
      %3766 = vmatpush1.bf16.msra.mxu0 %v2575
      %3767 = vmatprep.subr.bf16.mxu0 %v2584
      %3768 = vmatpush1.bf16.msra.mxu0 %v2583
      %3769 = vmatprep.subr.bf16.mxu0 %v2592
      %3770 = vmatpush1.bf16.msra.mxu0 %v2591
      %3771 = vmatprep.subr.bf16.mxu0 %v2600
      %3772 = vmatpush1.bf16.msra.mxu0 %v2599
      %3773 = vmatprep.subr.bf16.mxu0 %v2608
      %3774 = vmatpush1.bf16.msra.mxu0 %v2607
      %3775 = vmatprep.subr.bf16.mxu0 %v2616
      %3776 = vmatpush1.bf16.msra.mxu0 %v2615
      %3777 = vmatprep.subr.bf16.mxu0 %v2624
      %3778 = vmatpush1.bf16.msra.mxu0 %v2623
      %3779 = vmatprep.subr.bf16.mxu0 %v2632
      %3780 = vmatpush1.bf16.msra.mxu0 %v2631
      %3781 = vmatprep.subr.bf16.mxu0 %v2640
      %3782 = vmatpush1.bf16.msra.mxu0 %v2639
      %3783 = vmatprep.subr.bf16.mxu0 %v2648
      %3784 = vmatpush1.bf16.msra.mxu0 %v2647
      %3785 = vmatprep.mubr.bf16.mxu0 %v2686
      %3786 = vmatmul.mubr.bf16.gmra.mrb[0].mxu0 %v2685
      %v3787 = vpop.f32.mrb[0].mxu0
      %v3788 = vadd.f32 %v3747, %v3787
      %v3789 = vpop.f32.mrb[0].mxu0
      %v3790 = vadd.f32 %v3749, %v3789
      %v3791 = vpop.f32.mrb[0].mxu0
      %v3792 = vpop.f32.mrb[0].mxu0
      %3793 = vdwg.mxu0
      %3794 = vmatprep.subr.bf16.mxu0 %v1506
      %3795 = vmatpush1.bf16.msra.mxu0 %v1505
      %3796 = vmatprep.subr.bf16.mxu0 %v1514
      %3797 = vmatpush1.bf16.msra.mxu0 %v1513
      %3798 = vmatprep.subr.bf16.mxu0 %v1522
      %3799 = vmatpush1.bf16.msra.mxu0 %v1521
      %3800 = vmatprep.subr.bf16.mxu0 %v1530
      %3801 = vmatpush1.bf16.msra.mxu0 %v1529
      %3802 = vmatprep.subr.bf16.mxu0 %v1538
      %3803 = vmatpush1.bf16.msra.mxu0 %v1537
      %3804 = vmatprep.subr.bf16.mxu0 %v1546
      %3805 = vmatpush1.bf16.msra.mxu0 %v1545
      %3806 = vmatprep.subr.bf16.mxu0 %v1554
      %3807 = vmatpush1.bf16.msra.mxu0 %v1553
      %3808 = vmatprep.subr.bf16.mxu0 %v1562
      %3809 = vmatpush1.bf16.msra.mxu0 %v1561
      %3810 = vmatprep.subr.bf16.mxu0 %v1570
      %3811 = vmatpush1.bf16.msra.mxu0 %v1569
      %3812 = vmatprep.subr.bf16.mxu0 %v1578
      %3813 = vmatpush1.bf16.msra.mxu0 %v1577
      %3814 = vmatprep.subr.bf16.mxu0 %v1586
      %3815 = vmatpush1.bf16.msra.mxu0 %v1585
      %3816 = vmatprep.subr.bf16.mxu0 %v1594
      %3817 = vmatpush1.bf16.msra.mxu0 %v1593
      %3818 = vmatprep.subr.bf16.mxu0 %v1602
      %3819 = vmatpush1.bf16.msra.mxu0 %v1601
      %3820 = vmatprep.subr.bf16.mxu0 %v1610
      %3821 = vmatpush1.bf16.msra.mxu0 %v1609
      %3822 = vmatprep.subr.bf16.mxu0 %v1618
      %3823 = vmatpush1.bf16.msra.mxu0 %v1617
      %3824 = vmatprep.subr.bf16.mxu0 %v1626
      %3825 = vmatpush1.bf16.msra.mxu0 %v1625
      %3826 = vmatprep.mubr.bf16.mxu0 %v2670
      %3827 = vmatmul.mubr.bf16.gmra.mrb[0].mxu0 %v2669
      %v3828 = vpop.f32.mrb[0].mxu0
      %v3829 = vadd.f32 0.0, %v3828
      %v3830 = vpop.f32.mrb[0].mxu0
      %v3831 = vadd.f32 0.0, %v3830
      %v3832 = vpop.f32.mrb[0].mxu0
      %v3833 = vpop.f32.mrb[0].mxu0
      %3834 = vdwg.mxu0
      %3835 = vmatprep.subr.bf16.mxu0 %v1634
      %3836 = vmatpush1.bf16.msra.mxu0 %v1633
      %3837 = vmatprep.subr.bf16.mxu0 %v1642
      %3838 = vmatpush1.bf16.msra.mxu0 %v1641
      %3839 = vmatprep.subr.bf16.mxu0 %v1650
      %3840 = vmatpush1.bf16.msra.mxu0 %v1649
      %3841 = vmatprep.subr.bf16.mxu0 %v1658
      %3842 = vmatpush1.bf16.msra.mxu0 %v1657
      %3843 = vmatprep.subr.bf16.mxu0 %v1666
      %3844 = vmatpush1.bf16.msra.mxu0 %v1665
      %3845 = vmatprep.subr.bf16.mxu0 %v1674
      %3846 = vmatpush1.bf16.msra.mxu0 %v1673
      %3847 = vmatprep.subr.bf16.mxu0 %v1682
      %3848 = vmatpush1.bf16.msra.mxu0 %v1681
      %3849 = vmatprep.subr.bf16.mxu0 %v1690
      %3850 = vmatpush1.bf16.msra.mxu0 %v1689
      %3851 = vmatprep.subr.bf16.mxu0 %v1698
      %3852 = vmatpush1.bf16.msra.mxu0 %v1697
      %3853 = vmatprep.subr.bf16.mxu0 %v1706
      %3854 = vmatpush1.bf16.msra.mxu0 %v1705
      %3855 = vmatprep.subr.bf16.mxu0 %v1714
      %3856 = vmatpush1.bf16.msra.mxu0 %v1713
      %3857 = vmatprep.subr.bf16.mxu0 %v1722
      %3858 = vmatpush1.bf16.msra.mxu0 %v1721
      %3859 = vmatprep.subr.bf16.mxu0 %v1730
      %3860 = vmatpush1.bf16.msra.mxu0 %v1729
      %3861 = vmatprep.subr.bf16.mxu0 %v1738
      %3862 = vmatpush1.bf16.msra.mxu0 %v1737
      %3863 = vmatprep.subr.bf16.mxu0 %v1746
      %3864 = vmatpush1.bf16.msra.mxu0 %v1745
      %3865 = vmatprep.subr.bf16.mxu0 %v1754
      %3866 = vmatpush1.bf16.msra.mxu0 %v1753
      %3867 = vmatprep.mubr.bf16.mxu0 %v2672
      %3868 = vmatmul.mubr.bf16.gmra.mrb[0].mxu0 %v2671
      %v3869 = vpop.f32.mrb[0].mxu0
      %v3870 = vadd.f32 %v3829, %v3869
      %v3871 = vpop.f32.mrb[0].mxu0
      %v3872 = vadd.f32 %v3831, %v3871
      %v3873 = vpop.f32.mrb[0].mxu0
      %v3874 = vpop.f32.mrb[0].mxu0
      %3875 = vdwg.mxu0
      %3876 = vmatprep.subr.bf16.mxu0 %v1762
      %3877 = vmatpush1.bf16.msra.mxu0 %v1761
      %3878 = vmatprep.subr.bf16.mxu0 %v1770
      %3879 = vmatpush1.bf16.msra.mxu0 %v1769
      %3880 = vmatprep.subr.bf16.mxu0 %v1778
      %3881 = vmatpush1.bf16.msra.mxu0 %v1777
      %3882 = vmatprep.subr.bf16.mxu0 %v1786
      %3883 = vmatpush1.bf16.msra.mxu0 %v1785
      %3884 = vmatprep.subr.bf16.mxu0 %v1794
      %3885 = vmatpush1.bf16.msra.mxu0 %v1793
      %3886 = vmatprep.subr.bf16.mxu0 %v1802
      %3887 = vmatpush1.bf16.msra.mxu0 %v1801
      %3888 = vmatprep.subr.bf16.mxu0 %v1810
      %3889 = vmatpush1.bf16.msra.mxu0 %v1809
      %3890 = vmatprep.subr.bf16.mxu0 %v1818
      %3891 = vmatpush1.bf16.msra.mxu0 %v1817
      %3892 = vmatprep.subr.bf16.mxu0 %v1826
      %3893 = vmatpush1.bf16.msra.mxu0 %v1825
      %3894 = vmatprep.subr.bf16.mxu0 %v1834
      %3895 = vmatpush1.bf16.msra.mxu0 %v1833
      %3896 = vmatprep.subr.bf16.mxu0 %v1842
      %3897 = vmatpush1.bf16.msra.mxu0 %v1841
      %3898 = vmatprep.subr.bf16.mxu0 %v1850
      %3899 = vmatpush1.bf16.msra.mxu0 %v1849
      %3900 = vmatprep.subr.bf16.mxu0 %v1858
      %3901 = vmatpush1.bf16.msra.mxu0 %v1857
      %3902 = vmatprep.subr.bf16.mxu0 %v1866
      %3903 = vmatpush1.bf16.msra.mxu0 %v1865
      %3904 = vmatprep.subr.bf16.mxu0 %v1874
      %3905 = vmatpush1.bf16.msra.mxu0 %v1873
      %3906 = vmatprep.subr.bf16.mxu0 %v1882
      %3907 = vmatpush1.bf16.msra.mxu0 %v1881
      %3908 = vmatprep.mubr.bf16.mxu0 %v2674
      %3909 = vmatmul.mubr.bf16.gmra.mrb[0].mxu0 %v2673
      %v3910 = vpop.f32.mrb[0].mxu0
      %v3911 = vadd.f32 %v3870, %v3910
      %v3912 = vpop.f32.mrb[0].mxu0
      %v3913 = vadd.f32 %v3872, %v3912
      %v3914 = vpop.f32.mrb[0].mxu0
      %v3915 = vpop.f32.mrb[0].mxu0
      %3916 = vdwg.mxu0
      %3917 = vmatprep.subr.bf16.mxu0 %v1890
      %3918 = vmatpush1.bf16.msra.mxu0 %v1889
      %3919 = vmatprep.subr.bf16.mxu0 %v1898
      %3920 = vmatpush1.bf16.msra.mxu0 %v1897
      %3921 = vmatprep.subr.bf16.mxu0 %v1906
      %3922 = vmatpush1.bf16.msra.mxu0 %v1905
      %3923 = vmatprep.subr.bf16.mxu0 %v1914
      %3924 = vmatpush1.bf16.msra.mxu0 %v1913
      %3925 = vmatprep.subr.bf16.mxu0 %v1922
      %3926 = vmatpush1.bf16.msra.mxu0 %v1921
      %3927 = vmatprep.subr.bf16.mxu0 %v1930
      %3928 = vmatpush1.bf16.msra.mxu0 %v1929
      %3929 = vmatprep.subr.bf16.mxu0 %v1938
      %3930 = vmatpush1.bf16.msra.mxu0 %v1937
      %3931 = vmatprep.subr.bf16.mxu0 %v1946
      %3932 = vmatpush1.bf16.msra.mxu0 %v1945
      %3933 = vmatprep.subr.bf16.mxu0 %v1954
      %3934 = vmatpush1.bf16.msra.mxu0 %v1953
      %3935 = vmatprep.subr.bf16.mxu0 %v1962
      %3936 = vmatpush1.bf16.msra.mxu0 %v1961
      %3937 = vmatprep.subr.bf16.mxu0 %v1970
      %3938 = vmatpush1.bf16.msra.mxu0 %v1969
      %3939 = vmatprep.subr.bf16.mxu0 %v1978
      %3940 = vmatpush1.bf16.msra.mxu0 %v1977
      %3941 = vmatprep.subr.bf16.mxu0 %v1986
      %3942 = vmatpush1.bf16.msra.mxu0 %v1985
      %3943 = vmatprep.subr.bf16.mxu0 %v1994
      %3944 = vmatpush1.bf16.msra.mxu0 %v1993
      %3945 = vmatprep.subr.bf16.mxu0 %v2002
      %3946 = vmatpush1.bf16.msra.mxu0 %v2001
      %3947 = vmatprep.subr.bf16.mxu0 %v2010
      %3948 = vmatpush1.bf16.msra.mxu0 %v2009
      %3949 = vmatprep.mubr.bf16.mxu0 %v2676
      %3950 = vmatmul.mubr.bf16.gmra.mrb[0].mxu0 %v2675
      %v3951 = vpop.f32.mrb[0].mxu0
      %v3952 = vadd.f32 %v3911, %v3951
      %v3953 = vpop.f32.mrb[0].mxu0
      %v3954 = vadd.f32 %v3913, %v3953
      %v3955 = vpop.f32.mrb[0].mxu0
      %v3956 = vpop.f32.mrb[0].mxu0
      %3957 = vdwg.mxu0
      %3958 = vmatprep.subr.bf16.mxu0 %v2018
      %3959 = vmatpush1.bf16.msra.mxu0 %v2017
      %3960 = vmatprep.subr.bf16.mxu0 %v2026
      %3961 = vmatpush1.bf16.msra.mxu0 %v2025
      %3962 = vmatprep.subr.bf16.mxu0 %v2034
      %3963 = vmatpush1.bf16.msra.mxu0 %v2033
      %3964 = vmatprep.subr.bf16.mxu0 %v2042
      %3965 = vmatpush1.bf16.msra.mxu0 %v2041
      %3966 = vmatprep.subr.bf16.mxu0 %v2050
      %3967 = vmatpush1.bf16.msra.mxu0 %v2049
      %3968 = vmatprep.subr.bf16.mxu0 %v2058
      %3969 = vmatpush1.bf16.msra.mxu0 %v2057
      %3970 = vmatprep.subr.bf16.mxu0 %v2066
      %3971 = vmatpush1.bf16.msra.mxu0 %v2065
      %3972 = vmatprep.subr.bf16.mxu0 %v2074
      %3973 = vmatpush1.bf16.msra.mxu0 %v2073
      %3974 = vmatprep.subr.bf16.mxu0 %v2082
      %3975 = vmatpush1.bf16.msra.mxu0 %v2081
      %3976 = vmatprep.subr.bf16.mxu0 %v2090
      %3977 = vmatpush1.bf16.msra.mxu0 %v2089
      %3978 = vmatprep.subr.bf16.mxu0 %v2098
      %3979 = vmatpush1.bf16.msra.mxu0 %v2097
      %3980 = vmatprep.subr.bf16.mxu0 %v2106
      %3981 = vmatpush1.bf16.msra.mxu0 %v2105
      %3982 = vmatprep.subr.bf16.mxu0 %v2114
      %3983 = vmatpush1.bf16.msra.mxu0 %v2113
      %3984 = vmatprep.subr.bf16.mxu0 %v2122
      %3985 = vmatpush1.bf16.msra.mxu0 %v2121
      %3986 = vmatprep.subr.bf16.mxu0 %v2130
      %3987 = vmatpush1.bf16.msra.mxu0 %v2129
      %3988 = vmatprep.subr.bf16.mxu0 %v2138
      %3989 = vmatpush1.bf16.msra.mxu0 %v2137
      %3990 = vmatprep.mubr.bf16.mxu0 %v2678
      %3991 = vmatmul.mubr.bf16.gmra.mrb[0].mxu0 %v2677
      %v3992 = vpop.f32.mrb[0].mxu0
      %v3993 = vadd.f32 %v3952, %v3992
      %v3994 = vpop.f32.mrb[0].mxu0
      %v3995 = vadd.f32 %v3954, %v3994
      %v3996 = vpop.f32.mrb[0].mxu0
      %v3997 = vpop.f32.mrb[0].mxu0
      %3998 = vdwg.mxu0
      %3999 = vmatprep.subr.bf16.mxu0 %v2146
      %4000 = vmatpush1.bf16.msra.mxu0 %v2145
      %4001 = vmatprep.subr.bf16.mxu0 %v2154
      %4002 = vmatpush1.bf16.msra.mxu0 %v2153
      %4003 = vmatprep.subr.bf16.mxu0 %v2162
      %4004 = vmatpush1.bf16.msra.mxu0 %v2161
      %4005 = vmatprep.subr.bf16.mxu0 %v2170
      %4006 = vmatpush1.bf16.msra.mxu0 %v2169
      %4007 = vmatprep.subr.bf16.mxu0 %v2178
      %4008 = vmatpush1.bf16.msra.mxu0 %v2177
      %4009 = vmatprep.subr.bf16.mxu0 %v2186
      %4010 = vmatpush1.bf16.msra.mxu0 %v2185
      %4011 = vmatprep.subr.bf16.mxu0 %v2194
      %4012 = vmatpush1.bf16.msra.mxu0 %v2193
      %4013 = vmatprep.subr.bf16.mxu0 %v2202
      %4014 = vmatpush1.bf16.msra.mxu0 %v2201
      %4015 = vmatprep.subr.bf16.mxu0 %v2210
      %4016 = vmatpush1.bf16.msra.mxu0 %v2209
      %4017 = vmatprep.subr.bf16.mxu0 %v2218
      %4018 = vmatpush1.bf16.msra.mxu0 %v2217
      %4019 = vmatprep.subr.bf16.mxu0 %v2226
      %4020 = vmatpush1.bf16.msra.mxu0 %v2225
      %4021 = vmatprep.subr.bf16.mxu0 %v2234
      %4022 = vmatpush1.bf16.msra.mxu0 %v2233
      %4023 = vmatprep.subr.bf16.mxu0 %v2242
      %4024 = vmatpush1.bf16.msra.mxu0 %v2241
      %4025 = vmatprep.subr.bf16.mxu0 %v2250
      %4026 = vmatpush1.bf16.msra.mxu0 %v2249
      %4027 = vmatprep.subr.bf16.mxu0 %v2258
      %4028 = vmatpush1.bf16.msra.mxu0 %v2257
      %4029 = vmatprep.subr.bf16.mxu0 %v2266
      %4030 = vmatpush1.bf16.msra.mxu0 %v2265
      %4031 = vmatprep.mubr.bf16.mxu0 %v2680
      %4032 = vmatmul.mubr.bf16.gmra.mrb[0].mxu0 %v2679
      %v4033 = vpop.f32.mrb[0].mxu0
      %v4034 = vadd.f32 %v3993, %v4033
      %v4035 = vpop.f32.mrb[0].mxu0
      %v4036 = vadd.f32 %v3995, %v4035
      %v4037 = vpop.f32.mrb[0].mxu0
      %v4038 = vpop.f32.mrb[0].mxu0
      %4039 = vdwg.mxu0
      %4040 = vmatprep.subr.bf16.mxu0 %v2274
      %4041 = vmatpush1.bf16.msra.mxu0 %v2273
      %4042 = vmatprep.subr.bf16.mxu0 %v2282
      %4043 = vmatpush1.bf16.msra.mxu0 %v2281
      %4044 = vmatprep.subr.bf16.mxu0 %v2290
      %4045 = vmatpush1.bf16.msra.mxu0 %v2289
      %4046 = vmatprep.subr.bf16.mxu0 %v2298
      %4047 = vmatpush1.bf16.msra.mxu0 %v2297
      %4048 = vmatprep.subr.bf16.mxu0 %v2306
      %4049 = vmatpush1.bf16.msra.mxu0 %v2305
      %4050 = vmatprep.subr.bf16.mxu0 %v2314
      %4051 = vmatpush1.bf16.msra.mxu0 %v2313
      %4052 = vmatprep.subr.bf16.mxu0 %v2322
      %4053 = vmatpush1.bf16.msra.mxu0 %v2321
      %4054 = vmatprep.subr.bf16.mxu0 %v2330
      %4055 = vmatpush1.bf16.msra.mxu0 %v2329
      %4056 = vmatprep.subr.bf16.mxu0 %v2338
      %4057 = vmatpush1.bf16.msra.mxu0 %v2337
      %4058 = vmatprep.subr.bf16.mxu0 %v2346
      %4059 = vmatpush1.bf16.msra.mxu0 %v2345
      %4060 = vmatprep.subr.bf16.mxu0 %v2354
      %4061 = vmatpush1.bf16.msra.mxu0 %v2353
      %4062 = vmatprep.subr.bf16.mxu0 %v2362
      %4063 = vmatpush1.bf16.msra.mxu0 %v2361
      %4064 = vmatprep.subr.bf16.mxu0 %v2370
      %4065 = vmatpush1.bf16.msra.mxu0 %v2369
      %4066 = vmatprep.subr.bf16.mxu0 %v2378
      %4067 = vmatpush1.bf16.msra.mxu0 %v2377
      %4068 = vmatprep.subr.bf16.mxu0 %v2386
      %4069 = vmatpush1.bf16.msra.mxu0 %v2385
      %4070 = vmatprep.subr.bf16.mxu0 %v2394
      %4071 = vmatpush1.bf16.msra.mxu0 %v2393
      %4072 = vmatprep.mubr.bf16.mxu0 %v2682
      %4073 = vmatmul.mubr.bf16.gmra.mrb[0].mxu0 %v2681
      %v4074 = vpop.f32.mrb[0].mxu0
      %v4075 = vadd.f32 %v4034, %v4074
      %v4076 = vpop.f32.mrb[0].mxu0
      %v4077 = vadd.f32 %v4036, %v4076
      %v4078 = vpop.f32.mrb[0].mxu0
      %v4079 = vpop.f32.mrb[0].mxu0
      %4080 = vdwg.mxu0
      %4081 = vmatprep.subr.bf16.mxu0 %v2402
      %4082 = vmatpush1.bf16.msra.mxu0 %v2401
      %4083 = vmatprep.subr.bf16.mxu0 %v2410
      %4084 = vmatpush1.bf16.msra.mxu0 %v2409
      %4085 = vmatprep.subr.bf16.mxu0 %v2418
      %4086 = vmatpush1.bf16.msra.mxu0 %v2417
      %4087 = vmatprep.subr.bf16.mxu0 %v2426
      %4088 = vmatpush1.bf16.msra.mxu0 %v2425
      %4089 = vmatprep.subr.bf16.mxu0 %v2434
      %4090 = vmatpush1.bf16.msra.mxu0 %v2433
      %4091 = vmatprep.subr.bf16.mxu0 %v2442
      %4092 = vmatpush1.bf16.msra.mxu0 %v2441
      %4093 = vmatprep.subr.bf16.mxu0 %v2450
      %4094 = vmatpush1.bf16.msra.mxu0 %v2449
      %4095 = vmatprep.subr.bf16.mxu0 %v2458
      %4096 = vmatpush1.bf16.msra.mxu0 %v2457
      %4097 = vmatprep.subr.bf16.mxu0 %v2466
      %4098 = vmatpush1.bf16.msra.mxu0 %v2465
      %4099 = vmatprep.subr.bf16.mxu0 %v2474
      %4100 = vmatpush1.bf16.msra.mxu0 %v2473
      %4101 = vmatprep.subr.bf16.mxu0 %v2482
      %4102 = vmatpush1.bf16.msra.mxu0 %v2481
      %4103 = vmatprep.subr.bf16.mxu0 %v2490
      %4104 = vmatpush1.bf16.msra.mxu0 %v2489
      %4105 = vmatprep.subr.bf16.mxu0 %v2498
      %4106 = vmatpush1.bf16.msra.mxu0 %v2497
      %4107 = vmatprep.subr.bf16.mxu0 %v2506
      %4108 = vmatpush1.bf16.msra.mxu0 %v2505
      %4109 = vmatprep.subr.bf16.mxu0 %v2514
      %4110 = vmatpush1.bf16.msra.mxu0 %v2513
      %4111 = vmatprep.subr.bf16.mxu0 %v2522
      %4112 = vmatpush1.bf16.msra.mxu0 %v2521
      %4113 = vmatprep.mubr.bf16.mxu0 %v2684
      %4114 = vmatmul.mubr.bf16.gmra.mrb[0].mxu0 %v2683
      %v4115 = vpop.f32.mrb[0].mxu0
      %v4116 = vadd.f32 %v4075, %v4115
      %v4117 = vpop.f32.mrb[0].mxu0
      %v4118 = vadd.f32 %v4077, %v4117
      %v4119 = vpop.f32.mrb[0].mxu0
      %v4120 = vpop.f32.mrb[0].mxu0
      %4121 = vdwg.mxu0
      %4122 = vmatprep.subr.bf16.mxu0 %v2530
      %4123 = vmatpush1.bf16.msra.mxu0 %v2529
      %4124 = vmatprep.subr.bf16.mxu0 %v2538
      %4125 = vmatpush1.bf16.msra.mxu0 %v2537
      %4126 = vmatprep.subr.bf16.mxu0 %v2546
      %4127 = vmatpush1.bf16.msra.mxu0 %v2545
      %4128 = vmatprep.subr.bf16.mxu0 %v2554
      %4129 = vmatpush1.bf16.msra.mxu0 %v2553
      %4130 = vmatprep.subr.bf16.mxu0 %v2562
      %4131 = vmatpush1.bf16.msra.mxu0 %v2561
      %4132 = vmatprep.subr.bf16.mxu0 %v2570
      %4133 = vmatpush1.bf16.msra.mxu0 %v2569
      %4134 = vmatprep.subr.bf16.mxu0 %v2578
      %4135 = vmatpush1.bf16.msra.mxu0 %v2577
      %4136 = vmatprep.subr.bf16.mxu0 %v2586
      %4137 = vmatpush1.bf16.msra.mxu0 %v2585
      %4138 = vmatprep.subr.bf16.mxu0 %v2594
      %4139 = vmatpush1.bf16.msra.mxu0 %v2593
      %4140 = vmatprep.subr.bf16.mxu0 %v2602
      %4141 = vmatpush1.bf16.msra.mxu0 %v2601
      %4142 = vmatprep.subr.bf16.mxu0 %v2610
      %4143 = vmatpush1.bf16.msra.mxu0 %v2609
      %4144 = vmatprep.subr.bf16.mxu0 %v2618
      %4145 = vmatpush1.bf16.msra.mxu0 %v2617
      %4146 = vmatprep.subr.bf16.mxu0 %v2626
      %4147 = vmatpush1.bf16.msra.mxu0 %v2625
      %4148 = vmatprep.subr.bf16.mxu0 %v2634
      %4149 = vmatpush1.bf16.msra.mxu0 %v2633
      %4150 = vmatprep.subr.bf16.mxu0 %v2642
      %4151 = vmatpush1.bf16.msra.mxu0 %v2641
      %4152 = vmatprep.subr.bf16.mxu0 %v2650
      %4153 = vmatpush1.bf16.msra.mxu0 %v2649
      %4154 = vmatprep.mubr.bf16.mxu0 %v2686
      %4155 = vmatmul.mubr.bf16.gmra.mrb[0].mxu0 %v2685
      %v4156 = vpop.f32.mrb[0].mxu0
      %v4157 = vadd.f32 %v4116, %v4156
      %v4158 = vpop.f32.mrb[0].mxu0
      %v4159 = vadd.f32 %v4118, %v4158
      %v4160 = vpop.f32.mrb[0].mxu0
      %v4161 = vpop.f32.mrb[0].mxu0
      %4162 = vdwg.mxu0
      %v4163 = vld [vmem:[#allocation2] sm:$0xff]
      %v4164 = vld [vmem:[#allocation2 + $0x8] sm:$0xff]
      %v4165 = vld [vmem:[#allocation2 + $0x10] sm:$0xff]
      %v4166 = vld [vmem:[#allocation2 + $0x18] sm:$0xff]
      %v4167 = vld [vmem:[#allocation2 + $0x20] sm:$0xff]
      %v4168 = vld [vmem:[#allocation2 + $0x28] sm:$0xff]
      %v4169 = vld [vmem:[#allocation2 + $0x30] sm:$0xff]
      %v4170 = vld [vmem:[#allocation2 + $0x38] sm:$0xff]
      %v4171 = vld [vmem:[%s414] sm:$0xff]
      %v4173 = vlaneseq
      %v4174 = vshrl.u32 %v4173, 7
      %v4175 = vsub.s32 0, %v4174
      %v4176 = vrot.slane %v4171, %v4175
      %v4177 = vlaneseq
      %v4178 = vshrl.u32 %v4177, 7
      %v4179 = vsub.s32 1, %v4178
      %v4180 = vrot.slane %v4171, %v4179
      %v4181 = vlaneseq
      %v4182 = vshrl.u32 %v4181, 7
      %v4183 = vsub.s32 2, %v4182
      %v4184 = vrot.slane %v4171, %v4183
      %v4185 = vlaneseq
      %v4186 = vshrl.u32 %v4185, 7
      %v4187 = vsub.s32 3, %v4186
      %v4188 = vrot.slane %v4171, %v4187
      %v4189 = vlaneseq
      %v4190 = vshrl.u32 %v4189, 7
      %v4191 = vsub.s32 4, %v4190
      %v4192 = vrot.slane %v4171, %v4191
      %v4193 = vlaneseq
      %v4194 = vshrl.u32 %v4193, 7
      %v4195 = vsub.s32 5, %v4194
      %v4196 = vrot.slane %v4171, %v4195
      %v4197 = vlaneseq
      %v4198 = vshrl.u32 %v4197, 7
      %v4199 = vsub.s32 6, %v4198
      %v4200 = vrot.slane %v4171, %v4199
      %v4201 = vlaneseq
      %v4202 = vshrl.u32 %v4201, 7
      %v4203 = vsub.s32 7, %v4202
      %v4204 = vrot.slane %v4171, %v4203
      %v4213 = vmul.f32 %v3050, %v4176
      %v4214 = vmul.f32 %v3052, %v4180
      %v4215 = vmul.f32 %v3419, %v4184
      %v4216 = vmul.f32 %v3421, %v4188
      %v4217 = vmul.f32 %v3788, %v4192
      %v4218 = vmul.f32 %v3790, %v4196
      %v4219 = vmul.f32 %v4157, %v4200
      %v4220 = vmul.f32 %v4159, %v4204
      %v4221 = vadd.f32 %v4163, %v4213
      %v4222 = vadd.f32 %v4164, %v4214
      %v4223 = vadd.f32 %v4165, %v4215
      %v4224 = vadd.f32 %v4166, %v4216
      %v4225 = vadd.f32 %v4167, %v4217
      %v4226 = vadd.f32 %v4168, %v4218
      %v4227 = vadd.f32 %v4169, %v4219
      %v4228 = vadd.f32 %v4170, %v4220
      %4229 = vst [vmem:[#allocation2] sm:$0xff] %v4221
      %4230 = vst [vmem:[#allocation2 + $0x8] sm:$0xff] %v4222
      %4231 = vst [vmem:[#allocation2 + $0x10] sm:$0xff] %v4223
      %4232 = vst [vmem:[#allocation2 + $0x18] sm:$0xff] %v4224
      %4233 = vst [vmem:[#allocation2 + $0x20] sm:$0xff] %v4225
      %4234 = vst [vmem:[#allocation2 + $0x28] sm:$0xff] %v4226
      %4235 = vst [vmem:[#allocation2 + $0x30] sm:$0xff] %v4227
      %4236 = vst [vmem:[#allocation2 + $0x38] sm:$0xff] %v4228
      %p4237 = scmp.eq.s32.totalorder %s24, 3
      // Predicated region
      $region57: #{critic_forward.4} parent=51 // pred_check
        %p4238 = pneg %p4237
      $region58: #{critic_forward.4} parent=51 // pred_check_branch
        %4240 = sbr.rel (%p4238) target = $region60
      $region59: #{critic_forward.4} parent=51 // pred_region
        %v4241 = vld [vmem:[#allocation2] sm:$0xff]
        %v4242 = vld [vmem:[#allocation2 + $0x8] sm:$0xff]
        %v4243 = vld [vmem:[#allocation2 + $0x10] sm:$0xff]
        %v4244 = vld [vmem:[#allocation2 + $0x18] sm:$0xff]
        %v4245 = vld [vmem:[#allocation2 + $0x20] sm:$0xff]
        %v4246 = vld [vmem:[#allocation2 + $0x28] sm:$0xff]
        %v4247 = vld [vmem:[#allocation2 + $0x30] sm:$0xff]
        %v4248 = vld [vmem:[#allocation2 + $0x38] sm:$0xff]
        %v4249 = vmax.f32 %v4241, 0.0
        %v4250 = vmax.f32 %v4242, 0.0
        %v4251 = vmax.f32 %v4243, 0.0
        %v4252 = vmax.f32 %v4244, 0.0
        %v4253 = vmax.f32 %v4245, 0.0
        %v4254 = vmax.f32 %v4246, 0.0
        %v4255 = vmax.f32 %v4247, 0.0
        %v4256 = vmax.f32 %v4248, 0.0
        %4257 = vst [vmem:[%s420] sm:$0xff] %v4249
        %4258 = vst [vmem:[%s420 + $0x8] sm:$0xff] %v4250
        %4259 = vst [vmem:[%s420 + $0x10] sm:$0xff] %v4251
        %4260 = vst [vmem:[%s420 + $0x18] sm:$0xff] %v4252
        %4261 = vst [vmem:[%s420 + $0x20] sm:$0xff] %v4253
        %4262 = vst [vmem:[%s420 + $0x28] sm:$0xff] %v4254
        %4263 = vst [vmem:[%s420 + $0x30] sm:$0xff] %v4255
        %4264 = vst [vmem:[%s420 + $0x38] sm:$0xff] %v4256
      $region60: #{critic_forward.4} parent=51 // pred_fallthru
        _
      %s4265 = smul.u32 8, %s23
      %p4266 = scmp.lt.s32.totalorder %s4265, 7
      %s4267 = scalar_select %p4266, %s4265, 7
      %s4268 = smul.addr %s4267, 8
      %s4269 = scalar_lea.vmem %s8, %s4268
      // Predicated region
      $region61: #{critic_forward.4} parent=51 // pred_check
        %p4270 = pneg %p244
      $region62: #{critic_forward.4} parent=51 // pred_check_branch
        %4272 = sbr.rel (%p4270) target = $region64
      $region63: #{critic_forward.4} parent=51 // pred_region
        %s4273 = smul.u32 8, %s23
      $region64: #{critic_forward.4} parent=51 // pred_fallthru
        _
      // Predicated region
      $region65: #{critic_forward.4} parent=51 // pred_check
        %p4274 = pneg %p244
      $region66: #{critic_forward.4} parent=51 // pred_check_branch
        %4276 = sbr.rel (%p4274) target = $region68
      $region67: #{critic_forward.4} parent=51 // pred_region
        %s4277 = smul.u32 8, %s23
        %p4278 = scmp.lt.s32.totalorder %s4277, 7
        %s4279 = scalar_select %p4278, %s4277, 7
        %s4280 = smul.addr %s4279, 8
        %s4281 = scalar_lea.vmem %s8, %s4280
      $region68: #{critic_forward.4} parent=51 // pred_fallthru
        _
    $region52: #{critic_forward.4} parent=5 // pred_fallthru
      _
    %p4282 = scmp.le.s32.totalorder 2, %s14
    // Predicated region
    $region69: #{critic_forward.4} parent=5 // pred_check
      %p4283 = pneg %p4282
    $region70: #{critic_forward.4} parent=5 // pred_check_branch
      %4285 = sbr.rel (%p4283) target = $region72
    $region71: #{critic_forward.4} parent=5 // pred_region
      %s4286 = ssub.s32 %s14, 2
    $region72: #{critic_forward.4} parent=5 // pred_fallthru
      _
  $region6: #{critic_forward.4} parent=0 // loop_footer
    %s18 = sadd.s32 1, %s14
  $region7: #{critic_forward.4} parent=0 // loop_footer_branch
    %13 = sbr.rel target = $region3
  $region8: #{critic_forward.4} parent=0 // loop_exit
    _

</llo_original>
